<compile_context>
chip_gen: v7x
topology: tpu7x:2x2x1
jax: 0.10.0
libtpu: 0.0.40
codegen_flags: <defaults>
</compile_context>

<pallas_src>
import jax
import jax.numpy as jnp
from jax import lax
from jax.experimental import pallas as pl
from jax.experimental.pallas import tpu as pltpu


# ----------------------------------------------------------------------------
# helpers
# ----------------------------------------------------------------------------
def _round_up(n, q):
    return ((n + q - 1) // q) * q


def _pick_tile(n, target, quantum):
    """Largest multiple of `quantum` that divides n and is <= target; else n."""
    t = (min(target, n) // quantum) * quantum
    while t >= quantum:
        if n % t == 0:
            return t
        t -= quantum
    return n


def _pick_batch_block(bp, target=64):
    """Batch block: as large as sensible, but keep >=2 blocks when Bp >= 16
    so the 'parallel' batch axis can be sharded across TCs (v7x megacore)."""
    bb = _pick_tile(bp, min(target, bp), 8)
    if bp // bb < 2 and bp >= 16:
        bb = _pick_tile(bp, bp // 2, 8)
    return bb


def _pick_time_chunk(T, bb, H, tc_target, vmem_budget=12 * 1024 * 1024):
    """Time chunk for the fused LSTM: bound the double-buffered streamed
    blocks (gx1 chunk f32 + y chunk bf16) to a fixed VMEM budget."""
    per_step = bb * 4 * H * 4 + bb * H * 2
    max_tc = max(1, vmem_budget // (2 * per_step))
    return _pick_tile(T, min(tc_target, max_tc), 1)


# ----------------------------------------------------------------------------
# Generic tiled matmul+bias kernel (bf16 inputs, f32 accumulate).
# Used for the hoisted layer-1 input projection X @ W_ih1^T + b1.
# K is kept whole (E/H are small); M and N are tiled and both axes parallel.
# ----------------------------------------------------------------------------
def matmul_bias_kernel(x_ref, w_ref, b_ref, o_ref):
    o_ref[...] = (jnp.dot(x_ref[...], w_ref[...],
                          preferred_element_type=jnp.float32)
                  + b_ref[...]).astype(o_ref.dtype)


def matmul_bias(x, w_t, b, *, tm_target=256, tn_target=512,
                out_dtype=jnp.float32):
    M, K = x.shape
    N = w_t.shape[1]
    tm = _pick_tile(M, tm_target, 8)
    tn = _pick_tile(N, tn_target, 128)
    return pl.pallas_call(
        matmul_bias_kernel,
        out_shape=jax.ShapeDtypeStruct((M, N), out_dtype),
        grid_spec=pltpu.PrefetchScalarGridSpec(
            num_scalar_prefetch=0,
            grid=(M // tm, N // tn),
            in_specs=[pl.BlockSpec((tm, K), lambda i, j: (i, 0)),
                      pl.BlockSpec((K, tn), lambda i, j: (0, j)),
                      pl.BlockSpec((1, tn), lambda i, j: (0, j))],
            out_specs=pl.BlockSpec((tm, tn), lambda i, j: (i, j))),
        compiler_params=pltpu.CompilerParams(
            dimension_semantics=("parallel", "parallel")),
    )(x, w_t, b)


# ----------------------------------------------------------------------------
# Fused 2-layer LSTM recurrence, chunked over time.
#   grid = (B_blocks, T // Tc); batch axis "parallel", time axis "arbitrary".
#   gx1   : (T, B, 4H) f32   precomputed layer-1 gate inputs (X@Wih1 + b1)
#   y     : (T, B, H)  bf16  layer-2 outputs (chunk written once per grid step)
#   h, c  : (2, B, H)  f32   carries, resident output blocks (final state)
# ----------------------------------------------------------------------------
def fused_lstm_kernel(gx1_ref, whh1_ref, wih2_ref, whh2_ref, b2_ref,
                      y_ref, h_ref, c_ref):
    H = whh1_ref.shape[0]
    Tc = gx1_ref.shape[0]

    @pl.when(pl.program_id(1) == 0)
    def _():
        # hidden=None in the PyTorch module -> zero initial state
        h_ref[...] = jnp.zeros_like(h_ref)
        c_ref[...] = jnp.zeros_like(c_ref)

    # Constant-index weight blocks: DMA'd once (block index never changes),
    # read into vregs once per chunk and reused Tc times.
    whh1 = whh1_ref[...]
    wih2 = wih2_ref[...]
    whh2 = whh2_ref[...]
    b2 = b2_ref[...]

    def cell(gates, c_prev):
        # PyTorch gate order: i, f, g, o.  Elementwise path stays f32.
        i_g = jax.nn.sigmoid(gates[:, 0 * H:1 * H])
        f_g = jax.nn.sigmoid(gates[:, 1 * H:2 * H])
        g_g = jnp.tanh(gates[:, 2 * H:3 * H])
        o_g = jax.nn.sigmoid(gates[:, 3 * H:4 * H])
        c_new = f_g * c_prev + i_g * g_g
        h_new = o_g * jnp.tanh(c_new)
        return h_new, c_new

    def step(s, carry):
        h1, c1, h2, c2 = carry
        # layer 1: input projection already folded into gx1 (bias included)
        g1 = gx1_ref[s] + jnp.dot(h1.astype(jnp.bfloat16), whh1,
                                  preferred_element_type=jnp.float32)
        h1, c1 = cell(g1, c1)
        # layer 2: consumes layer-1 h directly from registers (never hits HBM)
        h1b = h1.astype(jnp.bfloat16)
        g2 = (jnp.dot(h1b, wih2, preferred_element_type=jnp.float32)
              + jnp.dot(h2.astype(jnp.bfloat16), whh2,
                        preferred_element_type=jnp.float32)
              + b2)
        h2, c2 = cell(g2, c2)
        y_ref[s] = h2.astype(y_ref.dtype)
        return (h1, c1, h2, c2)

    carry = (h_ref[0], c_ref[0], h_ref[1], c_ref[1])
    if Tc <= 32:
        for s in range(Tc):          # fully unrolled, static indices
            carry = step(s, carry)
    else:
        carry = lax.fori_loop(0, Tc, step, carry, unroll=2)
    h1, c1, h2, c2 = carry
    h_ref[0] = h1
    c_ref[0] = c1
    h_ref[1] = h2
    c_ref[1] = c2


def fused_lstm(gx1, whh1_t, wih2_t, whh2_t, b2, *, hidden_dim, bb, tc):
    T, Bp, _ = gx1.shape
    H = hidden_dim
    return pl.pallas_call(
        fused_lstm_kernel,
        out_shape=(jax.ShapeDtypeStruct((T, Bp, H), jnp.bfloat16),
                   jax.ShapeDtypeStruct((2, Bp, H), jnp.float32),
                   jax.ShapeDtypeStruct((2, Bp, H), jnp.float32)),
        grid_spec=pltpu.PrefetchScalarGridSpec(
            num_scalar_prefetch=0,
            grid=(Bp // bb, T // tc),
            in_specs=[
                pl.BlockSpec((tc, bb, 4 * H), lambda b, t: (t, b, 0)),  # gx1 chunk
                pl.BlockSpec((H, 4 * H), lambda b, t: (0, 0)),          # W_hh1^T
                pl.BlockSpec((H, 4 * H), lambda b, t: (0, 0)),          # W_ih2^T
                pl.BlockSpec((H, 4 * H), lambda b, t: (0, 0)),          # W_hh2^T
                pl.BlockSpec((1, 4 * H), lambda b, t: (0, 0)),          # b2
            ],
            out_specs=[
                pl.BlockSpec((tc, bb, H), lambda b, t: (t, b, 0)),      # y chunk
                pl.BlockSpec((2, bb, H), lambda b, t: (0, b, 0)),       # h carry/final
                pl.BlockSpec((2, bb, H), lambda b, t: (0, b, 0)),       # c carry/final
            ],
        ),
        compiler_params=pltpu.CompilerParams(
            dimension_semantics=("parallel", "arbitrary"),
            # safe on v5e/v6e (128 MiB) and v7x (64 MiB physical)
            vmem_limit_bytes=48 * 1024 * 1024),
    )(gx1, whh1_t, wih2_t, whh2_t, b2)


# ----------------------------------------------------------------------------
# FC head: reads time-major (T, B, H) LSTM output, writes batch-major
# (B, T, V) logits directly (no XLA transpose pass).  Tiled over (b, t, v).
# ----------------------------------------------------------------------------
def fc_head_kernel(y_ref, w_ref, b_ref, o_ref):
    w = w_ref[...]
    bias = b_ref[...]
    for bi in range(o_ref.shape[0]):                 # static unroll over batch rows
        o_ref[bi] = (jnp.dot(y_ref[:, bi, :], w,
                             preferred_element_type=jnp.float32) + bias)


def fc_head(y, w_t, b, *, bb, tt_target=128, tv_target=512):
    T, Bp, H = y.shape
    V = w_t.shape[1]
    tt = _pick_tile(T, tt_target, 8)
    tv = _pick_tile(V, tv_target, 128)
    return pl.pallas_call(
        fc_head_kernel,
        out_shape=jax.ShapeDtypeStruct((Bp, T, V), jnp.float32),
        grid_spec=pltpu.PrefetchScalarGridSpec(
            num_scalar_prefetch=0,
            grid=(Bp // bb, T // tt, V // tv),
            in_specs=[
                pl.BlockSpec((tt, bb, H), lambda b, t, v: (t, b, 0)),
                pl.BlockSpec((H, tv), lambda b, t, v: (0, v)),
                pl.BlockSpec((1, tv), lambda b, t, v: (0, v)),
            ],
            out_specs=pl.BlockSpec((bb, tt, tv), lambda b, t, v: (b, t, v)),
        ),
        compiler_params=pltpu.CompilerParams(
            dimension_semantics=("parallel", "parallel", "parallel"),
            vmem_limit_bytes=48 * 1024 * 1024),
    )(y, w_t, b)


# ----------------------------------------------------------------------------
# Full forward (mirrors LSTMLanguageModel.forward with hidden=None)
# ----------------------------------------------------------------------------
def lstm_lm_forward(params, input_ids, *, tc=128):
    assert len(params["lstm"]) == 2, "fused kernel is specialized to num_layers=2"
    l1, l2 = params["lstm"]
    H = l1["whh_t"].shape[0]
    E = l1["wih_t"].shape[0]
    B, T = input_ids.shape

    # pad batch to a sublane multiple (8); padded rows are sliced off at the end
    Bp = _round_up(B, 8)
    if Bp != B:
        input_ids = jnp.pad(input_ids, ((0, Bp - B), (0, 0)))
    Bb = _pick_batch_block(Bp)
    Tc = _pick_time_chunk(T, Bb, H, tc)

    # embedding gather straight into time-major layout (no transpose pass)
    x = jnp.take(params["embedding"], input_ids.T, axis=0).astype(jnp.bfloat16)

    # hoisted layer-1 input projection (+bias) over all timesteps: one big GEMM
    gx1 = matmul_bias(x.reshape(T * Bp, E), l1["wih_t"], l1["b"],
                      tm_target=256, tn_target=512).reshape(T, Bp, 4 * H)

    # fused 2-layer recurrence (chunked time grid, batch-parallel grid axis)
    y, h_n, c_n = fused_lstm(gx1, l1["whh_t"], l2["wih_t"], l2["whh_t"],
                             l2["b"], hidden_dim=H, bb=Bb, tc=Tc)

    # linear head, logits emitted directly in (B, T, V)
    logits = fc_head(y, params["fc_w_t"], params["fc_b"], bb=Bb)

    return logits[:B], (h_n[:, :B], c_n[:, :B])


# ----------------------------------------------------------------------------
# Pure-JAX reference with IDENTICAL bf16 casting points (lax.scan) for validation
# ----------------------------------------------------------------------------
def ref_forward(params, input_ids):
    bf16 = jnp.bfloat16
    l1, l2 = params["lstm"]
    H = l1["whh_t"].shape[0]
    V = params["fc_w_t"].shape[1]

    x = jnp.take(params["embedding"], input_ids.T, axis=0).astype(bf16)  # (T,B,E)
    T, B, E = x.shape
    gx1 = (jnp.dot(x.reshape(T * B, E), l1["wih_t"],
                   preferred_element_type=jnp.float32)
           + l1["b"]).reshape(T, B, 4 * H)

    def cell(gates, c):
        i = jax.nn.sigmoid(gates[:, 0 * H:1 * H])
        f = jax.nn.sigmoid(gates[:, 1 * H:2 * H])
        g = jnp.tanh(gates[:, 2 * H:3 * H])
        o = jax.nn.sigmoid(gates[:, 3 * H:4 * H])
        c = f * c + i * g
        return o * jnp.tanh(c), c

    def step(carry, gx_t):
        h1, c1, h2, c2 = carry
        g1 = gx_t + jnp.dot(h1.astype(bf16), l1["whh_t"],
                            preferred_element_type=jnp.float32)
        h1, c1 = cell(g1, c1)
        g2 = (jnp.dot(h1.astype(bf16), l2["wih_t"],
                      preferred_element_type=jnp.float32)
              + jnp.dot(h2.astype(bf16), l2["whh_t"],
                        preferred_element_type=jnp.float32)
              + l2["b"])
        h2, c2 = cell(g2, c2)
        return (h1, c1, h2, c2), h2.astype(bf16)

    z = jnp.zeros((B, H), jnp.float32)
    (h1, c1, h2, c2), y = jax.lax.scan(step, (z, z, z, z), gx1)

    logits = (jnp.dot(y.reshape(T * B, H), params["fc_w_t"],
                      preferred_element_type=jnp.float32)
              + params["fc_b"]).reshape(T, B, V)
    logits = jnp.transpose(logits, (1, 0, 2))
    return logits, (jnp.stack([h1, h2]), jnp.stack([c1, c2]))


# ----------------------------------------------------------------------------
# Deterministic parameter init (PyTorch-style shapes; matmul weights in bf16)
# ----------------------------------------------------------------------------
def init_params(key, vocab_size, embed_dim, hidden_dim, num_layers, pad_token_id):
    keys = jax.random.split(key, 1 + 4 * num_layers + 2)
    k_iter = iter(keys)

    emb = jax.random.normal(next(k_iter), (vocab_size, embed_dim), jnp.float32)
    emb = emb.at[pad_token_id].set(0.0)          # padding_idx row is zero

    bound = 1.0 / float(hidden_dim) ** 0.5
    lstm_layers = []
    for layer in range(num_layers):
        in_dim = embed_dim if layer == 0 else hidden_dim
        w_ih = jax.random.uniform(next(k_iter), (4 * hidden_dim, in_dim),
                                  jnp.float32, -bound, bound)
        w_hh = jax.random.uniform(next(k_iter), (4 * hidden_dim, hidden_dim),
                                  jnp.float32, -bound, bound)
        b_ih = jax.random.uniform(next(k_iter), (4 * hidden_dim,),
                                  jnp.float32, -bound, bound)
        b_hh = jax.random.uniform(next(k_iter), (4 * hidden_dim,),
                                  jnp.float32, -bound, bound)
        lstm_layers.append({
            "wih_t": w_ih.T.astype(jnp.bfloat16),            # (in_dim, 4H) bf16
            "whh_t": w_hh.T.astype(jnp.bfloat16),            # (H, 4H)     bf16
            "b": (b_ih + b_hh).reshape(1, 4 * hidden_dim),   # (1, 4H)     f32
        })

    fc_w = jax.random.uniform(next(k_iter), (vocab_size, hidden_dim),
                              jnp.float32, -bound, bound)
    fc_b = jax.random.uniform(next(k_iter), (vocab_size,),
                              jnp.float32, -bound, bound)

    return {
        "embedding": emb,
        "lstm": lstm_layers,
        "fc_w_t": fc_w.T.astype(jnp.bfloat16),   # (H, V) bf16
        "fc_b": fc_b.reshape(1, -1),             # (1, V) f32
    }


if __name__ == "__main__":
    # small but lane/sublane-aligned shapes (H, E mult of 128; B mult of 8)
    vocab_size = 256
    embed_dim = 128
    hidden_dim = 128
    num_layers = 2
    pad_token_id = 3
    B, T = 8, 32

    key = jax.random.PRNGKey(0)
    k_params, k_ids = jax.random.split(key)
    params = init_params(k_params, vocab_size, embed_dim, hidden_dim,
                         num_layers, pad_token_id)
    input_ids = jax.random.randint(k_ids, (B, T), 0, vocab_size, jnp.int32)

    fwd = jax.jit(lambda p, ids: lstm_lm_forward(p, ids, tc=8))
    logits, (h_n, c_n) = fwd(params, input_ids)
    logits = jax.block_until_ready(logits)
    h_n = jax.block_until_ready(h_n)
    c_n = jax.block_until_ready(c_n)

    assert logits.shape == (B, T, vocab_size)
    assert h_n.shape == (num_layers, B, hidden_dim)
    assert c_n.shape == (num_layers, B, hidden_dim)

    ref_logits, (ref_h, ref_c) = ref_forward(params, input_ids)
    err_logits = float(jnp.max(jnp.abs(logits - ref_logits)))
    err_h = float(jnp.max(jnp.abs(h_n - ref_h)))
    err_c = float(jnp.max(jnp.abs(c_n - ref_c)))
    # Reference uses the same bf16 matmul-input casts, so the only differences
    # are MXU accumulation order and transcendental implementations.
    tol = 5e-2
    assert err_logits < tol, f"logits mismatch: {err_logits}"
    assert err_h < tol, f"h_n mismatch: {err_h}"
    assert err_c < tol, f"c_n mismatch: {err_c}"

    print("KERNEL_OK")
</pallas_src>

<mosaic_0001>
module attributes {stable_mosaic.version = 11 : i64} {
  func.func @matmul_bias_kernel(%arg0: i32, %arg1: i32, %arg2: memref<256x128xbf16, #tpu.memory_space<vmem>>, %arg3: memref<128x512xbf16, #tpu.memory_space<vmem>>, %arg4: memref<1x512xf32, #tpu.memory_space<vmem>>, %arg5: memref<256x512xf32, #tpu.memory_space<vmem>>) attributes {dimension_semantics = [#tpu.dimension_semantics<parallel>, #tpu.dimension_semantics<parallel>], iteration_bounds = array<i64: 1, 1>, scalar_prefetch = 0 : i64, scratch_operands = 0 : i64, tpu.core_type = #tpu.core_type<tc>, window_params = [{transform_indices = @transform_0, window_bounds = array<i64: 256, 128>}, {transform_indices = @transform_1, window_bounds = array<i64: 128, 512>}, {transform_indices = @transform_2, window_bounds = array<i64: 1, 512>}, {transform_indices = @transform_3, window_bounds = array<i64: 256, 512>}]} {
    %c0 = arith.constant 0 : index
    %c0_0 = arith.constant 0 : index
    %0 = vector.load %arg2[%c0, %c0_0] : memref<256x128xbf16, #tpu.memory_space<vmem>>, vector<256x128xbf16>
    %c0_1 = arith.constant 0 : index
    %c0_2 = arith.constant 0 : index
    %1 = vector.load %arg3[%c0_1, %c0_2] : memref<128x512xbf16, #tpu.memory_space<vmem>>, vector<128x512xbf16>
    %cst = arith.constant dense<0.000000e+00> : vector<256x512xf32>
    %2 = tpu.matmul %0, %1, %cst {dimension_numbers = #tpu.dot_dimension_numbers<[1], [0], [0], [1], [0, 0, 1, 1], [], []>} : vector<256x128xbf16>, vector<128x512xbf16>, vector<256x512xf32> -> vector<256x512xf32>
    %c0_3 = arith.constant 0 : index
    %c0_4 = arith.constant 0 : index
    %3 = vector.load %arg4[%c0_3, %c0_4] : memref<1x512xf32, #tpu.memory_space<vmem>>, vector<1x512xf32>
    %4 = vector.broadcast %3 : vector<1x512xf32> to vector<256x512xf32>
    %5 = arith.addf %2, %4 : vector<256x512xf32>
    %c0_5 = arith.constant 0 : index
    %c0_6 = arith.constant 0 : index
    %6 = vector.load %arg5[%c0_5, %c0_6] : memref<256x512xf32, #tpu.memory_space<vmem>>, vector<256x512xf32>
    tpu.vector_store %arg5[%c0_5, %c0_6], %5 {strides = array<i32>} : memref<256x512xf32, #tpu.memory_space<vmem>>, vector<256x512xf32>,
    return
  }
  func.func @transform_0(%arg0: i32, %arg1: i32) -> (i32, i32) {
    %c0_i32 = arith.constant 0 : i32
    %c0_i32_0 = arith.constant 0 : i32
    return %arg0, %c0_i32 : i32, i32
  }
  func.func @transform_1(%arg0: i32, %arg1: i32) -> (i32, i32) {
    %c0_i32 = arith.constant 0 : i32
    %c0_i32_0 = arith.constant 0 : i32
    return %c0_i32, %arg1 : i32, i32
  }
  func.func @transform_2(%arg0: i32, %arg1: i32) -> (i32, i32) {
    %c0_i32 = arith.constant 0 : i32
    %c0_i32_0 = arith.constant 0 : i32
    return %c0_i32, %arg1 : i32, i32
  }
  func.func @transform_3(%arg0: i32, %arg1: i32) -> (i32, i32) {
    %c0_i32 = arith.constant 0 : i32
    return %arg0, %arg1 : i32, i32
  }
}

module attributes {stable_mosaic.version = 11 : i64} {
  func.func @fused_lstm_kernel(%arg0: i32, %arg1: i32, %arg2: memref<8x8x512xf32, #tpu.memory_space<vmem>>, %arg3: memref<128x512xbf16, #tpu.memory_space<vmem>>, %arg4: memref<128x512xbf16, #tpu.memory_space<vmem>>, %arg5: memref<128x512xbf16, #tpu.memory_space<vmem>>, %arg6: memref<1x512xf32, #tpu.memory_space<vmem>>, %arg7: memref<8x8x128xbf16, #tpu.memory_space<vmem>>, %arg8: memref<2x8x128xf32, #tpu.memory_space<vmem>>, %arg9: memref<2x8x128xf32, #tpu.memory_space<vmem>>) attributes {dimension_semantics = [#tpu.dimension_semantics<parallel>, #tpu.dimension_semantics<arbitrary>], iteration_bounds = array<i64: 1, 4>, scalar_prefetch = 0 : i64, scratch_operands = 0 : i64, tpu.core_type = #tpu.core_type<tc>, window_params = [{transform_indices = @transform_0, window_bounds = array<i64: 8, 8, 512>}, {pipeline_mode = #tpu.pipeline_mode<synchronous>, transform_indices = @transform_1, window_bounds = array<i64: 128, 512>}, {pipeline_mode = #tpu.pipeline_mode<synchronous>, transform_indices = @transform_2, window_bounds = array<i64: 128, 512>}, {pipeline_mode = #tpu.pipeline_mode<synchronous>, transform_indices = @transform_3, window_bounds = array<i64: 128, 512>}, {pipeline_mode = #tpu.pipeline_mode<synchronous>, transform_indices = @transform_4, window_bounds = array<i64: 1, 512>}, {transform_indices = @transform_5, window_bounds = array<i64: 8, 8, 128>}, {transform_indices = @transform_6, window_bounds = array<i64: 2, 8, 128>}, {transform_indices = @transform_7, window_bounds = array<i64: 2, 8, 128>}]} {
    %c0_i32 = arith.constant 0 : i32
    %0 = arith.cmpi eq, %arg1, %c0_i32 : i32
    %1 = arith.extui %0 : i1 to i32
    %c0_i32_0 = arith.constant 0 : i32
    %2 = arith.cmpi ne, %1, %c0_i32_0 : i32
    scf.if %2 {
      %cst_144 = arith.constant 0.000000e+00 : f32
      %555 = vector.broadcast %cst_144 : f32 to vector<2x8x128xf32>
      %c0_145 = arith.constant 0 : index
      %c0_146 = arith.constant 0 : index
      %c0_147 = arith.constant 0 : index
      %556 = vector.load %arg8[%c0_145, %c0_146, %c0_147] : memref<2x8x128xf32, #tpu.memory_space<vmem>>, vector<2x8x128xf32>
      tpu.vector_store %arg8[%c0_145, %c0_146, %c0_147], %555 {strides = array<i32>} : memref<2x8x128xf32, #tpu.memory_space<vmem>>, vector<2x8x128xf32>,
      %cst_148 = arith.constant 0.000000e+00 : f32
      %557 = vector.broadcast %cst_148 : f32 to vector<2x8x128xf32>
      %c0_149 = arith.constant 0 : index
      %c0_150 = arith.constant 0 : index
      %c0_151 = arith.constant 0 : index
      %558 = vector.load %arg9[%c0_149, %c0_150, %c0_151] : memref<2x8x128xf32, #tpu.memory_space<vmem>>, vector<2x8x128xf32>
      tpu.vector_store %arg9[%c0_149, %c0_150, %c0_151], %557 {strides = array<i32>} : memref<2x8x128xf32, #tpu.memory_space<vmem>>, vector<2x8x128xf32>,
    } else {
    }
    %c0 = arith.constant 0 : index
    %c0_1 = arith.constant 0 : index
    %3 = vector.load %arg3[%c0, %c0_1] : memref<128x512xbf16, #tpu.memory_space<vmem>>, vector<128x512xbf16>
    %c0_2 = arith.constant 0 : index
    %c0_3 = arith.constant 0 : index
    %4 = vector.load %arg4[%c0_2, %c0_3] : memref<128x512xbf16, #tpu.memory_space<vmem>>, vector<128x512xbf16>
    %c0_4 = arith.constant 0 : index
    %c0_5 = arith.constant 0 : index
    %5 = vector.load %arg5[%c0_4, %c0_5] : memref<128x512xbf16, #tpu.memory_space<vmem>>, vector<128x512xbf16>
    %c0_6 = arith.constant 0 : index
    %c0_7 = arith.constant 0 : index
    %6 = vector.load %arg6[%c0_6, %c0_7] : memref<1x512xf32, #tpu.memory_space<vmem>>, vector<1x512xf32>
    %c0_8 = arith.constant 0 : index
    %c0_9 = arith.constant 0 : index
    %c0_10 = arith.constant 0 : index
    %7 = vector.load %arg8[%c0_8, %c0_9, %c0_10] : memref<2x8x128xf32, #tpu.memory_space<vmem>>, vector<1x8x128xf32>
    %8 = vector.shape_cast %7 : vector<1x8x128xf32> to vector<8x128xf32>
    %c0_11 = arith.constant 0 : index
    %c0_12 = arith.constant 0 : index
    %c0_13 = arith.constant 0 : index
    %9 = vector.load %arg9[%c0_11, %c0_12, %c0_13] : memref<2x8x128xf32, #tpu.memory_space<vmem>>, vector<1x8x128xf32>
    %10 = vector.shape_cast %9 : vector<1x8x128xf32> to vector<8x128xf32>
    %c1 = arith.constant 1 : index
    %c0_14 = arith.constant 0 : index
    %c0_15 = arith.constant 0 : index
    %11 = vector.load %arg8[%c1, %c0_14, %c0_15] : memref<2x8x128xf32, #tpu.memory_space<vmem>>, vector<1x8x128xf32>
    %12 = vector.shape_cast %11 : vector<1x8x128xf32> to vector<8x128xf32>
    %c1_16 = arith.constant 1 : index
    %c0_17 = arith.constant 0 : index
    %c0_18 = arith.constant 0 : index
    %13 = vector.load %arg9[%c1_16, %c0_17, %c0_18] : memref<2x8x128xf32, #tpu.memory_space<vmem>>, vector<1x8x128xf32>
    %14 = vector.shape_cast %13 : vector<1x8x128xf32> to vector<8x128xf32>
    %c0_19 = arith.constant 0 : index
    %c0_20 = arith.constant 0 : index
    %c0_21 = arith.constant 0 : index
    %15 = vector.load %arg2[%c0_19, %c0_20, %c0_21] : memref<8x8x512xf32, #tpu.memory_space<vmem>>, vector<1x8x512xf32>
    %16 = vector.shape_cast %15 : vector<1x8x512xf32> to vector<8x512xf32>
    %17 = arith.truncf %8 : vector<8x128xf32> to vector<8x128xbf16>
    %cst = arith.constant dense<0.000000e+00> : vector<8x512xf32>
    %18 = tpu.matmul %17, %3, %cst {dimension_numbers = #tpu.dot_dimension_numbers<[1], [0], [0], [1], [0, 0, 1, 1], [], []>} : vector<8x128xbf16>, vector<128x512xbf16>, vector<8x512xf32> -> vector<8x512xf32>
    %19 = arith.addf %16, %18 : vector<8x512xf32>
    %20 = vector.extract_strided_slice %19 {offsets = [0, 0], sizes = [8, 128], strides = [1, 1]} : vector<8x512xf32> to vector<8x128xf32>
    %21 = arith.negf %20 : vector<8x128xf32>
    %22 = math.exp %21 : vector<8x128xf32>
    %cst_22 = arith.constant 1.000000e+00 : f32
    %23 = vector.broadcast %cst_22 : f32 to vector<8x128xf32>
    %24 = arith.addf %23, %22 : vector<8x128xf32>
    %25 = arith.divf %23, %24 : vector<8x128xf32>
    %26 = vector.extract_strided_slice %19 {offsets = [0, 128], sizes = [8, 128], strides = [1, 1]} : vector<8x512xf32> to vector<8x128xf32>
    %27 = arith.negf %26 : vector<8x128xf32>
    %28 = math.exp %27 : vector<8x128xf32>
    %cst_23 = arith.constant 1.000000e+00 : f32
    %29 = vector.broadcast %cst_23 : f32 to vector<8x128xf32>
    %30 = arith.addf %29, %28 : vector<8x128xf32>
    %31 = arith.divf %29, %30 : vector<8x128xf32>
    %32 = vector.extract_strided_slice %19 {offsets = [0, 256], sizes = [8, 128], strides = [1, 1]} : vector<8x512xf32> to vector<8x128xf32>
    %33 = math.tanh %32 : vector<8x128xf32>
    %34 = vector.extract_strided_slice %19 {offsets = [0, 384], sizes = [8, 128], strides = [1, 1]} : vector<8x512xf32> to vector<8x128xf32>
    %35 = arith.negf %34 : vector<8x128xf32>
    %36 = math.exp %35 : vector<8x128xf32>
    %cst_24 = arith.constant 1.000000e+00 : f32
    %37 = vector.broadcast %cst_24 : f32 to vector<8x128xf32>
    %38 = arith.addf %37, %36 : vector<8x128xf32>
    %39 = arith.divf %37, %38 : vector<8x128xf32>
    %40 = arith.mulf %31, %10 : vector<8x128xf32>
    %41 = arith.mulf %25, %33 : vector<8x128xf32>
    %42 = arith.addf %40, %41 : vector<8x128xf32>
    %43 = math.tanh %42 : vector<8x128xf32>
    %44 = arith.mulf %39, %43 : vector<8x128xf32>
    %45 = arith.truncf %44 : vector<8x128xf32> to vector<8x128xbf16>
    %cst_25 = arith.constant dense<0.000000e+00> : vector<8x512xf32>
    %46 = tpu.matmul %45, %4, %cst_25 {dimension_numbers = #tpu.dot_dimension_numbers<[1], [0], [0], [1], [0, 0, 1, 1], [], []>} : vector<8x128xbf16>, vector<128x512xbf16>, vector<8x512xf32> -> vector<8x512xf32>
    %47 = arith.truncf %12 : vector<8x128xf32> to vector<8x128xbf16>
    %cst_26 = arith.constant dense<0.000000e+00> : vector<8x512xf32>
    %48 = tpu.matmul %47, %5, %cst_26 {dimension_numbers = #tpu.dot_dimension_numbers<[1], [0], [0], [1], [0, 0, 1, 1], [], []>} : vector<8x128xbf16>, vector<128x512xbf16>, vector<8x512xf32> -> vector<8x512xf32>
    %49 = arith.addf %46, %48 : vector<8x512xf32>
    %50 = vector.broadcast %6 : vector<1x512xf32> to vector<8x512xf32>
    %51 = arith.addf %49, %50 : vector<8x512xf32>
    %52 = vector.extract_strided_slice %51 {offsets = [0, 0], sizes = [8, 128], strides = [1, 1]} : vector<8x512xf32> to vector<8x128xf32>
    %53 = arith.negf %52 : vector<8x128xf32>
    %54 = math.exp %53 : vector<8x128xf32>
    %cst_27 = arith.constant 1.000000e+00 : f32
    %55 = vector.broadcast %cst_27 : f32 to vector<8x128xf32>
    %56 = arith.addf %55, %54 : vector<8x128xf32>
    %57 = arith.divf %55, %56 : vector<8x128xf32>
    %58 = vector.extract_strided_slice %51 {offsets = [0, 128], sizes = [8, 128], strides = [1, 1]} : vector<8x512xf32> to vector<8x128xf32>
    %59 = arith.negf %58 : vector<8x128xf32>
    %60 = math.exp %59 : vector<8x128xf32>
    %cst_28 = arith.constant 1.000000e+00 : f32
    %61 = vector.broadcast %cst_28 : f32 to vector<8x128xf32>
    %62 = arith.addf %61, %60 : vector<8x128xf32>
    %63 = arith.divf %61, %62 : vector<8x128xf32>
    %64 = vector.extract_strided_slice %51 {offsets = [0, 256], sizes = [8, 128], strides = [1, 1]} : vector<8x512xf32> to vector<8x128xf32>
    %65 = math.tanh %64 : vector<8x128xf32>
    %66 = vector.extract_strided_slice %51 {offsets = [0, 384], sizes = [8, 128], strides = [1, 1]} : vector<8x512xf32> to vector<8x128xf32>
    %67 = arith.negf %66 : vector<8x128xf32>
    %68 = math.exp %67 : vector<8x128xf32>
    %cst_29 = arith.constant 1.000000e+00 : f32
    %69 = vector.broadcast %cst_29 : f32 to vector<8x128xf32>
    %70 = arith.addf %69, %68 : vector<8x128xf32>
    %71 = arith.divf %69, %70 : vector<8x128xf32>
    %72 = arith.mulf %63, %14 : vector<8x128xf32>
    %73 = arith.mulf %57, %65 : vector<8x128xf32>
    %74 = arith.addf %72, %73 : vector<8x128xf32>
    %75 = math.tanh %74 : vector<8x128xf32>
    %76 = arith.mulf %71, %75 : vector<8x128xf32>
    %77 = arith.truncf %76 : vector<8x128xf32> to vector<8x128xbf16>
    %c0_30 = arith.constant 0 : index
    %c0_31 = arith.constant 0 : index
    %c0_32 = arith.constant 0 : index
    %78 = vector.load %arg7[%c0_30, %c0_31, %c0_32] : memref<8x8x128xbf16, #tpu.memory_space<vmem>>, vector<1x8x128xbf16>
    %79 = vector.shape_cast %78 : vector<1x8x128xbf16> to vector<8x128xbf16>
    %80 = vector.shape_cast %77 : vector<8x128xbf16> to vector<1x8x128xbf16>
    tpu.vector_store %arg7[%c0_30, %c0_31, %c0_32], %80 {strides = array<i32>} : memref<8x8x128xbf16, #tpu.memory_space<vmem>>, vector<1x8x128xbf16>,
    %c1_33 = arith.constant 1 : index
    %c0_34 = arith.constant 0 : index
    %c0_35 = arith.constant 0 : index
    %81 = vector.load %arg2[%c1_33, %c0_34, %c0_35] : memref<8x8x512xf32, #tpu.memory_space<vmem>>, vector<1x8x512xf32>
    %82 = vector.shape_cast %81 : vector<1x8x512xf32> to vector<8x512xf32>
    %83 = arith.truncf %44 : vector<8x128xf32> to vector<8x128xbf16>
    %cst_36 = arith.constant dense<0.000000e+00> : vector<8x512xf32>
    %84 = tpu.matmul %83, %3, %cst_36 {dimension_numbers = #tpu.dot_dimension_numbers<[1], [0], [0], [1], [0, 0, 1, 1], [], []>} : vector<8x128xbf16>, vector<128x512xbf16>, vector<8x512xf32> -> vector<8x512xf32>
    %85 = arith.addf %82, %84 : vector<8x512xf32>
    %86 = vector.extract_strided_slice %85 {offsets = [0, 0], sizes = [8, 128], strides = [1, 1]} : vector<8x512xf32> to vector<8x128xf32>
    %87 = arith.negf %86 : vector<8x128xf32>
    %88 = math.exp %87 : vector<8x128xf32>
    %cst_37 = arith.constant 1.000000e+00 : f32
    %89 = vector.broadcast %cst_37 : f32 to vector<8x128xf32>
    %90 = arith.addf %89, %88 : vector<8x128xf32>
    %91 = arith.divf %89, %90 : vector<8x128xf32>
    %92 = vector.extract_strided_slice %85 {offsets = [0, 128], sizes = [8, 128], strides = [1, 1]} : vector<8x512xf32> to vector<8x128xf32>
    %93 = arith.negf %92 : vector<8x128xf32>
    %94 = math.exp %93 : vector<8x128xf32>
    %cst_38 = arith.constant 1.000000e+00 : f32
    %95 = vector.broadcast %cst_38 : f32 to vector<8x128xf32>
    %96 = arith.addf %95, %94 : vector<8x128xf32>
    %97 = arith.divf %95, %96 : vector<8x128xf32>
    %98 = vector.extract_strided_slice %85 {offsets = [0, 256], sizes = [8, 128], strides = [1, 1]} : vector<8x512xf32> to vector<8x128xf32>
    %99 = math.tanh %98 : vector<8x128xf32>
    %100 = vector.extract_strided_slice %85 {offsets = [0, 384], sizes = [8, 128], strides = [1, 1]} : vector<8x512xf32> to vector<8x128xf32>
    %101 = arith.negf %100 : vector<8x128xf32>
    %102 = math.exp %101 : vector<8x128xf32>
    %cst_39 = arith.constant 1.000000e+00 : f32
    %103 = vector.broadcast %cst_39 : f32 to vector<8x128xf32>
    %104 = arith.addf %103, %102 : vector<8x128xf32>
    %105 = arith.divf %103, %104 : vector<8x128xf32>
    %106 = arith.mulf %97, %42 : vector<8x128xf32>
    %107 = arith.mulf %91, %99 : vector<8x128xf32>
    %108 = arith.addf %106, %107 : vector<8x128xf32>
    %109 = math.tanh %108 : vector<8x128xf32>
    %110 = arith.mulf %105, %109 : vector<8x128xf32>
    %111 = arith.truncf %110 : vector<8x128xf32> to vector<8x128xbf16>
    %cst_40 = arith.constant dense<0.000000e+00> : vector<8x512xf32>
    %112 = tpu.matmul %111, %4, %cst_40 {dimension_numbers = #tpu.dot_dimension_numbers<[1], [0], [0], [1], [0, 0, 1, 1], [], []>} : vector<8x128xbf16>, vector<128x512xbf16>, vector<8x512xf32> -> vector<8x512xf32>
    %113 = arith.truncf %76 : vector<8x128xf32> to vector<8x128xbf16>
    %cst_41 = arith.constant dense<0.000000e+00> : vector<8x512xf32>
    %114 = tpu.matmul %113, %5, %cst_41 {dimension_numbers = #tpu.dot_dimension_numbers<[1], [0], [0], [1], [0, 0, 1, 1], [], []>} : vector<8x128xbf16>, vector<128x512xbf16>, vector<8x512xf32> -> vector<8x512xf32>
    %115 = arith.addf %112, %114 : vector<8x512xf32>
    %116 = vector.broadcast %6 : vector<1x512xf32> to vector<8x512xf32>
    %117 = arith.addf %115, %116 : vector<8x512xf32>
    %118 = vector.extract_strided_slice %117 {offsets = [0, 0], sizes = [8, 128], strides = [1, 1]} : vector<8x512xf32> to vector<8x128xf32>
    %119 = arith.negf %118 : vector<8x128xf32>
    %120 = math.exp %119 : vector<8x128xf32>
    %cst_42 = arith.constant 1.000000e+00 : f32
    %121 = vector.broadcast %cst_42 : f32 to vector<8x128xf32>
    %122 = arith.addf %121, %120 : vector<8x128xf32>
    %123 = arith.divf %121, %122 : vector<8x128xf32>
    %124 = vector.extract_strided_slice %117 {offsets = [0, 128], sizes = [8, 128], strides = [1, 1]} : vector<8x512xf32> to vector<8x128xf32>
    %125 = arith.negf %124 : vector<8x128xf32>
    %126 = math.exp %125 : vector<8x128xf32>
    %cst_43 = arith.constant 1.000000e+00 : f32
    %127 = vector.broadcast %cst_43 : f32 to vector<8x128xf32>
    %128 = arith.addf %127, %126 : vector<8x128xf32>
    %129 = arith.divf %127, %128 : vector<8x128xf32>
    %130 = vector.extract_strided_slice %117 {offsets = [0, 256], sizes = [8, 128], strides = [1, 1]} : vector<8x512xf32> to vector<8x128xf32>
    %131 = math.tanh %130 : vector<8x128xf32>
    %132 = vector.extract_strided_slice %117 {offsets = [0, 384], sizes = [8, 128], strides = [1, 1]} : vector<8x512xf32> to vector<8x128xf32>
    %133 = arith.negf %132 : vector<8x128xf32>
    %134 = math.exp %133 : vector<8x128xf32>
    %cst_44 = arith.constant 1.000000e+00 : f32
    %135 = vector.broadcast %cst_44 : f32 to vector<8x128xf32>
    %136 = arith.addf %135, %134 : vector<8x128xf32>
    %137 = arith.divf %135, %136 : vector<8x128xf32>
    %138 = arith.mulf %129, %74 : vector<8x128xf32>
    %139 = arith.mulf %123, %131 : vector<8x128xf32>
    %140 = arith.addf %138, %139 : vector<8x128xf32>
    %141 = math.tanh %140 : vector<8x128xf32>
    %142 = arith.mulf %137, %141 : vector<8x128xf32>
    %143 = arith.truncf %142 : vector<8x128xf32> to vector<8x128xbf16>
    %c1_45 = arith.constant 1 : index
    %c0_46 = arith.constant 0 : index
    %c0_47 = arith.constant 0 : index
    %144 = vector.load %arg7[%c1_45, %c0_46, %c0_47] : memref<8x8x128xbf16, #tpu.memory_space<vmem>>, vector<1x8x128xbf16>
    %145 = vector.shape_cast %144 : vector<1x8x128xbf16> to vector<8x128xbf16>
    %146 = vector.shape_cast %143 : vector<8x128xbf16> to vector<1x8x128xbf16>
    tpu.vector_store %arg7[%c1_45, %c0_46, %c0_47], %146 {strides = array<i32>} : memref<8x8x128xbf16, #tpu.memory_space<vmem>>, vector<1x8x128xbf16>,
    %c2 = arith.constant 2 : index
    %c0_48 = arith.constant 0 : index
    %c0_49 = arith.constant 0 : index
    %147 = vector.load %arg2[%c2, %c0_48, %c0_49] : memref<8x8x512xf32, #tpu.memory_space<vmem>>, vector<1x8x512xf32>
    %148 = vector.shape_cast %147 : vector<1x8x512xf32> to vector<8x512xf32>
    %149 = arith.truncf %110 : vector<8x128xf32> to vector<8x128xbf16>
    %cst_50 = arith.constant dense<0.000000e+00> : vector<8x512xf32>
    %150 = tpu.matmul %149, %3, %cst_50 {dimension_numbers = #tpu.dot_dimension_numbers<[1], [0], [0], [1], [0, 0, 1, 1], [], []>} : vector<8x128xbf16>, vector<128x512xbf16>, vector<8x512xf32> -> vector<8x512xf32>
    %151 = arith.addf %148, %150 : vector<8x512xf32>
    %152 = vector.extract_strided_slice %151 {offsets = [0, 0], sizes = [8, 128], strides = [1, 1]} : vector<8x512xf32> to vector<8x128xf32>
    %153 = arith.negf %152 : vector<8x128xf32>
    %154 = math.exp %153 : vector<8x128xf32>
    %cst_51 = arith.constant 1.000000e+00 : f32
    %155 = vector.broadcast %cst_51 : f32 to vector<8x128xf32>
    %156 = arith.addf %155, %154 : vector<8x128xf32>
    %157 = arith.divf %155, %156 : vector<8x128xf32>
    %158 = vector.extract_strided_slice %151 {offsets = [0, 128], sizes = [8, 128], strides = [1, 1]} : vector<8x512xf32> to vector<8x128xf32>
    %159 = arith.negf %158 : vector<8x128xf32>
    %160 = math.exp %159 : vector<8x128xf32>
    %cst_52 = arith.constant 1.000000e+00 : f32
    %161 = vector.broadcast %cst_52 : f32 to vector<8x128xf32>
    %162 = arith.addf %161, %160 : vector<8x128xf32>
    %163 = arith.divf %161, %162 : vector<8x128xf32>
    %164 = vector.extract_strided_slice %151 {offsets = [0, 256], sizes = [8, 128], strides = [1, 1]} : vector<8x512xf32> to vector<8x128xf32>
    %165 = math.tanh %164 : vector<8x128xf32>
    %166 = vector.extract_strided_slice %151 {offsets = [0, 384], sizes = [8, 128], strides = [1, 1]} : vector<8x512xf32> to vector<8x128xf32>
    %167 = arith.negf %166 : vector<8x128xf32>
    %168 = math.exp %167 : vector<8x128xf32>
    %cst_53 = arith.constant 1.000000e+00 : f32
    %169 = vector.broadcast %cst_53 : f32 to vector<8x128xf32>
    %170 = arith.addf %169, %168 : vector<8x128xf32>
    %171 = arith.divf %169, %170 : vector<8x128xf32>
    %172 = arith.mulf %163, %108 : vector<8x128xf32>
    %173 = arith.mulf %157, %165 : vector<8x128xf32>
    %174 = arith.addf %172, %173 : vector<8x128xf32>
    %175 = math.tanh %174 : vector<8x128xf32>
    %176 = arith.mulf %171, %175 : vector<8x128xf32>
    %177 = arith.truncf %176 : vector<8x128xf32> to vector<8x128xbf16>
    %cst_54 = arith.constant dense<0.000000e+00> : vector<8x512xf32>
    %178 = tpu.matmul %177, %4, %cst_54 {dimension_numbers = #tpu.dot_dimension_numbers<[1], [0], [0], [1], [0, 0, 1, 1], [], []>} : vector<8x128xbf16>, vector<128x512xbf16>, vector<8x512xf32> -> vector<8x512xf32>
    %179 = arith.truncf %142 : vector<8x128xf32> to vector<8x128xbf16>
    %cst_55 = arith.constant dense<0.000000e+00> : vector<8x512xf32>
    %180 = tpu.matmul %179, %5, %cst_55 {dimension_numbers = #tpu.dot_dimension_numbers<[1], [0], [0], [1], [0, 0, 1, 1], [], []>} : vector<8x128xbf16>, vector<128x512xbf16>, vector<8x512xf32> -> vector<8x512xf32>
    %181 = arith.addf %178, %180 : vector<8x512xf32>
    %182 = vector.broadcast %6 : vector<1x512xf32> to vector<8x512xf32>
    %183 = arith.addf %181, %182 : vector<8x512xf32>
    %184 = vector.extract_strided_slice %183 {offsets = [0, 0], sizes = [8, 128], strides = [1, 1]} : vector<8x512xf32> to vector<8x128xf32>
    %185 = arith.negf %184 : vector<8x128xf32>
    %186 = math.exp %185 : vector<8x128xf32>
    %cst_56 = arith.constant 1.000000e+00 : f32
    %187 = vector.broadcast %cst_56 : f32 to vector<8x128xf32>
    %188 = arith.addf %187, %186 : vector<8x128xf32>
    %189 = arith.divf %187, %188 : vector<8x128xf32>
    %190 = vector.extract_strided_slice %183 {offsets = [0, 128], sizes = [8, 128], strides = [1, 1]} : vector<8x512xf32> to vector<8x128xf32>
    %191 = arith.negf %190 : vector<8x128xf32>
    %192 = math.exp %191 : vector<8x128xf32>
    %cst_57 = arith.constant 1.000000e+00 : f32
    %193 = vector.broadcast %cst_57 : f32 to vector<8x128xf32>
    %194 = arith.addf %193, %192 : vector<8x128xf32>
    %195 = arith.divf %193, %194 : vector<8x128xf32>
    %196 = vector.extract_strided_slice %183 {offsets = [0, 256], sizes = [8, 128], strides = [1, 1]} : vector<8x512xf32> to vector<8x128xf32>
    %197 = math.tanh %196 : vector<8x128xf32>
    %198 = vector.extract_strided_slice %183 {offsets = [0, 384], sizes = [8, 128], strides = [1, 1]} : vector<8x512xf32> to vector<8x128xf32>
    %199 = arith.negf %198 : vector<8x128xf32>
    %200 = math.exp %199 : vector<8x128xf32>
    %cst_58 = arith.constant 1.000000e+00 : f32
    %201 = vector.broadcast %cst_58 : f32 to vector<8x128xf32>
    %202 = arith.addf %201, %200 : vector<8x128xf32>
    %203 = arith.divf %201, %202 : vector<8x128xf32>
    %204 = arith.mulf %195, %140 : vector<8x128xf32>
    %205 = arith.mulf %189, %197 : vector<8x128xf32>
    %206 = arith.addf %204, %205 : vector<8x128xf32>
    %207 = math.tanh %206 : vector<8x128xf32>
    %208 = arith.mulf %203, %207 : vector<8x128xf32>
    %209 = arith.truncf %208 : vector<8x128xf32> to vector<8x128xbf16>
    %c2_59 = arith.constant 2 : index
    %c0_60 = arith.constant 0 : index
    %c0_61 = arith.constant 0 : index
    %210 = vector.load %arg7[%c2_59, %c0_60, %c0_61] : memref<8x8x128xbf16, #tpu.memory_space<vmem>>, vector<1x8x128xbf16>
    %211 = vector.shape_cast %210 : vector<1x8x128xbf16> to vector<8x128xbf16>
    %212 = vector.shape_cast %209 : vector<8x128xbf16> to vector<1x8x128xbf16>
    tpu.vector_store %arg7[%c2_59, %c0_60, %c0_61], %212 {strides = array<i32>} : memref<8x8x128xbf16, #tpu.memory_space<vmem>>, vector<1x8x128xbf16>,
    %c3 = arith.constant 3 : index
    %c0_62 = arith.constant 0 : index
    %c0_63 = arith.constant 0 : index
    %213 = vector.load %arg2[%c3, %c0_62, %c0_63] : memref<8x8x512xf32, #tpu.memory_space<vmem>>, vector<1x8x512xf32>
    %214 = vector.shape_cast %213 : vector<1x8x512xf32> to vector<8x512xf32>
    %215 = arith.truncf %176 : vector<8x128xf32> to vector<8x128xbf16>
    %cst_64 = arith.constant dense<0.000000e+00> : vector<8x512xf32>
    %216 = tpu.matmul %215, %3, %cst_64 {dimension_numbers = #tpu.dot_dimension_numbers<[1], [0], [0], [1], [0, 0, 1, 1], [], []>} : vector<8x128xbf16>, vector<128x512xbf16>, vector<8x512xf32> -> vector<8x512xf32>
    %217 = arith.addf %214, %216 : vector<8x512xf32>
    %218 = vector.extract_strided_slice %217 {offsets = [0, 0], sizes = [8, 128], strides = [1, 1]} : vector<8x512xf32> to vector<8x128xf32>
    %219 = arith.negf %218 : vector<8x128xf32>
    %220 = math.exp %219 : vector<8x128xf32>
    %cst_65 = arith.constant 1.000000e+00 : f32
    %221 = vector.broadcast %cst_65 : f32 to vector<8x128xf32>
    %222 = arith.addf %221, %220 : vector<8x128xf32>
    %223 = arith.divf %221, %222 : vector<8x128xf32>
    %224 = vector.extract_strided_slice %217 {offsets = [0, 128], sizes = [8, 128], strides = [1, 1]} : vector<8x512xf32> to vector<8x128xf32>
    %225 = arith.negf %224 : vector<8x128xf32>
    %226 = math.exp %225 : vector<8x128xf32>
    %cst_66 = arith.constant 1.000000e+00 : f32
    %227 = vector.broadcast %cst_66 : f32 to vector<8x128xf32>
    %228 = arith.addf %227, %226 : vector<8x128xf32>
    %229 = arith.divf %227, %228 : vector<8x128xf32>
    %230 = vector.extract_strided_slice %217 {offsets = [0, 256], sizes = [8, 128], strides = [1, 1]} : vector<8x512xf32> to vector<8x128xf32>
    %231 = math.tanh %230 : vector<8x128xf32>
    %232 = vector.extract_strided_slice %217 {offsets = [0, 384], sizes = [8, 128], strides = [1, 1]} : vector<8x512xf32> to vector<8x128xf32>
    %233 = arith.negf %232 : vector<8x128xf32>
    %234 = math.exp %233 : vector<8x128xf32>
    %cst_67 = arith.constant 1.000000e+00 : f32
    %235 = vector.broadcast %cst_67 : f32 to vector<8x128xf32>
    %236 = arith.addf %235, %234 : vector<8x128xf32>
    %237 = arith.divf %235, %236 : vector<8x128xf32>
    %238 = arith.mulf %229, %174 : vector<8x128xf32>
    %239 = arith.mulf %223, %231 : vector<8x128xf32>
    %240 = arith.addf %238, %239 : vector<8x128xf32>
    %241 = math.tanh %240 : vector<8x128xf32>
    %242 = arith.mulf %237, %241 : vector<8x128xf32>
    %243 = arith.truncf %242 : vector<8x128xf32> to vector<8x128xbf16>
    %cst_68 = arith.constant dense<0.000000e+00> : vector<8x512xf32>
    %244 = tpu.matmul %243, %4, %cst_68 {dimension_numbers = #tpu.dot_dimension_numbers<[1], [0], [0], [1], [0, 0, 1, 1], [], []>} : vector<8x128xbf16>, vector<128x512xbf16>, vector<8x512xf32> -> vector<8x512xf32>
    %245 = arith.truncf %208 : vector<8x128xf32> to vector<8x128xbf16>
    %cst_69 = arith.constant dense<0.000000e+00> : vector<8x512xf32>
    %246 = tpu.matmul %245, %5, %cst_69 {dimension_numbers = #tpu.dot_dimension_numbers<[1], [0], [0], [1], [0, 0, 1, 1], [], []>} : vector<8x128xbf16>, vector<128x512xbf16>, vector<8x512xf32> -> vector<8x512xf32>
    %247 = arith.addf %244, %246 : vector<8x512xf32>
    %248 = vector.broadcast %6 : vector<1x512xf32> to vector<8x512xf32>
    %249 = arith.addf %247, %248 : vector<8x512xf32>
    %250 = vector.extract_strided_slice %249 {offsets = [0, 0], sizes = [8, 128], strides = [1, 1]} : vector<8x512xf32> to vector<8x128xf32>
    %251 = arith.negf %250 : vector<8x128xf32>
    %252 = math.exp %251 : vector<8x128xf32>
    %cst_70 = arith.constant 1.000000e+00 : f32
    %253 = vector.broadcast %cst_70 : f32 to vector<8x128xf32>
    %254 = arith.addf %253, %252 : vector<8x128xf32>
    %255 = arith.divf %253, %254 : vector<8x128xf32>
    %256 = vector.extract_strided_slice %249 {offsets = [0, 128], sizes = [8, 128], strides = [1, 1]} : vector<8x512xf32> to vector<8x128xf32>
    %257 = arith.negf %256 : vector<8x128xf32>
    %258 = math.exp %257 : vector<8x128xf32>
    %cst_71 = arith.constant 1.000000e+00 : f32
    %259 = vector.broadcast %cst_71 : f32 to vector<8x128xf32>
    %260 = arith.addf %259, %258 : vector<8x128xf32>
    %261 = arith.divf %259, %260 : vector<8x128xf32>
    %262 = vector.extract_strided_slice %249 {offsets = [0, 256], sizes = [8, 128], strides = [1, 1]} : vector<8x512xf32> to vector<8x128xf32>
    %263 = math.tanh %262 : vector<8x128xf32>
    %264 = vector.extract_strided_slice %249 {offsets = [0, 384], sizes = [8, 128], strides = [1, 1]} : vector<8x512xf32> to vector<8x128xf32>
    %265 = arith.negf %264 : vector<8x128xf32>
    %266 = math.exp %265 : vector<8x128xf32>
    %cst_72 = arith.constant 1.000000e+00 : f32
    %267 = vector.broadcast %cst_72 : f32 to vector<8x128xf32>
    %268 = arith.addf %267, %266 : vector<8x128xf32>
    %269 = arith.divf %267, %268 : vector<8x128xf32>
    %270 = arith.mulf %261, %206 : vector<8x128xf32>
    %271 = arith.mulf %255, %263 : vector<8x128xf32>
    %272 = arith.addf %270, %271 : vector<8x128xf32>
    %273 = math.tanh %272 : vector<8x128xf32>
    %274 = arith.mulf %269, %273 : vector<8x128xf32>
    %275 = arith.truncf %274 : vector<8x128xf32> to vector<8x128xbf16>
    %c3_73 = arith.constant 3 : index
    %c0_74 = arith.constant 0 : index
    %c0_75 = arith.constant 0 : index
    %276 = vector.load %arg7[%c3_73, %c0_74, %c0_75] : memref<8x8x128xbf16, #tpu.memory_space<vmem>>, vector<1x8x128xbf16>
    %277 = vector.shape_cast %276 : vector<1x8x128xbf16> to vector<8x128xbf16>
    %278 = vector.shape_cast %275 : vector<8x128xbf16> to vector<1x8x128xbf16>
    tpu.vector_store %arg7[%c3_73, %c0_74, %c0_75], %278 {strides = array<i32>} : memref<8x8x128xbf16, #tpu.memory_space<vmem>>, vector<1x8x128xbf16>,
    %c4 = arith.constant 4 : index
    %c0_76 = arith.constant 0 : index
    %c0_77 = arith.constant 0 : index
    %279 = vector.load %arg2[%c4, %c0_76, %c0_77] : memref<8x8x512xf32, #tpu.memory_space<vmem>>, vector<1x8x512xf32>
    %280 = vector.shape_cast %279 : vector<1x8x512xf32> to vector<8x512xf32>
    %281 = arith.truncf %242 : vector<8x128xf32> to vector<8x128xbf16>
    %cst_78 = arith.constant dense<0.000000e+00> : vector<8x512xf32>
    %282 = tpu.matmul %281, %3, %cst_78 {dimension_numbers = #tpu.dot_dimension_numbers<[1], [0], [0], [1], [0, 0, 1, 1], [], []>} : vector<8x128xbf16>, vector<128x512xbf16>, vector<8x512xf32> -> vector<8x512xf32>
    %283 = arith.addf %280, %282 : vector<8x512xf32>
    %284 = vector.extract_strided_slice %283 {offsets = [0, 0], sizes = [8, 128], strides = [1, 1]} : vector<8x512xf32> to vector<8x128xf32>
    %285 = arith.negf %284 : vector<8x128xf32>
    %286 = math.exp %285 : vector<8x128xf32>
    %cst_79 = arith.constant 1.000000e+00 : f32
    %287 = vector.broadcast %cst_79 : f32 to vector<8x128xf32>
    %288 = arith.addf %287, %286 : vector<8x128xf32>
    %289 = arith.divf %287, %288 : vector<8x128xf32>
    %290 = vector.extract_strided_slice %283 {offsets = [0, 128], sizes = [8, 128], strides = [1, 1]} : vector<8x512xf32> to vector<8x128xf32>
    %291 = arith.negf %290 : vector<8x128xf32>
    %292 = math.exp %291 : vector<8x128xf32>
    %cst_80 = arith.constant 1.000000e+00 : f32
    %293 = vector.broadcast %cst_80 : f32 to vector<8x128xf32>
    %294 = arith.addf %293, %292 : vector<8x128xf32>
    %295 = arith.divf %293, %294 : vector<8x128xf32>
    %296 = vector.extract_strided_slice %283 {offsets = [0, 256], sizes = [8, 128], strides = [1, 1]} : vector<8x512xf32> to vector<8x128xf32>
    %297 = math.tanh %296 : vector<8x128xf32>
    %298 = vector.extract_strided_slice %283 {offsets = [0, 384], sizes = [8, 128], strides = [1, 1]} : vector<8x512xf32> to vector<8x128xf32>
    %299 = arith.negf %298 : vector<8x128xf32>
    %300 = math.exp %299 : vector<8x128xf32>
    %cst_81 = arith.constant 1.000000e+00 : f32
    %301 = vector.broadcast %cst_81 : f32 to vector<8x128xf32>
    %302 = arith.addf %301, %300 : vector<8x128xf32>
    %303 = arith.divf %301, %302 : vector<8x128xf32>
    %304 = arith.mulf %295, %240 : vector<8x128xf32>
    %305 = arith.mulf %289, %297 : vector<8x128xf32>
    %306 = arith.addf %304, %305 : vector<8x128xf32>
    %307 = math.tanh %306 : vector<8x128xf32>
    %308 = arith.mulf %303, %307 : vector<8x128xf32>
    %309 = arith.truncf %308 : vector<8x128xf32> to vector<8x128xbf16>
    %cst_82 = arith.constant dense<0.000000e+00> : vector<8x512xf32>
    %310 = tpu.matmul %309, %4, %cst_82 {dimension_numbers = #tpu.dot_dimension_numbers<[1], [0], [0], [1], [0, 0, 1, 1], [], []>} : vector<8x128xbf16>, vector<128x512xbf16>, vector<8x512xf32> -> vector<8x512xf32>
    %311 = arith.truncf %274 : vector<8x128xf32> to vector<8x128xbf16>
    %cst_83 = arith.constant dense<0.000000e+00> : vector<8x512xf32>
    %312 = tpu.matmul %311, %5, %cst_83 {dimension_numbers = #tpu.dot_dimension_numbers<[1], [0], [0], [1], [0, 0, 1, 1], [], []>} : vector<8x128xbf16>, vector<128x512xbf16>, vector<8x512xf32> -> vector<8x512xf32>
    %313 = arith.addf %310, %312 : vector<8x512xf32>
    %314 = vector.broadcast %6 : vector<1x512xf32> to vector<8x512xf32>
    %315 = arith.addf %313, %314 : vector<8x512xf32>
    %316 = vector.extract_strided_slice %315 {offsets = [0, 0], sizes = [8, 128], strides = [1, 1]} : vector<8x512xf32> to vector<8x128xf32>
    %317 = arith.negf %316 : vector<8x128xf32>
    %318 = math.exp %317 : vector<8x128xf32>
    %cst_84 = arith.constant 1.000000e+00 : f32
    %319 = vector.broadcast %cst_84 : f32 to vector<8x128xf32>
    %320 = arith.addf %319, %318 : vector<8x128xf32>
    %321 = arith.divf %319, %320 : vector<8x128xf32>
    %322 = vector.extract_strided_slice %315 {offsets = [0, 128], sizes = [8, 128], strides = [1, 1]} : vector<8x512xf32> to vector<8x128xf32>
    %323 = arith.negf %322 : vector<8x128xf32>
    %324 = math.exp %323 : vector<8x128xf32>
    %cst_85 = arith.constant 1.000000e+00 : f32
    %325 = vector.broadcast %cst_85 : f32 to vector<8x128xf32>
    %326 = arith.addf %325, %324 : vector<8x128xf32>
    %327 = arith.divf %325, %326 : vector<8x128xf32>
    %328 = vector.extract_strided_slice %315 {offsets = [0, 256], sizes = [8, 128], strides = [1, 1]} : vector<8x512xf32> to vector<8x128xf32>
    %329 = math.tanh %328 : vector<8x128xf32>
    %330 = vector.extract_strided_slice %315 {offsets = [0, 384], sizes = [8, 128], strides = [1, 1]} : vector<8x512xf32> to vector<8x128xf32>
    %331 = arith.negf %330 : vector<8x128xf32>
    %332 = math.exp %331 : vector<8x128xf32>
    %cst_86 = arith.constant 1.000000e+00 : f32
    %333 = vector.broadcast %cst_86 : f32 to vector<8x128xf32>
    %334 = arith.addf %333, %332 : vector<8x128xf32>
    %335 = arith.divf %333, %334 : vector<8x128xf32>
    %336 = arith.mulf %327, %272 : vector<8x128xf32>
    %337 = arith.mulf %321, %329 : vector<8x128xf32>
    %338 = arith.addf %336, %337 : vector<8x128xf32>
    %339 = math.tanh %338 : vector<8x128xf32>
    %340 = arith.mulf %335, %339 : vector<8x128xf32>
    %341 = arith.truncf %340 : vector<8x128xf32> to vector<8x128xbf16>
    %c4_87 = arith.constant 4 : index
    %c0_88 = arith.constant 0 : index
    %c0_89 = arith.constant 0 : index
    %342 = vector.load %arg7[%c4_87, %c0_88, %c0_89] : memref<8x8x128xbf16, #tpu.memory_space<vmem>>, vector<1x8x128xbf16>
    %343 = vector.shape_cast %342 : vector<1x8x128xbf16> to vector<8x128xbf16>
    %344 = vector.shape_cast %341 : vector<8x128xbf16> to vector<1x8x128xbf16>
    tpu.vector_store %arg7[%c4_87, %c0_88, %c0_89], %344 {strides = array<i32>} : memref<8x8x128xbf16, #tpu.memory_space<vmem>>, vector<1x8x128xbf16>,
    %c5 = arith.constant 5 : index
    %c0_90 = arith.constant 0 : index
    %c0_91 = arith.constant 0 : index
    %345 = vector.load %arg2[%c5, %c0_90, %c0_91] : memref<8x8x512xf32, #tpu.memory_space<vmem>>, vector<1x8x512xf32>
    %346 = vector.shape_cast %345 : vector<1x8x512xf32> to vector<8x512xf32>
    %347 = arith.truncf %308 : vector<8x128xf32> to vector<8x128xbf16>
    %cst_92 = arith.constant dense<0.000000e+00> : vector<8x512xf32>
    %348 = tpu.matmul %347, %3, %cst_92 {dimension_numbers = #tpu.dot_dimension_numbers<[1], [0], [0], [1], [0, 0, 1, 1], [], []>} : vector<8x128xbf16>, vector<128x512xbf16>, vector<8x512xf32> -> vector<8x512xf32>
    %349 = arith.addf %346, %348 : vector<8x512xf32>
    %350 = vector.extract_strided_slice %349 {offsets = [0, 0], sizes = [8, 128], strides = [1, 1]} : vector<8x512xf32> to vector<8x128xf32>
    %351 = arith.negf %350 : vector<8x128xf32>
    %352 = math.exp %351 : vector<8x128xf32>
    %cst_93 = arith.constant 1.000000e+00 : f32
    %353 = vector.broadcast %cst_93 : f32 to vector<8x128xf32>
    %354 = arith.addf %353, %352 : vector<8x128xf32>
    %355 = arith.divf %353, %354 : vector<8x128xf32>
    %356 = vector.extract_strided_slice %349 {offsets = [0, 128], sizes = [8, 128], strides = [1, 1]} : vector<8x512xf32> to vector<8x128xf32>
    %357 = arith.negf %356 : vector<8x128xf32>
    %358 = math.exp %357 : vector<8x128xf32>
    %cst_94 = arith.constant 1.000000e+00 : f32
    %359 = vector.broadcast %cst_94 : f32 to vector<8x128xf32>
    %360 = arith.addf %359, %358 : vector<8x128xf32>
    %361 = arith.divf %359, %360 : vector<8x128xf32>
    %362 = vector.extract_strided_slice %349 {offsets = [0, 256], sizes = [8, 128], strides = [1, 1]} : vector<8x512xf32> to vector<8x128xf32>
    %363 = math.tanh %362 : vector<8x128xf32>
    %364 = vector.extract_strided_slice %349 {offsets = [0, 384], sizes = [8, 128], strides = [1, 1]} : vector<8x512xf32> to vector<8x128xf32>
    %365 = arith.negf %364 : vector<8x128xf32>
    %366 = math.exp %365 : vector<8x128xf32>
    %cst_95 = arith.constant 1.000000e+00 : f32
    %367 = vector.broadcast %cst_95 : f32 to vector<8x128xf32>
    %368 = arith.addf %367, %366 : vector<8x128xf32>
    %369 = arith.divf %367, %368 : vector<8x128xf32>
    %370 = arith.mulf %361, %306 : vector<8x128xf32>
    %371 = arith.mulf %355, %363 : vector<8x128xf32>
    %372 = arith.addf %370, %371 : vector<8x128xf32>
    %373 = math.tanh %372 : vector<8x128xf32>
    %374 = arith.mulf %369, %373 : vector<8x128xf32>
    %375 = arith.truncf %374 : vector<8x128xf32> to vector<8x128xbf16>
    %cst_96 = arith.constant dense<0.000000e+00> : vector<8x512xf32>
    %376 = tpu.matmul %375, %4, %cst_96 {dimension_numbers = #tpu.dot_dimension_numbers<[1], [0], [0], [1], [0, 0, 1, 1], [], []>} : vector<8x128xbf16>, vector<128x512xbf16>, vector<8x512xf32> -> vector<8x512xf32>
    %377 = arith.truncf %340 : vector<8x128xf32> to vector<8x128xbf16>
    %cst_97 = arith.constant dense<0.000000e+00> : vector<8x512xf32>
    %378 = tpu.matmul %377, %5, %cst_97 {dimension_numbers = #tpu.dot_dimension_numbers<[1], [0], [0], [1], [0, 0, 1, 1], [], []>} : vector<8x128xbf16>, vector<128x512xbf16>, vector<8x512xf32> -> vector<8x512xf32>
    %379 = arith.addf %376, %378 : vector<8x512xf32>
    %380 = vector.broadcast %6 : vector<1x512xf32> to vector<8x512xf32>
    %381 = arith.addf %379, %380 : vector<8x512xf32>
    %382 = vector.extract_strided_slice %381 {offsets = [0, 0], sizes = [8, 128], strides = [1, 1]} : vector<8x512xf32> to vector<8x128xf32>
    %383 = arith.negf %382 : vector<8x128xf32>
    %384 = math.exp %383 : vector<8x128xf32>
    %cst_98 = arith.constant 1.000000e+00 : f32
    %385 = vector.broadcast %cst_98 : f32 to vector<8x128xf32>
    %386 = arith.addf %385, %384 : vector<8x128xf32>
    %387 = arith.divf %385, %386 : vector<8x128xf32>
    %388 = vector.extract_strided_slice %381 {offsets = [0, 128], sizes = [8, 128], strides = [1, 1]} : vector<8x512xf32> to vector<8x128xf32>
    %389 = arith.negf %388 : vector<8x128xf32>
    %390 = math.exp %389 : vector<8x128xf32>
    %cst_99 = arith.constant 1.000000e+00 : f32
    %391 = vector.broadcast %cst_99 : f32 to vector<8x128xf32>
    %392 = arith.addf %391, %390 : vector<8x128xf32>
    %393 = arith.divf %391, %392 : vector<8x128xf32>
    %394 = vector.extract_strided_slice %381 {offsets = [0, 256], sizes = [8, 128], strides = [1, 1]} : vector<8x512xf32> to vector<8x128xf32>
    %395 = math.tanh %394 : vector<8x128xf32>
    %396 = vector.extract_strided_slice %381 {offsets = [0, 384], sizes = [8, 128], strides = [1, 1]} : vector<8x512xf32> to vector<8x128xf32>
    %397 = arith.negf %396 : vector<8x128xf32>
    %398 = math.exp %397 : vector<8x128xf32>
    %cst_100 = arith.constant 1.000000e+00 : f32
    %399 = vector.broadcast %cst_100 : f32 to vector<8x128xf32>
    %400 = arith.addf %399, %398 : vector<8x128xf32>
    %401 = arith.divf %399, %400 : vector<8x128xf32>
    %402 = arith.mulf %393, %338 : vector<8x128xf32>
    %403 = arith.mulf %387, %395 : vector<8x128xf32>
    %404 = arith.addf %402, %403 : vector<8x128xf32>
    %405 = math.tanh %404 : vector<8x128xf32>
    %406 = arith.mulf %401, %405 : vector<8x128xf32>
    %407 = arith.truncf %406 : vector<8x128xf32> to vector<8x128xbf16>
    %c5_101 = arith.constant 5 : index
    %c0_102 = arith.constant 0 : index
    %c0_103 = arith.constant 0 : index
    %408 = vector.load %arg7[%c5_101, %c0_102, %c0_103] : memref<8x8x128xbf16, #tpu.memory_space<vmem>>, vector<1x8x128xbf16>
    %409 = vector.shape_cast %408 : vector<1x8x128xbf16> to vector<8x128xbf16>
    %410 = vector.shape_cast %407 : vector<8x128xbf16> to vector<1x8x128xbf16>
    tpu.vector_store %arg7[%c5_101, %c0_102, %c0_103], %410 {strides = array<i32>} : memref<8x8x128xbf16, #tpu.memory_space<vmem>>, vector<1x8x128xbf16>,
    %c6 = arith.constant 6 : index
    %c0_104 = arith.constant 0 : index
    %c0_105 = arith.constant 0 : index
    %411 = vector.load %arg2[%c6, %c0_104, %c0_105] : memref<8x8x512xf32, #tpu.memory_space<vmem>>, vector<1x8x512xf32>
    %412 = vector.shape_cast %411 : vector<1x8x512xf32> to vector<8x512xf32>
    %413 = arith.truncf %374 : vector<8x128xf32> to vector<8x128xbf16>
    %cst_106 = arith.constant dense<0.000000e+00> : vector<8x512xf32>
    %414 = tpu.matmul %413, %3, %cst_106 {dimension_numbers = #tpu.dot_dimension_numbers<[1], [0], [0], [1], [0, 0, 1, 1], [], []>} : vector<8x128xbf16>, vector<128x512xbf16>, vector<8x512xf32> -> vector<8x512xf32>
    %415 = arith.addf %412, %414 : vector<8x512xf32>
    %416 = vector.extract_strided_slice %415 {offsets = [0, 0], sizes = [8, 128], strides = [1, 1]} : vector<8x512xf32> to vector<8x128xf32>
    %417 = arith.negf %416 : vector<8x128xf32>
    %418 = math.exp %417 : vector<8x128xf32>
    %cst_107 = arith.constant 1.000000e+00 : f32
    %419 = vector.broadcast %cst_107 : f32 to vector<8x128xf32>
    %420 = arith.addf %419, %418 : vector<8x128xf32>
    %421 = arith.divf %419, %420 : vector<8x128xf32>
    %422 = vector.extract_strided_slice %415 {offsets = [0, 128], sizes = [8, 128], strides = [1, 1]} : vector<8x512xf32> to vector<8x128xf32>
    %423 = arith.negf %422 : vector<8x128xf32>
    %424 = math.exp %423 : vector<8x128xf32>
    %cst_108 = arith.constant 1.000000e+00 : f32
    %425 = vector.broadcast %cst_108 : f32 to vector<8x128xf32>
    %426 = arith.addf %425, %424 : vector<8x128xf32>
    %427 = arith.divf %425, %426 : vector<8x128xf32>
    %428 = vector.extract_strided_slice %415 {offsets = [0, 256], sizes = [8, 128], strides = [1, 1]} : vector<8x512xf32> to vector<8x128xf32>
    %429 = math.tanh %428 : vector<8x128xf32>
    %430 = vector.extract_strided_slice %415 {offsets = [0, 384], sizes = [8, 128], strides = [1, 1]} : vector<8x512xf32> to vector<8x128xf32>
    %431 = arith.negf %430 : vector<8x128xf32>
    %432 = math.exp %431 : vector<8x128xf32>
    %cst_109 = arith.constant 1.000000e+00 : f32
    %433 = vector.broadcast %cst_109 : f32 to vector<8x128xf32>
    %434 = arith.addf %433, %432 : vector<8x128xf32>
    %435 = arith.divf %433, %434 : vector<8x128xf32>
    %436 = arith.mulf %427, %372 : vector<8x128xf32>
    %437 = arith.mulf %421, %429 : vector<8x128xf32>
    %438 = arith.addf %436, %437 : vector<8x128xf32>
    %439 = math.tanh %438 : vector<8x128xf32>
    %440 = arith.mulf %435, %439 : vector<8x128xf32>
    %441 = arith.truncf %440 : vector<8x128xf32> to vector<8x128xbf16>
    %cst_110 = arith.constant dense<0.000000e+00> : vector<8x512xf32>
    %442 = tpu.matmul %441, %4, %cst_110 {dimension_numbers = #tpu.dot_dimension_numbers<[1], [0], [0], [1], [0, 0, 1, 1], [], []>} : vector<8x128xbf16>, vector<128x512xbf16>, vector<8x512xf32> -> vector<8x512xf32>
    %443 = arith.truncf %406 : vector<8x128xf32> to vector<8x128xbf16>
    %cst_111 = arith.constant dense<0.000000e+00> : vector<8x512xf32>
    %444 = tpu.matmul %443, %5, %cst_111 {dimension_numbers = #tpu.dot_dimension_numbers<[1], [0], [0], [1], [0, 0, 1, 1], [], []>} : vector<8x128xbf16>, vector<128x512xbf16>, vector<8x512xf32> -> vector<8x512xf32>
    %445 = arith.addf %442, %444 : vector<8x512xf32>
    %446 = vector.broadcast %6 : vector<1x512xf32> to vector<8x512xf32>
    %447 = arith.addf %445, %446 : vector<8x512xf32>
    %448 = vector.extract_strided_slice %447 {offsets = [0, 0], sizes = [8, 128], strides = [1, 1]} : vector<8x512xf32> to vector<8x128xf32>
    %449 = arith.negf %448 : vector<8x128xf32>
    %450 = math.exp %449 : vector<8x128xf32>
    %cst_112 = arith.constant 1.000000e+00 : f32
    %451 = vector.broadcast %cst_112 : f32 to vector<8x128xf32>
    %452 = arith.addf %451, %450 : vector<8x128xf32>
    %453 = arith.divf %451, %452 : vector<8x128xf32>
    %454 = vector.extract_strided_slice %447 {offsets = [0, 128], sizes = [8, 128], strides = [1, 1]} : vector<8x512xf32> to vector<8x128xf32>
    %455 = arith.negf %454 : vector<8x128xf32>
    %456 = math.exp %455 : vector<8x128xf32>
    %cst_113 = arith.constant 1.000000e+00 : f32
    %457 = vector.broadcast %cst_113 : f32 to vector<8x128xf32>
    %458 = arith.addf %457, %456 : vector<8x128xf32>
    %459 = arith.divf %457, %458 : vector<8x128xf32>
    %460 = vector.extract_strided_slice %447 {offsets = [0, 256], sizes = [8, 128], strides = [1, 1]} : vector<8x512xf32> to vector<8x128xf32>
    %461 = math.tanh %460 : vector<8x128xf32>
    %462 = vector.extract_strided_slice %447 {offsets = [0, 384], sizes = [8, 128], strides = [1, 1]} : vector<8x512xf32> to vector<8x128xf32>
    %463 = arith.negf %462 : vector<8x128xf32>
    %464 = math.exp %463 : vector<8x128xf32>
    %cst_114 = arith.constant 1.000000e+00 : f32
    %465 = vector.broadcast %cst_114 : f32 to vector<8x128xf32>
    %466 = arith.addf %465, %464 : vector<8x128xf32>
    %467 = arith.divf %465, %466 : vector<8x128xf32>
    %468 = arith.mulf %459, %404 : vector<8x128xf32>
    %469 = arith.mulf %453, %461 : vector<8x128xf32>
    %470 = arith.addf %468, %469 : vector<8x128xf32>
    %471 = math.tanh %470 : vector<8x128xf32>
    %472 = arith.mulf %467, %471 : vector<8x128xf32>
    %473 = arith.truncf %472 : vector<8x128xf32> to vector<8x128xbf16>
    %c6_115 = arith.constant 6 : index
    %c0_116 = arith.constant 0 : index
    %c0_117 = arith.constant 0 : index
    %474 = vector.load %arg7[%c6_115, %c0_116, %c0_117] : memref<8x8x128xbf16, #tpu.memory_space<vmem>>, vector<1x8x128xbf16>
    %475 = vector.shape_cast %474 : vector<1x8x128xbf16> to vector<8x128xbf16>
    %476 = vector.shape_cast %473 : vector<8x128xbf16> to vector<1x8x128xbf16>
    tpu.vector_store %arg7[%c6_115, %c0_116, %c0_117], %476 {strides = array<i32>} : memref<8x8x128xbf16, #tpu.memory_space<vmem>>, vector<1x8x128xbf16>,
    %c7 = arith.constant 7 : index
    %c0_118 = arith.constant 0 : index
    %c0_119 = arith.constant 0 : index
    %477 = vector.load %arg2[%c7, %c0_118, %c0_119] : memref<8x8x512xf32, #tpu.memory_space<vmem>>, vector<1x8x512xf32>
    %478 = vector.shape_cast %477 : vector<1x8x512xf32> to vector<8x512xf32>
    %479 = arith.truncf %440 : vector<8x128xf32> to vector<8x128xbf16>
    %cst_120 = arith.constant dense<0.000000e+00> : vector<8x512xf32>
    %480 = tpu.matmul %479, %3, %cst_120 {dimension_numbers = #tpu.dot_dimension_numbers<[1], [0], [0], [1], [0, 0, 1, 1], [], []>} : vector<8x128xbf16>, vector<128x512xbf16>, vector<8x512xf32> -> vector<8x512xf32>
    %481 = arith.addf %478, %480 : vector<8x512xf32>
    %482 = vector.extract_strided_slice %481 {offsets = [0, 0], sizes = [8, 128], strides = [1, 1]} : vector<8x512xf32> to vector<8x128xf32>
    %483 = arith.negf %482 : vector<8x128xf32>
    %484 = math.exp %483 : vector<8x128xf32>
    %cst_121 = arith.constant 1.000000e+00 : f32
    %485 = vector.broadcast %cst_121 : f32 to vector<8x128xf32>
    %486 = arith.addf %485, %484 : vector<8x128xf32>
    %487 = arith.divf %485, %486 : vector<8x128xf32>
    %488 = vector.extract_strided_slice %481 {offsets = [0, 128], sizes = [8, 128], strides = [1, 1]} : vector<8x512xf32> to vector<8x128xf32>
    %489 = arith.negf %488 : vector<8x128xf32>
    %490 = math.exp %489 : vector<8x128xf32>
    %cst_122 = arith.constant 1.000000e+00 : f32
    %491 = vector.broadcast %cst_122 : f32 to vector<8x128xf32>
    %492 = arith.addf %491, %490 : vector<8x128xf32>
    %493 = arith.divf %491, %492 : vector<8x128xf32>
    %494 = vector.extract_strided_slice %481 {offsets = [0, 256], sizes = [8, 128], strides = [1, 1]} : vector<8x512xf32> to vector<8x128xf32>
    %495 = math.tanh %494 : vector<8x128xf32>
    %496 = vector.extract_strided_slice %481 {offsets = [0, 384], sizes = [8, 128], strides = [1, 1]} : vector<8x512xf32> to vector<8x128xf32>
    %497 = arith.negf %496 : vector<8x128xf32>
    %498 = math.exp %497 : vector<8x128xf32>
    %cst_123 = arith.constant 1.000000e+00 : f32
    %499 = vector.broadcast %cst_123 : f32 to vector<8x128xf32>
    %500 = arith.addf %499, %498 : vector<8x128xf32>
    %501 = arith.divf %499, %500 : vector<8x128xf32>
    %502 = arith.mulf %493, %438 : vector<8x128xf32>
    %503 = arith.mulf %487, %495 : vector<8x128xf32>
    %504 = arith.addf %502, %503 : vector<8x128xf32>
    %505 = math.tanh %504 : vector<8x128xf32>
    %506 = arith.mulf %501, %505 : vector<8x128xf32>
    %507 = arith.truncf %506 : vector<8x128xf32> to vector<8x128xbf16>
    %cst_124 = arith.constant dense<0.000000e+00> : vector<8x512xf32>
    %508 = tpu.matmul %507, %4, %cst_124 {dimension_numbers = #tpu.dot_dimension_numbers<[1], [0], [0], [1], [0, 0, 1, 1], [], []>} : vector<8x128xbf16>, vector<128x512xbf16>, vector<8x512xf32> -> vector<8x512xf32>
    %509 = arith.truncf %472 : vector<8x128xf32> to vector<8x128xbf16>
    %cst_125 = arith.constant dense<0.000000e+00> : vector<8x512xf32>
    %510 = tpu.matmul %509, %5, %cst_125 {dimension_numbers = #tpu.dot_dimension_numbers<[1], [0], [0], [1], [0, 0, 1, 1], [], []>} : vector<8x128xbf16>, vector<128x512xbf16>, vector<8x512xf32> -> vector<8x512xf32>
    %511 = arith.addf %508, %510 : vector<8x512xf32>
    %512 = vector.broadcast %6 : vector<1x512xf32> to vector<8x512xf32>
    %513 = arith.addf %511, %512 : vector<8x512xf32>
    %514 = vector.extract_strided_slice %513 {offsets = [0, 0], sizes = [8, 128], strides = [1, 1]} : vector<8x512xf32> to vector<8x128xf32>
    %515 = arith.negf %514 : vector<8x128xf32>
    %516 = math.exp %515 : vector<8x128xf32>
    %cst_126 = arith.constant 1.000000e+00 : f32
    %517 = vector.broadcast %cst_126 : f32 to vector<8x128xf32>
    %518 = arith.addf %517, %516 : vector<8x128xf32>
    %519 = arith.divf %517, %518 : vector<8x128xf32>
    %520 = vector.extract_strided_slice %513 {offsets = [0, 128], sizes = [8, 128], strides = [1, 1]} : vector<8x512xf32> to vector<8x128xf32>
    %521 = arith.negf %520 : vector<8x128xf32>
    %522 = math.exp %521 : vector<8x128xf32>
    %cst_127 = arith.constant 1.000000e+00 : f32
    %523 = vector.broadcast %cst_127 : f32 to vector<8x128xf32>
    %524 = arith.addf %523, %522 : vector<8x128xf32>
    %525 = arith.divf %523, %524 : vector<8x128xf32>
    %526 = vector.extract_strided_slice %513 {offsets = [0, 256], sizes = [8, 128], strides = [1, 1]} : vector<8x512xf32> to vector<8x128xf32>
    %527 = math.tanh %526 : vector<8x128xf32>
    %528 = vector.extract_strided_slice %513 {offsets = [0, 384], sizes = [8, 128], strides = [1, 1]} : vector<8x512xf32> to vector<8x128xf32>
    %529 = arith.negf %528 : vector<8x128xf32>
    %530 = math.exp %529 : vector<8x128xf32>
    %cst_128 = arith.constant 1.000000e+00 : f32
    %531 = vector.broadcast %cst_128 : f32 to vector<8x128xf32>
    %532 = arith.addf %531, %530 : vector<8x128xf32>
    %533 = arith.divf %531, %532 : vector<8x128xf32>
    %534 = arith.mulf %525, %470 : vector<8x128xf32>
    %535 = arith.mulf %519, %527 : vector<8x128xf32>
    %536 = arith.addf %534, %535 : vector<8x128xf32>
    %537 = math.tanh %536 : vector<8x128xf32>
    %538 = arith.mulf %533, %537 : vector<8x128xf32>
    %539 = arith.truncf %538 : vector<8x128xf32> to vector<8x128xbf16>
    %c7_129 = arith.constant 7 : index
    %c0_130 = arith.constant 0 : index
    %c0_131 = arith.constant 0 : index
    %540 = vector.load %arg7[%c7_129, %c0_130, %c0_131] : memref<8x8x128xbf16, #tpu.memory_space<vmem>>, vector<1x8x128xbf16>
    %541 = vector.shape_cast %540 : vector<1x8x128xbf16> to vector<8x128xbf16>
    %542 = vector.shape_cast %539 : vector<8x128xbf16> to vector<1x8x128xbf16>
    tpu.vector_store %arg7[%c7_129, %c0_130, %c0_131], %542 {strides = array<i32>} : memref<8x8x128xbf16, #tpu.memory_space<vmem>>, vector<1x8x128xbf16>,
    %c0_132 = arith.constant 0 : index
    %c0_133 = arith.constant 0 : index
    %c0_134 = arith.constant 0 : index
    %543 = vector.load %arg8[%c0_132, %c0_133, %c0_134] : memref<2x8x128xf32, #tpu.memory_space<vmem>>, vector<1x8x128xf32>
    %544 = vector.shape_cast %543 : vector<1x8x128xf32> to vector<8x128xf32>
    %545 = vector.shape_cast %506 : vector<8x128xf32> to vector<1x8x128xf32>
    tpu.vector_store %arg8[%c0_132, %c0_133, %c0_134], %545 {strides = array<i32>} : memref<2x8x128xf32, #tpu.memory_space<vmem>>, vector<1x8x128xf32>,
    %c0_135 = arith.constant 0 : index
    %c0_136 = arith.constant 0 : index
    %c0_137 = arith.constant 0 : index
    %546 = vector.load %arg9[%c0_135, %c0_136, %c0_137] : memref<2x8x128xf32, #tpu.memory_space<vmem>>, vector<1x8x128xf32>
    %547 = vector.shape_cast %546 : vector<1x8x128xf32> to vector<8x128xf32>
    %548 = vector.shape_cast %504 : vector<8x128xf32> to vector<1x8x128xf32>
    tpu.vector_store %arg9[%c0_135, %c0_136, %c0_137], %548 {strides = array<i32>} : memref<2x8x128xf32, #tpu.memory_space<vmem>>, vector<1x8x128xf32>,
    %c1_138 = arith.constant 1 : index
    %c0_139 = arith.constant 0 : index
    %c0_140 = arith.constant 0 : index
    %549 = vector.load %arg8[%c1_138, %c0_139, %c0_140] : memref<2x8x128xf32, #tpu.memory_space<vmem>>, vector<1x8x128xf32>
    %550 = vector.shape_cast %549 : vector<1x8x128xf32> to vector<8x128xf32>
    %551 = vector.shape_cast %538 : vector<8x128xf32> to vector<1x8x128xf32>
    tpu.vector_store %arg8[%c1_138, %c0_139, %c0_140], %551 {strides = array<i32>} : memref<2x8x128xf32, #tpu.memory_space<vmem>>, vector<1x8x128xf32>,
    %c1_141 = arith.constant 1 : index
    %c0_142 = arith.constant 0 : index
    %c0_143 = arith.constant 0 : index
    %552 = vector.load %arg9[%c1_141, %c0_142, %c0_143] : memref<2x8x128xf32, #tpu.memory_space<vmem>>, vector<1x8x128xf32>
    %553 = vector.shape_cast %552 : vector<1x8x128xf32> to vector<8x128xf32>
    %554 = vector.shape_cast %536 : vector<8x128xf32> to vector<1x8x128xf32>
    tpu.vector_store %arg9[%c1_141, %c0_142, %c0_143], %554 {strides = array<i32>} : memref<2x8x128xf32, #tpu.memory_space<vmem>>, vector<1x8x128xf32>,
    return
  }
  func.func @transform_0(%arg0: i32, %arg1: i32) -> (i32, i32, i32) {
    %c0_i32 = arith.constant 0 : i32
    %c0_i32_0 = arith.constant 0 : i32
    return %arg1, %arg0, %c0_i32 : i32, i32, i32
  }
  func.func @transform_1(%arg0: i32, %arg1: i32) -> (i32, i32) {
    %c0_i32 = arith.constant 0 : i32
    %c0_i32_0 = arith.constant 0 : i32
    %c0_i32_1 = arith.constant 0 : i32
    return %c0_i32, %c0_i32_0 : i32, i32
  }
  func.func @transform_2(%arg0: i32, %arg1: i32) -> (i32, i32) {
    %c0_i32 = arith.constant 0 : i32
    %c0_i32_0 = arith.constant 0 : i32
    %c0_i32_1 = arith.constant 0 : i32
    return %c0_i32, %c0_i32_0 : i32, i32
  }
  func.func @transform_3(%arg0: i32, %arg1: i32) -> (i32, i32) {
    %c0_i32 = arith.constant 0 : i32
    %c0_i32_0 = arith.constant 0 : i32
    %c0_i32_1 = arith.constant 0 : i32
    return %c0_i32, %c0_i32_0 : i32, i32
  }
  func.func @transform_4(%arg0: i32, %arg1: i32) -> (i32, i32) {
    %c0_i32 = arith.constant 0 : i32
    %c0_i32_0 = arith.constant 0 : i32
    %c0_i32_1 = arith.constant 0 : i32
    return %c0_i32, %c0_i32_0 : i32, i32
  }
  func.func @transform_5(%arg0: i32, %arg1: i32) -> (i32, i32, i32) {
    %c0_i32 = arith.constant 0 : i32
    %c0_i32_0 = arith.constant 0 : i32
    return %arg1, %arg0, %c0_i32 : i32, i32, i32
  }
  func.func @transform_6(%arg0: i32, %arg1: i32) -> (i32, i32, i32) {
    %c0_i32 = arith.constant 0 : i32
    %c0_i32_0 = arith.constant 0 : i32
    %c0_i32_1 = arith.constant 0 : i32
    return %c0_i32, %arg0, %c0_i32_0 : i32, i32, i32
  }
  func.func @transform_7(%arg0: i32, %arg1: i32) -> (i32, i32, i32) {
    %c0_i32 = arith.constant 0 : i32
    %c0_i32_0 = arith.constant 0 : i32
    %c0_i32_1 = arith.constant 0 : i32
    return %c0_i32, %arg0, %c0_i32_0 : i32, i32, i32
  }
}

module attributes {stable_mosaic.version = 11 : i64} {
  func.func @fc_head_kernel(%arg0: i32, %arg1: i32, %arg2: i32, %arg3: memref<32x8x128xbf16, #tpu.memory_space<vmem>>, %arg4: memref<128x256xbf16, #tpu.memory_space<vmem>>, %arg5: memref<1x256xf32, #tpu.memory_space<vmem>>, %arg6: memref<8x32x256xf32, #tpu.memory_space<vmem>>) attributes {dimension_semantics = [#tpu.dimension_semantics<parallel>, #tpu.dimension_semantics<parallel>, #tpu.dimension_semantics<parallel>], iteration_bounds = array<i64: 1, 1, 1>, scalar_prefetch = 0 : i64, scratch_operands = 0 : i64, tpu.core_type = #tpu.core_type<tc>, window_params = [{transform_indices = @transform_0, window_bounds = array<i64: 32, 8, 128>}, {transform_indices = @transform_1, window_bounds = array<i64: 128, 256>}, {transform_indices = @transform_2, window_bounds = array<i64: 1, 256>}, {transform_indices = @transform_3, window_bounds = array<i64: 8, 32, 256>}]} {
    %c0 = arith.constant 0 : index
    %c0_0 = arith.constant 0 : index
    %0 = vector.load %arg4[%c0, %c0_0] : memref<128x256xbf16, #tpu.memory_space<vmem>>, vector<128x256xbf16>
    %c0_1 = arith.constant 0 : index
    %c0_2 = arith.constant 0 : index
    %1 = vector.load %arg5[%c0_1, %c0_2] : memref<1x256xf32, #tpu.memory_space<vmem>>, vector<1x256xf32>
    %c0_3 = arith.constant 0 : index
    %c0_4 = arith.constant 0 : index
    %c0_5 = arith.constant 0 : index
    %2 = vector.load %arg3[%c0_3, %c0_4, %c0_5] : memref<32x8x128xbf16, #tpu.memory_space<vmem>>, vector<32x1x128xbf16>
    %3 = vector.shape_cast %2 : vector<32x1x128xbf16> to vector<32x128xbf16>
    %cst = arith.constant dense<0.000000e+00> : vector<32x256xf32>
    %4 = tpu.matmul %3, %0, %cst {dimension_numbers = #tpu.dot_dimension_numbers<[1], [0], [0], [1], [0, 0, 1, 1], [], []>} : vector<32x128xbf16>, vector<128x256xbf16>, vector<32x256xf32> -> vector<32x256xf32>
    %5 = vector.broadcast %1 : vector<1x256xf32> to vector<32x256xf32>
    %6 = arith.addf %4, %5 : vector<32x256xf32>
    %c0_6 = arith.constant 0 : index
    %c0_7 = arith.constant 0 : index
    %c0_8 = arith.constant 0 : index
    %7 = vector.load %arg6[%c0_6, %c0_7, %c0_8] : memref<8x32x256xf32, #tpu.memory_space<vmem>>, vector<1x32x256xf32>
    %8 = vector.shape_cast %7 : vector<1x32x256xf32> to vector<32x256xf32>
    %9 = vector.shape_cast %6 : vector<32x256xf32> to vector<1x32x256xf32>
    tpu.vector_store %arg6[%c0_6, %c0_7, %c0_8], %9 {strides = array<i32>} : memref<8x32x256xf32, #tpu.memory_space<vmem>>, vector<1x32x256xf32>,
    %c0_9 = arith.constant 0 : index
    %c1 = arith.constant 1 : index
    %c0_10 = arith.constant 0 : index
    %10 = vector.load %arg3[%c0_9, %c1, %c0_10] : memref<32x8x128xbf16, #tpu.memory_space<vmem>>, vector<32x1x128xbf16>
    %11 = vector.shape_cast %10 : vector<32x1x128xbf16> to vector<32x128xbf16>
    %cst_11 = arith.constant dense<0.000000e+00> : vector<32x256xf32>
    %12 = tpu.matmul %11, %0, %cst_11 {dimension_numbers = #tpu.dot_dimension_numbers<[1], [0], [0], [1], [0, 0, 1, 1], [], []>} : vector<32x128xbf16>, vector<128x256xbf16>, vector<32x256xf32> -> vector<32x256xf32>
    %13 = vector.broadcast %1 : vector<1x256xf32> to vector<32x256xf32>
    %14 = arith.addf %12, %13 : vector<32x256xf32>
    %c1_12 = arith.constant 1 : index
    %c0_13 = arith.constant 0 : index
    %c0_14 = arith.constant 0 : index
    %15 = vector.load %arg6[%c1_12, %c0_13, %c0_14] : memref<8x32x256xf32, #tpu.memory_space<vmem>>, vector<1x32x256xf32>
    %16 = vector.shape_cast %15 : vector<1x32x256xf32> to vector<32x256xf32>
    %17 = vector.shape_cast %14 : vector<32x256xf32> to vector<1x32x256xf32>
    tpu.vector_store %arg6[%c1_12, %c0_13, %c0_14], %17 {strides = array<i32>} : memref<8x32x256xf32, #tpu.memory_space<vmem>>, vector<1x32x256xf32>,
    %c0_15 = arith.constant 0 : index
    %c2 = arith.constant 2 : index
    %c0_16 = arith.constant 0 : index
    %18 = vector.load %arg3[%c0_15, %c2, %c0_16] : memref<32x8x128xbf16, #tpu.memory_space<vmem>>, vector<32x1x128xbf16>
    %19 = vector.shape_cast %18 : vector<32x1x128xbf16> to vector<32x128xbf16>
    %cst_17 = arith.constant dense<0.000000e+00> : vector<32x256xf32>
    %20 = tpu.matmul %19, %0, %cst_17 {dimension_numbers = #tpu.dot_dimension_numbers<[1], [0], [0], [1], [0, 0, 1, 1], [], []>} : vector<32x128xbf16>, vector<128x256xbf16>, vector<32x256xf32> -> vector<32x256xf32>
    %21 = vector.broadcast %1 : vector<1x256xf32> to vector<32x256xf32>
    %22 = arith.addf %20, %21 : vector<32x256xf32>
    %c2_18 = arith.constant 2 : index
    %c0_19 = arith.constant 0 : index
    %c0_20 = arith.constant 0 : index
    %23 = vector.load %arg6[%c2_18, %c0_19, %c0_20] : memref<8x32x256xf32, #tpu.memory_space<vmem>>, vector<1x32x256xf32>
    %24 = vector.shape_cast %23 : vector<1x32x256xf32> to vector<32x256xf32>
    %25 = vector.shape_cast %22 : vector<32x256xf32> to vector<1x32x256xf32>
    tpu.vector_store %arg6[%c2_18, %c0_19, %c0_20], %25 {strides = array<i32>} : memref<8x32x256xf32, #tpu.memory_space<vmem>>, vector<1x32x256xf32>,
    %c0_21 = arith.constant 0 : index
    %c3 = arith.constant 3 : index
    %c0_22 = arith.constant 0 : index
    %26 = vector.load %arg3[%c0_21, %c3, %c0_22] : memref<32x8x128xbf16, #tpu.memory_space<vmem>>, vector<32x1x128xbf16>
    %27 = vector.shape_cast %26 : vector<32x1x128xbf16> to vector<32x128xbf16>
    %cst_23 = arith.constant dense<0.000000e+00> : vector<32x256xf32>
    %28 = tpu.matmul %27, %0, %cst_23 {dimension_numbers = #tpu.dot_dimension_numbers<[1], [0], [0], [1], [0, 0, 1, 1], [], []>} : vector<32x128xbf16>, vector<128x256xbf16>, vector<32x256xf32> -> vector<32x256xf32>
    %29 = vector.broadcast %1 : vector<1x256xf32> to vector<32x256xf32>
    %30 = arith.addf %28, %29 : vector<32x256xf32>
    %c3_24 = arith.constant 3 : index
    %c0_25 = arith.constant 0 : index
    %c0_26 = arith.constant 0 : index
    %31 = vector.load %arg6[%c3_24, %c0_25, %c0_26] : memref<8x32x256xf32, #tpu.memory_space<vmem>>, vector<1x32x256xf32>
    %32 = vector.shape_cast %31 : vector<1x32x256xf32> to vector<32x256xf32>
    %33 = vector.shape_cast %30 : vector<32x256xf32> to vector<1x32x256xf32>
    tpu.vector_store %arg6[%c3_24, %c0_25, %c0_26], %33 {strides = array<i32>} : memref<8x32x256xf32, #tpu.memory_space<vmem>>, vector<1x32x256xf32>,
    %c0_27 = arith.constant 0 : index
    %c4 = arith.constant 4 : index
    %c0_28 = arith.constant 0 : index
    %34 = vector.load %arg3[%c0_27, %c4, %c0_28] : memref<32x8x128xbf16, #tpu.memory_space<vmem>>, vector<32x1x128xbf16>
    %35 = vector.shape_cast %34 : vector<32x1x128xbf16> to vector<32x128xbf16>
    %cst_29 = arith.constant dense<0.000000e+00> : vector<32x256xf32>
    %36 = tpu.matmul %35, %0, %cst_29 {dimension_numbers = #tpu.dot_dimension_numbers<[1], [0], [0], [1], [0, 0, 1, 1], [], []>} : vector<32x128xbf16>, vector<128x256xbf16>, vector<32x256xf32> -> vector<32x256xf32>
    %37 = vector.broadcast %1 : vector<1x256xf32> to vector<32x256xf32>
    %38 = arith.addf %36, %37 : vector<32x256xf32>
    %c4_30 = arith.constant 4 : index
    %c0_31 = arith.constant 0 : index
    %c0_32 = arith.constant 0 : index
    %39 = vector.load %arg6[%c4_30, %c0_31, %c0_32] : memref<8x32x256xf32, #tpu.memory_space<vmem>>, vector<1x32x256xf32>
    %40 = vector.shape_cast %39 : vector<1x32x256xf32> to vector<32x256xf32>
    %41 = vector.shape_cast %38 : vector<32x256xf32> to vector<1x32x256xf32>
    tpu.vector_store %arg6[%c4_30, %c0_31, %c0_32], %41 {strides = array<i32>} : memref<8x32x256xf32, #tpu.memory_space<vmem>>, vector<1x32x256xf32>,
    %c0_33 = arith.constant 0 : index
    %c5 = arith.constant 5 : index
    %c0_34 = arith.constant 0 : index
    %42 = vector.load %arg3[%c0_33, %c5, %c0_34] : memref<32x8x128xbf16, #tpu.memory_space<vmem>>, vector<32x1x128xbf16>
    %43 = vector.shape_cast %42 : vector<32x1x128xbf16> to vector<32x128xbf16>
    %cst_35 = arith.constant dense<0.000000e+00> : vector<32x256xf32>
    %44 = tpu.matmul %43, %0, %cst_35 {dimension_numbers = #tpu.dot_dimension_numbers<[1], [0], [0], [1], [0, 0, 1, 1], [], []>} : vector<32x128xbf16>, vector<128x256xbf16>, vector<32x256xf32> -> vector<32x256xf32>
    %45 = vector.broadcast %1 : vector<1x256xf32> to vector<32x256xf32>
    %46 = arith.addf %44, %45 : vector<32x256xf32>
    %c5_36 = arith.constant 5 : index
    %c0_37 = arith.constant 0 : index
    %c0_38 = arith.constant 0 : index
    %47 = vector.load %arg6[%c5_36, %c0_37, %c0_38] : memref<8x32x256xf32, #tpu.memory_space<vmem>>, vector<1x32x256xf32>
    %48 = vector.shape_cast %47 : vector<1x32x256xf32> to vector<32x256xf32>
    %49 = vector.shape_cast %46 : vector<32x256xf32> to vector<1x32x256xf32>
    tpu.vector_store %arg6[%c5_36, %c0_37, %c0_38], %49 {strides = array<i32>} : memref<8x32x256xf32, #tpu.memory_space<vmem>>, vector<1x32x256xf32>,
    %c0_39 = arith.constant 0 : index
    %c6 = arith.constant 6 : index
    %c0_40 = arith.constant 0 : index
    %50 = vector.load %arg3[%c0_39, %c6, %c0_40] : memref<32x8x128xbf16, #tpu.memory_space<vmem>>, vector<32x1x128xbf16>
    %51 = vector.shape_cast %50 : vector<32x1x128xbf16> to vector<32x128xbf16>
    %cst_41 = arith.constant dense<0.000000e+00> : vector<32x256xf32>
    %52 = tpu.matmul %51, %0, %cst_41 {dimension_numbers = #tpu.dot_dimension_numbers<[1], [0], [0], [1], [0, 0, 1, 1], [], []>} : vector<32x128xbf16>, vector<128x256xbf16>, vector<32x256xf32> -> vector<32x256xf32>
    %53 = vector.broadcast %1 : vector<1x256xf32> to vector<32x256xf32>
    %54 = arith.addf %52, %53 : vector<32x256xf32>
    %c6_42 = arith.constant 6 : index
    %c0_43 = arith.constant 0 : index
    %c0_44 = arith.constant 0 : index
    %55 = vector.load %arg6[%c6_42, %c0_43, %c0_44] : memref<8x32x256xf32, #tpu.memory_space<vmem>>, vector<1x32x256xf32>
    %56 = vector.shape_cast %55 : vector<1x32x256xf32> to vector<32x256xf32>
    %57 = vector.shape_cast %54 : vector<32x256xf32> to vector<1x32x256xf32>
    tpu.vector_store %arg6[%c6_42, %c0_43, %c0_44], %57 {strides = array<i32>} : memref<8x32x256xf32, #tpu.memory_space<vmem>>, vector<1x32x256xf32>,
    %c0_45 = arith.constant 0 : index
    %c7 = arith.constant 7 : index
    %c0_46 = arith.constant 0 : index
    %58 = vector.load %arg3[%c0_45, %c7, %c0_46] : memref<32x8x128xbf16, #tpu.memory_space<vmem>>, vector<32x1x128xbf16>
    %59 = vector.shape_cast %58 : vector<32x1x128xbf16> to vector<32x128xbf16>
    %cst_47 = arith.constant dense<0.000000e+00> : vector<32x256xf32>
    %60 = tpu.matmul %59, %0, %cst_47 {dimension_numbers = #tpu.dot_dimension_numbers<[1], [0], [0], [1], [0, 0, 1, 1], [], []>} : vector<32x128xbf16>, vector<128x256xbf16>, vector<32x256xf32> -> vector<32x256xf32>
    %61 = vector.broadcast %1 : vector<1x256xf32> to vector<32x256xf32>
    %62 = arith.addf %60, %61 : vector<32x256xf32>
    %c7_48 = arith.constant 7 : index
    %c0_49 = arith.constant 0 : index
    %c0_50 = arith.constant 0 : index
    %63 = vector.load %arg6[%c7_48, %c0_49, %c0_50] : memref<8x32x256xf32, #tpu.memory_space<vmem>>, vector<1x32x256xf32>
    %64 = vector.shape_cast %63 : vector<1x32x256xf32> to vector<32x256xf32>
    %65 = vector.shape_cast %62 : vector<32x256xf32> to vector<1x32x256xf32>
    tpu.vector_store %arg6[%c7_48, %c0_49, %c0_50], %65 {strides = array<i32>} : memref<8x32x256xf32, #tpu.memory_space<vmem>>, vector<1x32x256xf32>,
    return
  }
  func.func @transform_0(%arg0: i32, %arg1: i32, %arg2: i32) -> (i32, i32, i32) {
    %c0_i32 = arith.constant 0 : i32
    %c0_i32_0 = arith.constant 0 : i32
    return %arg1, %arg0, %c0_i32 : i32, i32, i32
  }
  func.func @transform_1(%arg0: i32, %arg1: i32, %arg2: i32) -> (i32, i32) {
    %c0_i32 = arith.constant 0 : i32
    %c0_i32_0 = arith.constant 0 : i32
    return %c0_i32, %arg2 : i32, i32
  }
  func.func @transform_2(%arg0: i32, %arg1: i32, %arg2: i32) -> (i32, i32) {
    %c0_i32 = arith.constant 0 : i32
    %c0_i32_0 = arith.constant 0 : i32
    return %c0_i32, %arg2 : i32, i32
  }
  func.func @transform_3(%arg0: i32, %arg1: i32, %arg2: i32) -> (i32, i32, i32) {
    %c0_i32 = arith.constant 0 : i32
    return %arg0, %arg1, %arg2 : i32, i32, i32
  }
}

</mosaic_0001>

<llo_original>
// kernel: _lambda_.3
$region0: #{_lambda_.3}
  #allocation0 [shape = 'u32[]', space=smem, size = 0x4, offset = 0x4, fixed_abs, tag = 'smem constant byte address 0x4 - core index']
  #allocation1 [shape = 'u32[144,128]{1,0:T(1,128)}', space=vmem, size = 0x12000, scoped, tag = 'internal scratch']
  %s0 = inlined_call_operand.vmem [shape: bf16[256,128], index: 0, kind: input, shape index: {}]
  %s1 = inlined_call_operand.vmem [shape: bf16[128,512], index: 1, kind: input, shape index: {}]
  %s2 = inlined_call_operand.vmem [shape: f32[1,512], index: 2, kind: input, shape index: {}]
  %s3 = inlined_call_operand.vmem [shape: f32[256,512], index: 3, kind: output, shape index: {}]
  %s4 = sld [smem:[#allocation0]]
  $region22: #{_lambda_.3} parent=0
    _
  %s6 = ssub.s32 1, %s4
  %s7 = scalar_select 0, %s6, %s4
  // Predicated region
  $region2: #{_lambda_.3} parent=0 // pred_check
    _
  $region3: #{_lambda_.3} parent=0 // pred_check_branch
    %9 = sbr.rel (0) target = $region5
  $region4: #{_lambda_.3} parent=0 // pred_region
    _
  $region5: #{_lambda_.3} parent=0 // pred_fallthru
    _
  // Predicated region
  $region6: #{_lambda_.3} parent=0 // pred_check
    _
  $region7: #{_lambda_.3} parent=0 // pred_check_branch
    %11 = sbr.rel (0) target = $region9
  $region8: #{_lambda_.3} parent=0 // pred_region
    _
  $region9: #{_lambda_.3} parent=0 // pred_fallthru
    _
  // Predicated region
  $region10: #{_lambda_.3} parent=0 // pred_check
    _
  $region11: #{_lambda_.3} parent=0 // pred_check_branch
    %13 = sbr.rel (0) target = $region13
  $region12: #{_lambda_.3} parent=0 // pred_region
    _
  $region13: #{_lambda_.3} parent=0 // pred_fallthru
    _
  %v15 = vld [vmem:[%s0] sm:$0xf]
  %v16 = vld [vmem:[%s0 + $0x4] sm:$0xf]
  %v17 = vld [vmem:[%s0 + $0x8] sm:$0xf]
  %v18 = vld [vmem:[%s0 + $0xc] sm:$0xf]
  %v19 = vld [vmem:[%s0 + $0x10] sm:$0xf]
  %v20 = vld [vmem:[%s0 + $0x14] sm:$0xf]
  %v21 = vld [vmem:[%s0 + $0x18] sm:$0xf]
  %v22 = vld [vmem:[%s0 + $0x1c] sm:$0xf]
  %v23 = vld [vmem:[%s0 + $0x20] sm:$0xf]
  %v24 = vld [vmem:[%s0 + $0x24] sm:$0xf]
  %v25 = vld [vmem:[%s0 + $0x28] sm:$0xf]
  %v26 = vld [vmem:[%s0 + $0x2c] sm:$0xf]
  %v27 = vld [vmem:[%s0 + $0x30] sm:$0xf]
  %v28 = vld [vmem:[%s0 + $0x34] sm:$0xf]
  %v29 = vld [vmem:[%s0 + $0x38] sm:$0xf]
  %v30 = vld [vmem:[%s0 + $0x3c] sm:$0xf]
  %v31 = vld [vmem:[%s0 + $0x40] sm:$0xf]
  %v32 = vld [vmem:[%s0 + $0x44] sm:$0xf]
  %v33 = vld [vmem:[%s0 + $0x48] sm:$0xf]
  %v34 = vld [vmem:[%s0 + $0x4c] sm:$0xf]
  %v35 = vld [vmem:[%s0 + $0x50] sm:$0xf]
  %v36 = vld [vmem:[%s0 + $0x54] sm:$0xf]
  %v37 = vld [vmem:[%s0 + $0x58] sm:$0xf]
  %v38 = vld [vmem:[%s0 + $0x5c] sm:$0xf]
  %v39 = vld [vmem:[%s0 + $0x60] sm:$0xf]
  %v40 = vld [vmem:[%s0 + $0x64] sm:$0xf]
  %v41 = vld [vmem:[%s0 + $0x68] sm:$0xf]
  %v42 = vld [vmem:[%s0 + $0x6c] sm:$0xf]
  %v43 = vld [vmem:[%s0 + $0x70] sm:$0xf]
  %v44 = vld [vmem:[%s0 + $0x74] sm:$0xf]
  %v45 = vld [vmem:[%s0 + $0x78] sm:$0xf]
  %v46 = vld [vmem:[%s0 + $0x7c] sm:$0xf]
  %v47 = vld [vmem:[%s1] sm:$0xff]
  %v48 = vld [vmem:[%s1 + $0x8] sm:$0xff]
  %v49 = vld [vmem:[%s1 + $0x10] sm:$0xff]
  %v50 = vld [vmem:[%s1 + $0x18] sm:$0xff]
  %v51 = vld [vmem:[%s1 + $0x20] sm:$0xff]
  %v52 = vld [vmem:[%s1 + $0x28] sm:$0xff]
  %v53 = vld [vmem:[%s1 + $0x30] sm:$0xff]
  %v54 = vld [vmem:[%s1 + $0x38] sm:$0xff]
  %v55 = vld [vmem:[%s1 + $0x40] sm:$0xff]
  %v56 = vld [vmem:[%s1 + $0x48] sm:$0xff]
  %v57 = vld [vmem:[%s1 + $0x50] sm:$0xff]
  %v58 = vld [vmem:[%s1 + $0x58] sm:$0xff]
  %v59 = vld [vmem:[%s1 + $0x60] sm:$0xff]
  %v60 = vld [vmem:[%s1 + $0x68] sm:$0xff]
  %v61 = vld [vmem:[%s1 + $0x70] sm:$0xff]
  %v62 = vld [vmem:[%s1 + $0x78] sm:$0xff]
  %v63 = vld [vmem:[%s1 + $0x80] sm:$0xff]
  %v64 = vld [vmem:[%s1 + $0x88] sm:$0xff]
  %v65 = vld [vmem:[%s1 + $0x90] sm:$0xff]
  %v66 = vld [vmem:[%s1 + $0x98] sm:$0xff]
  %v67 = vld [vmem:[%s1 + $0xa0] sm:$0xff]
  %v68 = vld [vmem:[%s1 + $0xa8] sm:$0xff]
  %v69 = vld [vmem:[%s1 + $0xb0] sm:$0xff]
  %v70 = vld [vmem:[%s1 + $0xb8] sm:$0xff]
  %v71 = vld [vmem:[%s1 + $0xc0] sm:$0xff]
  %v72 = vld [vmem:[%s1 + $0xc8] sm:$0xff]
  %v73 = vld [vmem:[%s1 + $0xd0] sm:$0xff]
  %v74 = vld [vmem:[%s1 + $0xd8] sm:$0xff]
  %v75 = vld [vmem:[%s1 + $0xe0] sm:$0xff]
  %v76 = vld [vmem:[%s1 + $0xe8] sm:$0xff]
  %v77 = vld [vmem:[%s1 + $0xf0] sm:$0xff]
  %v78 = vld [vmem:[%s1 + $0xf8] sm:$0xff]
  %v79 = vld [vmem:[%s2] sm:$0xf]
  %v81 = vlaneseq
  %v82 = vshrl.u32 %v81, 7
  %v83 = vsub.s32 0, %v82
  %v84 = vrot.slane %v79, %v83
  %v85 = vlaneseq
  %v86 = vshrl.u32 %v85, 7
  %v87 = vsub.s32 1, %v86
  %v88 = vrot.slane %v79, %v87
  %v89 = vlaneseq
  %v90 = vshrl.u32 %v89, 7
  %v91 = vsub.s32 2, %v90
  %v92 = vrot.slane %v79, %v91
  %v93 = vlaneseq
  %v94 = vshrl.u32 %v93, 7
  %v95 = vsub.s32 3, %v94
  %v96 = vrot.slane %v79, %v95
  %v133 = vunpack.c.l.b16 %v15
  %v134 = vunpack.c.l.b16 %v16
  %v135 = vunpack.c.l.b16 %v17
  %v136 = vunpack.c.l.b16 %v18
  %v137 = vunpack.c.l.b16 %v19
  %v138 = vunpack.c.l.b16 %v20
  %v139 = vunpack.c.l.b16 %v21
  %v140 = vunpack.c.l.b16 %v22
  %v141 = vunpack.c.l.b16 %v23
  %v142 = vunpack.c.l.b16 %v24
  %v143 = vunpack.c.l.b16 %v25
  %v144 = vunpack.c.l.b16 %v26
  %v145 = vunpack.c.l.b16 %v27
  %v146 = vunpack.c.l.b16 %v28
  %v147 = vunpack.c.l.b16 %v29
  %v148 = vunpack.c.l.b16 %v30
  %v149 = vunpack.c.l.b16 %v31
  %v150 = vunpack.c.l.b16 %v32
  %v151 = vunpack.c.l.b16 %v33
  %v152 = vunpack.c.l.b16 %v34
  %v153 = vunpack.c.l.b16 %v35
  %v154 = vunpack.c.l.b16 %v36
  %v155 = vunpack.c.l.b16 %v37
  %v156 = vunpack.c.l.b16 %v38
  %v157 = vunpack.c.l.b16 %v39
  %v158 = vunpack.c.l.b16 %v40
  %v159 = vunpack.c.l.b16 %v41
  %v160 = vunpack.c.l.b16 %v42
  %v161 = vunpack.c.l.b16 %v43
  %v162 = vunpack.c.l.b16 %v44
  %v163 = vunpack.c.l.b16 %v45
  %v164 = vunpack.c.l.b16 %v46
  %v165 = vpack.c.b16 %v134, %v133
  %v166 = vpack.c.b16 %v136, %v135
  %v167 = vpack.c.b16 %v138, %v137
  %v168 = vpack.c.b16 %v140, %v139
  %v169 = vpack.c.b16 %v142, %v141
  %v170 = vpack.c.b16 %v144, %v143
  %v171 = vpack.c.b16 %v146, %v145
  %v172 = vpack.c.b16 %v148, %v147
  %v173 = vpack.c.b16 %v150, %v149
  %v174 = vpack.c.b16 %v152, %v151
  %v175 = vpack.c.b16 %v154, %v153
  %v176 = vpack.c.b16 %v156, %v155
  %v177 = vpack.c.b16 %v158, %v157
  %v178 = vpack.c.b16 %v160, %v159
  %v179 = vpack.c.b16 %v162, %v161
  %v180 = vpack.c.b16 %v164, %v163
  %v229 = vunpack.c.l.b16 %v47
  %v230 = vunpack.c.h.b16 %v47
  %v231 = vunpack.c.l.b16 %v48
  %v232 = vunpack.c.h.b16 %v48
  %v233 = vunpack.c.l.b16 %v49
  %v234 = vunpack.c.h.b16 %v49
  %v235 = vunpack.c.l.b16 %v50
  %v236 = vunpack.c.h.b16 %v50
  %v237 = vunpack.c.l.b16 %v51
  %v238 = vunpack.c.h.b16 %v51
  %v239 = vunpack.c.l.b16 %v52
  %v240 = vunpack.c.h.b16 %v52
  %v241 = vunpack.c.l.b16 %v53
  %v242 = vunpack.c.h.b16 %v53
  %v243 = vunpack.c.l.b16 %v54
  %v244 = vunpack.c.h.b16 %v54
  %v245 = vunpack.c.l.b16 %v55
  %v246 = vunpack.c.h.b16 %v55
  %v247 = vunpack.c.l.b16 %v56
  %v248 = vunpack.c.h.b16 %v56
  %v249 = vunpack.c.l.b16 %v57
  %v250 = vunpack.c.h.b16 %v57
  %v251 = vunpack.c.l.b16 %v58
  %v252 = vunpack.c.h.b16 %v58
  %v253 = vunpack.c.l.b16 %v59
  %v254 = vunpack.c.h.b16 %v59
  %v255 = vunpack.c.l.b16 %v60
  %v256 = vunpack.c.h.b16 %v60
  %v257 = vunpack.c.l.b16 %v61
  %v258 = vunpack.c.h.b16 %v61
  %v259 = vunpack.c.l.b16 %v62
  %v260 = vunpack.c.h.b16 %v62
  %v261 = vunpack.c.l.b16 %v63
  %v262 = vunpack.c.h.b16 %v63
  %v263 = vunpack.c.l.b16 %v64
  %v264 = vunpack.c.h.b16 %v64
  %v265 = vunpack.c.l.b16 %v65
  %v266 = vunpack.c.h.b16 %v65
  %v267 = vunpack.c.l.b16 %v66
  %v268 = vunpack.c.h.b16 %v66
  %v269 = vunpack.c.l.b16 %v67
  %v270 = vunpack.c.h.b16 %v67
  %v271 = vunpack.c.l.b16 %v68
  %v272 = vunpack.c.h.b16 %v68
  %v273 = vunpack.c.l.b16 %v69
  %v274 = vunpack.c.h.b16 %v69
  %v275 = vunpack.c.l.b16 %v70
  %v276 = vunpack.c.h.b16 %v70
  %v277 = vunpack.c.l.b16 %v71
  %v278 = vunpack.c.h.b16 %v71
  %v279 = vunpack.c.l.b16 %v72
  %v280 = vunpack.c.h.b16 %v72
  %v281 = vunpack.c.l.b16 %v73
  %v282 = vunpack.c.h.b16 %v73
  %v283 = vunpack.c.l.b16 %v74
  %v284 = vunpack.c.h.b16 %v74
  %v285 = vunpack.c.l.b16 %v75
  %v286 = vunpack.c.h.b16 %v75
  %v287 = vunpack.c.l.b16 %v76
  %v288 = vunpack.c.h.b16 %v76
  %v289 = vunpack.c.l.b16 %v77
  %v290 = vunpack.c.h.b16 %v77
  %v291 = vunpack.c.l.b16 %v78
  %v292 = vunpack.c.h.b16 %v78
  %v293 = vpack.c.b16 %v233, %v229
  %v294 = vpack.c.b16 %v234, %v230
  %v295 = vpack.c.b16 %v235, %v231
  %v296 = vpack.c.b16 %v236, %v232
  %v297 = vpack.c.b16 %v241, %v237
  %v298 = vpack.c.b16 %v242, %v238
  %v299 = vpack.c.b16 %v243, %v239
  %v300 = vpack.c.b16 %v244, %v240
  %v301 = vpack.c.b16 %v249, %v245
  %v302 = vpack.c.b16 %v250, %v246
  %v303 = vpack.c.b16 %v251, %v247
  %v304 = vpack.c.b16 %v252, %v248
  %v305 = vpack.c.b16 %v257, %v253
  %v306 = vpack.c.b16 %v258, %v254
  %v307 = vpack.c.b16 %v259, %v255
  %v308 = vpack.c.b16 %v260, %v256
  %v309 = vpack.c.b16 %v265, %v261
  %v310 = vpack.c.b16 %v266, %v262
  %v311 = vpack.c.b16 %v267, %v263
  %v312 = vpack.c.b16 %v268, %v264
  %v313 = vpack.c.b16 %v273, %v269
  %v314 = vpack.c.b16 %v274, %v270
  %v315 = vpack.c.b16 %v275, %v271
  %v316 = vpack.c.b16 %v276, %v272
  %v317 = vpack.c.b16 %v281, %v277
  %v318 = vpack.c.b16 %v282, %v278
  %v319 = vpack.c.b16 %v283, %v279
  %v320 = vpack.c.b16 %v284, %v280
  %v321 = vpack.c.b16 %v289, %v285
  %v322 = vpack.c.b16 %v290, %v286
  %v323 = vpack.c.b16 %v291, %v287
  %v324 = vpack.c.b16 %v292, %v288
  %357 = vmatprep.subr.bf16.mxu0 %v294
  %358 = vmatpush1.bf16.msra.mxu0 %v293
  %359 = vmatprep.subr.bf16.mxu0 %v298
  %360 = vmatpush1.bf16.msra.mxu0 %v297
  %361 = vmatprep.subr.bf16.mxu0 %v302
  %362 = vmatpush1.bf16.msra.mxu0 %v301
  %363 = vmatprep.subr.bf16.mxu0 %v306
  %364 = vmatpush1.bf16.msra.mxu0 %v305
  %365 = vmatprep.subr.bf16.mxu0 %v310
  %366 = vmatpush1.bf16.msra.mxu0 %v309
  %367 = vmatprep.subr.bf16.mxu0 %v314
  %368 = vmatpush1.bf16.msra.mxu0 %v313
  %369 = vmatprep.subr.bf16.mxu0 %v318
  %370 = vmatpush1.bf16.msra.mxu0 %v317
  %371 = vmatprep.subr.bf16.mxu0 %v322
  %372 = vmatpush1.bf16.msra.mxu0 %v321
  %373 = vmatprep.subr.bf16.mxu0 0
  %374 = vmatpush1.bf16.msra.mxu0 0
  %375 = vmatprep.subr.bf16.mxu0 0
  %376 = vmatpush1.bf16.msra.mxu0 0
  %377 = vmatprep.subr.bf16.mxu0 0
  %378 = vmatpush1.bf16.msra.mxu0 0
  %379 = vmatprep.subr.bf16.mxu0 0
  %380 = vmatpush1.bf16.msra.mxu0 0
  %381 = vmatprep.subr.bf16.mxu0 0
  %382 = vmatpush1.bf16.msra.mxu0 0
  %383 = vmatprep.subr.bf16.mxu0 0
  %384 = vmatpush1.bf16.msra.mxu0 0
  %385 = vmatprep.subr.bf16.mxu0 0
  %386 = vmatpush1.bf16.msra.mxu0 0
  %387 = vmatprep.subr.bf16.mxu0 0
  %388 = vmatpush1.bf16.msra.mxu0 0
  %389 = vmatprep.mubr.bf16.mxu0 0
  %390 = vmatmul.mubr.bf16.gmra.mrb[0].mxu0 %v165
  %v391 = vpop.f32.mrb[0].mxu0
  %v392 = vadd.f32 %v84, %v391
  %v393 = vpop.f32.mrb[0].mxu0
  %v394 = vadd.f32 %v88, %v393
  %v395 = vpop.f32.mrb[0].mxu0
  %v396 = vadd.f32 %v84, %v395
  %v397 = vpop.f32.mrb[0].mxu0
  %v398 = vadd.f32 %v88, %v397
  %399 = vmatprep.mubr.bf16.mxu0 0
  %400 = vmatmul.mubr.bf16.gmra.mrb[0].mxu0 %v166
  %v401 = vpop.f32.mrb[0].mxu0
  %v402 = vadd.f32 %v84, %v401
  %v403 = vpop.f32.mrb[0].mxu0
  %v404 = vadd.f32 %v88, %v403
  %v405 = vpop.f32.mrb[0].mxu0
  %v406 = vadd.f32 %v84, %v405
  %v407 = vpop.f32.mrb[0].mxu0
  %v408 = vadd.f32 %v88, %v407
  %409 = vmatprep.mubr.bf16.mxu0 0
  %410 = vmatmul.mubr.bf16.gmra.mrb[0].mxu0 %v167
  %v411 = vpop.f32.mrb[0].mxu0
  %v412 = vadd.f32 %v84, %v411
  %v413 = vpop.f32.mrb[0].mxu0
  %v414 = vadd.f32 %v88, %v413
  %v415 = vpop.f32.mrb[0].mxu0
  %v416 = vadd.f32 %v84, %v415
  %v417 = vpop.f32.mrb[0].mxu0
  %v418 = vadd.f32 %v88, %v417
  %419 = vmatprep.mubr.bf16.mxu0 0
  %420 = vmatmul.mubr.bf16.gmra.mrb[0].mxu0 %v168
  %v421 = vpop.f32.mrb[0].mxu0
  %v422 = vadd.f32 %v84, %v421
  %v423 = vpop.f32.mrb[0].mxu0
  %v424 = vadd.f32 %v88, %v423
  %v425 = vpop.f32.mrb[0].mxu0
  %v426 = vadd.f32 %v84, %v425
  %v427 = vpop.f32.mrb[0].mxu0
  %v428 = vadd.f32 %v88, %v427
  %429 = vmatprep.mubr.bf16.mxu0 0
  %430 = vmatmul.mubr.bf16.gmra.mrb[0].mxu0 %v169
  %v431 = vpop.f32.mrb[0].mxu0
  %v432 = vadd.f32 %v84, %v431
  %v433 = vpop.f32.mrb[0].mxu0
  %v434 = vadd.f32 %v88, %v433
  %v435 = vpop.f32.mrb[0].mxu0
  %v436 = vadd.f32 %v84, %v435
  %v437 = vpop.f32.mrb[0].mxu0
  %v438 = vadd.f32 %v88, %v437
  %439 = vmatprep.mubr.bf16.mxu0 0
  %440 = vmatmul.mubr.bf16.gmra.mrb[0].mxu0 %v170
  %v441 = vpop.f32.mrb[0].mxu0
  %v442 = vadd.f32 %v84, %v441
  %v443 = vpop.f32.mrb[0].mxu0
  %v444 = vadd.f32 %v88, %v443
  %v445 = vpop.f32.mrb[0].mxu0
  %v446 = vadd.f32 %v84, %v445
  %v447 = vpop.f32.mrb[0].mxu0
  %v448 = vadd.f32 %v88, %v447
  %449 = vmatprep.mubr.bf16.mxu0 0
  %450 = vmatmul.mubr.bf16.gmra.mrb[0].mxu0 %v171
  %v451 = vpop.f32.mrb[0].mxu0
  %v452 = vadd.f32 %v84, %v451
  %v453 = vpop.f32.mrb[0].mxu0
  %v454 = vadd.f32 %v88, %v453
  %v455 = vpop.f32.mrb[0].mxu0
  %v456 = vadd.f32 %v84, %v455
  %v457 = vpop.f32.mrb[0].mxu0
  %v458 = vadd.f32 %v88, %v457
  %459 = vmatprep.mubr.bf16.mxu0 0
  %460 = vmatmul.mubr.bf16.gmra.mrb[0].mxu0 %v172
  %v461 = vpop.f32.mrb[0].mxu0
  %v462 = vadd.f32 %v84, %v461
  %v463 = vpop.f32.mrb[0].mxu0
  %v464 = vadd.f32 %v88, %v463
  %v465 = vpop.f32.mrb[0].mxu0
  %v466 = vadd.f32 %v84, %v465
  %v467 = vpop.f32.mrb[0].mxu0
  %v468 = vadd.f32 %v88, %v467
  %469 = vmatprep.mubr.bf16.mxu0 0
  %470 = vmatmul.mubr.bf16.gmra.mrb[0].mxu0 %v173
  %v471 = vpop.f32.mrb[0].mxu0
  %v472 = vadd.f32 %v84, %v471
  %v473 = vpop.f32.mrb[0].mxu0
  %v474 = vadd.f32 %v88, %v473
  %v475 = vpop.f32.mrb[0].mxu0
  %v476 = vadd.f32 %v84, %v475
  %v477 = vpop.f32.mrb[0].mxu0
  %v478 = vadd.f32 %v88, %v477
  %479 = vmatprep.mubr.bf16.mxu0 0
  %480 = vmatmul.mubr.bf16.gmra.mrb[0].mxu0 %v174
  %v481 = vpop.f32.mrb[0].mxu0
  %v482 = vadd.f32 %v84, %v481
  %v483 = vpop.f32.mrb[0].mxu0
  %v484 = vadd.f32 %v88, %v483
  %v485 = vpop.f32.mrb[0].mxu0
  %v486 = vadd.f32 %v84, %v485
  %v487 = vpop.f32.mrb[0].mxu0
  %v488 = vadd.f32 %v88, %v487
  %489 = vmatprep.mubr.bf16.mxu0 0
  %490 = vmatmul.mubr.bf16.gmra.mrb[0].mxu0 %v175
  %v491 = vpop.f32.mrb[0].mxu0
  %v492 = vadd.f32 %v84, %v491
  %v493 = vpop.f32.mrb[0].mxu0
  %v494 = vadd.f32 %v88, %v493
  %v495 = vpop.f32.mrb[0].mxu0
  %v496 = vadd.f32 %v84, %v495
  %v497 = vpop.f32.mrb[0].mxu0
  %v498 = vadd.f32 %v88, %v497
  %499 = vmatprep.mubr.bf16.mxu0 0
  %500 = vmatmul.mubr.bf16.gmra.mrb[0].mxu0 %v176
  %v501 = vpop.f32.mrb[0].mxu0
  %v502 = vadd.f32 %v84, %v501
  %v503 = vpop.f32.mrb[0].mxu0
  %v504 = vadd.f32 %v88, %v503
  %v505 = vpop.f32.mrb[0].mxu0
  %v506 = vadd.f32 %v84, %v505
  %v507 = vpop.f32.mrb[0].mxu0
  %v508 = vadd.f32 %v88, %v507
  %509 = vmatprep.mubr.bf16.mxu0 0
  %510 = vmatmul.mubr.bf16.gmra.mrb[0].mxu0 %v177
  %v511 = vpop.f32.mrb[0].mxu0
  %v512 = vadd.f32 %v84, %v511
  %v513 = vpop.f32.mrb[0].mxu0
  %v514 = vadd.f32 %v88, %v513
  %v515 = vpop.f32.mrb[0].mxu0
  %v516 = vadd.f32 %v84, %v515
  %v517 = vpop.f32.mrb[0].mxu0
  %v518 = vadd.f32 %v88, %v517
  %519 = vmatprep.mubr.bf16.mxu0 0
  %520 = vmatmul.mubr.bf16.gmra.mrb[0].mxu0 %v178
  %v521 = vpop.f32.mrb[0].mxu0
  %v522 = vadd.f32 %v84, %v521
  %v523 = vpop.f32.mrb[0].mxu0
  %v524 = vadd.f32 %v88, %v523
  %v525 = vpop.f32.mrb[0].mxu0
  %v526 = vadd.f32 %v84, %v525
  %v527 = vpop.f32.mrb[0].mxu0
  %v528 = vadd.f32 %v88, %v527
  %529 = vmatprep.mubr.bf16.mxu0 0
  %530 = vmatmul.mubr.bf16.gmra.mrb[0].mxu0 %v179
  %v531 = vpop.f32.mrb[0].mxu0
  %v532 = vadd.f32 %v84, %v531
  %v533 = vpop.f32.mrb[0].mxu0
  %v534 = vadd.f32 %v88, %v533
  %v535 = vpop.f32.mrb[0].mxu0
  %v536 = vadd.f32 %v84, %v535
  %v537 = vpop.f32.mrb[0].mxu0
  %v538 = vadd.f32 %v88, %v537
  %539 = vmatprep.mubr.bf16.mxu0 0
  %540 = vmatmul.mubr.bf16.gmra.mrb[0].mxu0 %v180
  %v541 = vpop.f32.mrb[0].mxu0
  %v542 = vadd.f32 %v84, %v541
  %v543 = vpop.f32.mrb[0].mxu0
  %v544 = vadd.f32 %v88, %v543
  %v545 = vpop.f32.mrb[0].mxu0
  %v546 = vadd.f32 %v84, %v545
  %v547 = vpop.f32.mrb[0].mxu0
  %v548 = vadd.f32 %v88, %v547
  %549 = vdwg.mxu0
  %550 = vmatprep.subr.bf16.mxu0 %v296
  %551 = vmatpush1.bf16.msra.mxu0 %v295
  %552 = vmatprep.subr.bf16.mxu0 %v300
  %553 = vmatpush1.bf16.msra.mxu0 %v299
  %554 = vmatprep.subr.bf16.mxu0 %v304
  %555 = vmatpush1.bf16.msra.mxu0 %v303
  %556 = vmatprep.subr.bf16.mxu0 %v308
  %557 = vmatpush1.bf16.msra.mxu0 %v307
  %558 = vmatprep.subr.bf16.mxu0 %v312
  %559 = vmatpush1.bf16.msra.mxu0 %v311
  %560 = vmatprep.subr.bf16.mxu0 %v316
  %561 = vmatpush1.bf16.msra.mxu0 %v315
  %562 = vmatprep.subr.bf16.mxu0 %v320
  %563 = vmatpush1.bf16.msra.mxu0 %v319
  %564 = vmatprep.subr.bf16.mxu0 %v324
  %565 = vmatpush1.bf16.msra.mxu0 %v323
  %566 = vmatprep.subr.bf16.mxu0 0
  %567 = vmatpush1.bf16.msra.mxu0 0
  %568 = vmatprep.subr.bf16.mxu0 0
  %569 = vmatpush1.bf16.msra.mxu0 0
  %570 = vmatprep.subr.bf16.mxu0 0
  %571 = vmatpush1.bf16.msra.mxu0 0
  %572 = vmatprep.subr.bf16.mxu0 0
  %573 = vmatpush1.bf16.msra.mxu0 0
  %574 = vmatprep.subr.bf16.mxu0 0
  %575 = vmatpush1.bf16.msra.mxu0 0
  %576 = vmatprep.subr.bf16.mxu0 0
  %577 = vmatpush1.bf16.msra.mxu0 0
  %578 = vmatprep.subr.bf16.mxu0 0
  %579 = vmatpush1.bf16.msra.mxu0 0
  %580 = vmatprep.subr.bf16.mxu0 0
  %581 = vmatpush1.bf16.msra.mxu0 0
  %582 = vmatprep.mubr.bf16.mxu0 0
  %583 = vmatmul.mubr.bf16.gmra.mrb[0].mxu0 %v165
  %v584 = vpop.f32.mrb[0].mxu0
  %v585 = vadd.f32 %v92, %v584
  %v586 = vpop.f32.mrb[0].mxu0
  %v587 = vadd.f32 %v96, %v586
  %v588 = vpop.f32.mrb[0].mxu0
  %v589 = vadd.f32 %v92, %v588
  %v590 = vpop.f32.mrb[0].mxu0
  %v591 = vadd.f32 %v96, %v590
  %592 = vmatprep.mubr.bf16.mxu0 0
  %593 = vmatmul.mubr.bf16.gmra.mrb[0].mxu0 %v166
  %v594 = vpop.f32.mrb[0].mxu0
  %v595 = vadd.f32 %v92, %v594
  %v596 = vpop.f32.mrb[0].mxu0
  %v597 = vadd.f32 %v96, %v596
  %v598 = vpop.f32.mrb[0].mxu0
  %v599 = vadd.f32 %v92, %v598
  %v600 = vpop.f32.mrb[0].mxu0
  %v601 = vadd.f32 %v96, %v600
  %602 = vmatprep.mubr.bf16.mxu0 0
  %603 = vmatmul.mubr.bf16.gmra.mrb[0].mxu0 %v167
  %v604 = vpop.f32.mrb[0].mxu0
  %v605 = vadd.f32 %v92, %v604
  %v606 = vpop.f32.mrb[0].mxu0
  %v607 = vadd.f32 %v96, %v606
  %v608 = vpop.f32.mrb[0].mxu0
  %v609 = vadd.f32 %v92, %v608
  %v610 = vpop.f32.mrb[0].mxu0
  %v611 = vadd.f32 %v96, %v610
  %612 = vmatprep.mubr.bf16.mxu0 0
  %613 = vmatmul.mubr.bf16.gmra.mrb[0].mxu0 %v168
  %v614 = vpop.f32.mrb[0].mxu0
  %v615 = vadd.f32 %v92, %v614
  %v616 = vpop.f32.mrb[0].mxu0
  %v617 = vadd.f32 %v96, %v616
  %v618 = vpop.f32.mrb[0].mxu0
  %v619 = vadd.f32 %v92, %v618
  %v620 = vpop.f32.mrb[0].mxu0
  %v621 = vadd.f32 %v96, %v620
  %622 = vmatprep.mubr.bf16.mxu0 0
  %623 = vmatmul.mubr.bf16.gmra.mrb[0].mxu0 %v169
  %v624 = vpop.f32.mrb[0].mxu0
  %v625 = vadd.f32 %v92, %v624
  %v626 = vpop.f32.mrb[0].mxu0
  %v627 = vadd.f32 %v96, %v626
  %v628 = vpop.f32.mrb[0].mxu0
  %v629 = vadd.f32 %v92, %v628
  %v630 = vpop.f32.mrb[0].mxu0
  %v631 = vadd.f32 %v96, %v630
  %632 = vmatprep.mubr.bf16.mxu0 0
  %633 = vmatmul.mubr.bf16.gmra.mrb[0].mxu0 %v170
  %v634 = vpop.f32.mrb[0].mxu0
  %v635 = vadd.f32 %v92, %v634
  %v636 = vpop.f32.mrb[0].mxu0
  %v637 = vadd.f32 %v96, %v636
  %v638 = vpop.f32.mrb[0].mxu0
  %v639 = vadd.f32 %v92, %v638
  %v640 = vpop.f32.mrb[0].mxu0
  %v641 = vadd.f32 %v96, %v640
  %642 = vmatprep.mubr.bf16.mxu0 0
  %643 = vmatmul.mubr.bf16.gmra.mrb[0].mxu0 %v171
  %v644 = vpop.f32.mrb[0].mxu0
  %v645 = vadd.f32 %v92, %v644
  %v646 = vpop.f32.mrb[0].mxu0
  %v647 = vadd.f32 %v96, %v646
  %v648 = vpop.f32.mrb[0].mxu0
  %v649 = vadd.f32 %v92, %v648
  %v650 = vpop.f32.mrb[0].mxu0
  %v651 = vadd.f32 %v96, %v650
  %652 = vmatprep.mubr.bf16.mxu0 0
  %653 = vmatmul.mubr.bf16.gmra.mrb[0].mxu0 %v172
  %v654 = vpop.f32.mrb[0].mxu0
  %v655 = vadd.f32 %v92, %v654
  %v656 = vpop.f32.mrb[0].mxu0
  %v657 = vadd.f32 %v96, %v656
  %v658 = vpop.f32.mrb[0].mxu0
  %v659 = vadd.f32 %v92, %v658
  %v660 = vpop.f32.mrb[0].mxu0
  %v661 = vadd.f32 %v96, %v660
  %662 = vmatprep.mubr.bf16.mxu0 0
  %663 = vmatmul.mubr.bf16.gmra.mrb[0].mxu0 %v173
  %v664 = vpop.f32.mrb[0].mxu0
  %v665 = vadd.f32 %v92, %v664
  %v666 = vpop.f32.mrb[0].mxu0
  %v667 = vadd.f32 %v96, %v666
  %v668 = vpop.f32.mrb[0].mxu0
  %v669 = vadd.f32 %v92, %v668
  %v670 = vpop.f32.mrb[0].mxu0
  %v671 = vadd.f32 %v96, %v670
  %672 = vmatprep.mubr.bf16.mxu0 0
  %673 = vmatmul.mubr.bf16.gmra.mrb[0].mxu0 %v174
  %v674 = vpop.f32.mrb[0].mxu0
  %v675 = vadd.f32 %v92, %v674
  %v676 = vpop.f32.mrb[0].mxu0
  %v677 = vadd.f32 %v96, %v676
  %v678 = vpop.f32.mrb[0].mxu0
  %v679 = vadd.f32 %v92, %v678
  %v680 = vpop.f32.mrb[0].mxu0
  %v681 = vadd.f32 %v96, %v680
  %682 = vmatprep.mubr.bf16.mxu0 0
  %683 = vmatmul.mubr.bf16.gmra.mrb[0].mxu0 %v175
  %v684 = vpop.f32.mrb[0].mxu0
  %v685 = vadd.f32 %v92, %v684
  %v686 = vpop.f32.mrb[0].mxu0
  %v687 = vadd.f32 %v96, %v686
  %v688 = vpop.f32.mrb[0].mxu0
  %v689 = vadd.f32 %v92, %v688
  %v690 = vpop.f32.mrb[0].mxu0
  %v691 = vadd.f32 %v96, %v690
  %692 = vmatprep.mubr.bf16.mxu0 0
  %693 = vmatmul.mubr.bf16.gmra.mrb[0].mxu0 %v176
  %v694 = vpop.f32.mrb[0].mxu0
  %v695 = vadd.f32 %v92, %v694
  %v696 = vpop.f32.mrb[0].mxu0
  %v697 = vadd.f32 %v96, %v696
  %v698 = vpop.f32.mrb[0].mxu0
  %v699 = vadd.f32 %v92, %v698
  %v700 = vpop.f32.mrb[0].mxu0
  %v701 = vadd.f32 %v96, %v700
  %702 = vmatprep.mubr.bf16.mxu0 0
  %703 = vmatmul.mubr.bf16.gmra.mrb[0].mxu0 %v177
  %v704 = vpop.f32.mrb[0].mxu0
  %v705 = vadd.f32 %v92, %v704
  %v706 = vpop.f32.mrb[0].mxu0
  %v707 = vadd.f32 %v96, %v706
  %v708 = vpop.f32.mrb[0].mxu0
  %v709 = vadd.f32 %v92, %v708
  %v710 = vpop.f32.mrb[0].mxu0
  %v711 = vadd.f32 %v96, %v710
  %712 = vmatprep.mubr.bf16.mxu0 0
  %713 = vmatmul.mubr.bf16.gmra.mrb[0].mxu0 %v178
  %v714 = vpop.f32.mrb[0].mxu0
  %v715 = vadd.f32 %v92, %v714
  %v716 = vpop.f32.mrb[0].mxu0
  %v717 = vadd.f32 %v96, %v716
  %v718 = vpop.f32.mrb[0].mxu0
  %v719 = vadd.f32 %v92, %v718
  %v720 = vpop.f32.mrb[0].mxu0
  %v721 = vadd.f32 %v96, %v720
  %722 = vmatprep.mubr.bf16.mxu0 0
  %723 = vmatmul.mubr.bf16.gmra.mrb[0].mxu0 %v179
  %v724 = vpop.f32.mrb[0].mxu0
  %v725 = vadd.f32 %v92, %v724
  %v726 = vpop.f32.mrb[0].mxu0
  %v727 = vadd.f32 %v96, %v726
  %v728 = vpop.f32.mrb[0].mxu0
  %v729 = vadd.f32 %v92, %v728
  %v730 = vpop.f32.mrb[0].mxu0
  %v731 = vadd.f32 %v96, %v730
  %732 = vmatprep.mubr.bf16.mxu0 0
  %733 = vmatmul.mubr.bf16.gmra.mrb[0].mxu0 %v180
  %v734 = vpop.f32.mrb[0].mxu0
  %v735 = vadd.f32 %v92, %v734
  %v736 = vpop.f32.mrb[0].mxu0
  %v737 = vadd.f32 %v96, %v736
  %v738 = vpop.f32.mrb[0].mxu0
  %v739 = vadd.f32 %v92, %v738
  %v740 = vpop.f32.mrb[0].mxu0
  %v741 = vadd.f32 %v96, %v740
  %742 = vdwg.mxu0
  %743 = vst [vmem:[%s3] sm:$0xff] %v392
  %744 = vst [vmem:[%s3 + $0x8] sm:$0xff] %v394
  %745 = vst [vmem:[%s3 + $0x10] sm:$0xff] %v585
  %746 = vst [vmem:[%s3 + $0x18] sm:$0xff] %v587
  %747 = vst [vmem:[%s3 + $0x20] sm:$0xff] %v396
  %748 = vst [vmem:[%s3 + $0x28] sm:$0xff] %v398
  %749 = vst [vmem:[%s3 + $0x30] sm:$0xff] %v589
  %750 = vst [vmem:[%s3 + $0x38] sm:$0xff] %v591
  %751 = vst [vmem:[%s3 + $0x40] sm:$0xff] %v402
  %752 = vst [vmem:[%s3 + $0x48] sm:$0xff] %v404
  %753 = vst [vmem:[%s3 + $0x50] sm:$0xff] %v595
  %754 = vst [vmem:[%s3 + $0x58] sm:$0xff] %v597
  %755 = vst [vmem:[%s3 + $0x60] sm:$0xff] %v406
  %756 = vst [vmem:[%s3 + $0x68] sm:$0xff] %v408
  %757 = vst [vmem:[%s3 + $0x70] sm:$0xff] %v599
  %758 = vst [vmem:[%s3 + $0x78] sm:$0xff] %v601
  %759 = vst [vmem:[%s3 + $0x80] sm:$0xff] %v412
  %760 = vst [vmem:[%s3 + $0x88] sm:$0xff] %v414
  %761 = vst [vmem:[%s3 + $0x90] sm:$0xff] %v605
  %762 = vst [vmem:[%s3 + $0x98] sm:$0xff] %v607
  %763 = vst [vmem:[%s3 + $0xa0] sm:$0xff] %v416
  %764 = vst [vmem:[%s3 + $0xa8] sm:$0xff] %v418
  %765 = vst [vmem:[%s3 + $0xb0] sm:$0xff] %v609
  %766 = vst [vmem:[%s3 + $0xb8] sm:$0xff] %v611
  %767 = vst [vmem:[%s3 + $0xc0] sm:$0xff] %v422
  %768 = vst [vmem:[%s3 + $0xc8] sm:$0xff] %v424
  %769 = vst [vmem:[%s3 + $0xd0] sm:$0xff] %v615
  %770 = vst [vmem:[%s3 + $0xd8] sm:$0xff] %v617
  %771 = vst [vmem:[%s3 + $0xe0] sm:$0xff] %v426
  %772 = vst [vmem:[%s3 + $0xe8] sm:$0xff] %v428
  %773 = vst [vmem:[%s3 + $0xf0] sm:$0xff] %v619
  %774 = vst [vmem:[%s3 + $0xf8] sm:$0xff] %v621
  %775 = vst [vmem:[%s3 + $0x100] sm:$0xff] %v432
  %776 = vst [vmem:[%s3 + $0x108] sm:$0xff] %v434
  %777 = vst [vmem:[%s3 + $0x110] sm:$0xff] %v625
  %778 = vst [vmem:[%s3 + $0x118] sm:$0xff] %v627
  %779 = vst [vmem:[%s3 + $0x120] sm:$0xff] %v436
  %780 = vst [vmem:[%s3 + $0x128] sm:$0xff] %v438
  %781 = vst [vmem:[%s3 + $0x130] sm:$0xff] %v629
  %782 = vst [vmem:[%s3 + $0x138] sm:$0xff] %v631
  %783 = vst [vmem:[%s3 + $0x140] sm:$0xff] %v442
  %784 = vst [vmem:[%s3 + $0x148] sm:$0xff] %v444
  %785 = vst [vmem:[%s3 + $0x150] sm:$0xff] %v635
  %786 = vst [vmem:[%s3 + $0x158] sm:$0xff] %v637
  %787 = vst [vmem:[%s3 + $0x160] sm:$0xff] %v446
  %788 = vst [vmem:[%s3 + $0x168] sm:$0xff] %v448
  %789 = vst [vmem:[%s3 + $0x170] sm:$0xff] %v639
  %790 = vst [vmem:[%s3 + $0x178] sm:$0xff] %v641
  %791 = vst [vmem:[%s3 + $0x180] sm:$0xff] %v452
  %792 = vst [vmem:[%s3 + $0x188] sm:$0xff] %v454
  %793 = vst [vmem:[%s3 + $0x190] sm:$0xff] %v645
  %794 = vst [vmem:[%s3 + $0x198] sm:$0xff] %v647
  %795 = vst [vmem:[%s3 + $0x1a0] sm:$0xff] %v456
  %796 = vst [vmem:[%s3 + $0x1a8] sm:$0xff] %v458
  %797 = vst [vmem:[%s3 + $0x1b0] sm:$0xff] %v649
  %798 = vst [vmem:[%s3 + $0x1b8] sm:$0xff] %v651
  %799 = vst [vmem:[%s3 + $0x1c0] sm:$0xff] %v462
  %800 = vst [vmem:[%s3 + $0x1c8] sm:$0xff] %v464
  %801 = vst [vmem:[%s3 + $0x1d0] sm:$0xff] %v655
  %802 = vst [vmem:[%s3 + $0x1d8] sm:$0xff] %v657
  %803 = vst [vmem:[%s3 + $0x1e0] sm:$0xff] %v466
  %804 = vst [vmem:[%s3 + $0x1e8] sm:$0xff] %v468
  %805 = vst [vmem:[%s3 + $0x1f0] sm:$0xff] %v659
  %806 = vst [vmem:[%s3 + $0x1f8] sm:$0xff] %v661
  %807 = vst [vmem:[%s3 + $0x200] sm:$0xff] %v472
  %808 = vst [vmem:[%s3 + $0x208] sm:$0xff] %v474
  %809 = vst [vmem:[%s3 + $0x210] sm:$0xff] %v665
  %810 = vst [vmem:[%s3 + $0x218] sm:$0xff] %v667
  %811 = vst [vmem:[%s3 + $0x220] sm:$0xff] %v476
  %812 = vst [vmem:[%s3 + $0x228] sm:$0xff] %v478
  %813 = vst [vmem:[%s3 + $0x230] sm:$0xff] %v669
  %814 = vst [vmem:[%s3 + $0x238] sm:$0xff] %v671
  %815 = vst [vmem:[%s3 + $0x240] sm:$0xff] %v482
  %816 = vst [vmem:[%s3 + $0x248] sm:$0xff] %v484
  %817 = vst [vmem:[%s3 + $0x250] sm:$0xff] %v675
  %818 = vst [vmem:[%s3 + $0x258] sm:$0xff] %v677
  %819 = vst [vmem:[%s3 + $0x260] sm:$0xff] %v486
  %820 = vst [vmem:[%s3 + $0x268] sm:$0xff] %v488
  %821 = vst [vmem:[%s3 + $0x270] sm:$0xff] %v679
  %822 = vst [vmem:[%s3 + $0x278] sm:$0xff] %v681
  %823 = vst [vmem:[%s3 + $0x280] sm:$0xff] %v492
  %824 = vst [vmem:[%s3 + $0x288] sm:$0xff] %v494
  %825 = vst [vmem:[%s3 + $0x290] sm:$0xff] %v685
  %826 = vst [vmem:[%s3 + $0x298] sm:$0xff] %v687
  %827 = vst [vmem:[%s3 + $0x2a0] sm:$0xff] %v496
  %828 = vst [vmem:[%s3 + $0x2a8] sm:$0xff] %v498
  %829 = vst [vmem:[%s3 + $0x2b0] sm:$0xff] %v689
  %830 = vst [vmem:[%s3 + $0x2b8] sm:$0xff] %v691
  %831 = vst [vmem:[%s3 + $0x2c0] sm:$0xff] %v502
  %832 = vst [vmem:[%s3 + $0x2c8] sm:$0xff] %v504
  %833 = vst [vmem:[%s3 + $0x2d0] sm:$0xff] %v695
  %834 = vst [vmem:[%s3 + $0x2d8] sm:$0xff] %v697
  %835 = vst [vmem:[%s3 + $0x2e0] sm:$0xff] %v506
  %836 = vst [vmem:[%s3 + $0x2e8] sm:$0xff] %v508
  %837 = vst [vmem:[%s3 + $0x2f0] sm:$0xff] %v699
  %838 = vst [vmem:[%s3 + $0x2f8] sm:$0xff] %v701
  %839 = vst [vmem:[%s3 + $0x300] sm:$0xff] %v512
  %840 = vst [vmem:[%s3 + $0x308] sm:$0xff] %v514
  %841 = vst [vmem:[%s3 + $0x310] sm:$0xff] %v705
  %842 = vst [vmem:[%s3 + $0x318] sm:$0xff] %v707
  %843 = vst [vmem:[%s3 + $0x320] sm:$0xff] %v516
  %844 = vst [vmem:[%s3 + $0x328] sm:$0xff] %v518
  %845 = vst [vmem:[%s3 + $0x330] sm:$0xff] %v709
  %846 = vst [vmem:[%s3 + $0x338] sm:$0xff] %v711
  %847 = vst [vmem:[%s3 + $0x340] sm:$0xff] %v522
  %848 = vst [vmem:[%s3 + $0x348] sm:$0xff] %v524
  %849 = vst [vmem:[%s3 + $0x350] sm:$0xff] %v715
  %850 = vst [vmem:[%s3 + $0x358] sm:$0xff] %v717
  %851 = vst [vmem:[%s3 + $0x360] sm:$0xff] %v526
  %852 = vst [vmem:[%s3 + $0x368] sm:$0xff] %v528
  %853 = vst [vmem:[%s3 + $0x370] sm:$0xff] %v719
  %854 = vst [vmem:[%s3 + $0x378] sm:$0xff] %v721
  %855 = vst [vmem:[%s3 + $0x380] sm:$0xff] %v532
  %856 = vst [vmem:[%s3 + $0x388] sm:$0xff] %v534
  %857 = vst [vmem:[%s3 + $0x390] sm:$0xff] %v725
  %858 = vst [vmem:[%s3 + $0x398] sm:$0xff] %v727
  %859 = vst [vmem:[%s3 + $0x3a0] sm:$0xff] %v536
  %860 = vst [vmem:[%s3 + $0x3a8] sm:$0xff] %v538
  %861 = vst [vmem:[%s3 + $0x3b0] sm:$0xff] %v729
  %862 = vst [vmem:[%s3 + $0x3b8] sm:$0xff] %v731
  %863 = vst [vmem:[%s3 + $0x3c0] sm:$0xff] %v542
  %864 = vst [vmem:[%s3 + $0x3c8] sm:$0xff] %v544
  %865 = vst [vmem:[%s3 + $0x3d0] sm:$0xff] %v735
  %866 = vst [vmem:[%s3 + $0x3d8] sm:$0xff] %v737
  %867 = vst [vmem:[%s3 + $0x3e0] sm:$0xff] %v546
  %868 = vst [vmem:[%s3 + $0x3e8] sm:$0xff] %v548
  %869 = vst [vmem:[%s3 + $0x3f0] sm:$0xff] %v739
  %870 = vst [vmem:[%s3 + $0x3f8] sm:$0xff] %v741
  // Predicated region
  $region14: #{_lambda_.3} parent=0 // pred_check
    _
  $region15: #{_lambda_.3} parent=0 // pred_check_branch
    %872 = sbr.rel (0) target = $region17
  $region16: #{_lambda_.3} parent=0 // pred_region
    _
  $region17: #{_lambda_.3} parent=0 // pred_fallthru
    _
  // Predicated region
  $region18: #{_lambda_.3} parent=0 // pred_check
    _
  $region19: #{_lambda_.3} parent=0 // pred_check_branch
    %874 = sbr.rel (0) target = $region21
  $region20: #{_lambda_.3} parent=0 // pred_region
    _
  $region21: #{_lambda_.3} parent=0 // pred_fallthru
    _

// kernel: _lambda_.5
$region0: #{_lambda_.5}
  #allocation0 [shape = 'u32[]', space=smem, size = 0x4, offset = 0x4, fixed_abs, tag = 'smem constant byte address 0x4 - core index']
  #allocation1 [shape = 'u32[144,128]{1,0:T(1,128)}', space=vmem, size = 0x12000, scoped, tag = 'internal scratch']
  %s0 = inlined_call_operand.vmem [shape: bf16[32,8,128], index: 0, kind: input, shape index: {}]
  %s1 = inlined_call_operand.vmem [shape: bf16[128,256], index: 1, kind: input, shape index: {}]
  %s2 = inlined_call_operand.vmem [shape: f32[1,256], index: 2, kind: input, shape index: {}]
  %s3 = inlined_call_operand.hbm [shape: f32[8,32,256], index: 3, kind: output, shape index: {}]
  %s4 = sld [smem:[#allocation0]]
  $region22: #{_lambda_.5} parent=0
    _
  %s6 = ssub.s32 1, %s4
  %s7 = scalar_select 0, %s6, %s4
  $region1: #{_lambda_.5} parent=0
    #allocation2 [shape = 'u8[262144]{0}', space=vmem, size = 0x40000, scoped, tag = 'output window, operand 0, single buffered']
    #allocation3 [shape = 's32[1]{0}', space=sflag, size = 0x4, scoped, tag = 'scoped memory for _lambda_.5']
    %8 = vsyncpa [#allocation3], 0
    // Predicated region
    $region2: #{_lambda_.5} parent=1 // pred_check
      _
    $region3: #{_lambda_.5} parent=1 // pred_check_branch
      %10 = sbr.rel (0) target = $region5
    $region4: #{_lambda_.5} parent=1 // pred_region
      _
    $region5: #{_lambda_.5} parent=1 // pred_fallthru
      _
    // Predicated region
    $region6: #{_lambda_.5} parent=1 // pred_check
      _
    $region7: #{_lambda_.5} parent=1 // pred_check_branch
      %12 = sbr.rel (0) target = $region9
    $region8: #{_lambda_.5} parent=1 // pred_region
      _
    $region9: #{_lambda_.5} parent=1 // pred_fallthru
      _
    // Predicated region
    $region10: #{_lambda_.5} parent=1 // pred_check
      _
    $region11: #{_lambda_.5} parent=1 // pred_check_branch
      %14 = sbr.rel (0) target = $region13
    $region12: #{_lambda_.5} parent=1 // pred_region
      _
    $region13: #{_lambda_.5} parent=1 // pred_fallthru
      _
    %v16 = vld [vmem:[%s1] sm:$0xff]
    %v17 = vld [vmem:[%s1 + $0x8] sm:$0xff]
    %v18 = vld [vmem:[%s1 + $0x10] sm:$0xff]
    %v19 = vld [vmem:[%s1 + $0x18] sm:$0xff]
    %v20 = vld [vmem:[%s1 + $0x20] sm:$0xff]
    %v21 = vld [vmem:[%s1 + $0x28] sm:$0xff]
    %v22 = vld [vmem:[%s1 + $0x30] sm:$0xff]
    %v23 = vld [vmem:[%s1 + $0x38] sm:$0xff]
    %v24 = vld [vmem:[%s1 + $0x40] sm:$0xff]
    %v25 = vld [vmem:[%s1 + $0x48] sm:$0xff]
    %v26 = vld [vmem:[%s1 + $0x50] sm:$0xff]
    %v27 = vld [vmem:[%s1 + $0x58] sm:$0xff]
    %v28 = vld [vmem:[%s1 + $0x60] sm:$0xff]
    %v29 = vld [vmem:[%s1 + $0x68] sm:$0xff]
    %v30 = vld [vmem:[%s1 + $0x70] sm:$0xff]
    %v31 = vld [vmem:[%s1 + $0x78] sm:$0xff]
    %v32 = vld [vmem:[%s2] sm:$0x3]
    %v33 = vld [vmem:[%s0] sm:$0x1]
    %v34 = vld [vmem:[%s0 + $0x4] sm:$0x1]
    %v35 = vld [vmem:[%s0 + $0x8] sm:$0x1]
    %v36 = vld [vmem:[%s0 + $0xc] sm:$0x1]
    %v37 = vld [vmem:[%s0 + $0x10] sm:$0x1]
    %v38 = vld [vmem:[%s0 + $0x14] sm:$0x1]
    %v39 = vld [vmem:[%s0 + $0x18] sm:$0x1]
    %v40 = vld [vmem:[%s0 + $0x1c] sm:$0x1]
    %v41 = vld [vmem:[%s0 + $0x20] sm:$0x1]
    %v42 = vld [vmem:[%s0 + $0x24] sm:$0x1]
    %v43 = vld [vmem:[%s0 + $0x28] sm:$0x1]
    %v44 = vld [vmem:[%s0 + $0x2c] sm:$0x1]
    %v45 = vld [vmem:[%s0 + $0x30] sm:$0x1]
    %v46 = vld [vmem:[%s0 + $0x34] sm:$0x1]
    %v47 = vld [vmem:[%s0 + $0x38] sm:$0x1]
    %v48 = vld [vmem:[%s0 + $0x3c] sm:$0x1]
    %v49 = vld [vmem:[%s0 + $0x40] sm:$0x1]
    %v50 = vld [vmem:[%s0 + $0x44] sm:$0x1]
    %v51 = vld [vmem:[%s0 + $0x48] sm:$0x1]
    %v52 = vld [vmem:[%s0 + $0x4c] sm:$0x1]
    %v53 = vld [vmem:[%s0 + $0x50] sm:$0x1]
    %v54 = vld [vmem:[%s0 + $0x54] sm:$0x1]
    %v55 = vld [vmem:[%s0 + $0x58] sm:$0x1]
    %v56 = vld [vmem:[%s0 + $0x5c] sm:$0x1]
    %v57 = vld [vmem:[%s0 + $0x60] sm:$0x1]
    %v58 = vld [vmem:[%s0 + $0x64] sm:$0x1]
    %v59 = vld [vmem:[%s0 + $0x68] sm:$0x1]
    %v60 = vld [vmem:[%s0 + $0x6c] sm:$0x1]
    %v61 = vld [vmem:[%s0 + $0x70] sm:$0x1]
    %v62 = vld [vmem:[%s0 + $0x74] sm:$0x1]
    %v63 = vld [vmem:[%s0 + $0x78] sm:$0x1]
    %v64 = vld [vmem:[%s0 + $0x7c] sm:$0x1]
    %v66 = vlaneseq
    %v67 = vshrl.u32 %v66, 7
    %v68 = vsub.s32 0, %v67
    %v69 = vrot.slane %v32, %v68
    %v70 = vlaneseq
    %v71 = vshrl.u32 %v70, 7
    %v72 = vsub.s32 1, %v71
    %v73 = vrot.slane %v32, %v72
    %v108 = vunpack.c.l.b16 %v33
    %v109 = vunpack.c.l.b16 %v34
    %v110 = vunpack.c.l.b16 %v35
    %v111 = vunpack.c.l.b16 %v36
    %v112 = vunpack.c.l.b16 %v37
    %v113 = vunpack.c.l.b16 %v38
    %v114 = vunpack.c.l.b16 %v39
    %v115 = vunpack.c.l.b16 %v40
    %v116 = vunpack.c.l.b16 %v41
    %v117 = vunpack.c.l.b16 %v42
    %v118 = vunpack.c.l.b16 %v43
    %v119 = vunpack.c.l.b16 %v44
    %v120 = vunpack.c.l.b16 %v45
    %v121 = vunpack.c.l.b16 %v46
    %v122 = vunpack.c.l.b16 %v47
    %v123 = vunpack.c.l.b16 %v48
    %v124 = vunpack.c.l.b16 %v49
    %v125 = vunpack.c.l.b16 %v50
    %v126 = vunpack.c.l.b16 %v51
    %v127 = vunpack.c.l.b16 %v52
    %v128 = vunpack.c.l.b16 %v53
    %v129 = vunpack.c.l.b16 %v54
    %v130 = vunpack.c.l.b16 %v55
    %v131 = vunpack.c.l.b16 %v56
    %v132 = vunpack.c.l.b16 %v57
    %v133 = vunpack.c.l.b16 %v58
    %v134 = vunpack.c.l.b16 %v59
    %v135 = vunpack.c.l.b16 %v60
    %v136 = vunpack.c.l.b16 %v61
    %v137 = vunpack.c.l.b16 %v62
    %v138 = vunpack.c.l.b16 %v63
    %v139 = vunpack.c.l.b16 %v64
    %v140 = vpack.c.b16 %v108, %v108
    %v141 = vpack.c.b16 %v109, %v109
    %v142 = vpack.c.b16 %v110, %v110
    %v143 = vpack.c.b16 %v111, %v111
    %v144 = vpack.c.b16 %v112, %v112
    %v145 = vpack.c.b16 %v113, %v113
    %v146 = vpack.c.b16 %v114, %v114
    %v147 = vpack.c.b16 %v115, %v115
    %v148 = vpack.c.b16 %v116, %v116
    %v149 = vpack.c.b16 %v117, %v117
    %v150 = vpack.c.b16 %v118, %v118
    %v151 = vpack.c.b16 %v119, %v119
    %v152 = vpack.c.b16 %v120, %v120
    %v153 = vpack.c.b16 %v121, %v121
    %v154 = vpack.c.b16 %v122, %v122
    %v155 = vpack.c.b16 %v123, %v123
    %v156 = vpack.c.b16 %v124, %v124
    %v157 = vpack.c.b16 %v125, %v125
    %v158 = vpack.c.b16 %v126, %v126
    %v159 = vpack.c.b16 %v127, %v127
    %v160 = vpack.c.b16 %v128, %v128
    %v161 = vpack.c.b16 %v129, %v129
    %v162 = vpack.c.b16 %v130, %v130
    %v163 = vpack.c.b16 %v131, %v131
    %v164 = vpack.c.b16 %v132, %v132
    %v165 = vpack.c.b16 %v133, %v133
    %v166 = vpack.c.b16 %v134, %v134
    %v167 = vpack.c.b16 %v135, %v135
    %v168 = vpack.c.b16 %v136, %v136
    %v169 = vpack.c.b16 %v137, %v137
    %v170 = vpack.c.b16 %v138, %v138
    %v171 = vpack.c.b16 %v139, %v139
    %v172 = vunpack.c.l.b16 %v140
    %v173 = vunpack.c.l.b16 %v141
    %v174 = vunpack.c.l.b16 %v142
    %v175 = vunpack.c.l.b16 %v143
    %v176 = vunpack.c.l.b16 %v144
    %v177 = vunpack.c.l.b16 %v145
    %v178 = vunpack.c.l.b16 %v146
    %v179 = vunpack.c.l.b16 %v147
    %v180 = vunpack.c.l.b16 %v148
    %v181 = vunpack.c.l.b16 %v149
    %v182 = vunpack.c.l.b16 %v150
    %v183 = vunpack.c.l.b16 %v151
    %v184 = vunpack.c.l.b16 %v152
    %v185 = vunpack.c.l.b16 %v153
    %v186 = vunpack.c.l.b16 %v154
    %v187 = vunpack.c.l.b16 %v155
    %v188 = vunpack.c.l.b16 %v156
    %v189 = vunpack.c.l.b16 %v157
    %v190 = vunpack.c.l.b16 %v158
    %v191 = vunpack.c.l.b16 %v159
    %v192 = vunpack.c.l.b16 %v160
    %v193 = vunpack.c.l.b16 %v161
    %v194 = vunpack.c.l.b16 %v162
    %v195 = vunpack.c.l.b16 %v163
    %v196 = vunpack.c.l.b16 %v164
    %v197 = vunpack.c.l.b16 %v165
    %v198 = vunpack.c.l.b16 %v166
    %v199 = vunpack.c.l.b16 %v167
    %v200 = vunpack.c.l.b16 %v168
    %v201 = vunpack.c.l.b16 %v169
    %v202 = vunpack.c.l.b16 %v170
    %v203 = vunpack.c.l.b16 %v171
    %v204 = vrot.slane %v173, 7
    %vm205 = vcmask 1041409
    %v206 = vsel %vm205, %v204, %v172
    %v207 = vrot.slane %v174, 6
    %vm208 = vcmask 1042434
    %v209 = vsel %vm208, %v207, %v206
    %v210 = vrot.slane %v175, 5
    %vm211 = vcmask 1043459
    %v212 = vsel %vm211, %v210, %v209
    %v213 = vrot.slane %v176, 4
    %vm214 = vcmask 1044484
    %v215 = vsel %vm214, %v213, %v212
    %v216 = vrot.slane %v177, 3
    %vm217 = vcmask 1045509
    %v218 = vsel %vm217, %v216, %v215
    %v219 = vrot.slane %v178, 2
    %vm220 = vcmask 1046534
    %v221 = vsel %vm220, %v219, %v218
    %v222 = vrot.slane %v179, 1
    %vm223 = vcmask 1047559
    %v224 = vsel %vm223, %v222, %v221
    %v225 = vrot.slane %v181, 7
    %v226 = vsel %vm205, %v225, %v180
    %v227 = vrot.slane %v182, 6
    %v228 = vsel %vm208, %v227, %v226
    %v229 = vrot.slane %v183, 5
    %v230 = vsel %vm211, %v229, %v228
    %v231 = vrot.slane %v184, 4
    %v232 = vsel %vm214, %v231, %v230
    %v233 = vrot.slane %v185, 3
    %v234 = vsel %vm217, %v233, %v232
    %v235 = vrot.slane %v186, 2
    %v236 = vsel %vm220, %v235, %v234
    %v237 = vrot.slane %v187, 1
    %v238 = vsel %vm223, %v237, %v236
    %v239 = vrot.slane %v189, 7
    %v240 = vsel %vm205, %v239, %v188
    %v241 = vrot.slane %v190, 6
    %v242 = vsel %vm208, %v241, %v240
    %v243 = vrot.slane %v191, 5
    %v244 = vsel %vm211, %v243, %v242
    %v245 = vrot.slane %v192, 4
    %v246 = vsel %vm214, %v245, %v244
    %v247 = vrot.slane %v193, 3
    %v248 = vsel %vm217, %v247, %v246
    %v249 = vrot.slane %v194, 2
    %v250 = vsel %vm220, %v249, %v248
    %v251 = vrot.slane %v195, 1
    %v252 = vsel %vm223, %v251, %v250
    %v253 = vrot.slane %v197, 7
    %v254 = vsel %vm205, %v253, %v196
    %v255 = vrot.slane %v198, 6
    %v256 = vsel %vm208, %v255, %v254
    %v257 = vrot.slane %v199, 5
    %v258 = vsel %vm211, %v257, %v256
    %v259 = vrot.slane %v200, 4
    %v260 = vsel %vm214, %v259, %v258
    %v261 = vrot.slane %v201, 3
    %v262 = vsel %vm217, %v261, %v260
    %v263 = vrot.slane %v202, 2
    %v264 = vsel %vm220, %v263, %v262
    %v265 = vrot.slane %v203, 1
    %v266 = vsel %vm223, %v265, %v264
    %v267 = vpack.c.b16 %v238, %v224
    %v268 = vpack.c.b16 %v266, %v252
    %v287 = vunpack.c.l.b16 %v16
    %v288 = vunpack.c.h.b16 %v16
    %v289 = vunpack.c.l.b16 %v17
    %v290 = vunpack.c.h.b16 %v17
    %v291 = vunpack.c.l.b16 %v18
    %v292 = vunpack.c.h.b16 %v18
    %v293 = vunpack.c.l.b16 %v19
    %v294 = vunpack.c.h.b16 %v19
    %v295 = vunpack.c.l.b16 %v20
    %v296 = vunpack.c.h.b16 %v20
    %v297 = vunpack.c.l.b16 %v21
    %v298 = vunpack.c.h.b16 %v21
    %v299 = vunpack.c.l.b16 %v22
    %v300 = vunpack.c.h.b16 %v22
    %v301 = vunpack.c.l.b16 %v23
    %v302 = vunpack.c.h.b16 %v23
    %v303 = vunpack.c.l.b16 %v24
    %v304 = vunpack.c.h.b16 %v24
    %v305 = vunpack.c.l.b16 %v25
    %v306 = vunpack.c.h.b16 %v25
    %v307 = vunpack.c.l.b16 %v26
    %v308 = vunpack.c.h.b16 %v26
    %v309 = vunpack.c.l.b16 %v27
    %v310 = vunpack.c.h.b16 %v27
    %v311 = vunpack.c.l.b16 %v28
    %v312 = vunpack.c.h.b16 %v28
    %v313 = vunpack.c.l.b16 %v29
    %v314 = vunpack.c.h.b16 %v29
    %v315 = vunpack.c.l.b16 %v30
    %v316 = vunpack.c.h.b16 %v30
    %v317 = vunpack.c.l.b16 %v31
    %v318 = vunpack.c.h.b16 %v31
    %v319 = vpack.c.b16 %v289, %v287
    %v320 = vpack.c.b16 %v290, %v288
    %v321 = vpack.c.b16 %v293, %v291
    %v322 = vpack.c.b16 %v294, %v292
    %v323 = vpack.c.b16 %v297, %v295
    %v324 = vpack.c.b16 %v298, %v296
    %v325 = vpack.c.b16 %v301, %v299
    %v326 = vpack.c.b16 %v302, %v300
    %v327 = vpack.c.b16 %v305, %v303
    %v328 = vpack.c.b16 %v306, %v304
    %v329 = vpack.c.b16 %v309, %v307
    %v330 = vpack.c.b16 %v310, %v308
    %v331 = vpack.c.b16 %v313, %v311
    %v332 = vpack.c.b16 %v314, %v312
    %v333 = vpack.c.b16 %v317, %v315
    %v334 = vpack.c.b16 %v318, %v316
    %351 = vmatprep.subr.bf16.mxu0 %v320
    %352 = vmatpush1.bf16.msra.mxu0 %v319
    %353 = vmatprep.subr.bf16.mxu0 %v322
    %354 = vmatpush1.bf16.msra.mxu0 %v321
    %355 = vmatprep.subr.bf16.mxu0 %v324
    %356 = vmatpush1.bf16.msra.mxu0 %v323
    %357 = vmatprep.subr.bf16.mxu0 %v326
    %358 = vmatpush1.bf16.msra.mxu0 %v325
    %359 = vmatprep.subr.bf16.mxu0 %v328
    %360 = vmatpush1.bf16.msra.mxu0 %v327
    %361 = vmatprep.subr.bf16.mxu0 %v330
    %362 = vmatpush1.bf16.msra.mxu0 %v329
    %363 = vmatprep.subr.bf16.mxu0 %v332
    %364 = vmatpush1.bf16.msra.mxu0 %v331
    %365 = vmatprep.subr.bf16.mxu0 %v334
    %366 = vmatpush1.bf16.msra.mxu0 %v333
    %367 = vmatprep.subr.bf16.mxu0 0
    %368 = vmatpush1.bf16.msra.mxu0 0
    %369 = vmatprep.subr.bf16.mxu0 0
    %370 = vmatpush1.bf16.msra.mxu0 0
    %371 = vmatprep.subr.bf16.mxu0 0
    %372 = vmatpush1.bf16.msra.mxu0 0
    %373 = vmatprep.subr.bf16.mxu0 0
    %374 = vmatpush1.bf16.msra.mxu0 0
    %375 = vmatprep.subr.bf16.mxu0 0
    %376 = vmatpush1.bf16.msra.mxu0 0
    %377 = vmatprep.subr.bf16.mxu0 0
    %378 = vmatpush1.bf16.msra.mxu0 0
    %379 = vmatprep.subr.bf16.mxu0 0
    %380 = vmatpush1.bf16.msra.mxu0 0
    %381 = vmatprep.subr.bf16.mxu0 0
    %382 = vmatpush1.bf16.msra.mxu0 0
    %383 = vmatprep.mubr.bf16.mxu0 0
    %384 = vmatmul.mubr.bf16.gmra.mrb[0].mxu0 %v267
    %v385 = vpop.f32.mrb[0].mxu0
    %v386 = vadd.f32 %v69, %v385
    %v387 = vpop.f32.mrb[0].mxu0
    %v388 = vadd.f32 %v73, %v387
    %v389 = vpop.f32.mrb[0].mxu0
    %v390 = vadd.f32 %v69, %v389
    %v391 = vpop.f32.mrb[0].mxu0
    %v392 = vadd.f32 %v73, %v391
    %393 = vmatprep.mubr.bf16.mxu0 0
    %394 = vmatmul.mubr.bf16.gmra.mrb[0].mxu0 %v268
    %v395 = vpop.f32.mrb[0].mxu0
    %v396 = vadd.f32 %v69, %v395
    %v397 = vpop.f32.mrb[0].mxu0
    %v398 = vadd.f32 %v73, %v397
    %v399 = vpop.f32.mrb[0].mxu0
    %v400 = vadd.f32 %v69, %v399
    %v401 = vpop.f32.mrb[0].mxu0
    %v402 = vadd.f32 %v73, %v401
    %403 = vdwg.mxu0
    %404 = vst [vmem:[#allocation2] sm:$0xff] %v386
    %405 = vst [vmem:[#allocation2 + $0x8] sm:$0xff] %v388
    %406 = vst [vmem:[#allocation2 + $0x10] sm:$0xff] %v390
    %407 = vst [vmem:[#allocation2 + $0x18] sm:$0xff] %v392
    %408 = vst [vmem:[#allocation2 + $0x20] sm:$0xff] %v396
    %409 = vst [vmem:[#allocation2 + $0x28] sm:$0xff] %v398
    %410 = vst [vmem:[#allocation2 + $0x30] sm:$0xff] %v400
    %411 = vst [vmem:[#allocation2 + $0x38] sm:$0xff] %v402
    %v412 = vld [vmem:[%s0] sm:$0x1]
    %v413 = vld [vmem:[%s0 + $0x4] sm:$0x1]
    %v414 = vld [vmem:[%s0 + $0x8] sm:$0x1]
    %v415 = vld [vmem:[%s0 + $0xc] sm:$0x1]
    %v416 = vld [vmem:[%s0 + $0x10] sm:$0x1]
    %v417 = vld [vmem:[%s0 + $0x14] sm:$0x1]
    %v418 = vld [vmem:[%s0 + $0x18] sm:$0x1]
    %v419 = vld [vmem:[%s0 + $0x1c] sm:$0x1]
    %v420 = vld [vmem:[%s0 + $0x20] sm:$0x1]
    %v421 = vld [vmem:[%s0 + $0x24] sm:$0x1]
    %v422 = vld [vmem:[%s0 + $0x28] sm:$0x1]
    %v423 = vld [vmem:[%s0 + $0x2c] sm:$0x1]
    %v424 = vld [vmem:[%s0 + $0x30] sm:$0x1]
    %v425 = vld [vmem:[%s0 + $0x34] sm:$0x1]
    %v426 = vld [vmem:[%s0 + $0x38] sm:$0x1]
    %v427 = vld [vmem:[%s0 + $0x3c] sm:$0x1]
    %v428 = vld [vmem:[%s0 + $0x40] sm:$0x1]
    %v429 = vld [vmem:[%s0 + $0x44] sm:$0x1]
    %v430 = vld [vmem:[%s0 + $0x48] sm:$0x1]
    %v431 = vld [vmem:[%s0 + $0x4c] sm:$0x1]
    %v432 = vld [vmem:[%s0 + $0x50] sm:$0x1]
    %v433 = vld [vmem:[%s0 + $0x54] sm:$0x1]
    %v434 = vld [vmem:[%s0 + $0x58] sm:$0x1]
    %v435 = vld [vmem:[%s0 + $0x5c] sm:$0x1]
    %v436 = vld [vmem:[%s0 + $0x60] sm:$0x1]
    %v437 = vld [vmem:[%s0 + $0x64] sm:$0x1]
    %v438 = vld [vmem:[%s0 + $0x68] sm:$0x1]
    %v439 = vld [vmem:[%s0 + $0x6c] sm:$0x1]
    %v440 = vld [vmem:[%s0 + $0x70] sm:$0x1]
    %v441 = vld [vmem:[%s0 + $0x74] sm:$0x1]
    %v442 = vld [vmem:[%s0 + $0x78] sm:$0x1]
    %v443 = vld [vmem:[%s0 + $0x7c] sm:$0x1]
    %v476 = vunpack.c.l.b16 %v412
    %v477 = vunpack.c.l.b16 %v413
    %v478 = vunpack.c.l.b16 %v414
    %v479 = vunpack.c.l.b16 %v415
    %v480 = vunpack.c.l.b16 %v416
    %v481 = vunpack.c.l.b16 %v417
    %v482 = vunpack.c.l.b16 %v418
    %v483 = vunpack.c.l.b16 %v419
    %v484 = vunpack.c.l.b16 %v420
    %v485 = vunpack.c.l.b16 %v421
    %v486 = vunpack.c.l.b16 %v422
    %v487 = vunpack.c.l.b16 %v423
    %v488 = vunpack.c.l.b16 %v424
    %v489 = vunpack.c.l.b16 %v425
    %v490 = vunpack.c.l.b16 %v426
    %v491 = vunpack.c.l.b16 %v427
    %v492 = vunpack.c.l.b16 %v428
    %v493 = vunpack.c.l.b16 %v429
    %v494 = vunpack.c.l.b16 %v430
    %v495 = vunpack.c.l.b16 %v431
    %v496 = vunpack.c.l.b16 %v432
    %v497 = vunpack.c.l.b16 %v433
    %v498 = vunpack.c.l.b16 %v434
    %v499 = vunpack.c.l.b16 %v435
    %v500 = vunpack.c.l.b16 %v436
    %v501 = vunpack.c.l.b16 %v437
    %v502 = vunpack.c.l.b16 %v438
    %v503 = vunpack.c.l.b16 %v439
    %v504 = vunpack.c.l.b16 %v440
    %v505 = vunpack.c.l.b16 %v441
    %v506 = vunpack.c.l.b16 %v442
    %v507 = vunpack.c.l.b16 %v443
    %v508 = vpack.c.b16 %v476, %v476
    %v509 = vpack.c.b16 %v477, %v477
    %v510 = vpack.c.b16 %v478, %v478
    %v511 = vpack.c.b16 %v479, %v479
    %v512 = vpack.c.b16 %v480, %v480
    %v513 = vpack.c.b16 %v481, %v481
    %v514 = vpack.c.b16 %v482, %v482
    %v515 = vpack.c.b16 %v483, %v483
    %v516 = vpack.c.b16 %v484, %v484
    %v517 = vpack.c.b16 %v485, %v485
    %v518 = vpack.c.b16 %v486, %v486
    %v519 = vpack.c.b16 %v487, %v487
    %v520 = vpack.c.b16 %v488, %v488
    %v521 = vpack.c.b16 %v489, %v489
    %v522 = vpack.c.b16 %v490, %v490
    %v523 = vpack.c.b16 %v491, %v491
    %v524 = vpack.c.b16 %v492, %v492
    %v525 = vpack.c.b16 %v493, %v493
    %v526 = vpack.c.b16 %v494, %v494
    %v527 = vpack.c.b16 %v495, %v495
    %v528 = vpack.c.b16 %v496, %v496
    %v529 = vpack.c.b16 %v497, %v497
    %v530 = vpack.c.b16 %v498, %v498
    %v531 = vpack.c.b16 %v499, %v499
    %v532 = vpack.c.b16 %v500, %v500
    %v533 = vpack.c.b16 %v501, %v501
    %v534 = vpack.c.b16 %v502, %v502
    %v535 = vpack.c.b16 %v503, %v503
    %v536 = vpack.c.b16 %v504, %v504
    %v537 = vpack.c.b16 %v505, %v505
    %v538 = vpack.c.b16 %v506, %v506
    %v539 = vpack.c.b16 %v507, %v507
    %v540 = vunpack.c.l.b16 %v508
    %v541 = vunpack.c.l.b16 %v509
    %v542 = vunpack.c.l.b16 %v510
    %v543 = vunpack.c.l.b16 %v511
    %v544 = vunpack.c.l.b16 %v512
    %v545 = vunpack.c.l.b16 %v513
    %v546 = vunpack.c.l.b16 %v514
    %v547 = vunpack.c.l.b16 %v515
    %v548 = vunpack.c.l.b16 %v516
    %v549 = vunpack.c.l.b16 %v517
    %v550 = vunpack.c.l.b16 %v518
    %v551 = vunpack.c.l.b16 %v519
    %v552 = vunpack.c.l.b16 %v520
    %v553 = vunpack.c.l.b16 %v521
    %v554 = vunpack.c.l.b16 %v522
    %v555 = vunpack.c.l.b16 %v523
    %v556 = vunpack.c.l.b16 %v524
    %v557 = vunpack.c.l.b16 %v525
    %v558 = vunpack.c.l.b16 %v526
    %v559 = vunpack.c.l.b16 %v527
    %v560 = vunpack.c.l.b16 %v528
    %v561 = vunpack.c.l.b16 %v529
    %v562 = vunpack.c.l.b16 %v530
    %v563 = vunpack.c.l.b16 %v531
    %v564 = vunpack.c.l.b16 %v532
    %v565 = vunpack.c.l.b16 %v533
    %v566 = vunpack.c.l.b16 %v534
    %v567 = vunpack.c.l.b16 %v535
    %v568 = vunpack.c.l.b16 %v536
    %v569 = vunpack.c.l.b16 %v537
    %v570 = vunpack.c.l.b16 %v538
    %v571 = vunpack.c.l.b16 %v539
    %v572 = vrot.slane %v540, 1
    %v573 = vsel %vm205, %v541, %v572
    %v574 = vrot.slane %v542, 7
    %v575 = vsel %vm208, %v574, %v573
    %v576 = vrot.slane %v543, 6
    %v577 = vsel %vm211, %v576, %v575
    %v578 = vrot.slane %v544, 5
    %v579 = vsel %vm214, %v578, %v577
    %v580 = vrot.slane %v545, 4
    %v581 = vsel %vm217, %v580, %v579
    %v582 = vrot.slane %v546, 3
    %v583 = vsel %vm220, %v582, %v581
    %v584 = vrot.slane %v547, 2
    %v585 = vsel %vm223, %v584, %v583
    %v586 = vrot.slane %v548, 1
    %v587 = vsel %vm205, %v549, %v586
    %v588 = vrot.slane %v550, 7
    %v589 = vsel %vm208, %v588, %v587
    %v590 = vrot.slane %v551, 6
    %v591 = vsel %vm211, %v590, %v589
    %v592 = vrot.slane %v552, 5
    %v593 = vsel %vm214, %v592, %v591
    %v594 = vrot.slane %v553, 4
    %v595 = vsel %vm217, %v594, %v593
    %v596 = vrot.slane %v554, 3
    %v597 = vsel %vm220, %v596, %v595
    %v598 = vrot.slane %v555, 2
    %v599 = vsel %vm223, %v598, %v597
    %v600 = vrot.slane %v556, 1
    %v601 = vsel %vm205, %v557, %v600
    %v602 = vrot.slane %v558, 7
    %v603 = vsel %vm208, %v602, %v601
    %v604 = vrot.slane %v559, 6
    %v605 = vsel %vm211, %v604, %v603
    %v606 = vrot.slane %v560, 5
    %v607 = vsel %vm214, %v606, %v605
    %v608 = vrot.slane %v561, 4
    %v609 = vsel %vm217, %v608, %v607
    %v610 = vrot.slane %v562, 3
    %v611 = vsel %vm220, %v610, %v609
    %v612 = vrot.slane %v563, 2
    %v613 = vsel %vm223, %v612, %v611
    %v614 = vrot.slane %v564, 1
    %v615 = vsel %vm205, %v565, %v614
    %v616 = vrot.slane %v566, 7
    %v617 = vsel %vm208, %v616, %v615
    %v618 = vrot.slane %v567, 6
    %v619 = vsel %vm211, %v618, %v617
    %v620 = vrot.slane %v568, 5
    %v621 = vsel %vm214, %v620, %v619
    %v622 = vrot.slane %v569, 4
    %v623 = vsel %vm217, %v622, %v621
    %v624 = vrot.slane %v570, 3
    %v625 = vsel %vm220, %v624, %v623
    %v626 = vrot.slane %v571, 2
    %v627 = vsel %vm223, %v626, %v625
    %v628 = vpack.c.b16 %v599, %v585
    %v629 = vpack.c.b16 %v627, %v613
    %632 = vmatprep.subr.bf16.mxu0 %v320
    %633 = vmatpush1.bf16.msra.mxu0 %v319
    %634 = vmatprep.subr.bf16.mxu0 %v322
    %635 = vmatpush1.bf16.msra.mxu0 %v321
    %636 = vmatprep.subr.bf16.mxu0 %v324
    %637 = vmatpush1.bf16.msra.mxu0 %v323
    %638 = vmatprep.subr.bf16.mxu0 %v326
    %639 = vmatpush1.bf16.msra.mxu0 %v325
    %640 = vmatprep.subr.bf16.mxu0 %v328
    %641 = vmatpush1.bf16.msra.mxu0 %v327
    %642 = vmatprep.subr.bf16.mxu0 %v330
    %643 = vmatpush1.bf16.msra.mxu0 %v329
    %644 = vmatprep.subr.bf16.mxu0 %v332
    %645 = vmatpush1.bf16.msra.mxu0 %v331
    %646 = vmatprep.subr.bf16.mxu0 %v334
    %647 = vmatpush1.bf16.msra.mxu0 %v333
    %648 = vmatprep.subr.bf16.mxu0 0
    %649 = vmatpush1.bf16.msra.mxu0 0
    %650 = vmatprep.subr.bf16.mxu0 0
    %651 = vmatpush1.bf16.msra.mxu0 0
    %652 = vmatprep.subr.bf16.mxu0 0
    %653 = vmatpush1.bf16.msra.mxu0 0
    %654 = vmatprep.subr.bf16.mxu0 0
    %655 = vmatpush1.bf16.msra.mxu0 0
    %656 = vmatprep.subr.bf16.mxu0 0
    %657 = vmatpush1.bf16.msra.mxu0 0
    %658 = vmatprep.subr.bf16.mxu0 0
    %659 = vmatpush1.bf16.msra.mxu0 0
    %660 = vmatprep.subr.bf16.mxu0 0
    %661 = vmatpush1.bf16.msra.mxu0 0
    %662 = vmatprep.subr.bf16.mxu0 0
    %663 = vmatpush1.bf16.msra.mxu0 0
    %664 = vmatprep.mubr.bf16.mxu0 0
    %665 = vmatmul.mubr.bf16.gmra.mrb[0].mxu0 %v628
    %v666 = vpop.f32.mrb[0].mxu0
    %v667 = vadd.f32 %v69, %v666
    %v668 = vpop.f32.mrb[0].mxu0
    %v669 = vadd.f32 %v73, %v668
    %v670 = vpop.f32.mrb[0].mxu0
    %v671 = vadd.f32 %v69, %v670
    %v672 = vpop.f32.mrb[0].mxu0
    %v673 = vadd.f32 %v73, %v672
    %674 = vmatprep.mubr.bf16.mxu0 0
    %675 = vmatmul.mubr.bf16.gmra.mrb[0].mxu0 %v629
    %v676 = vpop.f32.mrb[0].mxu0
    %v677 = vadd.f32 %v69, %v676
    %v678 = vpop.f32.mrb[0].mxu0
    %v679 = vadd.f32 %v73, %v678
    %v680 = vpop.f32.mrb[0].mxu0
    %v681 = vadd.f32 %v69, %v680
    %v682 = vpop.f32.mrb[0].mxu0
    %v683 = vadd.f32 %v73, %v682
    %684 = vdwg.mxu0
    %s685 = scalar_lea.vmem [#allocation2], 64
    %686 = vst [vmem:[%s685] sm:$0xff] %v667
    %687 = vst [vmem:[%s685 + $0x8] sm:$0xff] %v669
    %688 = vst [vmem:[%s685 + $0x10] sm:$0xff] %v671
    %689 = vst [vmem:[%s685 + $0x18] sm:$0xff] %v673
    %690 = vst [vmem:[%s685 + $0x20] sm:$0xff] %v677
    %691 = vst [vmem:[%s685 + $0x28] sm:$0xff] %v679
    %692 = vst [vmem:[%s685 + $0x30] sm:$0xff] %v681
    %693 = vst [vmem:[%s685 + $0x38] sm:$0xff] %v683
    %v694 = vld [vmem:[%s0] sm:$0x2]
    %v695 = vld [vmem:[%s0 + $0x4] sm:$0x2]
    %v696 = vld [vmem:[%s0 + $0x8] sm:$0x2]
    %v697 = vld [vmem:[%s0 + $0xc] sm:$0x2]
    %v698 = vld [vmem:[%s0 + $0x10] sm:$0x2]
    %v699 = vld [vmem:[%s0 + $0x14] sm:$0x2]
    %v700 = vld [vmem:[%s0 + $0x18] sm:$0x2]
    %v701 = vld [vmem:[%s0 + $0x1c] sm:$0x2]
    %v702 = vld [vmem:[%s0 + $0x20] sm:$0x2]
    %v703 = vld [vmem:[%s0 + $0x24] sm:$0x2]
    %v704 = vld [vmem:[%s0 + $0x28] sm:$0x2]
    %v705 = vld [vmem:[%s0 + $0x2c] sm:$0x2]
    %v706 = vld [vmem:[%s0 + $0x30] sm:$0x2]
    %v707 = vld [vmem:[%s0 + $0x34] sm:$0x2]
    %v708 = vld [vmem:[%s0 + $0x38] sm:$0x2]
    %v709 = vld [vmem:[%s0 + $0x3c] sm:$0x2]
    %v710 = vld [vmem:[%s0 + $0x40] sm:$0x2]
    %v711 = vld [vmem:[%s0 + $0x44] sm:$0x2]
    %v712 = vld [vmem:[%s0 + $0x48] sm:$0x2]
    %v713 = vld [vmem:[%s0 + $0x4c] sm:$0x2]
    %v714 = vld [vmem:[%s0 + $0x50] sm:$0x2]
    %v715 = vld [vmem:[%s0 + $0x54] sm:$0x2]
    %v716 = vld [vmem:[%s0 + $0x58] sm:$0x2]
    %v717 = vld [vmem:[%s0 + $0x5c] sm:$0x2]
    %v718 = vld [vmem:[%s0 + $0x60] sm:$0x2]
    %v719 = vld [vmem:[%s0 + $0x64] sm:$0x2]
    %v720 = vld [vmem:[%s0 + $0x68] sm:$0x2]
    %v721 = vld [vmem:[%s0 + $0x6c] sm:$0x2]
    %v722 = vld [vmem:[%s0 + $0x70] sm:$0x2]
    %v723 = vld [vmem:[%s0 + $0x74] sm:$0x2]
    %v724 = vld [vmem:[%s0 + $0x78] sm:$0x2]
    %v725 = vld [vmem:[%s0 + $0x7c] sm:$0x2]
    %v758 = vunpack.c.l.b16 %v694
    %v759 = vunpack.c.l.b16 %v695
    %v760 = vunpack.c.l.b16 %v696
    %v761 = vunpack.c.l.b16 %v697
    %v762 = vunpack.c.l.b16 %v698
    %v763 = vunpack.c.l.b16 %v699
    %v764 = vunpack.c.l.b16 %v700
    %v765 = vunpack.c.l.b16 %v701
    %v766 = vunpack.c.l.b16 %v702
    %v767 = vunpack.c.l.b16 %v703
    %v768 = vunpack.c.l.b16 %v704
    %v769 = vunpack.c.l.b16 %v705
    %v770 = vunpack.c.l.b16 %v706
    %v771 = vunpack.c.l.b16 %v707
    %v772 = vunpack.c.l.b16 %v708
    %v773 = vunpack.c.l.b16 %v709
    %v774 = vunpack.c.l.b16 %v710
    %v775 = vunpack.c.l.b16 %v711
    %v776 = vunpack.c.l.b16 %v712
    %v777 = vunpack.c.l.b16 %v713
    %v778 = vunpack.c.l.b16 %v714
    %v779 = vunpack.c.l.b16 %v715
    %v780 = vunpack.c.l.b16 %v716
    %v781 = vunpack.c.l.b16 %v717
    %v782 = vunpack.c.l.b16 %v718
    %v783 = vunpack.c.l.b16 %v719
    %v784 = vunpack.c.l.b16 %v720
    %v785 = vunpack.c.l.b16 %v721
    %v786 = vunpack.c.l.b16 %v722
    %v787 = vunpack.c.l.b16 %v723
    %v788 = vunpack.c.l.b16 %v724
    %v789 = vunpack.c.l.b16 %v725
    %v790 = vpack.c.b16 %v758, %v758
    %v791 = vpack.c.b16 %v759, %v759
    %v792 = vpack.c.b16 %v760, %v760
    %v793 = vpack.c.b16 %v761, %v761
    %v794 = vpack.c.b16 %v762, %v762
    %v795 = vpack.c.b16 %v763, %v763
    %v796 = vpack.c.b16 %v764, %v764
    %v797 = vpack.c.b16 %v765, %v765
    %v798 = vpack.c.b16 %v766, %v766
    %v799 = vpack.c.b16 %v767, %v767
    %v800 = vpack.c.b16 %v768, %v768
    %v801 = vpack.c.b16 %v769, %v769
    %v802 = vpack.c.b16 %v770, %v770
    %v803 = vpack.c.b16 %v771, %v771
    %v804 = vpack.c.b16 %v772, %v772
    %v805 = vpack.c.b16 %v773, %v773
    %v806 = vpack.c.b16 %v774, %v774
    %v807 = vpack.c.b16 %v775, %v775
    %v808 = vpack.c.b16 %v776, %v776
    %v809 = vpack.c.b16 %v777, %v777
    %v810 = vpack.c.b16 %v778, %v778
    %v811 = vpack.c.b16 %v779, %v779
    %v812 = vpack.c.b16 %v780, %v780
    %v813 = vpack.c.b16 %v781, %v781
    %v814 = vpack.c.b16 %v782, %v782
    %v815 = vpack.c.b16 %v783, %v783
    %v816 = vpack.c.b16 %v784, %v784
    %v817 = vpack.c.b16 %v785, %v785
    %v818 = vpack.c.b16 %v786, %v786
    %v819 = vpack.c.b16 %v787, %v787
    %v820 = vpack.c.b16 %v788, %v788
    %v821 = vpack.c.b16 %v789, %v789
    %v822 = vunpack.c.l.b16 %v790
    %v823 = vunpack.c.l.b16 %v791
    %v824 = vunpack.c.l.b16 %v792
    %v825 = vunpack.c.l.b16 %v793
    %v826 = vunpack.c.l.b16 %v794
    %v827 = vunpack.c.l.b16 %v795
    %v828 = vunpack.c.l.b16 %v796
    %v829 = vunpack.c.l.b16 %v797
    %v830 = vunpack.c.l.b16 %v798
    %v831 = vunpack.c.l.b16 %v799
    %v832 = vunpack.c.l.b16 %v800
    %v833 = vunpack.c.l.b16 %v801
    %v834 = vunpack.c.l.b16 %v802
    %v835 = vunpack.c.l.b16 %v803
    %v836 = vunpack.c.l.b16 %v804
    %v837 = vunpack.c.l.b16 %v805
    %v838 = vunpack.c.l.b16 %v806
    %v839 = vunpack.c.l.b16 %v807
    %v840 = vunpack.c.l.b16 %v808
    %v841 = vunpack.c.l.b16 %v809
    %v842 = vunpack.c.l.b16 %v810
    %v843 = vunpack.c.l.b16 %v811
    %v844 = vunpack.c.l.b16 %v812
    %v845 = vunpack.c.l.b16 %v813
    %v846 = vunpack.c.l.b16 %v814
    %v847 = vunpack.c.l.b16 %v815
    %v848 = vunpack.c.l.b16 %v816
    %v849 = vunpack.c.l.b16 %v817
    %v850 = vunpack.c.l.b16 %v818
    %v851 = vunpack.c.l.b16 %v819
    %v852 = vunpack.c.l.b16 %v820
    %v853 = vunpack.c.l.b16 %v821
    %v854 = vrot.slane %v822, 2
    %v855 = vrot.slane %v823, 1
    %v856 = vsel %vm205, %v855, %v854
    %v857 = vsel %vm208, %v824, %v856
    %v858 = vrot.slane %v825, 7
    %v859 = vsel %vm211, %v858, %v857
    %v860 = vrot.slane %v826, 6
    %v861 = vsel %vm214, %v860, %v859
    %v862 = vrot.slane %v827, 5
    %v863 = vsel %vm217, %v862, %v861
    %v864 = vrot.slane %v828, 4
    %v865 = vsel %vm220, %v864, %v863
    %v866 = vrot.slane %v829, 3
    %v867 = vsel %vm223, %v866, %v865
    %v868 = vrot.slane %v830, 2
    %v869 = vrot.slane %v831, 1
    %v870 = vsel %vm205, %v869, %v868
    %v871 = vsel %vm208, %v832, %v870
    %v872 = vrot.slane %v833, 7
    %v873 = vsel %vm211, %v872, %v871
    %v874 = vrot.slane %v834, 6
    %v875 = vsel %vm214, %v874, %v873
    %v876 = vrot.slane %v835, 5
    %v877 = vsel %vm217, %v876, %v875
    %v878 = vrot.slane %v836, 4
    %v879 = vsel %vm220, %v878, %v877
    %v880 = vrot.slane %v837, 3
    %v881 = vsel %vm223, %v880, %v879
    %v882 = vrot.slane %v838, 2
    %v883 = vrot.slane %v839, 1
    %v884 = vsel %vm205, %v883, %v882
    %v885 = vsel %vm208, %v840, %v884
    %v886 = vrot.slane %v841, 7
    %v887 = vsel %vm211, %v886, %v885
    %v888 = vrot.slane %v842, 6
    %v889 = vsel %vm214, %v888, %v887
    %v890 = vrot.slane %v843, 5
    %v891 = vsel %vm217, %v890, %v889
    %v892 = vrot.slane %v844, 4
    %v893 = vsel %vm220, %v892, %v891
    %v894 = vrot.slane %v845, 3
    %v895 = vsel %vm223, %v894, %v893
    %v896 = vrot.slane %v846, 2
    %v897 = vrot.slane %v847, 1
    %v898 = vsel %vm205, %v897, %v896
    %v899 = vsel %vm208, %v848, %v898
    %v900 = vrot.slane %v849, 7
    %v901 = vsel %vm211, %v900, %v899
    %v902 = vrot.slane %v850, 6
    %v903 = vsel %vm214, %v902, %v901
    %v904 = vrot.slane %v851, 5
    %v905 = vsel %vm217, %v904, %v903
    %v906 = vrot.slane %v852, 4
    %v907 = vsel %vm220, %v906, %v905
    %v908 = vrot.slane %v853, 3
    %v909 = vsel %vm223, %v908, %v907
    %v910 = vpack.c.b16 %v881, %v867
    %v911 = vpack.c.b16 %v909, %v895
    %914 = vmatprep.subr.bf16.mxu0 %v320
    %915 = vmatpush1.bf16.msra.mxu0 %v319
    %916 = vmatprep.subr.bf16.mxu0 %v322
    %917 = vmatpush1.bf16.msra.mxu0 %v321
    %918 = vmatprep.subr.bf16.mxu0 %v324
    %919 = vmatpush1.bf16.msra.mxu0 %v323
    %920 = vmatprep.subr.bf16.mxu0 %v326
    %921 = vmatpush1.bf16.msra.mxu0 %v325
    %922 = vmatprep.subr.bf16.mxu0 %v328
    %923 = vmatpush1.bf16.msra.mxu0 %v327
    %924 = vmatprep.subr.bf16.mxu0 %v330
    %925 = vmatpush1.bf16.msra.mxu0 %v329
    %926 = vmatprep.subr.bf16.mxu0 %v332
    %927 = vmatpush1.bf16.msra.mxu0 %v331
    %928 = vmatprep.subr.bf16.mxu0 %v334
    %929 = vmatpush1.bf16.msra.mxu0 %v333
    %930 = vmatprep.subr.bf16.mxu0 0
    %931 = vmatpush1.bf16.msra.mxu0 0
    %932 = vmatprep.subr.bf16.mxu0 0
    %933 = vmatpush1.bf16.msra.mxu0 0
    %934 = vmatprep.subr.bf16.mxu0 0
    %935 = vmatpush1.bf16.msra.mxu0 0
    %936 = vmatprep.subr.bf16.mxu0 0
    %937 = vmatpush1.bf16.msra.mxu0 0
    %938 = vmatprep.subr.bf16.mxu0 0
    %939 = vmatpush1.bf16.msra.mxu0 0
    %940 = vmatprep.subr.bf16.mxu0 0
    %941 = vmatpush1.bf16.msra.mxu0 0
    %942 = vmatprep.subr.bf16.mxu0 0
    %943 = vmatpush1.bf16.msra.mxu0 0
    %944 = vmatprep.subr.bf16.mxu0 0
    %945 = vmatpush1.bf16.msra.mxu0 0
    %946 = vmatprep.mubr.bf16.mxu0 0
    %947 = vmatmul.mubr.bf16.gmra.mrb[0].mxu0 %v910
    %v948 = vpop.f32.mrb[0].mxu0
    %v949 = vadd.f32 %v69, %v948
    %v950 = vpop.f32.mrb[0].mxu0
    %v951 = vadd.f32 %v73, %v950
    %v952 = vpop.f32.mrb[0].mxu0
    %v953 = vadd.f32 %v69, %v952
    %v954 = vpop.f32.mrb[0].mxu0
    %v955 = vadd.f32 %v73, %v954
    %956 = vmatprep.mubr.bf16.mxu0 0
    %957 = vmatmul.mubr.bf16.gmra.mrb[0].mxu0 %v911
    %v958 = vpop.f32.mrb[0].mxu0
    %v959 = vadd.f32 %v69, %v958
    %v960 = vpop.f32.mrb[0].mxu0
    %v961 = vadd.f32 %v73, %v960
    %v962 = vpop.f32.mrb[0].mxu0
    %v963 = vadd.f32 %v69, %v962
    %v964 = vpop.f32.mrb[0].mxu0
    %v965 = vadd.f32 %v73, %v964
    %966 = vdwg.mxu0
    %s967 = scalar_lea.vmem [#allocation2], 128
    %968 = vst [vmem:[%s967] sm:$0xff] %v949
    %969 = vst [vmem:[%s967 + $0x8] sm:$0xff] %v951
    %970 = vst [vmem:[%s967 + $0x10] sm:$0xff] %v953
    %971 = vst [vmem:[%s967 + $0x18] sm:$0xff] %v955
    %972 = vst [vmem:[%s967 + $0x20] sm:$0xff] %v959
    %973 = vst [vmem:[%s967 + $0x28] sm:$0xff] %v961
    %974 = vst [vmem:[%s967 + $0x30] sm:$0xff] %v963
    %975 = vst [vmem:[%s967 + $0x38] sm:$0xff] %v965
    %v976 = vld [vmem:[%s0] sm:$0x2]
    %v977 = vld [vmem:[%s0 + $0x4] sm:$0x2]
    %v978 = vld [vmem:[%s0 + $0x8] sm:$0x2]
    %v979 = vld [vmem:[%s0 + $0xc] sm:$0x2]
    %v980 = vld [vmem:[%s0 + $0x10] sm:$0x2]
    %v981 = vld [vmem:[%s0 + $0x14] sm:$0x2]
    %v982 = vld [vmem:[%s0 + $0x18] sm:$0x2]
    %v983 = vld [vmem:[%s0 + $0x1c] sm:$0x2]
    %v984 = vld [vmem:[%s0 + $0x20] sm:$0x2]
    %v985 = vld [vmem:[%s0 + $0x24] sm:$0x2]
    %v986 = vld [vmem:[%s0 + $0x28] sm:$0x2]
    %v987 = vld [vmem:[%s0 + $0x2c] sm:$0x2]
    %v988 = vld [vmem:[%s0 + $0x30] sm:$0x2]
    %v989 = vld [vmem:[%s0 + $0x34] sm:$0x2]
    %v990 = vld [vmem:[%s0 + $0x38] sm:$0x2]
    %v991 = vld [vmem:[%s0 + $0x3c] sm:$0x2]
    %v992 = vld [vmem:[%s0 + $0x40] sm:$0x2]
    %v993 = vld [vmem:[%s0 + $0x44] sm:$0x2]
    %v994 = vld [vmem:[%s0 + $0x48] sm:$0x2]
    %v995 = vld [vmem:[%s0 + $0x4c] sm:$0x2]
    %v996 = vld [vmem:[%s0 + $0x50] sm:$0x2]
    %v997 = vld [vmem:[%s0 + $0x54] sm:$0x2]
    %v998 = vld [vmem:[%s0 + $0x58] sm:$0x2]
    %v999 = vld [vmem:[%s0 + $0x5c] sm:$0x2]
    %v1000 = vld [vmem:[%s0 + $0x60] sm:$0x2]
    %v1001 = vld [vmem:[%s0 + $0x64] sm:$0x2]
    %v1002 = vld [vmem:[%s0 + $0x68] sm:$0x2]
    %v1003 = vld [vmem:[%s0 + $0x6c] sm:$0x2]
    %v1004 = vld [vmem:[%s0 + $0x70] sm:$0x2]
    %v1005 = vld [vmem:[%s0 + $0x74] sm:$0x2]
    %v1006 = vld [vmem:[%s0 + $0x78] sm:$0x2]
    %v1007 = vld [vmem:[%s0 + $0x7c] sm:$0x2]
    %v1040 = vunpack.c.l.b16 %v976
    %v1041 = vunpack.c.l.b16 %v977
    %v1042 = vunpack.c.l.b16 %v978
    %v1043 = vunpack.c.l.b16 %v979
    %v1044 = vunpack.c.l.b16 %v980
    %v1045 = vunpack.c.l.b16 %v981
    %v1046 = vunpack.c.l.b16 %v982
    %v1047 = vunpack.c.l.b16 %v983
    %v1048 = vunpack.c.l.b16 %v984
    %v1049 = vunpack.c.l.b16 %v985
    %v1050 = vunpack.c.l.b16 %v986
    %v1051 = vunpack.c.l.b16 %v987
    %v1052 = vunpack.c.l.b16 %v988
    %v1053 = vunpack.c.l.b16 %v989
    %v1054 = vunpack.c.l.b16 %v990
    %v1055 = vunpack.c.l.b16 %v991
    %v1056 = vunpack.c.l.b16 %v992
    %v1057 = vunpack.c.l.b16 %v993
    %v1058 = vunpack.c.l.b16 %v994
    %v1059 = vunpack.c.l.b16 %v995
    %v1060 = vunpack.c.l.b16 %v996
    %v1061 = vunpack.c.l.b16 %v997
    %v1062 = vunpack.c.l.b16 %v998
    %v1063 = vunpack.c.l.b16 %v999
    %v1064 = vunpack.c.l.b16 %v1000
    %v1065 = vunpack.c.l.b16 %v1001
    %v1066 = vunpack.c.l.b16 %v1002
    %v1067 = vunpack.c.l.b16 %v1003
    %v1068 = vunpack.c.l.b16 %v1004
    %v1069 = vunpack.c.l.b16 %v1005
    %v1070 = vunpack.c.l.b16 %v1006
    %v1071 = vunpack.c.l.b16 %v1007
    %v1072 = vpack.c.b16 %v1040, %v1040
    %v1073 = vpack.c.b16 %v1041, %v1041
    %v1074 = vpack.c.b16 %v1042, %v1042
    %v1075 = vpack.c.b16 %v1043, %v1043
    %v1076 = vpack.c.b16 %v1044, %v1044
    %v1077 = vpack.c.b16 %v1045, %v1045
    %v1078 = vpack.c.b16 %v1046, %v1046
    %v1079 = vpack.c.b16 %v1047, %v1047
    %v1080 = vpack.c.b16 %v1048, %v1048
    %v1081 = vpack.c.b16 %v1049, %v1049
    %v1082 = vpack.c.b16 %v1050, %v1050
    %v1083 = vpack.c.b16 %v1051, %v1051
    %v1084 = vpack.c.b16 %v1052, %v1052
    %v1085 = vpack.c.b16 %v1053, %v1053
    %v1086 = vpack.c.b16 %v1054, %v1054
    %v1087 = vpack.c.b16 %v1055, %v1055
    %v1088 = vpack.c.b16 %v1056, %v1056
    %v1089 = vpack.c.b16 %v1057, %v1057
    %v1090 = vpack.c.b16 %v1058, %v1058
    %v1091 = vpack.c.b16 %v1059, %v1059
    %v1092 = vpack.c.b16 %v1060, %v1060
    %v1093 = vpack.c.b16 %v1061, %v1061
    %v1094 = vpack.c.b16 %v1062, %v1062
    %v1095 = vpack.c.b16 %v1063, %v1063
    %v1096 = vpack.c.b16 %v1064, %v1064
    %v1097 = vpack.c.b16 %v1065, %v1065
    %v1098 = vpack.c.b16 %v1066, %v1066
    %v1099 = vpack.c.b16 %v1067, %v1067
    %v1100 = vpack.c.b16 %v1068, %v1068
    %v1101 = vpack.c.b16 %v1069, %v1069
    %v1102 = vpack.c.b16 %v1070, %v1070
    %v1103 = vpack.c.b16 %v1071, %v1071
    %v1104 = vunpack.c.l.b16 %v1072
    %v1105 = vunpack.c.l.b16 %v1073
    %v1106 = vunpack.c.l.b16 %v1074
    %v1107 = vunpack.c.l.b16 %v1075
    %v1108 = vunpack.c.l.b16 %v1076
    %v1109 = vunpack.c.l.b16 %v1077
    %v1110 = vunpack.c.l.b16 %v1078
    %v1111 = vunpack.c.l.b16 %v1079
    %v1112 = vunpack.c.l.b16 %v1080
    %v1113 = vunpack.c.l.b16 %v1081
    %v1114 = vunpack.c.l.b16 %v1082
    %v1115 = vunpack.c.l.b16 %v1083
    %v1116 = vunpack.c.l.b16 %v1084
    %v1117 = vunpack.c.l.b16 %v1085
    %v1118 = vunpack.c.l.b16 %v1086
    %v1119 = vunpack.c.l.b16 %v1087
    %v1120 = vunpack.c.l.b16 %v1088
    %v1121 = vunpack.c.l.b16 %v1089
    %v1122 = vunpack.c.l.b16 %v1090
    %v1123 = vunpack.c.l.b16 %v1091
    %v1124 = vunpack.c.l.b16 %v1092
    %v1125 = vunpack.c.l.b16 %v1093
    %v1126 = vunpack.c.l.b16 %v1094
    %v1127 = vunpack.c.l.b16 %v1095
    %v1128 = vunpack.c.l.b16 %v1096
    %v1129 = vunpack.c.l.b16 %v1097
    %v1130 = vunpack.c.l.b16 %v1098
    %v1131 = vunpack.c.l.b16 %v1099
    %v1132 = vunpack.c.l.b16 %v1100
    %v1133 = vunpack.c.l.b16 %v1101
    %v1134 = vunpack.c.l.b16 %v1102
    %v1135 = vunpack.c.l.b16 %v1103
    %v1136 = vrot.slane %v1104, 3
    %v1137 = vrot.slane %v1105, 2
    %v1138 = vsel %vm205, %v1137, %v1136
    %v1139 = vrot.slane %v1106, 1
    %v1140 = vsel %vm208, %v1139, %v1138
    %v1141 = vsel %vm211, %v1107, %v1140
    %v1142 = vrot.slane %v1108, 7
    %v1143 = vsel %vm214, %v1142, %v1141
    %v1144 = vrot.slane %v1109, 6
    %v1145 = vsel %vm217, %v1144, %v1143
    %v1146 = vrot.slane %v1110, 5
    %v1147 = vsel %vm220, %v1146, %v1145
    %v1148 = vrot.slane %v1111, 4
    %v1149 = vsel %vm223, %v1148, %v1147
    %v1150 = vrot.slane %v1112, 3
    %v1151 = vrot.slane %v1113, 2
    %v1152 = vsel %vm205, %v1151, %v1150
    %v1153 = vrot.slane %v1114, 1
    %v1154 = vsel %vm208, %v1153, %v1152
    %v1155 = vsel %vm211, %v1115, %v1154
    %v1156 = vrot.slane %v1116, 7
    %v1157 = vsel %vm214, %v1156, %v1155
    %v1158 = vrot.slane %v1117, 6
    %v1159 = vsel %vm217, %v1158, %v1157
    %v1160 = vrot.slane %v1118, 5
    %v1161 = vsel %vm220, %v1160, %v1159
    %v1162 = vrot.slane %v1119, 4
    %v1163 = vsel %vm223, %v1162, %v1161
    %v1164 = vrot.slane %v1120, 3
    %v1165 = vrot.slane %v1121, 2
    %v1166 = vsel %vm205, %v1165, %v1164
    %v1167 = vrot.slane %v1122, 1
    %v1168 = vsel %vm208, %v1167, %v1166
    %v1169 = vsel %vm211, %v1123, %v1168
    %v1170 = vrot.slane %v1124, 7
    %v1171 = vsel %vm214, %v1170, %v1169
    %v1172 = vrot.slane %v1125, 6
    %v1173 = vsel %vm217, %v1172, %v1171
    %v1174 = vrot.slane %v1126, 5
    %v1175 = vsel %vm220, %v1174, %v1173
    %v1176 = vrot.slane %v1127, 4
    %v1177 = vsel %vm223, %v1176, %v1175
    %v1178 = vrot.slane %v1128, 3
    %v1179 = vrot.slane %v1129, 2
    %v1180 = vsel %vm205, %v1179, %v1178
    %v1181 = vrot.slane %v1130, 1
    %v1182 = vsel %vm208, %v1181, %v1180
    %v1183 = vsel %vm211, %v1131, %v1182
    %v1184 = vrot.slane %v1132, 7
    %v1185 = vsel %vm214, %v1184, %v1183
    %v1186 = vrot.slane %v1133, 6
    %v1187 = vsel %vm217, %v1186, %v1185
    %v1188 = vrot.slane %v1134, 5
    %v1189 = vsel %vm220, %v1188, %v1187
    %v1190 = vrot.slane %v1135, 4
    %v1191 = vsel %vm223, %v1190, %v1189
    %v1192 = vpack.c.b16 %v1163, %v1149
    %v1193 = vpack.c.b16 %v1191, %v1177
    %1196 = vmatprep.subr.bf16.mxu0 %v320
    %1197 = vmatpush1.bf16.msra.mxu0 %v319
    %1198 = vmatprep.subr.bf16.mxu0 %v322
    %1199 = vmatpush1.bf16.msra.mxu0 %v321
    %1200 = vmatprep.subr.bf16.mxu0 %v324
    %1201 = vmatpush1.bf16.msra.mxu0 %v323
    %1202 = vmatprep.subr.bf16.mxu0 %v326
    %1203 = vmatpush1.bf16.msra.mxu0 %v325
    %1204 = vmatprep.subr.bf16.mxu0 %v328
    %1205 = vmatpush1.bf16.msra.mxu0 %v327
    %1206 = vmatprep.subr.bf16.mxu0 %v330
    %1207 = vmatpush1.bf16.msra.mxu0 %v329
    %1208 = vmatprep.subr.bf16.mxu0 %v332
    %1209 = vmatpush1.bf16.msra.mxu0 %v331
    %1210 = vmatprep.subr.bf16.mxu0 %v334
    %1211 = vmatpush1.bf16.msra.mxu0 %v333
    %1212 = vmatprep.subr.bf16.mxu0 0
    %1213 = vmatpush1.bf16.msra.mxu0 0
    %1214 = vmatprep.subr.bf16.mxu0 0
    %1215 = vmatpush1.bf16.msra.mxu0 0
    %1216 = vmatprep.subr.bf16.mxu0 0
    %1217 = vmatpush1.bf16.msra.mxu0 0
    %1218 = vmatprep.subr.bf16.mxu0 0
    %1219 = vmatpush1.bf16.msra.mxu0 0
    %1220 = vmatprep.subr.bf16.mxu0 0
    %1221 = vmatpush1.bf16.msra.mxu0 0
    %1222 = vmatprep.subr.bf16.mxu0 0
    %1223 = vmatpush1.bf16.msra.mxu0 0
    %1224 = vmatprep.subr.bf16.mxu0 0
    %1225 = vmatpush1.bf16.msra.mxu0 0
    %1226 = vmatprep.subr.bf16.mxu0 0
    %1227 = vmatpush1.bf16.msra.mxu0 0
    %1228 = vmatprep.mubr.bf16.mxu0 0
    %1229 = vmatmul.mubr.bf16.gmra.mrb[0].mxu0 %v1192
    %v1230 = vpop.f32.mrb[0].mxu0
    %v1231 = vadd.f32 %v69, %v1230
    %v1232 = vpop.f32.mrb[0].mxu0
    %v1233 = vadd.f32 %v73, %v1232
    %v1234 = vpop.f32.mrb[0].mxu0
    %v1235 = vadd.f32 %v69, %v1234
    %v1236 = vpop.f32.mrb[0].mxu0
    %v1237 = vadd.f32 %v73, %v1236
    %1238 = vmatprep.mubr.bf16.mxu0 0
    %1239 = vmatmul.mubr.bf16.gmra.mrb[0].mxu0 %v1193
    %v1240 = vpop.f32.mrb[0].mxu0
    %v1241 = vadd.f32 %v69, %v1240
    %v1242 = vpop.f32.mrb[0].mxu0
    %v1243 = vadd.f32 %v73, %v1242
    %v1244 = vpop.f32.mrb[0].mxu0
    %v1245 = vadd.f32 %v69, %v1244
    %v1246 = vpop.f32.mrb[0].mxu0
    %v1247 = vadd.f32 %v73, %v1246
    %1248 = vdwg.mxu0
    %s1249 = scalar_lea.vmem [#allocation2], 192
    %1250 = vst [vmem:[%s1249] sm:$0xff] %v1231
    %1251 = vst [vmem:[%s1249 + $0x8] sm:$0xff] %v1233
    %1252 = vst [vmem:[%s1249 + $0x10] sm:$0xff] %v1235
    %1253 = vst [vmem:[%s1249 + $0x18] sm:$0xff] %v1237
    %1254 = vst [vmem:[%s1249 + $0x20] sm:$0xff] %v1241
    %1255 = vst [vmem:[%s1249 + $0x28] sm:$0xff] %v1243
    %1256 = vst [vmem:[%s1249 + $0x30] sm:$0xff] %v1245
    %1257 = vst [vmem:[%s1249 + $0x38] sm:$0xff] %v1247
    %v1258 = vld [vmem:[%s0] sm:$0x4]
    %v1259 = vld [vmem:[%s0 + $0x4] sm:$0x4]
    %v1260 = vld [vmem:[%s0 + $0x8] sm:$0x4]
    %v1261 = vld [vmem:[%s0 + $0xc] sm:$0x4]
    %v1262 = vld [vmem:[%s0 + $0x10] sm:$0x4]
    %v1263 = vld [vmem:[%s0 + $0x14] sm:$0x4]
    %v1264 = vld [vmem:[%s0 + $0x18] sm:$0x4]
    %v1265 = vld [vmem:[%s0 + $0x1c] sm:$0x4]
    %v1266 = vld [vmem:[%s0 + $0x20] sm:$0x4]
    %v1267 = vld [vmem:[%s0 + $0x24] sm:$0x4]
    %v1268 = vld [vmem:[%s0 + $0x28] sm:$0x4]
    %v1269 = vld [vmem:[%s0 + $0x2c] sm:$0x4]
    %v1270 = vld [vmem:[%s0 + $0x30] sm:$0x4]
    %v1271 = vld [vmem:[%s0 + $0x34] sm:$0x4]
    %v1272 = vld [vmem:[%s0 + $0x38] sm:$0x4]
    %v1273 = vld [vmem:[%s0 + $0x3c] sm:$0x4]
    %v1274 = vld [vmem:[%s0 + $0x40] sm:$0x4]
    %v1275 = vld [vmem:[%s0 + $0x44] sm:$0x4]
    %v1276 = vld [vmem:[%s0 + $0x48] sm:$0x4]
    %v1277 = vld [vmem:[%s0 + $0x4c] sm:$0x4]
    %v1278 = vld [vmem:[%s0 + $0x50] sm:$0x4]
    %v1279 = vld [vmem:[%s0 + $0x54] sm:$0x4]
    %v1280 = vld [vmem:[%s0 + $0x58] sm:$0x4]
    %v1281 = vld [vmem:[%s0 + $0x5c] sm:$0x4]
    %v1282 = vld [vmem:[%s0 + $0x60] sm:$0x4]
    %v1283 = vld [vmem:[%s0 + $0x64] sm:$0x4]
    %v1284 = vld [vmem:[%s0 + $0x68] sm:$0x4]
    %v1285 = vld [vmem:[%s0 + $0x6c] sm:$0x4]
    %v1286 = vld [vmem:[%s0 + $0x70] sm:$0x4]
    %v1287 = vld [vmem:[%s0 + $0x74] sm:$0x4]
    %v1288 = vld [vmem:[%s0 + $0x78] sm:$0x4]
    %v1289 = vld [vmem:[%s0 + $0x7c] sm:$0x4]
    %v1322 = vunpack.c.l.b16 %v1258
    %v1323 = vunpack.c.l.b16 %v1259
    %v1324 = vunpack.c.l.b16 %v1260
    %v1325 = vunpack.c.l.b16 %v1261
    %v1326 = vunpack.c.l.b16 %v1262
    %v1327 = vunpack.c.l.b16 %v1263
    %v1328 = vunpack.c.l.b16 %v1264
    %v1329 = vunpack.c.l.b16 %v1265
    %v1330 = vunpack.c.l.b16 %v1266
    %v1331 = vunpack.c.l.b16 %v1267
    %v1332 = vunpack.c.l.b16 %v1268
    %v1333 = vunpack.c.l.b16 %v1269
    %v1334 = vunpack.c.l.b16 %v1270
    %v1335 = vunpack.c.l.b16 %v1271
    %v1336 = vunpack.c.l.b16 %v1272
    %v1337 = vunpack.c.l.b16 %v1273
    %v1338 = vunpack.c.l.b16 %v1274
    %v1339 = vunpack.c.l.b16 %v1275
    %v1340 = vunpack.c.l.b16 %v1276
    %v1341 = vunpack.c.l.b16 %v1277
    %v1342 = vunpack.c.l.b16 %v1278
    %v1343 = vunpack.c.l.b16 %v1279
    %v1344 = vunpack.c.l.b16 %v1280
    %v1345 = vunpack.c.l.b16 %v1281
    %v1346 = vunpack.c.l.b16 %v1282
    %v1347 = vunpack.c.l.b16 %v1283
    %v1348 = vunpack.c.l.b16 %v1284
    %v1349 = vunpack.c.l.b16 %v1285
    %v1350 = vunpack.c.l.b16 %v1286
    %v1351 = vunpack.c.l.b16 %v1287
    %v1352 = vunpack.c.l.b16 %v1288
    %v1353 = vunpack.c.l.b16 %v1289
    %v1354 = vpack.c.b16 %v1322, %v1322
    %v1355 = vpack.c.b16 %v1323, %v1323
    %v1356 = vpack.c.b16 %v1324, %v1324
    %v1357 = vpack.c.b16 %v1325, %v1325
    %v1358 = vpack.c.b16 %v1326, %v1326
    %v1359 = vpack.c.b16 %v1327, %v1327
    %v1360 = vpack.c.b16 %v1328, %v1328
    %v1361 = vpack.c.b16 %v1329, %v1329
    %v1362 = vpack.c.b16 %v1330, %v1330
    %v1363 = vpack.c.b16 %v1331, %v1331
    %v1364 = vpack.c.b16 %v1332, %v1332
    %v1365 = vpack.c.b16 %v1333, %v1333
    %v1366 = vpack.c.b16 %v1334, %v1334
    %v1367 = vpack.c.b16 %v1335, %v1335
    %v1368 = vpack.c.b16 %v1336, %v1336
    %v1369 = vpack.c.b16 %v1337, %v1337
    %v1370 = vpack.c.b16 %v1338, %v1338
    %v1371 = vpack.c.b16 %v1339, %v1339
    %v1372 = vpack.c.b16 %v1340, %v1340
    %v1373 = vpack.c.b16 %v1341, %v1341
    %v1374 = vpack.c.b16 %v1342, %v1342
    %v1375 = vpack.c.b16 %v1343, %v1343
    %v1376 = vpack.c.b16 %v1344, %v1344
    %v1377 = vpack.c.b16 %v1345, %v1345
    %v1378 = vpack.c.b16 %v1346, %v1346
    %v1379 = vpack.c.b16 %v1347, %v1347
    %v1380 = vpack.c.b16 %v1348, %v1348
    %v1381 = vpack.c.b16 %v1349, %v1349
    %v1382 = vpack.c.b16 %v1350, %v1350
    %v1383 = vpack.c.b16 %v1351, %v1351
    %v1384 = vpack.c.b16 %v1352, %v1352
    %v1385 = vpack.c.b16 %v1353, %v1353
    %v1386 = vunpack.c.l.b16 %v1354
    %v1387 = vunpack.c.l.b16 %v1355
    %v1388 = vunpack.c.l.b16 %v1356
    %v1389 = vunpack.c.l.b16 %v1357
    %v1390 = vunpack.c.l.b16 %v1358
    %v1391 = vunpack.c.l.b16 %v1359
    %v1392 = vunpack.c.l.b16 %v1360
    %v1393 = vunpack.c.l.b16 %v1361
    %v1394 = vunpack.c.l.b16 %v1362
    %v1395 = vunpack.c.l.b16 %v1363
    %v1396 = vunpack.c.l.b16 %v1364
    %v1397 = vunpack.c.l.b16 %v1365
    %v1398 = vunpack.c.l.b16 %v1366
    %v1399 = vunpack.c.l.b16 %v1367
    %v1400 = vunpack.c.l.b16 %v1368
    %v1401 = vunpack.c.l.b16 %v1369
    %v1402 = vunpack.c.l.b16 %v1370
    %v1403 = vunpack.c.l.b16 %v1371
    %v1404 = vunpack.c.l.b16 %v1372
    %v1405 = vunpack.c.l.b16 %v1373
    %v1406 = vunpack.c.l.b16 %v1374
    %v1407 = vunpack.c.l.b16 %v1375
    %v1408 = vunpack.c.l.b16 %v1376
    %v1409 = vunpack.c.l.b16 %v1377
    %v1410 = vunpack.c.l.b16 %v1378
    %v1411 = vunpack.c.l.b16 %v1379
    %v1412 = vunpack.c.l.b16 %v1380
    %v1413 = vunpack.c.l.b16 %v1381
    %v1414 = vunpack.c.l.b16 %v1382
    %v1415 = vunpack.c.l.b16 %v1383
    %v1416 = vunpack.c.l.b16 %v1384
    %v1417 = vunpack.c.l.b16 %v1385
    %v1418 = vrot.slane %v1386, 4
    %v1419 = vrot.slane %v1387, 3
    %v1420 = vsel %vm205, %v1419, %v1418
    %v1421 = vrot.slane %v1388, 2
    %v1422 = vsel %vm208, %v1421, %v1420
    %v1423 = vrot.slane %v1389, 1
    %v1424 = vsel %vm211, %v1423, %v1422
    %v1425 = vsel %vm214, %v1390, %v1424
    %v1426 = vrot.slane %v1391, 7
    %v1427 = vsel %vm217, %v1426, %v1425
    %v1428 = vrot.slane %v1392, 6
    %v1429 = vsel %vm220, %v1428, %v1427
    %v1430 = vrot.slane %v1393, 5
    %v1431 = vsel %vm223, %v1430, %v1429
    %v1432 = vrot.slane %v1394, 4
    %v1433 = vrot.slane %v1395, 3
    %v1434 = vsel %vm205, %v1433, %v1432
    %v1435 = vrot.slane %v1396, 2
    %v1436 = vsel %vm208, %v1435, %v1434
    %v1437 = vrot.slane %v1397, 1
    %v1438 = vsel %vm211, %v1437, %v1436
    %v1439 = vsel %vm214, %v1398, %v1438
    %v1440 = vrot.slane %v1399, 7
    %v1441 = vsel %vm217, %v1440, %v1439
    %v1442 = vrot.slane %v1400, 6
    %v1443 = vsel %vm220, %v1442, %v1441
    %v1444 = vrot.slane %v1401, 5
    %v1445 = vsel %vm223, %v1444, %v1443
    %v1446 = vrot.slane %v1402, 4
    %v1447 = vrot.slane %v1403, 3
    %v1448 = vsel %vm205, %v1447, %v1446
    %v1449 = vrot.slane %v1404, 2
    %v1450 = vsel %vm208, %v1449, %v1448
    %v1451 = vrot.slane %v1405, 1
    %v1452 = vsel %vm211, %v1451, %v1450
    %v1453 = vsel %vm214, %v1406, %v1452
    %v1454 = vrot.slane %v1407, 7
    %v1455 = vsel %vm217, %v1454, %v1453
    %v1456 = vrot.slane %v1408, 6
    %v1457 = vsel %vm220, %v1456, %v1455
    %v1458 = vrot.slane %v1409, 5
    %v1459 = vsel %vm223, %v1458, %v1457
    %v1460 = vrot.slane %v1410, 4
    %v1461 = vrot.slane %v1411, 3
    %v1462 = vsel %vm205, %v1461, %v1460
    %v1463 = vrot.slane %v1412, 2
    %v1464 = vsel %vm208, %v1463, %v1462
    %v1465 = vrot.slane %v1413, 1
    %v1466 = vsel %vm211, %v1465, %v1464
    %v1467 = vsel %vm214, %v1414, %v1466
    %v1468 = vrot.slane %v1415, 7
    %v1469 = vsel %vm217, %v1468, %v1467
    %v1470 = vrot.slane %v1416, 6
    %v1471 = vsel %vm220, %v1470, %v1469
    %v1472 = vrot.slane %v1417, 5
    %v1473 = vsel %vm223, %v1472, %v1471
    %v1474 = vpack.c.b16 %v1445, %v1431
    %v1475 = vpack.c.b16 %v1473, %v1459
    %1478 = vmatprep.subr.bf16.mxu0 %v320
    %1479 = vmatpush1.bf16.msra.mxu0 %v319
    %1480 = vmatprep.subr.bf16.mxu0 %v322
    %1481 = vmatpush1.bf16.msra.mxu0 %v321
    %1482 = vmatprep.subr.bf16.mxu0 %v324
    %1483 = vmatpush1.bf16.msra.mxu0 %v323
    %1484 = vmatprep.subr.bf16.mxu0 %v326
    %1485 = vmatpush1.bf16.msra.mxu0 %v325
    %1486 = vmatprep.subr.bf16.mxu0 %v328
    %1487 = vmatpush1.bf16.msra.mxu0 %v327
    %1488 = vmatprep.subr.bf16.mxu0 %v330
    %1489 = vmatpush1.bf16.msra.mxu0 %v329
    %1490 = vmatprep.subr.bf16.mxu0 %v332
    %1491 = vmatpush1.bf16.msra.mxu0 %v331
    %1492 = vmatprep.subr.bf16.mxu0 %v334
    %1493 = vmatpush1.bf16.msra.mxu0 %v333
    %1494 = vmatprep.subr.bf16.mxu0 0
    %1495 = vmatpush1.bf16.msra.mxu0 0
    %1496 = vmatprep.subr.bf16.mxu0 0
    %1497 = vmatpush1.bf16.msra.mxu0 0
    %1498 = vmatprep.subr.bf16.mxu0 0
    %1499 = vmatpush1.bf16.msra.mxu0 0
    %1500 = vmatprep.subr.bf16.mxu0 0
    %1501 = vmatpush1.bf16.msra.mxu0 0
    %1502 = vmatprep.subr.bf16.mxu0 0
    %1503 = vmatpush1.bf16.msra.mxu0 0
    %1504 = vmatprep.subr.bf16.mxu0 0
    %1505 = vmatpush1.bf16.msra.mxu0 0
    %1506 = vmatprep.subr.bf16.mxu0 0
    %1507 = vmatpush1.bf16.msra.mxu0 0
    %1508 = vmatprep.subr.bf16.mxu0 0
    %1509 = vmatpush1.bf16.msra.mxu0 0
    %1510 = vmatprep.mubr.bf16.mxu0 0
    %1511 = vmatmul.mubr.bf16.gmra.mrb[0].mxu0 %v1474
    %v1512 = vpop.f32.mrb[0].mxu0
    %v1513 = vadd.f32 %v69, %v1512
    %v1514 = vpop.f32.mrb[0].mxu0
    %v1515 = vadd.f32 %v73, %v1514
    %v1516 = vpop.f32.mrb[0].mxu0
    %v1517 = vadd.f32 %v69, %v1516
    %v1518 = vpop.f32.mrb[0].mxu0
    %v1519 = vadd.f32 %v73, %v1518
    %1520 = vmatprep.mubr.bf16.mxu0 0
    %1521 = vmatmul.mubr.bf16.gmra.mrb[0].mxu0 %v1475
    %v1522 = vpop.f32.mrb[0].mxu0
    %v1523 = vadd.f32 %v69, %v1522
    %v1524 = vpop.f32.mrb[0].mxu0
    %v1525 = vadd.f32 %v73, %v1524
    %v1526 = vpop.f32.mrb[0].mxu0
    %v1527 = vadd.f32 %v69, %v1526
    %v1528 = vpop.f32.mrb[0].mxu0
    %v1529 = vadd.f32 %v73, %v1528
    %1530 = vdwg.mxu0
    %s1531 = scalar_lea.vmem [#allocation2], 256
    %1532 = vst [vmem:[%s1531] sm:$0xff] %v1513
    %1533 = vst [vmem:[%s1531 + $0x8] sm:$0xff] %v1515
    %1534 = vst [vmem:[%s1531 + $0x10] sm:$0xff] %v1517
    %1535 = vst [vmem:[%s1531 + $0x18] sm:$0xff] %v1519
    %1536 = vst [vmem:[%s1531 + $0x20] sm:$0xff] %v1523
    %1537 = vst [vmem:[%s1531 + $0x28] sm:$0xff] %v1525
    %1538 = vst [vmem:[%s1531 + $0x30] sm:$0xff] %v1527
    %1539 = vst [vmem:[%s1531 + $0x38] sm:$0xff] %v1529
    %v1540 = vld [vmem:[%s0] sm:$0x4]
    %v1541 = vld [vmem:[%s0 + $0x4] sm:$0x4]
    %v1542 = vld [vmem:[%s0 + $0x8] sm:$0x4]
    %v1543 = vld [vmem:[%s0 + $0xc] sm:$0x4]
    %v1544 = vld [vmem:[%s0 + $0x10] sm:$0x4]
    %v1545 = vld [vmem:[%s0 + $0x14] sm:$0x4]
    %v1546 = vld [vmem:[%s0 + $0x18] sm:$0x4]
    %v1547 = vld [vmem:[%s0 + $0x1c] sm:$0x4]
    %v1548 = vld [vmem:[%s0 + $0x20] sm:$0x4]
    %v1549 = vld [vmem:[%s0 + $0x24] sm:$0x4]
    %v1550 = vld [vmem:[%s0 + $0x28] sm:$0x4]
    %v1551 = vld [vmem:[%s0 + $0x2c] sm:$0x4]
    %v1552 = vld [vmem:[%s0 + $0x30] sm:$0x4]
    %v1553 = vld [vmem:[%s0 + $0x34] sm:$0x4]
    %v1554 = vld [vmem:[%s0 + $0x38] sm:$0x4]
    %v1555 = vld [vmem:[%s0 + $0x3c] sm:$0x4]
    %v1556 = vld [vmem:[%s0 + $0x40] sm:$0x4]
    %v1557 = vld [vmem:[%s0 + $0x44] sm:$0x4]
    %v1558 = vld [vmem:[%s0 + $0x48] sm:$0x4]
    %v1559 = vld [vmem:[%s0 + $0x4c] sm:$0x4]
    %v1560 = vld [vmem:[%s0 + $0x50] sm:$0x4]
    %v1561 = vld [vmem:[%s0 + $0x54] sm:$0x4]
    %v1562 = vld [vmem:[%s0 + $0x58] sm:$0x4]
    %v1563 = vld [vmem:[%s0 + $0x5c] sm:$0x4]
    %v1564 = vld [vmem:[%s0 + $0x60] sm:$0x4]
    %v1565 = vld [vmem:[%s0 + $0x64] sm:$0x4]
    %v1566 = vld [vmem:[%s0 + $0x68] sm:$0x4]
    %v1567 = vld [vmem:[%s0 + $0x6c] sm:$0x4]
    %v1568 = vld [vmem:[%s0 + $0x70] sm:$0x4]
    %v1569 = vld [vmem:[%s0 + $0x74] sm:$0x4]
    %v1570 = vld [vmem:[%s0 + $0x78] sm:$0x4]
    %v1571 = vld [vmem:[%s0 + $0x7c] sm:$0x4]
    %v1604 = vunpack.c.l.b16 %v1540
    %v1605 = vunpack.c.l.b16 %v1541
    %v1606 = vunpack.c.l.b16 %v1542
    %v1607 = vunpack.c.l.b16 %v1543
    %v1608 = vunpack.c.l.b16 %v1544
    %v1609 = vunpack.c.l.b16 %v1545
    %v1610 = vunpack.c.l.b16 %v1546
    %v1611 = vunpack.c.l.b16 %v1547
    %v1612 = vunpack.c.l.b16 %v1548
    %v1613 = vunpack.c.l.b16 %v1549
    %v1614 = vunpack.c.l.b16 %v1550
    %v1615 = vunpack.c.l.b16 %v1551
    %v1616 = vunpack.c.l.b16 %v1552
    %v1617 = vunpack.c.l.b16 %v1553
    %v1618 = vunpack.c.l.b16 %v1554
    %v1619 = vunpack.c.l.b16 %v1555
    %v1620 = vunpack.c.l.b16 %v1556
    %v1621 = vunpack.c.l.b16 %v1557
    %v1622 = vunpack.c.l.b16 %v1558
    %v1623 = vunpack.c.l.b16 %v1559
    %v1624 = vunpack.c.l.b16 %v1560
    %v1625 = vunpack.c.l.b16 %v1561
    %v1626 = vunpack.c.l.b16 %v1562
    %v1627 = vunpack.c.l.b16 %v1563
    %v1628 = vunpack.c.l.b16 %v1564
    %v1629 = vunpack.c.l.b16 %v1565
    %v1630 = vunpack.c.l.b16 %v1566
    %v1631 = vunpack.c.l.b16 %v1567
    %v1632 = vunpack.c.l.b16 %v1568
    %v1633 = vunpack.c.l.b16 %v1569
    %v1634 = vunpack.c.l.b16 %v1570
    %v1635 = vunpack.c.l.b16 %v1571
    %v1636 = vpack.c.b16 %v1604, %v1604
    %v1637 = vpack.c.b16 %v1605, %v1605
    %v1638 = vpack.c.b16 %v1606, %v1606
    %v1639 = vpack.c.b16 %v1607, %v1607
    %v1640 = vpack.c.b16 %v1608, %v1608
    %v1641 = vpack.c.b16 %v1609, %v1609
    %v1642 = vpack.c.b16 %v1610, %v1610
    %v1643 = vpack.c.b16 %v1611, %v1611
    %v1644 = vpack.c.b16 %v1612, %v1612
    %v1645 = vpack.c.b16 %v1613, %v1613
    %v1646 = vpack.c.b16 %v1614, %v1614
    %v1647 = vpack.c.b16 %v1615, %v1615
    %v1648 = vpack.c.b16 %v1616, %v1616
    %v1649 = vpack.c.b16 %v1617, %v1617
    %v1650 = vpack.c.b16 %v1618, %v1618
    %v1651 = vpack.c.b16 %v1619, %v1619
    %v1652 = vpack.c.b16 %v1620, %v1620
    %v1653 = vpack.c.b16 %v1621, %v1621
    %v1654 = vpack.c.b16 %v1622, %v1622
    %v1655 = vpack.c.b16 %v1623, %v1623
    %v1656 = vpack.c.b16 %v1624, %v1624
    %v1657 = vpack.c.b16 %v1625, %v1625
    %v1658 = vpack.c.b16 %v1626, %v1626
    %v1659 = vpack.c.b16 %v1627, %v1627
    %v1660 = vpack.c.b16 %v1628, %v1628
    %v1661 = vpack.c.b16 %v1629, %v1629
    %v1662 = vpack.c.b16 %v1630, %v1630
    %v1663 = vpack.c.b16 %v1631, %v1631
    %v1664 = vpack.c.b16 %v1632, %v1632
    %v1665 = vpack.c.b16 %v1633, %v1633
    %v1666 = vpack.c.b16 %v1634, %v1634
    %v1667 = vpack.c.b16 %v1635, %v1635
    %v1668 = vunpack.c.l.b16 %v1636
    %v1669 = vunpack.c.l.b16 %v1637
    %v1670 = vunpack.c.l.b16 %v1638
    %v1671 = vunpack.c.l.b16 %v1639
    %v1672 = vunpack.c.l.b16 %v1640
    %v1673 = vunpack.c.l.b16 %v1641
    %v1674 = vunpack.c.l.b16 %v1642
    %v1675 = vunpack.c.l.b16 %v1643
    %v1676 = vunpack.c.l.b16 %v1644
    %v1677 = vunpack.c.l.b16 %v1645
    %v1678 = vunpack.c.l.b16 %v1646
    %v1679 = vunpack.c.l.b16 %v1647
    %v1680 = vunpack.c.l.b16 %v1648
    %v1681 = vunpack.c.l.b16 %v1649
    %v1682 = vunpack.c.l.b16 %v1650
    %v1683 = vunpack.c.l.b16 %v1651
    %v1684 = vunpack.c.l.b16 %v1652
    %v1685 = vunpack.c.l.b16 %v1653
    %v1686 = vunpack.c.l.b16 %v1654
    %v1687 = vunpack.c.l.b16 %v1655
    %v1688 = vunpack.c.l.b16 %v1656
    %v1689 = vunpack.c.l.b16 %v1657
    %v1690 = vunpack.c.l.b16 %v1658
    %v1691 = vunpack.c.l.b16 %v1659
    %v1692 = vunpack.c.l.b16 %v1660
    %v1693 = vunpack.c.l.b16 %v1661
    %v1694 = vunpack.c.l.b16 %v1662
    %v1695 = vunpack.c.l.b16 %v1663
    %v1696 = vunpack.c.l.b16 %v1664
    %v1697 = vunpack.c.l.b16 %v1665
    %v1698 = vunpack.c.l.b16 %v1666
    %v1699 = vunpack.c.l.b16 %v1667
    %v1700 = vrot.slane %v1668, 5
    %v1701 = vrot.slane %v1669, 4
    %v1702 = vsel %vm205, %v1701, %v1700
    %v1703 = vrot.slane %v1670, 3
    %v1704 = vsel %vm208, %v1703, %v1702
    %v1705 = vrot.slane %v1671, 2
    %v1706 = vsel %vm211, %v1705, %v1704
    %v1707 = vrot.slane %v1672, 1
    %v1708 = vsel %vm214, %v1707, %v1706
    %v1709 = vsel %vm217, %v1673, %v1708
    %v1710 = vrot.slane %v1674, 7
    %v1711 = vsel %vm220, %v1710, %v1709
    %v1712 = vrot.slane %v1675, 6
    %v1713 = vsel %vm223, %v1712, %v1711
    %v1714 = vrot.slane %v1676, 5
    %v1715 = vrot.slane %v1677, 4
    %v1716 = vsel %vm205, %v1715, %v1714
    %v1717 = vrot.slane %v1678, 3
    %v1718 = vsel %vm208, %v1717, %v1716
    %v1719 = vrot.slane %v1679, 2
    %v1720 = vsel %vm211, %v1719, %v1718
    %v1721 = vrot.slane %v1680, 1
    %v1722 = vsel %vm214, %v1721, %v1720
    %v1723 = vsel %vm217, %v1681, %v1722
    %v1724 = vrot.slane %v1682, 7
    %v1725 = vsel %vm220, %v1724, %v1723
    %v1726 = vrot.slane %v1683, 6
    %v1727 = vsel %vm223, %v1726, %v1725
    %v1728 = vrot.slane %v1684, 5
    %v1729 = vrot.slane %v1685, 4
    %v1730 = vsel %vm205, %v1729, %v1728
    %v1731 = vrot.slane %v1686, 3
    %v1732 = vsel %vm208, %v1731, %v1730
    %v1733 = vrot.slane %v1687, 2
    %v1734 = vsel %vm211, %v1733, %v1732
    %v1735 = vrot.slane %v1688, 1
    %v1736 = vsel %vm214, %v1735, %v1734
    %v1737 = vsel %vm217, %v1689, %v1736
    %v1738 = vrot.slane %v1690, 7
    %v1739 = vsel %vm220, %v1738, %v1737
    %v1740 = vrot.slane %v1691, 6
    %v1741 = vsel %vm223, %v1740, %v1739
    %v1742 = vrot.slane %v1692, 5
    %v1743 = vrot.slane %v1693, 4
    %v1744 = vsel %vm205, %v1743, %v1742
    %v1745 = vrot.slane %v1694, 3
    %v1746 = vsel %vm208, %v1745, %v1744
    %v1747 = vrot.slane %v1695, 2
    %v1748 = vsel %vm211, %v1747, %v1746
    %v1749 = vrot.slane %v1696, 1
    %v1750 = vsel %vm214, %v1749, %v1748
    %v1751 = vsel %vm217, %v1697, %v1750
    %v1752 = vrot.slane %v1698, 7
    %v1753 = vsel %vm220, %v1752, %v1751
    %v1754 = vrot.slane %v1699, 6
    %v1755 = vsel %vm223, %v1754, %v1753
    %v1756 = vpack.c.b16 %v1727, %v1713
    %v1757 = vpack.c.b16 %v1755, %v1741
    %1760 = vmatprep.subr.bf16.mxu0 %v320
    %1761 = vmatpush1.bf16.msra.mxu0 %v319
    %1762 = vmatprep.subr.bf16.mxu0 %v322
    %1763 = vmatpush1.bf16.msra.mxu0 %v321
    %1764 = vmatprep.subr.bf16.mxu0 %v324
    %1765 = vmatpush1.bf16.msra.mxu0 %v323
    %1766 = vmatprep.subr.bf16.mxu0 %v326
    %1767 = vmatpush1.bf16.msra.mxu0 %v325
    %1768 = vmatprep.subr.bf16.mxu0 %v328
    %1769 = vmatpush1.bf16.msra.mxu0 %v327
    %1770 = vmatprep.subr.bf16.mxu0 %v330
    %1771 = vmatpush1.bf16.msra.mxu0 %v329
    %1772 = vmatprep.subr.bf16.mxu0 %v332
    %1773 = vmatpush1.bf16.msra.mxu0 %v331
    %1774 = vmatprep.subr.bf16.mxu0 %v334
    %1775 = vmatpush1.bf16.msra.mxu0 %v333
    %1776 = vmatprep.subr.bf16.mxu0 0
    %1777 = vmatpush1.bf16.msra.mxu0 0
    %1778 = vmatprep.subr.bf16.mxu0 0
    %1779 = vmatpush1.bf16.msra.mxu0 0
    %1780 = vmatprep.subr.bf16.mxu0 0
    %1781 = vmatpush1.bf16.msra.mxu0 0
    %1782 = vmatprep.subr.bf16.mxu0 0
    %1783 = vmatpush1.bf16.msra.mxu0 0
    %1784 = vmatprep.subr.bf16.mxu0 0
    %1785 = vmatpush1.bf16.msra.mxu0 0
    %1786 = vmatprep.subr.bf16.mxu0 0
    %1787 = vmatpush1.bf16.msra.mxu0 0
    %1788 = vmatprep.subr.bf16.mxu0 0
    %1789 = vmatpush1.bf16.msra.mxu0 0
    %1790 = vmatprep.subr.bf16.mxu0 0
    %1791 = vmatpush1.bf16.msra.mxu0 0
    %1792 = vmatprep.mubr.bf16.mxu0 0
    %1793 = vmatmul.mubr.bf16.gmra.mrb[0].mxu0 %v1756
    %v1794 = vpop.f32.mrb[0].mxu0
    %v1795 = vadd.f32 %v69, %v1794
    %v1796 = vpop.f32.mrb[0].mxu0
    %v1797 = vadd.f32 %v73, %v1796
    %v1798 = vpop.f32.mrb[0].mxu0
    %v1799 = vadd.f32 %v69, %v1798
    %v1800 = vpop.f32.mrb[0].mxu0
    %v1801 = vadd.f32 %v73, %v1800
    %1802 = vmatprep.mubr.bf16.mxu0 0
    %1803 = vmatmul.mubr.bf16.gmra.mrb[0].mxu0 %v1757
    %v1804 = vpop.f32.mrb[0].mxu0
    %v1805 = vadd.f32 %v69, %v1804
    %v1806 = vpop.f32.mrb[0].mxu0
    %v1807 = vadd.f32 %v73, %v1806
    %v1808 = vpop.f32.mrb[0].mxu0
    %v1809 = vadd.f32 %v69, %v1808
    %v1810 = vpop.f32.mrb[0].mxu0
    %v1811 = vadd.f32 %v73, %v1810
    %1812 = vdwg.mxu0
    %s1813 = scalar_lea.vmem [#allocation2], 320
    %1814 = vst [vmem:[%s1813] sm:$0xff] %v1795
    %1815 = vst [vmem:[%s1813 + $0x8] sm:$0xff] %v1797
    %1816 = vst [vmem:[%s1813 + $0x10] sm:$0xff] %v1799
    %1817 = vst [vmem:[%s1813 + $0x18] sm:$0xff] %v1801
    %1818 = vst [vmem:[%s1813 + $0x20] sm:$0xff] %v1805
    %1819 = vst [vmem:[%s1813 + $0x28] sm:$0xff] %v1807
    %1820 = vst [vmem:[%s1813 + $0x30] sm:$0xff] %v1809
    %1821 = vst [vmem:[%s1813 + $0x38] sm:$0xff] %v1811
    %v1822 = vld [vmem:[%s0] sm:$0x8]
    %v1823 = vld [vmem:[%s0 + $0x4] sm:$0x8]
    %v1824 = vld [vmem:[%s0 + $0x8] sm:$0x8]
    %v1825 = vld [vmem:[%s0 + $0xc] sm:$0x8]
    %v1826 = vld [vmem:[%s0 + $0x10] sm:$0x8]
    %v1827 = vld [vmem:[%s0 + $0x14] sm:$0x8]
    %v1828 = vld [vmem:[%s0 + $0x18] sm:$0x8]
    %v1829 = vld [vmem:[%s0 + $0x1c] sm:$0x8]
    %v1830 = vld [vmem:[%s0 + $0x20] sm:$0x8]
    %v1831 = vld [vmem:[%s0 + $0x24] sm:$0x8]
    %v1832 = vld [vmem:[%s0 + $0x28] sm:$0x8]
    %v1833 = vld [vmem:[%s0 + $0x2c] sm:$0x8]
    %v1834 = vld [vmem:[%s0 + $0x30] sm:$0x8]
    %v1835 = vld [vmem:[%s0 + $0x34] sm:$0x8]
    %v1836 = vld [vmem:[%s0 + $0x38] sm:$0x8]
    %v1837 = vld [vmem:[%s0 + $0x3c] sm:$0x8]
    %v1838 = vld [vmem:[%s0 + $0x40] sm:$0x8]
    %v1839 = vld [vmem:[%s0 + $0x44] sm:$0x8]
    %v1840 = vld [vmem:[%s0 + $0x48] sm:$0x8]
    %v1841 = vld [vmem:[%s0 + $0x4c] sm:$0x8]
    %v1842 = vld [vmem:[%s0 + $0x50] sm:$0x8]
    %v1843 = vld [vmem:[%s0 + $0x54] sm:$0x8]
    %v1844 = vld [vmem:[%s0 + $0x58] sm:$0x8]
    %v1845 = vld [vmem:[%s0 + $0x5c] sm:$0x8]
    %v1846 = vld [vmem:[%s0 + $0x60] sm:$0x8]
    %v1847 = vld [vmem:[%s0 + $0x64] sm:$0x8]
    %v1848 = vld [vmem:[%s0 + $0x68] sm:$0x8]
    %v1849 = vld [vmem:[%s0 + $0x6c] sm:$0x8]
    %v1850 = vld [vmem:[%s0 + $0x70] sm:$0x8]
    %v1851 = vld [vmem:[%s0 + $0x74] sm:$0x8]
    %v1852 = vld [vmem:[%s0 + $0x78] sm:$0x8]
    %v1853 = vld [vmem:[%s0 + $0x7c] sm:$0x8]
    %v1886 = vunpack.c.l.b16 %v1822
    %v1887 = vunpack.c.l.b16 %v1823
    %v1888 = vunpack.c.l.b16 %v1824
    %v1889 = vunpack.c.l.b16 %v1825
    %v1890 = vunpack.c.l.b16 %v1826
    %v1891 = vunpack.c.l.b16 %v1827
    %v1892 = vunpack.c.l.b16 %v1828
    %v1893 = vunpack.c.l.b16 %v1829
    %v1894 = vunpack.c.l.b16 %v1830
    %v1895 = vunpack.c.l.b16 %v1831
    %v1896 = vunpack.c.l.b16 %v1832
    %v1897 = vunpack.c.l.b16 %v1833
    %v1898 = vunpack.c.l.b16 %v1834
    %v1899 = vunpack.c.l.b16 %v1835
    %v1900 = vunpack.c.l.b16 %v1836
    %v1901 = vunpack.c.l.b16 %v1837
    %v1902 = vunpack.c.l.b16 %v1838
    %v1903 = vunpack.c.l.b16 %v1839
    %v1904 = vunpack.c.l.b16 %v1840
    %v1905 = vunpack.c.l.b16 %v1841
    %v1906 = vunpack.c.l.b16 %v1842
    %v1907 = vunpack.c.l.b16 %v1843
    %v1908 = vunpack.c.l.b16 %v1844
    %v1909 = vunpack.c.l.b16 %v1845
    %v1910 = vunpack.c.l.b16 %v1846
    %v1911 = vunpack.c.l.b16 %v1847
    %v1912 = vunpack.c.l.b16 %v1848
    %v1913 = vunpack.c.l.b16 %v1849
    %v1914 = vunpack.c.l.b16 %v1850
    %v1915 = vunpack.c.l.b16 %v1851
    %v1916 = vunpack.c.l.b16 %v1852
    %v1917 = vunpack.c.l.b16 %v1853
    %v1918 = vpack.c.b16 %v1886, %v1886
    %v1919 = vpack.c.b16 %v1887, %v1887
    %v1920 = vpack.c.b16 %v1888, %v1888
    %v1921 = vpack.c.b16 %v1889, %v1889
    %v1922 = vpack.c.b16 %v1890, %v1890
    %v1923 = vpack.c.b16 %v1891, %v1891
    %v1924 = vpack.c.b16 %v1892, %v1892
    %v1925 = vpack.c.b16 %v1893, %v1893
    %v1926 = vpack.c.b16 %v1894, %v1894
    %v1927 = vpack.c.b16 %v1895, %v1895
    %v1928 = vpack.c.b16 %v1896, %v1896
    %v1929 = vpack.c.b16 %v1897, %v1897
    %v1930 = vpack.c.b16 %v1898, %v1898
    %v1931 = vpack.c.b16 %v1899, %v1899
    %v1932 = vpack.c.b16 %v1900, %v1900
    %v1933 = vpack.c.b16 %v1901, %v1901
    %v1934 = vpack.c.b16 %v1902, %v1902
    %v1935 = vpack.c.b16 %v1903, %v1903
    %v1936 = vpack.c.b16 %v1904, %v1904
    %v1937 = vpack.c.b16 %v1905, %v1905
    %v1938 = vpack.c.b16 %v1906, %v1906
    %v1939 = vpack.c.b16 %v1907, %v1907
    %v1940 = vpack.c.b16 %v1908, %v1908
    %v1941 = vpack.c.b16 %v1909, %v1909
    %v1942 = vpack.c.b16 %v1910, %v1910
    %v1943 = vpack.c.b16 %v1911, %v1911
    %v1944 = vpack.c.b16 %v1912, %v1912
    %v1945 = vpack.c.b16 %v1913, %v1913
    %v1946 = vpack.c.b16 %v1914, %v1914
    %v1947 = vpack.c.b16 %v1915, %v1915
    %v1948 = vpack.c.b16 %v1916, %v1916
    %v1949 = vpack.c.b16 %v1917, %v1917
    %v1950 = vunpack.c.l.b16 %v1918
    %v1951 = vunpack.c.l.b16 %v1919
    %v1952 = vunpack.c.l.b16 %v1920
    %v1953 = vunpack.c.l.b16 %v1921
    %v1954 = vunpack.c.l.b16 %v1922
    %v1955 = vunpack.c.l.b16 %v1923
    %v1956 = vunpack.c.l.b16 %v1924
    %v1957 = vunpack.c.l.b16 %v1925
    %v1958 = vunpack.c.l.b16 %v1926
    %v1959 = vunpack.c.l.b16 %v1927
    %v1960 = vunpack.c.l.b16 %v1928
    %v1961 = vunpack.c.l.b16 %v1929
    %v1962 = vunpack.c.l.b16 %v1930
    %v1963 = vunpack.c.l.b16 %v1931
    %v1964 = vunpack.c.l.b16 %v1932
    %v1965 = vunpack.c.l.b16 %v1933
    %v1966 = vunpack.c.l.b16 %v1934
    %v1967 = vunpack.c.l.b16 %v1935
    %v1968 = vunpack.c.l.b16 %v1936
    %v1969 = vunpack.c.l.b16 %v1937
    %v1970 = vunpack.c.l.b16 %v1938
    %v1971 = vunpack.c.l.b16 %v1939
    %v1972 = vunpack.c.l.b16 %v1940
    %v1973 = vunpack.c.l.b16 %v1941
    %v1974 = vunpack.c.l.b16 %v1942
    %v1975 = vunpack.c.l.b16 %v1943
    %v1976 = vunpack.c.l.b16 %v1944
    %v1977 = vunpack.c.l.b16 %v1945
    %v1978 = vunpack.c.l.b16 %v1946
    %v1979 = vunpack.c.l.b16 %v1947
    %v1980 = vunpack.c.l.b16 %v1948
    %v1981 = vunpack.c.l.b16 %v1949
    %v1982 = vrot.slane %v1950, 6
    %v1983 = vrot.slane %v1951, 5
    %v1984 = vsel %vm205, %v1983, %v1982
    %v1985 = vrot.slane %v1952, 4
    %v1986 = vsel %vm208, %v1985, %v1984
    %v1987 = vrot.slane %v1953, 3
    %v1988 = vsel %vm211, %v1987, %v1986
    %v1989 = vrot.slane %v1954, 2
    %v1990 = vsel %vm214, %v1989, %v1988
    %v1991 = vrot.slane %v1955, 1
    %v1992 = vsel %vm217, %v1991, %v1990
    %v1993 = vsel %vm220, %v1956, %v1992
    %v1994 = vrot.slane %v1957, 7
    %v1995 = vsel %vm223, %v1994, %v1993
    %v1996 = vrot.slane %v1958, 6
    %v1997 = vrot.slane %v1959, 5
    %v1998 = vsel %vm205, %v1997, %v1996
    %v1999 = vrot.slane %v1960, 4
    %v2000 = vsel %vm208, %v1999, %v1998
    %v2001 = vrot.slane %v1961, 3
    %v2002 = vsel %vm211, %v2001, %v2000
    %v2003 = vrot.slane %v1962, 2
    %v2004 = vsel %vm214, %v2003, %v2002
    %v2005 = vrot.slane %v1963, 1
    %v2006 = vsel %vm217, %v2005, %v2004
    %v2007 = vsel %vm220, %v1964, %v2006
    %v2008 = vrot.slane %v1965, 7
    %v2009 = vsel %vm223, %v2008, %v2007
    %v2010 = vrot.slane %v1966, 6
    %v2011 = vrot.slane %v1967, 5
    %v2012 = vsel %vm205, %v2011, %v2010
    %v2013 = vrot.slane %v1968, 4
    %v2014 = vsel %vm208, %v2013, %v2012
    %v2015 = vrot.slane %v1969, 3
    %v2016 = vsel %vm211, %v2015, %v2014
    %v2017 = vrot.slane %v1970, 2
    %v2018 = vsel %vm214, %v2017, %v2016
    %v2019 = vrot.slane %v1971, 1
    %v2020 = vsel %vm217, %v2019, %v2018
    %v2021 = vsel %vm220, %v1972, %v2020
    %v2022 = vrot.slane %v1973, 7
    %v2023 = vsel %vm223, %v2022, %v2021
    %v2024 = vrot.slane %v1974, 6
    %v2025 = vrot.slane %v1975, 5
    %v2026 = vsel %vm205, %v2025, %v2024
    %v2027 = vrot.slane %v1976, 4
    %v2028 = vsel %vm208, %v2027, %v2026
    %v2029 = vrot.slane %v1977, 3
    %v2030 = vsel %vm211, %v2029, %v2028
    %v2031 = vrot.slane %v1978, 2
    %v2032 = vsel %vm214, %v2031, %v2030
    %v2033 = vrot.slane %v1979, 1
    %v2034 = vsel %vm217, %v2033, %v2032
    %v2035 = vsel %vm220, %v1980, %v2034
    %v2036 = vrot.slane %v1981, 7
    %v2037 = vsel %vm223, %v2036, %v2035
    %v2038 = vpack.c.b16 %v2009, %v1995
    %v2039 = vpack.c.b16 %v2037, %v2023
    %2042 = vmatprep.subr.bf16.mxu0 %v320
    %2043 = vmatpush1.bf16.msra.mxu0 %v319
    %2044 = vmatprep.subr.bf16.mxu0 %v322
    %2045 = vmatpush1.bf16.msra.mxu0 %v321
    %2046 = vmatprep.subr.bf16.mxu0 %v324
    %2047 = vmatpush1.bf16.msra.mxu0 %v323
    %2048 = vmatprep.subr.bf16.mxu0 %v326
    %2049 = vmatpush1.bf16.msra.mxu0 %v325
    %2050 = vmatprep.subr.bf16.mxu0 %v328
    %2051 = vmatpush1.bf16.msra.mxu0 %v327
    %2052 = vmatprep.subr.bf16.mxu0 %v330
    %2053 = vmatpush1.bf16.msra.mxu0 %v329
    %2054 = vmatprep.subr.bf16.mxu0 %v332
    %2055 = vmatpush1.bf16.msra.mxu0 %v331
    %2056 = vmatprep.subr.bf16.mxu0 %v334
    %2057 = vmatpush1.bf16.msra.mxu0 %v333
    %2058 = vmatprep.subr.bf16.mxu0 0
    %2059 = vmatpush1.bf16.msra.mxu0 0
    %2060 = vmatprep.subr.bf16.mxu0 0
    %2061 = vmatpush1.bf16.msra.mxu0 0
    %2062 = vmatprep.subr.bf16.mxu0 0
    %2063 = vmatpush1.bf16.msra.mxu0 0
    %2064 = vmatprep.subr.bf16.mxu0 0
    %2065 = vmatpush1.bf16.msra.mxu0 0
    %2066 = vmatprep.subr.bf16.mxu0 0
    %2067 = vmatpush1.bf16.msra.mxu0 0
    %2068 = vmatprep.subr.bf16.mxu0 0
    %2069 = vmatpush1.bf16.msra.mxu0 0
    %2070 = vmatprep.subr.bf16.mxu0 0
    %2071 = vmatpush1.bf16.msra.mxu0 0
    %2072 = vmatprep.subr.bf16.mxu0 0
    %2073 = vmatpush1.bf16.msra.mxu0 0
    %2074 = vmatprep.mubr.bf16.mxu0 0
    %2075 = vmatmul.mubr.bf16.gmra.mrb[0].mxu0 %v2038
    %v2076 = vpop.f32.mrb[0].mxu0
    %v2077 = vadd.f32 %v69, %v2076
    %v2078 = vpop.f32.mrb[0].mxu0
    %v2079 = vadd.f32 %v73, %v2078
    %v2080 = vpop.f32.mrb[0].mxu0
    %v2081 = vadd.f32 %v69, %v2080
    %v2082 = vpop.f32.mrb[0].mxu0
    %v2083 = vadd.f32 %v73, %v2082
    %2084 = vmatprep.mubr.bf16.mxu0 0
    %2085 = vmatmul.mubr.bf16.gmra.mrb[0].mxu0 %v2039
    %v2086 = vpop.f32.mrb[0].mxu0
    %v2087 = vadd.f32 %v69, %v2086
    %v2088 = vpop.f32.mrb[0].mxu0
    %v2089 = vadd.f32 %v73, %v2088
    %v2090 = vpop.f32.mrb[0].mxu0
    %v2091 = vadd.f32 %v69, %v2090
    %v2092 = vpop.f32.mrb[0].mxu0
    %v2093 = vadd.f32 %v73, %v2092
    %2094 = vdwg.mxu0
    %s2095 = scalar_lea.vmem [#allocation2], 384
    %2096 = vst [vmem:[%s2095] sm:$0xff] %v2077
    %2097 = vst [vmem:[%s2095 + $0x8] sm:$0xff] %v2079
    %2098 = vst [vmem:[%s2095 + $0x10] sm:$0xff] %v2081
    %2099 = vst [vmem:[%s2095 + $0x18] sm:$0xff] %v2083
    %2100 = vst [vmem:[%s2095 + $0x20] sm:$0xff] %v2087
    %2101 = vst [vmem:[%s2095 + $0x28] sm:$0xff] %v2089
    %2102 = vst [vmem:[%s2095 + $0x30] sm:$0xff] %v2091
    %2103 = vst [vmem:[%s2095 + $0x38] sm:$0xff] %v2093
    %v2104 = vld [vmem:[%s0] sm:$0x8]
    %v2105 = vld [vmem:[%s0 + $0x4] sm:$0x8]
    %v2106 = vld [vmem:[%s0 + $0x8] sm:$0x8]
    %v2107 = vld [vmem:[%s0 + $0xc] sm:$0x8]
    %v2108 = vld [vmem:[%s0 + $0x10] sm:$0x8]
    %v2109 = vld [vmem:[%s0 + $0x14] sm:$0x8]
    %v2110 = vld [vmem:[%s0 + $0x18] sm:$0x8]
    %v2111 = vld [vmem:[%s0 + $0x1c] sm:$0x8]
    %v2112 = vld [vmem:[%s0 + $0x20] sm:$0x8]
    %v2113 = vld [vmem:[%s0 + $0x24] sm:$0x8]
    %v2114 = vld [vmem:[%s0 + $0x28] sm:$0x8]
    %v2115 = vld [vmem:[%s0 + $0x2c] sm:$0x8]
    %v2116 = vld [vmem:[%s0 + $0x30] sm:$0x8]
    %v2117 = vld [vmem:[%s0 + $0x34] sm:$0x8]
    %v2118 = vld [vmem:[%s0 + $0x38] sm:$0x8]
    %v2119 = vld [vmem:[%s0 + $0x3c] sm:$0x8]
    %v2120 = vld [vmem:[%s0 + $0x40] sm:$0x8]
    %v2121 = vld [vmem:[%s0 + $0x44] sm:$0x8]
    %v2122 = vld [vmem:[%s0 + $0x48] sm:$0x8]
    %v2123 = vld [vmem:[%s0 + $0x4c] sm:$0x8]
    %v2124 = vld [vmem:[%s0 + $0x50] sm:$0x8]
    %v2125 = vld [vmem:[%s0 + $0x54] sm:$0x8]
    %v2126 = vld [vmem:[%s0 + $0x58] sm:$0x8]
    %v2127 = vld [vmem:[%s0 + $0x5c] sm:$0x8]
    %v2128 = vld [vmem:[%s0 + $0x60] sm:$0x8]
    %v2129 = vld [vmem:[%s0 + $0x64] sm:$0x8]
    %v2130 = vld [vmem:[%s0 + $0x68] sm:$0x8]
    %v2131 = vld [vmem:[%s0 + $0x6c] sm:$0x8]
    %v2132 = vld [vmem:[%s0 + $0x70] sm:$0x8]
    %v2133 = vld [vmem:[%s0 + $0x74] sm:$0x8]
    %v2134 = vld [vmem:[%s0 + $0x78] sm:$0x8]
    %v2135 = vld [vmem:[%s0 + $0x7c] sm:$0x8]
    %v2168 = vunpack.c.l.b16 %v2104
    %v2169 = vunpack.c.l.b16 %v2105
    %v2170 = vunpack.c.l.b16 %v2106
    %v2171 = vunpack.c.l.b16 %v2107
    %v2172 = vunpack.c.l.b16 %v2108
    %v2173 = vunpack.c.l.b16 %v2109
    %v2174 = vunpack.c.l.b16 %v2110
    %v2175 = vunpack.c.l.b16 %v2111
    %v2176 = vunpack.c.l.b16 %v2112
    %v2177 = vunpack.c.l.b16 %v2113
    %v2178 = vunpack.c.l.b16 %v2114
    %v2179 = vunpack.c.l.b16 %v2115
    %v2180 = vunpack.c.l.b16 %v2116
    %v2181 = vunpack.c.l.b16 %v2117
    %v2182 = vunpack.c.l.b16 %v2118
    %v2183 = vunpack.c.l.b16 %v2119
    %v2184 = vunpack.c.l.b16 %v2120
    %v2185 = vunpack.c.l.b16 %v2121
    %v2186 = vunpack.c.l.b16 %v2122
    %v2187 = vunpack.c.l.b16 %v2123
    %v2188 = vunpack.c.l.b16 %v2124
    %v2189 = vunpack.c.l.b16 %v2125
    %v2190 = vunpack.c.l.b16 %v2126
    %v2191 = vunpack.c.l.b16 %v2127
    %v2192 = vunpack.c.l.b16 %v2128
    %v2193 = vunpack.c.l.b16 %v2129
    %v2194 = vunpack.c.l.b16 %v2130
    %v2195 = vunpack.c.l.b16 %v2131
    %v2196 = vunpack.c.l.b16 %v2132
    %v2197 = vunpack.c.l.b16 %v2133
    %v2198 = vunpack.c.l.b16 %v2134
    %v2199 = vunpack.c.l.b16 %v2135
    %v2200 = vpack.c.b16 %v2168, %v2168
    %v2201 = vpack.c.b16 %v2169, %v2169
    %v2202 = vpack.c.b16 %v2170, %v2170
    %v2203 = vpack.c.b16 %v2171, %v2171
    %v2204 = vpack.c.b16 %v2172, %v2172
    %v2205 = vpack.c.b16 %v2173, %v2173
    %v2206 = vpack.c.b16 %v2174, %v2174
    %v2207 = vpack.c.b16 %v2175, %v2175
    %v2208 = vpack.c.b16 %v2176, %v2176
    %v2209 = vpack.c.b16 %v2177, %v2177
    %v2210 = vpack.c.b16 %v2178, %v2178
    %v2211 = vpack.c.b16 %v2179, %v2179
    %v2212 = vpack.c.b16 %v2180, %v2180
    %v2213 = vpack.c.b16 %v2181, %v2181
    %v2214 = vpack.c.b16 %v2182, %v2182
    %v2215 = vpack.c.b16 %v2183, %v2183
    %v2216 = vpack.c.b16 %v2184, %v2184
    %v2217 = vpack.c.b16 %v2185, %v2185
    %v2218 = vpack.c.b16 %v2186, %v2186
    %v2219 = vpack.c.b16 %v2187, %v2187
    %v2220 = vpack.c.b16 %v2188, %v2188
    %v2221 = vpack.c.b16 %v2189, %v2189
    %v2222 = vpack.c.b16 %v2190, %v2190
    %v2223 = vpack.c.b16 %v2191, %v2191
    %v2224 = vpack.c.b16 %v2192, %v2192
    %v2225 = vpack.c.b16 %v2193, %v2193
    %v2226 = vpack.c.b16 %v2194, %v2194
    %v2227 = vpack.c.b16 %v2195, %v2195
    %v2228 = vpack.c.b16 %v2196, %v2196
    %v2229 = vpack.c.b16 %v2197, %v2197
    %v2230 = vpack.c.b16 %v2198, %v2198
    %v2231 = vpack.c.b16 %v2199, %v2199
    %v2232 = vunpack.c.l.b16 %v2200
    %v2233 = vunpack.c.l.b16 %v2201
    %v2234 = vunpack.c.l.b16 %v2202
    %v2235 = vunpack.c.l.b16 %v2203
    %v2236 = vunpack.c.l.b16 %v2204
    %v2237 = vunpack.c.l.b16 %v2205
    %v2238 = vunpack.c.l.b16 %v2206
    %v2239 = vunpack.c.l.b16 %v2207
    %v2240 = vunpack.c.l.b16 %v2208
    %v2241 = vunpack.c.l.b16 %v2209
    %v2242 = vunpack.c.l.b16 %v2210
    %v2243 = vunpack.c.l.b16 %v2211
    %v2244 = vunpack.c.l.b16 %v2212
    %v2245 = vunpack.c.l.b16 %v2213
    %v2246 = vunpack.c.l.b16 %v2214
    %v2247 = vunpack.c.l.b16 %v2215
    %v2248 = vunpack.c.l.b16 %v2216
    %v2249 = vunpack.c.l.b16 %v2217
    %v2250 = vunpack.c.l.b16 %v2218
    %v2251 = vunpack.c.l.b16 %v2219
    %v2252 = vunpack.c.l.b16 %v2220
    %v2253 = vunpack.c.l.b16 %v2221
    %v2254 = vunpack.c.l.b16 %v2222
    %v2255 = vunpack.c.l.b16 %v2223
    %v2256 = vunpack.c.l.b16 %v2224
    %v2257 = vunpack.c.l.b16 %v2225
    %v2258 = vunpack.c.l.b16 %v2226
    %v2259 = vunpack.c.l.b16 %v2227
    %v2260 = vunpack.c.l.b16 %v2228
    %v2261 = vunpack.c.l.b16 %v2229
    %v2262 = vunpack.c.l.b16 %v2230
    %v2263 = vunpack.c.l.b16 %v2231
    %v2264 = vrot.slane %v2232, 7
    %v2265 = vrot.slane %v2233, 6
    %v2266 = vsel %vm205, %v2265, %v2264
    %v2267 = vrot.slane %v2234, 5
    %v2268 = vsel %vm208, %v2267, %v2266
    %v2269 = vrot.slane %v2235, 4
    %v2270 = vsel %vm211, %v2269, %v2268
    %v2271 = vrot.slane %v2236, 3
    %v2272 = vsel %vm214, %v2271, %v2270
    %v2273 = vrot.slane %v2237, 2
    %v2274 = vsel %vm217, %v2273, %v2272
    %v2275 = vrot.slane %v2238, 1
    %v2276 = vsel %vm220, %v2275, %v2274
    %v2277 = vsel %vm223, %v2239, %v2276
    %v2278 = vrot.slane %v2240, 7
    %v2279 = vrot.slane %v2241, 6
    %v2280 = vsel %vm205, %v2279, %v2278
    %v2281 = vrot.slane %v2242, 5
    %v2282 = vsel %vm208, %v2281, %v2280
    %v2283 = vrot.slane %v2243, 4
    %v2284 = vsel %vm211, %v2283, %v2282
    %v2285 = vrot.slane %v2244, 3
    %v2286 = vsel %vm214, %v2285, %v2284
    %v2287 = vrot.slane %v2245, 2
    %v2288 = vsel %vm217, %v2287, %v2286
    %v2289 = vrot.slane %v2246, 1
    %v2290 = vsel %vm220, %v2289, %v2288
    %v2291 = vsel %vm223, %v2247, %v2290
    %v2292 = vrot.slane %v2248, 7
    %v2293 = vrot.slane %v2249, 6
    %v2294 = vsel %vm205, %v2293, %v2292
    %v2295 = vrot.slane %v2250, 5
    %v2296 = vsel %vm208, %v2295, %v2294
    %v2297 = vrot.slane %v2251, 4
    %v2298 = vsel %vm211, %v2297, %v2296
    %v2299 = vrot.slane %v2252, 3
    %v2300 = vsel %vm214, %v2299, %v2298
    %v2301 = vrot.slane %v2253, 2
    %v2302 = vsel %vm217, %v2301, %v2300
    %v2303 = vrot.slane %v2254, 1
    %v2304 = vsel %vm220, %v2303, %v2302
    %v2305 = vsel %vm223, %v2255, %v2304
    %v2306 = vrot.slane %v2256, 7
    %v2307 = vrot.slane %v2257, 6
    %v2308 = vsel %vm205, %v2307, %v2306
    %v2309 = vrot.slane %v2258, 5
    %v2310 = vsel %vm208, %v2309, %v2308
    %v2311 = vrot.slane %v2259, 4
    %v2312 = vsel %vm211, %v2311, %v2310
    %v2313 = vrot.slane %v2260, 3
    %v2314 = vsel %vm214, %v2313, %v2312
    %v2315 = vrot.slane %v2261, 2
    %v2316 = vsel %vm217, %v2315, %v2314
    %v2317 = vrot.slane %v2262, 1
    %v2318 = vsel %vm220, %v2317, %v2316
    %v2319 = vsel %vm223, %v2263, %v2318
    %v2320 = vpack.c.b16 %v2291, %v2277
    %v2321 = vpack.c.b16 %v2319, %v2305
    %2324 = vmatprep.subr.bf16.mxu0 %v320
    %2325 = vmatpush1.bf16.msra.mxu0 %v319
    %2326 = vmatprep.subr.bf16.mxu0 %v322
    %2327 = vmatpush1.bf16.msra.mxu0 %v321
    %2328 = vmatprep.subr.bf16.mxu0 %v324
    %2329 = vmatpush1.bf16.msra.mxu0 %v323
    %2330 = vmatprep.subr.bf16.mxu0 %v326
    %2331 = vmatpush1.bf16.msra.mxu0 %v325
    %2332 = vmatprep.subr.bf16.mxu0 %v328
    %2333 = vmatpush1.bf16.msra.mxu0 %v327
    %2334 = vmatprep.subr.bf16.mxu0 %v330
    %2335 = vmatpush1.bf16.msra.mxu0 %v329
    %2336 = vmatprep.subr.bf16.mxu0 %v332
    %2337 = vmatpush1.bf16.msra.mxu0 %v331
    %2338 = vmatprep.subr.bf16.mxu0 %v334
    %2339 = vmatpush1.bf16.msra.mxu0 %v333
    %2340 = vmatprep.subr.bf16.mxu0 0
    %2341 = vmatpush1.bf16.msra.mxu0 0
    %2342 = vmatprep.subr.bf16.mxu0 0
    %2343 = vmatpush1.bf16.msra.mxu0 0
    %2344 = vmatprep.subr.bf16.mxu0 0
    %2345 = vmatpush1.bf16.msra.mxu0 0
    %2346 = vmatprep.subr.bf16.mxu0 0
    %2347 = vmatpush1.bf16.msra.mxu0 0
    %2348 = vmatprep.subr.bf16.mxu0 0
    %2349 = vmatpush1.bf16.msra.mxu0 0
    %2350 = vmatprep.subr.bf16.mxu0 0
    %2351 = vmatpush1.bf16.msra.mxu0 0
    %2352 = vmatprep.subr.bf16.mxu0 0
    %2353 = vmatpush1.bf16.msra.mxu0 0
    %2354 = vmatprep.subr.bf16.mxu0 0
    %2355 = vmatpush1.bf16.msra.mxu0 0
    %2356 = vmatprep.mubr.bf16.mxu0 0
    %2357 = vmatmul.mubr.bf16.gmra.mrb[0].mxu0 %v2320
    %v2358 = vpop.f32.mrb[0].mxu0
    %v2359 = vadd.f32 %v69, %v2358
    %v2360 = vpop.f32.mrb[0].mxu0
    %v2361 = vadd.f32 %v73, %v2360
    %v2362 = vpop.f32.mrb[0].mxu0
    %v2363 = vadd.f32 %v69, %v2362
    %v2364 = vpop.f32.mrb[0].mxu0
    %v2365 = vadd.f32 %v73, %v2364
    %2366 = vmatprep.mubr.bf16.mxu0 0
    %2367 = vmatmul.mubr.bf16.gmra.mrb[0].mxu0 %v2321
    %v2368 = vpop.f32.mrb[0].mxu0
    %v2369 = vadd.f32 %v69, %v2368
    %v2370 = vpop.f32.mrb[0].mxu0
    %v2371 = vadd.f32 %v73, %v2370
    %v2372 = vpop.f32.mrb[0].mxu0
    %v2373 = vadd.f32 %v69, %v2372
    %v2374 = vpop.f32.mrb[0].mxu0
    %v2375 = vadd.f32 %v73, %v2374
    %2376 = vdwg.mxu0
    %s2377 = scalar_lea.vmem [#allocation2], 448
    %2378 = vst [vmem:[%s2377] sm:$0xff] %v2359
    %2379 = vst [vmem:[%s2377 + $0x8] sm:$0xff] %v2361
    %2380 = vst [vmem:[%s2377 + $0x10] sm:$0xff] %v2363
    %2381 = vst [vmem:[%s2377 + $0x18] sm:$0xff] %v2365
    %2382 = vst [vmem:[%s2377 + $0x20] sm:$0xff] %v2369
    %2383 = vst [vmem:[%s2377 + $0x28] sm:$0xff] %v2371
    %2384 = vst [vmem:[%s2377 + $0x30] sm:$0xff] %v2373
    %2385 = vst [vmem:[%s2377 + $0x38] sm:$0xff] %v2375
    // Predicated region
    $region14: #{_lambda_.5} parent=1 // pred_check
      _
    $region15: #{_lambda_.5} parent=1 // pred_check_branch
      %2387 = sbr.rel (0) target = $region17
    $region16: #{_lambda_.5} parent=1 // pred_region
      %s2389 = ssub.s32 8192, 8192
      %2390 = vsyncadd [#allocation3], %s2389
      %s2391 = sshll.u32 [#allocation2], 4
      %s2392 = int_to_ptr.vmem [resolvable:$true] %s2391
      %2397 = dma.vmem_to_hbm [thread:$0]  %s2392, 8192, %s3, [#allocation3], 256, 256, 16
    $region17: #{_lambda_.5} parent=1 // pred_fallthru
      _
    // Predicated region
    $region18: #{_lambda_.5} parent=1 // pred_check
      _
    $region19: #{_lambda_.5} parent=1 // pred_check_branch
      %2399 = sbr.rel (0) target = $region21
    $region20: #{_lambda_.5} parent=1 // pred_region
      %2400 = dma.done [#allocation3], 8192
    $region21: #{_lambda_.5} parent=1 // pred_fallthru
      _
    %2401 = vsyncpa [#allocation3], 1

// kernel: _lambda_.4
$region0: #{_lambda_.4}
  #allocation0 [shape = 'u32[]', space=smem, size = 0x4, offset = 0x4, fixed_abs, tag = 'smem constant byte address 0x4 - core index']
  #allocation1 [shape = 'u32[144,128]{1,0:T(1,128)}', space=vmem, size = 0x12000, scoped, tag = 'internal scratch']
  %s0 = inlined_call_operand.vmem [shape: f32[32,8,512], index: 0, kind: input, shape index: {}]
  %s1 = inlined_call_operand.vmem [shape: bf16[128,512], index: 1, kind: input, shape index: {}]
  %s2 = inlined_call_operand.vmem [shape: bf16[128,512], index: 2, kind: input, shape index: {}]
  %s3 = inlined_call_operand.vmem [shape: bf16[128,512], index: 3, kind: input, shape index: {}]
  %s4 = inlined_call_operand.vmem [shape: f32[1,512], index: 4, kind: input, shape index: {}]
  %s5 = inlined_call_operand.vmem [shape: bf16[32,8,128], index: 5, kind: output, shape index: {0}]
  %s6 = inlined_call_operand.hbm [shape: f32[2,8,128], index: 6, kind: output, shape index: {1}]
  %s7 = inlined_call_operand.hbm [shape: f32[2,8,128], index: 7, kind: output, shape index: {2}]
  %8 = xla_tuple %s5, %s6, %s7
  %s9 = sld [smem:[#allocation0]]
  $region73: #{_lambda_.4} parent=0
    _
  %s11 = ssub.s32 1, %s9
  %s12 = scalar_select 0, %s11, %s9
  $region1: #{_lambda_.4} parent=0
    #allocation2 [shape = 'u8[8192]{0}', space=vmem, size = 0x2000, scoped, tag = 'output window, operand 1, single buffered']
    #allocation3 [shape = 's32[2]{0}', space=sflag, size = 0x8, scoped, tag = 'scoped memory for _lambda_.4']
    #allocation4 [shape = 'u8[8192]{0}', space=vmem, size = 0x2000, scoped, tag = 'output window, operand 2, single buffered']
    #allocation5 [shape = 's32[1]{0}', space=sflag, size = 0x4, scoped, tag = 'scoped memory for _lambda_.4']
    %13 = vsyncpa [#allocation3], 0
    %14 = vsyncpa [#allocation5], 0
    loop: start=0, step=1, limit=6
    $region2: #{_lambda_.4} parent=1 // loop_pre_header
      _
    $region3: #{_lambda_.4} parent=1 // loop_header
      %s16 = sphi 0, %s20
      %p17 = scmp.ge.s32.totalorder %s16, 6
      %s23 = sphi 0, %s35
      %s24 = sphi 0, %s31
      %s25 = sphi 0, %s23
      %s26 = sphi 0, %s24
      %s27 = sphi 0, %s25
      %s28 = sphi 0, %s26
      %s40 = sphi 0, %s42
      %s43 = sphi 0, %s40
      %s44 = sphi 0, %s43
      %s60 = sphi 0, %s44
      %s64 = sphi 0, %s64
      %s66 = sphi 0, %s64
      %s67 = sphi 0, %s66
      %s81 = sphi 0, %s67
      %s85 = sphi 0, %s85
      %s87 = sphi 0, %s85
      %s88 = sphi 0, %s87
      %s102 = sphi 0, %s88
      %s106 = sphi 0, %s106
      %s108 = sphi 0, %s106
      %s109 = sphi 0, %s108
      %s123 = sphi 0, %s109
      %s127 = sphi 0, %s127
      %s129 = sphi 0, %s127
      %s130 = sphi 0, %s129
      %s144 = sphi 0, %s130
      %s152 = sphi 0, %s154
      %s155 = sphi 0, %s152
      %s156 = sphi 0, %s155
      %s172 = sphi 0, %s156
      %s178 = sphi 0, %s180
      %s181 = sphi 0, %s178
      %s182 = sphi 0, %s181
      %s198 = sphi 0, %s182
      %s204 = sphi 0, %s206
      %s207 = sphi 0, %s204
      %s208 = sphi 0, %s207
      %s224 = sphi 0, %s208
    $region4: #{_lambda_.4} parent=1 // loop_header_branch
      %19 = sbr.rel (%p17) target = $region8
    $region5: #{_lambda_.4} parent=1 // loop_body
      %s21 = ssub.s32 %s16, 1
      %s22 = ssub.s32 %s16, 2
      %s29 = sadd.s32 1, %s24
      %p30 = scmp.ge.s32.totalorder %s29, 4
      %s31 = scalar_select %p30, 0, %s29
      %s32 = sadd.s32 1, %s23
      %s33 = scalar_select %p30, %s32, %s23
      %p34 = scmp.ge.s32.totalorder %s33, 1
      %s35 = scalar_select %p34, 0, %s33
      %s36 = ssub.s32 %s24, %s31
      %s37 = ssub.s32 %s23, %s35
      %s38 = sor.u32 %s36, %s37
      %p39 = scmp.eq.s32.totalorder %s38, 0
      %s41 = sadd.s32 %s40, 1
      %s42 = scalar_select %p39, %s40, %s41
      %p45 = pneg %p39
      %p46 = scmp.eq.s32.totalorder %s16, 3
      %p47 = por %p45, %p46
      %p48 = scmp.ne.s32.totalorder %s40, %s43
      %p49 = scmp.eq.s32.totalorder %s16, 0
      %p50 = por %p48, %p49
      %p51 = scmp.ne.s32.totalorder %s40, %s43
      %p52 = scmp.eq.s32.totalorder %s21, 3
      %p53 = por %p51, %p52
      %p54 = scmp.ne.s32.totalorder %s43, %s44
      %p55 = scmp.eq.s32.totalorder %s21, 0
      %p56 = por %p54, %p55
      %p57 = scmp.ne.s32.totalorder %s43, %s44
      %p58 = scmp.eq.s32.totalorder %s22, 3
      %p59 = por %p57, %p58
      %p61 = scmp.ne.s32.totalorder %s44, %s60
      %p62 = scmp.eq.s32.totalorder %s22, 0
      %p63 = por %p61, %p62
      %s65 = sadd.s32 %s64, 1
      %p68 = scmp.eq.s32.totalorder %s16, 3
      %p69 = scmp.ne.s32.totalorder %s64, %s66
      %p70 = scmp.eq.s32.totalorder %s16, 0
      %p71 = por %p69, %p70
      %p72 = scmp.ne.s32.totalorder %s64, %s66
      %p73 = scmp.eq.s32.totalorder %s21, 3
      %p74 = por %p72, %p73
      %p75 = scmp.ne.s32.totalorder %s66, %s67
      %p76 = scmp.eq.s32.totalorder %s21, 0
      %p77 = por %p75, %p76
      %p78 = scmp.ne.s32.totalorder %s66, %s67
      %p79 = scmp.eq.s32.totalorder %s22, 3
      %p80 = por %p78, %p79
      %p82 = scmp.ne.s32.totalorder %s67, %s81
      %p83 = scmp.eq.s32.totalorder %s22, 0
      %p84 = por %p82, %p83
      %s86 = sadd.s32 %s85, 1
      %p89 = scmp.eq.s32.totalorder %s16, 3
      %p90 = scmp.ne.s32.totalorder %s85, %s87
      %p91 = scmp.eq.s32.totalorder %s16, 0
      %p92 = por %p90, %p91
      %p93 = scmp.ne.s32.totalorder %s85, %s87
      %p94 = scmp.eq.s32.totalorder %s21, 3
      %p95 = por %p93, %p94
      %p96 = scmp.ne.s32.totalorder %s87, %s88
      %p97 = scmp.eq.s32.totalorder %s21, 0
      %p98 = por %p96, %p97
      %p99 = scmp.ne.s32.totalorder %s87, %s88
      %p100 = scmp.eq.s32.totalorder %s22, 3
      %p101 = por %p99, %p100
      %p103 = scmp.ne.s32.totalorder %s88, %s102
      %p104 = scmp.eq.s32.totalorder %s22, 0
      %p105 = por %p103, %p104
      %s107 = sadd.s32 %s106, 1
      %p110 = scmp.eq.s32.totalorder %s16, 3
      %p111 = scmp.ne.s32.totalorder %s106, %s108
      %p112 = scmp.eq.s32.totalorder %s16, 0
      %p113 = por %p111, %p112
      %p114 = scmp.ne.s32.totalorder %s106, %s108
      %p115 = scmp.eq.s32.totalorder %s21, 3
      %p116 = por %p114, %p115
      %p117 = scmp.ne.s32.totalorder %s108, %s109
      %p118 = scmp.eq.s32.totalorder %s21, 0
      %p119 = por %p117, %p118
      %p120 = scmp.ne.s32.totalorder %s108, %s109
      %p121 = scmp.eq.s32.totalorder %s22, 3
      %p122 = por %p120, %p121
      %p124 = scmp.ne.s32.totalorder %s109, %s123
      %p125 = scmp.eq.s32.totalorder %s22, 0
      %p126 = por %p124, %p125
      %s128 = sadd.s32 %s127, 1
      %p131 = scmp.eq.s32.totalorder %s16, 3
      %p132 = scmp.ne.s32.totalorder %s127, %s129
      %p133 = scmp.eq.s32.totalorder %s16, 0
      %p134 = por %p132, %p133
      %p135 = scmp.ne.s32.totalorder %s127, %s129
      %p136 = scmp.eq.s32.totalorder %s21, 3
      %p137 = por %p135, %p136
      %p138 = scmp.ne.s32.totalorder %s129, %s130
      %p139 = scmp.eq.s32.totalorder %s21, 0
      %p140 = por %p138, %p139
      %p141 = scmp.ne.s32.totalorder %s129, %s130
      %p142 = scmp.eq.s32.totalorder %s22, 3
      %p143 = por %p141, %p142
      %p145 = scmp.ne.s32.totalorder %s130, %s144
      %p146 = scmp.eq.s32.totalorder %s22, 0
      %p147 = por %p145, %p146
      %s148 = ssub.s32 %s24, %s31
      %s149 = ssub.s32 %s23, %s35
      %s150 = sor.u32 %s148, %s149
      %p151 = scmp.eq.s32.totalorder %s150, 0
      %s153 = sadd.s32 %s152, 1
      %s154 = scalar_select %p151, %s152, %s153
      %p157 = pneg %p151
      %p158 = scmp.eq.s32.totalorder %s16, 3
      %p159 = por %p157, %p158
      %p160 = scmp.ne.s32.totalorder %s152, %s155
      %p161 = scmp.eq.s32.totalorder %s16, 0
      %p162 = por %p160, %p161
      %p163 = scmp.ne.s32.totalorder %s152, %s155
      %p164 = scmp.eq.s32.totalorder %s21, 3
      %p165 = por %p163, %p164
      %p166 = scmp.ne.s32.totalorder %s155, %s156
      %p167 = scmp.eq.s32.totalorder %s21, 0
      %p168 = por %p166, %p167
      %p169 = scmp.ne.s32.totalorder %s155, %s156
      %p170 = scmp.eq.s32.totalorder %s22, 3
      %p171 = por %p169, %p170
      %p173 = scmp.ne.s32.totalorder %s156, %s172
      %p174 = scmp.eq.s32.totalorder %s22, 0
      %p175 = por %p173, %p174
      %s176 = ssub.s32 %s23, %s35
      %p177 = scmp.eq.s32.totalorder %s176, 0
      %s179 = sadd.s32 %s178, 1
      %s180 = scalar_select %p177, %s178, %s179
      %p183 = pneg %p177
      %p184 = scmp.eq.s32.totalorder %s16, 3
      %p185 = por %p183, %p184
      %p186 = scmp.ne.s32.totalorder %s178, %s181
      %p187 = scmp.eq.s32.totalorder %s16, 0
      %p188 = por %p186, %p187
      %p189 = scmp.ne.s32.totalorder %s178, %s181
      %p190 = scmp.eq.s32.totalorder %s21, 3
      %p191 = por %p189, %p190
      %p192 = scmp.ne.s32.totalorder %s181, %s182
      %p193 = scmp.eq.s32.totalorder %s21, 0
      %p194 = por %p192, %p193
      %p195 = scmp.ne.s32.totalorder %s181, %s182
      %p196 = scmp.eq.s32.totalorder %s22, 3
      %p197 = por %p195, %p196
      %p199 = scmp.ne.s32.totalorder %s182, %s198
      %p200 = scmp.eq.s32.totalorder %s22, 0
      %p201 = por %p199, %p200
      %s202 = ssub.s32 %s23, %s35
      %p203 = scmp.eq.s32.totalorder %s202, 0
      %s205 = sadd.s32 %s204, 1
      %s206 = scalar_select %p203, %s204, %s205
      %p209 = pneg %p203
      %p210 = scmp.eq.s32.totalorder %s16, 3
      %p211 = por %p209, %p210
      %p212 = scmp.ne.s32.totalorder %s204, %s207
      %p213 = scmp.eq.s32.totalorder %s16, 0
      %p214 = por %p212, %p213
      %p215 = scmp.ne.s32.totalorder %s204, %s207
      %p216 = scmp.eq.s32.totalorder %s21, 3
      %p217 = por %p215, %p216
      %p218 = scmp.ne.s32.totalorder %s207, %s208
      %p219 = scmp.eq.s32.totalorder %s21, 0
      %p220 = por %p218, %p219
      %p221 = scmp.ne.s32.totalorder %s207, %s208
      %p222 = scmp.eq.s32.totalorder %s22, 3
      %p223 = por %p221, %p222
      %p225 = scmp.ne.s32.totalorder %s208, %s224
      %p226 = scmp.eq.s32.totalorder %s22, 0
      %p227 = por %p225, %p226
      %p228 = scmp.le.s32.totalorder 1, %s16
      %p229 = scmp.lt.s32.totalorder %s16, 5
      %p230 = pnand %p228, %p229
      %p231 = pneg %p230
      // Predicated region
      $region9: #{_lambda_.4} parent=5 // pred_check
        _
      $region10: #{_lambda_.4} parent=5 // pred_check_branch
        %233 = sbr.rel (%p230) target = $region12
      $region11: #{_lambda_.4} parent=5 // pred_region
        %s234 = ssub.s32 %s16, 1
        // Predicated region
        $region13: #{_lambda_.4} parent=11 // pred_check
          %p235 = pneg %p77
        $region14: #{_lambda_.4} parent=11 // pred_check_branch
          %237 = sbr.rel (%p235) target = $region16
        $region15: #{_lambda_.4} parent=11 // pred_region
          _
        $region16: #{_lambda_.4} parent=11 // pred_fallthru
          _
        // Predicated region
        $region17: #{_lambda_.4} parent=11 // pred_check
          %p238 = pneg %p98
        $region18: #{_lambda_.4} parent=11 // pred_check_branch
          %240 = sbr.rel (%p238) target = $region20
        $region19: #{_lambda_.4} parent=11 // pred_region
          _
        $region20: #{_lambda_.4} parent=11 // pred_fallthru
          _
        // Predicated region
        $region21: #{_lambda_.4} parent=11 // pred_check
          %p241 = pneg %p119
        $region22: #{_lambda_.4} parent=11 // pred_check_branch
          %243 = sbr.rel (%p241) target = $region24
        $region23: #{_lambda_.4} parent=11 // pred_region
          _
        $region24: #{_lambda_.4} parent=11 // pred_fallthru
          _
        // Predicated region
        $region25: #{_lambda_.4} parent=11 // pred_check
          %p244 = pneg %p140
        $region26: #{_lambda_.4} parent=11 // pred_check_branch
          %246 = sbr.rel (%p244) target = $region28
        $region27: #{_lambda_.4} parent=11 // pred_region
          _
        $region28: #{_lambda_.4} parent=11 // pred_fallthru
          _
      $region12: #{_lambda_.4} parent=5 // pred_fallthru
        _
      %p247 = scmp.lt.s32.totalorder %s16, 4
      // Predicated region
      $region29: #{_lambda_.4} parent=5 // pred_check
        %p248 = pneg %p247
      $region30: #{_lambda_.4} parent=5 // pred_check_branch
        %250 = sbr.rel (%p248) target = $region32
      $region31: #{_lambda_.4} parent=5 // pred_region
        // Predicated region
        $region33: #{_lambda_.4} parent=31 // pred_check
          %p251 = pneg %p50
        $region34: #{_lambda_.4} parent=31 // pred_check_branch
          %253 = sbr.rel (%p251) target = $region36
        $region35: #{_lambda_.4} parent=31 // pred_region
          %s254 = smul.u32 8, %s24
          %p255 = scmp.lt.s32.totalorder %s254, 31
          %s256 = scalar_select %p255, %s254, 31
          %p257 = scmp.lt.s32.totalorder %s23, 0
          %s258 = scalar_select %p257, %s23, 0
          %s259 = smul.addr %s258, 4
          %s260 = smul.addr %s256, 4
          %s261 = sadd.s32 %s259, %s260
          %s262 = smul.addr %s261, 8
          %s263 = scalar_lea.vmem %s0, %s262
          %s264 = smul.u32 8, %s24
        $region36: #{_lambda_.4} parent=31 // pred_fallthru
          _
      $region32: #{_lambda_.4} parent=5 // pred_fallthru
        _
      %p265 = scmp.le.s32.totalorder 1, %s16
      %p266 = scmp.lt.s32.totalorder %s16, 5
      %p267 = pnand %p265, %p266
      %p268 = pneg %p267
      // Predicated region
      $region37: #{_lambda_.4} parent=5 // pred_check
        _
      $region38: #{_lambda_.4} parent=5 // pred_check_branch
        %270 = sbr.rel (%p267) target = $region40
      $region39: #{_lambda_.4} parent=5 // pred_region
        %s271 = ssub.s32 %s16, 1
        %s272 = smul.u32 8, %s26
        %p273 = scmp.lt.s32.totalorder %s272, 31
        %s274 = scalar_select %p273, %s272, 31
        %p275 = scmp.lt.s32.totalorder %s25, 0
        %s276 = scalar_select %p275, %s25, 0
        %s277 = smul.addr %s276, 4
        %s278 = smul.addr %s274, 4
        %s279 = sadd.s32 %s277, %s278
        %s280 = smul.addr %s279, 8
        %s281 = scalar_lea.vmem %s0, %s280
        %p282 = pneg %p56
        %p283 = pneg %p53
        %p284 = pneg %p77
        %p285 = pneg %p74
        %p286 = pneg %p98
        %p287 = pneg %p95
        %p288 = pneg %p119
        %p289 = pneg %p116
        %p290 = pneg %p140
        %p291 = pneg %p137
        %p292 = pneg %p168
        %p293 = pneg %p165
        %s294 = smul.u32 8, %s26
        %p295 = scmp.lt.s32.totalorder %s294, 31
        %s296 = scalar_select %p295, %s294, 31
        %p297 = scmp.lt.s32.totalorder %s25, 0
        %s298 = scalar_select %p297, %s25, 0
        %s299 = sadd.s32 %s298, %s296
        %s300 = smul.addr %s299, 4
        %s301 = scalar_lea.vmem %s5, %s300
        %p302 = pneg %p194
        %p303 = pneg %p191
        %p304 = pneg %p220
        %p305 = pneg %p217
        %s306 = smul.u32 8, %s26
        %p307 = scmp.lt.s32.totalorder %s306, 31
        %s308 = scalar_select %p307, %s306, 31
        %p309 = scmp.lt.s32.totalorder %s25, 0
        %s310 = scalar_select %p309, %s25, 0
        %s311 = smul.addr %s310, 4
        %s312 = smul.addr %s308, 4
        %s313 = sadd.s32 %s311, %s312
        %s314 = smul.addr %s313, 8
        %s315 = scalar_lea.vmem %s0, %s314
        %s316 = smul.u32 8, %s26
        %s317 = smul.u32 8, %s26
        %p318 = scmp.lt.s32.totalorder %s317, 31
        %s319 = scalar_select %p318, %s317, 31
        %p320 = scmp.lt.s32.totalorder %s25, 0
        %s321 = scalar_select %p320, %s25, 0
        %s322 = sadd.s32 %s321, %s319
        %s323 = smul.addr %s322, 4
        %s324 = scalar_lea.vmem %s5, %s323
        %s325 = smul.u32 8, %s26
        %p327 = scmp.eq.s32.totalorder %s26, 0
        // Predicated region
        $region41: #{_lambda_.4} parent=39 // pred_check
          %p328 = pneg %p327
        $region42: #{_lambda_.4} parent=39 // pred_check_branch
          %330 = sbr.rel (%p328) target = $region44
        $region43: #{_lambda_.4} parent=39 // pred_region
          %331 = vst [vmem:[#allocation2] sm:$0xff] 0.0
          %332 = vst [vmem:[#allocation2 + $0x8] sm:$0xff] 0.0
          %333 = vst [vmem:[#allocation4] sm:$0xff] 0.0
          %334 = vst [vmem:[#allocation4 + $0x8] sm:$0xff] 0.0
        $region44: #{_lambda_.4} parent=39 // pred_fallthru
          _
        %v335 = vld [vmem:[%s1] sm:$0xff]
        %v336 = vld [vmem:[%s1 + $0x8] sm:$0xff]
        %v337 = vld [vmem:[%s1 + $0x10] sm:$0xff]
        %v338 = vld [vmem:[%s1 + $0x18] sm:$0xff]
        %v339 = vld [vmem:[%s1 + $0x20] sm:$0xff]
        %v340 = vld [vmem:[%s1 + $0x28] sm:$0xff]
        %v341 = vld [vmem:[%s1 + $0x30] sm:$0xff]
        %v342 = vld [vmem:[%s1 + $0x38] sm:$0xff]
        %v343 = vld [vmem:[%s1 + $0x40] sm:$0xff]
        %v344 = vld [vmem:[%s1 + $0x48] sm:$0xff]
        %v345 = vld [vmem:[%s1 + $0x50] sm:$0xff]
        %v346 = vld [vmem:[%s1 + $0x58] sm:$0xff]
        %v347 = vld [vmem:[%s1 + $0x60] sm:$0xff]
        %v348 = vld [vmem:[%s1 + $0x68] sm:$0xff]
        %v349 = vld [vmem:[%s1 + $0x70] sm:$0xff]
        %v350 = vld [vmem:[%s1 + $0x78] sm:$0xff]
        %v351 = vld [vmem:[%s1 + $0x80] sm:$0xff]
        %v352 = vld [vmem:[%s1 + $0x88] sm:$0xff]
        %v353 = vld [vmem:[%s1 + $0x90] sm:$0xff]
        %v354 = vld [vmem:[%s1 + $0x98] sm:$0xff]
        %v355 = vld [vmem:[%s1 + $0xa0] sm:$0xff]
        %v356 = vld [vmem:[%s1 + $0xa8] sm:$0xff]
        %v357 = vld [vmem:[%s1 + $0xb0] sm:$0xff]
        %v358 = vld [vmem:[%s1 + $0xb8] sm:$0xff]
        %v359 = vld [vmem:[%s1 + $0xc0] sm:$0xff]
        %v360 = vld [vmem:[%s1 + $0xc8] sm:$0xff]
        %v361 = vld [vmem:[%s1 + $0xd0] sm:$0xff]
        %v362 = vld [vmem:[%s1 + $0xd8] sm:$0xff]
        %v363 = vld [vmem:[%s1 + $0xe0] sm:$0xff]
        %v364 = vld [vmem:[%s1 + $0xe8] sm:$0xff]
        %v365 = vld [vmem:[%s1 + $0xf0] sm:$0xff]
        %v366 = vld [vmem:[%s1 + $0xf8] sm:$0xff]
        %v367 = vld [vmem:[%s2] sm:$0xff]
        %v368 = vld [vmem:[%s2 + $0x8] sm:$0xff]
        %v369 = vld [vmem:[%s2 + $0x10] sm:$0xff]
        %v370 = vld [vmem:[%s2 + $0x18] sm:$0xff]
        %v371 = vld [vmem:[%s2 + $0x20] sm:$0xff]
        %v372 = vld [vmem:[%s2 + $0x28] sm:$0xff]
        %v373 = vld [vmem:[%s2 + $0x30] sm:$0xff]
        %v374 = vld [vmem:[%s2 + $0x38] sm:$0xff]
        %v375 = vld [vmem:[%s2 + $0x40] sm:$0xff]
        %v376 = vld [vmem:[%s2 + $0x48] sm:$0xff]
        %v377 = vld [vmem:[%s2 + $0x50] sm:$0xff]
        %v378 = vld [vmem:[%s2 + $0x58] sm:$0xff]
        %v379 = vld [vmem:[%s2 + $0x60] sm:$0xff]
        %v380 = vld [vmem:[%s2 + $0x68] sm:$0xff]
        %v381 = vld [vmem:[%s2 + $0x70] sm:$0xff]
        %v382 = vld [vmem:[%s2 + $0x78] sm:$0xff]
        %v383 = vld [vmem:[%s2 + $0x80] sm:$0xff]
        %v384 = vld [vmem:[%s2 + $0x88] sm:$0xff]
        %v385 = vld [vmem:[%s2 + $0x90] sm:$0xff]
        %v386 = vld [vmem:[%s2 + $0x98] sm:$0xff]
        %v387 = vld [vmem:[%s2 + $0xa0] sm:$0xff]
        %v388 = vld [vmem:[%s2 + $0xa8] sm:$0xff]
        %v389 = vld [vmem:[%s2 + $0xb0] sm:$0xff]
        %v390 = vld [vmem:[%s2 + $0xb8] sm:$0xff]
        %v391 = vld [vmem:[%s2 + $0xc0] sm:$0xff]
        %v392 = vld [vmem:[%s2 + $0xc8] sm:$0xff]
        %v393 = vld [vmem:[%s2 + $0xd0] sm:$0xff]
        %v394 = vld [vmem:[%s2 + $0xd8] sm:$0xff]
        %v395 = vld [vmem:[%s2 + $0xe0] sm:$0xff]
        %v396 = vld [vmem:[%s2 + $0xe8] sm:$0xff]
        %v397 = vld [vmem:[%s2 + $0xf0] sm:$0xff]
        %v398 = vld [vmem:[%s2 + $0xf8] sm:$0xff]
        %v399 = vld [vmem:[%s3] sm:$0xff]
        %v400 = vld [vmem:[%s3 + $0x8] sm:$0xff]
        %v401 = vld [vmem:[%s3 + $0x10] sm:$0xff]
        %v402 = vld [vmem:[%s3 + $0x18] sm:$0xff]
        %v403 = vld [vmem:[%s3 + $0x20] sm:$0xff]
        %v404 = vld [vmem:[%s3 + $0x28] sm:$0xff]
        %v405 = vld [vmem:[%s3 + $0x30] sm:$0xff]
        %v406 = vld [vmem:[%s3 + $0x38] sm:$0xff]
        %v407 = vld [vmem:[%s3 + $0x40] sm:$0xff]
        %v408 = vld [vmem:[%s3 + $0x48] sm:$0xff]
        %v409 = vld [vmem:[%s3 + $0x50] sm:$0xff]
        %v410 = vld [vmem:[%s3 + $0x58] sm:$0xff]
        %v411 = vld [vmem:[%s3 + $0x60] sm:$0xff]
        %v412 = vld [vmem:[%s3 + $0x68] sm:$0xff]
        %v413 = vld [vmem:[%s3 + $0x70] sm:$0xff]
        %v414 = vld [vmem:[%s3 + $0x78] sm:$0xff]
        %v415 = vld [vmem:[%s3 + $0x80] sm:$0xff]
        %v416 = vld [vmem:[%s3 + $0x88] sm:$0xff]
        %v417 = vld [vmem:[%s3 + $0x90] sm:$0xff]
        %v418 = vld [vmem:[%s3 + $0x98] sm:$0xff]
        %v419 = vld [vmem:[%s3 + $0xa0] sm:$0xff]
        %v420 = vld [vmem:[%s3 + $0xa8] sm:$0xff]
        %v421 = vld [vmem:[%s3 + $0xb0] sm:$0xff]
        %v422 = vld [vmem:[%s3 + $0xb8] sm:$0xff]
        %v423 = vld [vmem:[%s3 + $0xc0] sm:$0xff]
        %v424 = vld [vmem:[%s3 + $0xc8] sm:$0xff]
        %v425 = vld [vmem:[%s3 + $0xd0] sm:$0xff]
        %v426 = vld [vmem:[%s3 + $0xd8] sm:$0xff]
        %v427 = vld [vmem:[%s3 + $0xe0] sm:$0xff]
        %v428 = vld [vmem:[%s3 + $0xe8] sm:$0xff]
        %v429 = vld [vmem:[%s3 + $0xf0] sm:$0xff]
        %v430 = vld [vmem:[%s3 + $0xf8] sm:$0xff]
        %v431 = vld [vmem:[%s4] sm:$0xf]
        %v432 = vld [vmem:[#allocation2] sm:$0xff]
        %v433 = vld [vmem:[#allocation4] sm:$0xff]
        %s434 = scalar_lea.vmem [#allocation2], 8
        %v435 = vld [vmem:[%s434] sm:$0xff]
        %s436 = scalar_lea.vmem [#allocation4], 8
        %v437 = vld [vmem:[%s436] sm:$0xff]
        %v438 = vld [vmem:[%s315] sm:$0xff]
        %v439 = vld [vmem:[%s315 + $0x8] sm:$0xff]
        %v440 = vld [vmem:[%s315 + $0x10] sm:$0xff]
        %v441 = vld [vmem:[%s315 + $0x18] sm:$0xff]
        %v442 = vpack.c.bf16 %v432, %v432
        %v475 = vunpack.c.l.b16 %v335
        %v476 = vunpack.c.h.b16 %v335
        %v477 = vunpack.c.l.b16 %v336
        %v478 = vunpack.c.h.b16 %v336
        %v479 = vunpack.c.l.b16 %v337
        %v480 = vunpack.c.h.b16 %v337
        %v481 = vunpack.c.l.b16 %v338
        %v482 = vunpack.c.h.b16 %v338
        %v483 = vunpack.c.l.b16 %v339
        %v484 = vunpack.c.h.b16 %v339
        %v485 = vunpack.c.l.b16 %v340
        %v486 = vunpack.c.h.b16 %v340
        %v487 = vunpack.c.l.b16 %v341
        %v488 = vunpack.c.h.b16 %v341
        %v489 = vunpack.c.l.b16 %v342
        %v490 = vunpack.c.h.b16 %v342
        %v491 = vunpack.c.l.b16 %v343
        %v492 = vunpack.c.h.b16 %v343
        %v493 = vunpack.c.l.b16 %v344
        %v494 = vunpack.c.h.b16 %v344
        %v495 = vunpack.c.l.b16 %v345
        %v496 = vunpack.c.h.b16 %v345
        %v497 = vunpack.c.l.b16 %v346
        %v498 = vunpack.c.h.b16 %v346
        %v499 = vunpack.c.l.b16 %v347
        %v500 = vunpack.c.h.b16 %v347
        %v501 = vunpack.c.l.b16 %v348
        %v502 = vunpack.c.h.b16 %v348
        %v503 = vunpack.c.l.b16 %v349
        %v504 = vunpack.c.h.b16 %v349
        %v505 = vunpack.c.l.b16 %v350
        %v506 = vunpack.c.h.b16 %v350
        %v507 = vunpack.c.l.b16 %v351
        %v508 = vunpack.c.h.b16 %v351
        %v509 = vunpack.c.l.b16 %v352
        %v510 = vunpack.c.h.b16 %v352
        %v511 = vunpack.c.l.b16 %v353
        %v512 = vunpack.c.h.b16 %v353
        %v513 = vunpack.c.l.b16 %v354
        %v514 = vunpack.c.h.b16 %v354
        %v515 = vunpack.c.l.b16 %v355
        %v516 = vunpack.c.h.b16 %v355
        %v517 = vunpack.c.l.b16 %v356
        %v518 = vunpack.c.h.b16 %v356
        %v519 = vunpack.c.l.b16 %v357
        %v520 = vunpack.c.h.b16 %v357
        %v521 = vunpack.c.l.b16 %v358
        %v522 = vunpack.c.h.b16 %v358
        %v523 = vunpack.c.l.b16 %v359
        %v524 = vunpack.c.h.b16 %v359
        %v525 = vunpack.c.l.b16 %v360
        %v526 = vunpack.c.h.b16 %v360
        %v527 = vunpack.c.l.b16 %v361
        %v528 = vunpack.c.h.b16 %v361
        %v529 = vunpack.c.l.b16 %v362
        %v530 = vunpack.c.h.b16 %v362
        %v531 = vunpack.c.l.b16 %v363
        %v532 = vunpack.c.h.b16 %v363
        %v533 = vunpack.c.l.b16 %v364
        %v534 = vunpack.c.h.b16 %v364
        %v535 = vunpack.c.l.b16 %v365
        %v536 = vunpack.c.h.b16 %v365
        %v537 = vunpack.c.l.b16 %v366
        %v538 = vunpack.c.h.b16 %v366
        %v539 = vpack.c.b16 %v479, %v475
        %v540 = vpack.c.b16 %v480, %v476
        %v541 = vpack.c.b16 %v481, %v477
        %v542 = vpack.c.b16 %v482, %v478
        %v543 = vpack.c.b16 %v487, %v483
        %v544 = vpack.c.b16 %v488, %v484
        %v545 = vpack.c.b16 %v489, %v485
        %v546 = vpack.c.b16 %v490, %v486
        %v547 = vpack.c.b16 %v495, %v491
        %v548 = vpack.c.b16 %v496, %v492
        %v549 = vpack.c.b16 %v497, %v493
        %v550 = vpack.c.b16 %v498, %v494
        %v551 = vpack.c.b16 %v503, %v499
        %v552 = vpack.c.b16 %v504, %v500
        %v553 = vpack.c.b16 %v505, %v501
        %v554 = vpack.c.b16 %v506, %v502
        %v555 = vpack.c.b16 %v511, %v507
        %v556 = vpack.c.b16 %v512, %v508
        %v557 = vpack.c.b16 %v513, %v509
        %v558 = vpack.c.b16 %v514, %v510
        %v559 = vpack.c.b16 %v519, %v515
        %v560 = vpack.c.b16 %v520, %v516
        %v561 = vpack.c.b16 %v521, %v517
        %v562 = vpack.c.b16 %v522, %v518
        %v563 = vpack.c.b16 %v527, %v523
        %v564 = vpack.c.b16 %v528, %v524
        %v565 = vpack.c.b16 %v529, %v525
        %v566 = vpack.c.b16 %v530, %v526
        %v567 = vpack.c.b16 %v535, %v531
        %v568 = vpack.c.b16 %v536, %v532
        %v569 = vpack.c.b16 %v537, %v533
        %v570 = vpack.c.b16 %v538, %v534
        %603 = vmatprep.subr.bf16.mxu0 %v540
        %604 = vmatpush1.bf16.msra.mxu0 %v539
        %605 = vmatprep.subr.bf16.mxu0 %v544
        %606 = vmatpush1.bf16.msra.mxu0 %v543
        %607 = vmatprep.subr.bf16.mxu0 %v548
        %608 = vmatpush1.bf16.msra.mxu0 %v547
        %609 = vmatprep.subr.bf16.mxu0 %v552
        %610 = vmatpush1.bf16.msra.mxu0 %v551
        %611 = vmatprep.subr.bf16.mxu0 %v556
        %612 = vmatpush1.bf16.msra.mxu0 %v555
        %613 = vmatprep.subr.bf16.mxu0 %v560
        %614 = vmatpush1.bf16.msra.mxu0 %v559
        %615 = vmatprep.subr.bf16.mxu0 %v564
        %616 = vmatpush1.bf16.msra.mxu0 %v563
        %617 = vmatprep.subr.bf16.mxu0 %v568
        %618 = vmatpush1.bf16.msra.mxu0 %v567
        %619 = vmatprep.subr.bf16.mxu0 0
        %620 = vmatpush1.bf16.msra.mxu0 0
        %621 = vmatprep.subr.bf16.mxu0 0
        %622 = vmatpush1.bf16.msra.mxu0 0
        %623 = vmatprep.subr.bf16.mxu0 0
        %624 = vmatpush1.bf16.msra.mxu0 0
        %625 = vmatprep.subr.bf16.mxu0 0
        %626 = vmatpush1.bf16.msra.mxu0 0
        %627 = vmatprep.subr.bf16.mxu0 0
        %628 = vmatpush1.bf16.msra.mxu0 0
        %629 = vmatprep.subr.bf16.mxu0 0
        %630 = vmatpush1.bf16.msra.mxu0 0
        %631 = vmatprep.subr.bf16.mxu0 0
        %632 = vmatpush1.bf16.msra.mxu0 0
        %633 = vmatprep.subr.bf16.mxu0 0
        %634 = vmatpush1.bf16.msra.mxu0 0
        %635 = vmatprep.mubr.bf16.mxu0 0
        %636 = vmatmul.mubr.bf16.gmra.mrb[0].mxu0 %v442
        %v637 = vpop.f32.mrb[0].mxu0
        %v638 = vadd.f32 0.0, %v637
        %v639 = vpop.f32.mrb[0].mxu0
        %v640 = vadd.f32 0.0, %v639
        %v641 = vpop.f32.mrb[0].mxu0
        %v642 = vpop.f32.mrb[0].mxu0
        %643 = vdwg.mxu0
        %644 = vmatprep.subr.bf16.mxu0 %v542
        %645 = vmatpush1.bf16.msra.mxu0 %v541
        %646 = vmatprep.subr.bf16.mxu0 %v546
        %647 = vmatpush1.bf16.msra.mxu0 %v545
        %648 = vmatprep.subr.bf16.mxu0 %v550
        %649 = vmatpush1.bf16.msra.mxu0 %v549
        %650 = vmatprep.subr.bf16.mxu0 %v554
        %651 = vmatpush1.bf16.msra.mxu0 %v553
        %652 = vmatprep.subr.bf16.mxu0 %v558
        %653 = vmatpush1.bf16.msra.mxu0 %v557
        %654 = vmatprep.subr.bf16.mxu0 %v562
        %655 = vmatpush1.bf16.msra.mxu0 %v561
        %656 = vmatprep.subr.bf16.mxu0 %v566
        %657 = vmatpush1.bf16.msra.mxu0 %v565
        %658 = vmatprep.subr.bf16.mxu0 %v570
        %659 = vmatpush1.bf16.msra.mxu0 %v569
        %660 = vmatprep.subr.bf16.mxu0 0
        %661 = vmatpush1.bf16.msra.mxu0 0
        %662 = vmatprep.subr.bf16.mxu0 0
        %663 = vmatpush1.bf16.msra.mxu0 0
        %664 = vmatprep.subr.bf16.mxu0 0
        %665 = vmatpush1.bf16.msra.mxu0 0
        %666 = vmatprep.subr.bf16.mxu0 0
        %667 = vmatpush1.bf16.msra.mxu0 0
        %668 = vmatprep.subr.bf16.mxu0 0
        %669 = vmatpush1.bf16.msra.mxu0 0
        %670 = vmatprep.subr.bf16.mxu0 0
        %671 = vmatpush1.bf16.msra.mxu0 0
        %672 = vmatprep.subr.bf16.mxu0 0
        %673 = vmatpush1.bf16.msra.mxu0 0
        %674 = vmatprep.subr.bf16.mxu0 0
        %675 = vmatpush1.bf16.msra.mxu0 0
        %676 = vmatprep.mubr.bf16.mxu0 0
        %677 = vmatmul.mubr.bf16.gmra.mrb[0].mxu0 %v442
        %v678 = vpop.f32.mrb[0].mxu0
        %v679 = vadd.f32 0.0, %v678
        %v680 = vpop.f32.mrb[0].mxu0
        %v681 = vadd.f32 0.0, %v680
        %v682 = vpop.f32.mrb[0].mxu0
        %v683 = vpop.f32.mrb[0].mxu0
        %684 = vdwg.mxu0
        %v685 = vadd.f32 %v438, %v638
        %v686 = vadd.f32 %v439, %v640
        %v687 = vadd.f32 %v440, %v679
        %v688 = vadd.f32 %v441, %v681
        %v689 = vxor.u32 %v685, 2147483648
        %v690 = vmul.f32 %v689, 1.442695
        %v691 = vpow.pop %v690
        %v692 = vadd.f32 %v691, 1.0
        %v693 = vrcp.pop %v692
        %v694 = vmul.f32 1.0, %v693
        %v695 = vxor.u32 %v686, 2147483648
        %v696 = vmul.f32 %v695, 1.442695
        %v697 = vpow.pop %v696
        %v698 = vadd.f32 %v697, 1.0
        %v699 = vrcp.pop %v698
        %v700 = vmul.f32 1.0, %v699
        %v701 = vtanh.pop %v687
        %v702 = vxor.u32 %v688, 2147483648
        %v703 = vmul.f32 %v702, 1.442695
        %v704 = vpow.pop %v703
        %v705 = vadd.f32 %v704, 1.0
        %v706 = vrcp.pop %v705
        %v707 = vmul.f32 1.0, %v706
        %v708 = vmul.f32 %v700, %v433
        %v709 = vmul.f32 %v694, %v701
        %v710 = vadd.f32 %v708, %v709
        %v711 = vtanh.pop %v710
        %v712 = vmul.f32 %v707, %v711
        %v713 = vpack.c.bf16 %v712, %v712
        %v714 = vpack.c.bf16 %v435, %v435
        %v747 = vunpack.c.l.b16 %v399
        %v748 = vunpack.c.h.b16 %v399
        %v749 = vunpack.c.l.b16 %v400
        %v750 = vunpack.c.h.b16 %v400
        %v751 = vunpack.c.l.b16 %v401
        %v752 = vunpack.c.h.b16 %v401
        %v753 = vunpack.c.l.b16 %v402
        %v754 = vunpack.c.h.b16 %v402
        %v755 = vunpack.c.l.b16 %v403
        %v756 = vunpack.c.h.b16 %v403
        %v757 = vunpack.c.l.b16 %v404
        %v758 = vunpack.c.h.b16 %v404
        %v759 = vunpack.c.l.b16 %v405
        %v760 = vunpack.c.h.b16 %v405
        %v761 = vunpack.c.l.b16 %v406
        %v762 = vunpack.c.h.b16 %v406
        %v763 = vunpack.c.l.b16 %v407
        %v764 = vunpack.c.h.b16 %v407
        %v765 = vunpack.c.l.b16 %v408
        %v766 = vunpack.c.h.b16 %v408
        %v767 = vunpack.c.l.b16 %v409
        %v768 = vunpack.c.h.b16 %v409
        %v769 = vunpack.c.l.b16 %v410
        %v770 = vunpack.c.h.b16 %v410
        %v771 = vunpack.c.l.b16 %v411
        %v772 = vunpack.c.h.b16 %v411
        %v773 = vunpack.c.l.b16 %v412
        %v774 = vunpack.c.h.b16 %v412
        %v775 = vunpack.c.l.b16 %v413
        %v776 = vunpack.c.h.b16 %v413
        %v777 = vunpack.c.l.b16 %v414
        %v778 = vunpack.c.h.b16 %v414
        %v779 = vunpack.c.l.b16 %v415
        %v780 = vunpack.c.h.b16 %v415
        %v781 = vunpack.c.l.b16 %v416
        %v782 = vunpack.c.h.b16 %v416
        %v783 = vunpack.c.l.b16 %v417
        %v784 = vunpack.c.h.b16 %v417
        %v785 = vunpack.c.l.b16 %v418
        %v786 = vunpack.c.h.b16 %v418
        %v787 = vunpack.c.l.b16 %v419
        %v788 = vunpack.c.h.b16 %v419
        %v789 = vunpack.c.l.b16 %v420
        %v790 = vunpack.c.h.b16 %v420
        %v791 = vunpack.c.l.b16 %v421
        %v792 = vunpack.c.h.b16 %v421
        %v793 = vunpack.c.l.b16 %v422
        %v794 = vunpack.c.h.b16 %v422
        %v795 = vunpack.c.l.b16 %v423
        %v796 = vunpack.c.h.b16 %v423
        %v797 = vunpack.c.l.b16 %v424
        %v798 = vunpack.c.h.b16 %v424
        %v799 = vunpack.c.l.b16 %v425
        %v800 = vunpack.c.h.b16 %v425
        %v801 = vunpack.c.l.b16 %v426
        %v802 = vunpack.c.h.b16 %v426
        %v803 = vunpack.c.l.b16 %v427
        %v804 = vunpack.c.h.b16 %v427
        %v805 = vunpack.c.l.b16 %v428
        %v806 = vunpack.c.h.b16 %v428
        %v807 = vunpack.c.l.b16 %v429
        %v808 = vunpack.c.h.b16 %v429
        %v809 = vunpack.c.l.b16 %v430
        %v810 = vunpack.c.h.b16 %v430
        %v811 = vpack.c.b16 %v751, %v747
        %v812 = vpack.c.b16 %v752, %v748
        %v813 = vpack.c.b16 %v753, %v749
        %v814 = vpack.c.b16 %v754, %v750
        %v815 = vpack.c.b16 %v759, %v755
        %v816 = vpack.c.b16 %v760, %v756
        %v817 = vpack.c.b16 %v761, %v757
        %v818 = vpack.c.b16 %v762, %v758
        %v819 = vpack.c.b16 %v767, %v763
        %v820 = vpack.c.b16 %v768, %v764
        %v821 = vpack.c.b16 %v769, %v765
        %v822 = vpack.c.b16 %v770, %v766
        %v823 = vpack.c.b16 %v775, %v771
        %v824 = vpack.c.b16 %v776, %v772
        %v825 = vpack.c.b16 %v777, %v773
        %v826 = vpack.c.b16 %v778, %v774
        %v827 = vpack.c.b16 %v783, %v779
        %v828 = vpack.c.b16 %v784, %v780
        %v829 = vpack.c.b16 %v785, %v781
        %v830 = vpack.c.b16 %v786, %v782
        %v831 = vpack.c.b16 %v791, %v787
        %v832 = vpack.c.b16 %v792, %v788
        %v833 = vpack.c.b16 %v793, %v789
        %v834 = vpack.c.b16 %v794, %v790
        %v835 = vpack.c.b16 %v799, %v795
        %v836 = vpack.c.b16 %v800, %v796
        %v837 = vpack.c.b16 %v801, %v797
        %v838 = vpack.c.b16 %v802, %v798
        %v839 = vpack.c.b16 %v807, %v803
        %v840 = vpack.c.b16 %v808, %v804
        %v841 = vpack.c.b16 %v809, %v805
        %v842 = vpack.c.b16 %v810, %v806
        %875 = vmatprep.subr.bf16.mxu0 %v812
        %876 = vmatpush1.bf16.msra.mxu0 %v811
        %877 = vmatprep.subr.bf16.mxu0 %v816
        %878 = vmatpush1.bf16.msra.mxu0 %v815
        %879 = vmatprep.subr.bf16.mxu0 %v820
        %880 = vmatpush1.bf16.msra.mxu0 %v819
        %881 = vmatprep.subr.bf16.mxu0 %v824
        %882 = vmatpush1.bf16.msra.mxu0 %v823
        %883 = vmatprep.subr.bf16.mxu0 %v828
        %884 = vmatpush1.bf16.msra.mxu0 %v827
        %885 = vmatprep.subr.bf16.mxu0 %v832
        %886 = vmatpush1.bf16.msra.mxu0 %v831
        %887 = vmatprep.subr.bf16.mxu0 %v836
        %888 = vmatpush1.bf16.msra.mxu0 %v835
        %889 = vmatprep.subr.bf16.mxu0 %v840
        %890 = vmatpush1.bf16.msra.mxu0 %v839
        %891 = vmatprep.subr.bf16.mxu0 0
        %892 = vmatpush1.bf16.msra.mxu0 0
        %893 = vmatprep.subr.bf16.mxu0 0
        %894 = vmatpush1.bf16.msra.mxu0 0
        %895 = vmatprep.subr.bf16.mxu0 0
        %896 = vmatpush1.bf16.msra.mxu0 0
        %897 = vmatprep.subr.bf16.mxu0 0
        %898 = vmatpush1.bf16.msra.mxu0 0
        %899 = vmatprep.subr.bf16.mxu0 0
        %900 = vmatpush1.bf16.msra.mxu0 0
        %901 = vmatprep.subr.bf16.mxu0 0
        %902 = vmatpush1.bf16.msra.mxu0 0
        %903 = vmatprep.subr.bf16.mxu0 0
        %904 = vmatpush1.bf16.msra.mxu0 0
        %905 = vmatprep.subr.bf16.mxu0 0
        %906 = vmatpush1.bf16.msra.mxu0 0
        %907 = vmatprep.mubr.bf16.mxu0 0
        %908 = vmatmul.mubr.bf16.gmra.mrb[0].mxu0 %v714
        %v909 = vpop.f32.mrb[0].mxu0
        %v910 = vadd.f32 0.0, %v909
        %v911 = vpop.f32.mrb[0].mxu0
        %v912 = vadd.f32 0.0, %v911
        %v913 = vpop.f32.mrb[0].mxu0
        %v914 = vpop.f32.mrb[0].mxu0
        %915 = vdwg.mxu0
        %916 = vmatprep.subr.bf16.mxu0 %v814
        %917 = vmatpush1.bf16.msra.mxu0 %v813
        %918 = vmatprep.subr.bf16.mxu0 %v818
        %919 = vmatpush1.bf16.msra.mxu0 %v817
        %920 = vmatprep.subr.bf16.mxu0 %v822
        %921 = vmatpush1.bf16.msra.mxu0 %v821
        %922 = vmatprep.subr.bf16.mxu0 %v826
        %923 = vmatpush1.bf16.msra.mxu0 %v825
        %924 = vmatprep.subr.bf16.mxu0 %v830
        %925 = vmatpush1.bf16.msra.mxu0 %v829
        %926 = vmatprep.subr.bf16.mxu0 %v834
        %927 = vmatpush1.bf16.msra.mxu0 %v833
        %928 = vmatprep.subr.bf16.mxu0 %v838
        %929 = vmatpush1.bf16.msra.mxu0 %v837
        %930 = vmatprep.subr.bf16.mxu0 %v842
        %931 = vmatpush1.bf16.msra.mxu0 %v841
        %932 = vmatprep.subr.bf16.mxu0 0
        %933 = vmatpush1.bf16.msra.mxu0 0
        %934 = vmatprep.subr.bf16.mxu0 0
        %935 = vmatpush1.bf16.msra.mxu0 0
        %936 = vmatprep.subr.bf16.mxu0 0
        %937 = vmatpush1.bf16.msra.mxu0 0
        %938 = vmatprep.subr.bf16.mxu0 0
        %939 = vmatpush1.bf16.msra.mxu0 0
        %940 = vmatprep.subr.bf16.mxu0 0
        %941 = vmatpush1.bf16.msra.mxu0 0
        %942 = vmatprep.subr.bf16.mxu0 0
        %943 = vmatpush1.bf16.msra.mxu0 0
        %944 = vmatprep.subr.bf16.mxu0 0
        %945 = vmatpush1.bf16.msra.mxu0 0
        %946 = vmatprep.subr.bf16.mxu0 0
        %947 = vmatpush1.bf16.msra.mxu0 0
        %948 = vmatprep.mubr.bf16.mxu0 0
        %949 = vmatmul.mubr.bf16.gmra.mrb[0].mxu0 %v714
        %v950 = vpop.f32.mrb[0].mxu0
        %v951 = vadd.f32 0.0, %v950
        %v952 = vpop.f32.mrb[0].mxu0
        %v953 = vadd.f32 0.0, %v952
        %v954 = vpop.f32.mrb[0].mxu0
        %v955 = vpop.f32.mrb[0].mxu0
        %956 = vdwg.mxu0
        %v989 = vunpack.c.l.b16 %v367
        %v990 = vunpack.c.h.b16 %v367
        %v991 = vunpack.c.l.b16 %v368
        %v992 = vunpack.c.h.b16 %v368
        %v993 = vunpack.c.l.b16 %v369
        %v994 = vunpack.c.h.b16 %v369
        %v995 = vunpack.c.l.b16 %v370
        %v996 = vunpack.c.h.b16 %v370
        %v997 = vunpack.c.l.b16 %v371
        %v998 = vunpack.c.h.b16 %v371
        %v999 = vunpack.c.l.b16 %v372
        %v1000 = vunpack.c.h.b16 %v372
        %v1001 = vunpack.c.l.b16 %v373
        %v1002 = vunpack.c.h.b16 %v373
        %v1003 = vunpack.c.l.b16 %v374
        %v1004 = vunpack.c.h.b16 %v374
        %v1005 = vunpack.c.l.b16 %v375
        %v1006 = vunpack.c.h.b16 %v375
        %v1007 = vunpack.c.l.b16 %v376
        %v1008 = vunpack.c.h.b16 %v376
        %v1009 = vunpack.c.l.b16 %v377
        %v1010 = vunpack.c.h.b16 %v377
        %v1011 = vunpack.c.l.b16 %v378
        %v1012 = vunpack.c.h.b16 %v378
        %v1013 = vunpack.c.l.b16 %v379
        %v1014 = vunpack.c.h.b16 %v379
        %v1015 = vunpack.c.l.b16 %v380
        %v1016 = vunpack.c.h.b16 %v380
        %v1017 = vunpack.c.l.b16 %v381
        %v1018 = vunpack.c.h.b16 %v381
        %v1019 = vunpack.c.l.b16 %v382
        %v1020 = vunpack.c.h.b16 %v382
        %v1021 = vunpack.c.l.b16 %v383
        %v1022 = vunpack.c.h.b16 %v383
        %v1023 = vunpack.c.l.b16 %v384
        %v1024 = vunpack.c.h.b16 %v384
        %v1025 = vunpack.c.l.b16 %v385
        %v1026 = vunpack.c.h.b16 %v385
        %v1027 = vunpack.c.l.b16 %v386
        %v1028 = vunpack.c.h.b16 %v386
        %v1029 = vunpack.c.l.b16 %v387
        %v1030 = vunpack.c.h.b16 %v387
        %v1031 = vunpack.c.l.b16 %v388
        %v1032 = vunpack.c.h.b16 %v388
        %v1033 = vunpack.c.l.b16 %v389
        %v1034 = vunpack.c.h.b16 %v389
        %v1035 = vunpack.c.l.b16 %v390
        %v1036 = vunpack.c.h.b16 %v390
        %v1037 = vunpack.c.l.b16 %v391
        %v1038 = vunpack.c.h.b16 %v391
        %v1039 = vunpack.c.l.b16 %v392
        %v1040 = vunpack.c.h.b16 %v392
        %v1041 = vunpack.c.l.b16 %v393
        %v1042 = vunpack.c.h.b16 %v393
        %v1043 = vunpack.c.l.b16 %v394
        %v1044 = vunpack.c.h.b16 %v394
        %v1045 = vunpack.c.l.b16 %v395
        %v1046 = vunpack.c.h.b16 %v395
        %v1047 = vunpack.c.l.b16 %v396
        %v1048 = vunpack.c.h.b16 %v396
        %v1049 = vunpack.c.l.b16 %v397
        %v1050 = vunpack.c.h.b16 %v397
        %v1051 = vunpack.c.l.b16 %v398
        %v1052 = vunpack.c.h.b16 %v398
        %v1053 = vpack.c.b16 %v993, %v989
        %v1054 = vpack.c.b16 %v994, %v990
        %v1055 = vpack.c.b16 %v995, %v991
        %v1056 = vpack.c.b16 %v996, %v992
        %v1057 = vpack.c.b16 %v1001, %v997
        %v1058 = vpack.c.b16 %v1002, %v998
        %v1059 = vpack.c.b16 %v1003, %v999
        %v1060 = vpack.c.b16 %v1004, %v1000
        %v1061 = vpack.c.b16 %v1009, %v1005
        %v1062 = vpack.c.b16 %v1010, %v1006
        %v1063 = vpack.c.b16 %v1011, %v1007
        %v1064 = vpack.c.b16 %v1012, %v1008
        %v1065 = vpack.c.b16 %v1017, %v1013
        %v1066 = vpack.c.b16 %v1018, %v1014
        %v1067 = vpack.c.b16 %v1019, %v1015
        %v1068 = vpack.c.b16 %v1020, %v1016
        %v1069 = vpack.c.b16 %v1025, %v1021
        %v1070 = vpack.c.b16 %v1026, %v1022
        %v1071 = vpack.c.b16 %v1027, %v1023
        %v1072 = vpack.c.b16 %v1028, %v1024
        %v1073 = vpack.c.b16 %v1033, %v1029
        %v1074 = vpack.c.b16 %v1034, %v1030
        %v1075 = vpack.c.b16 %v1035, %v1031
        %v1076 = vpack.c.b16 %v1036, %v1032
        %v1077 = vpack.c.b16 %v1041, %v1037
        %v1078 = vpack.c.b16 %v1042, %v1038
        %v1079 = vpack.c.b16 %v1043, %v1039
        %v1080 = vpack.c.b16 %v1044, %v1040
        %v1081 = vpack.c.b16 %v1049, %v1045
        %v1082 = vpack.c.b16 %v1050, %v1046
        %v1083 = vpack.c.b16 %v1051, %v1047
        %v1084 = vpack.c.b16 %v1052, %v1048
        %1117 = vmatprep.subr.bf16.mxu0 %v1054
        %1118 = vmatpush1.bf16.msra.mxu0 %v1053
        %1119 = vmatprep.subr.bf16.mxu0 %v1058
        %1120 = vmatpush1.bf16.msra.mxu0 %v1057
        %1121 = vmatprep.subr.bf16.mxu0 %v1062
        %1122 = vmatpush1.bf16.msra.mxu0 %v1061
        %1123 = vmatprep.subr.bf16.mxu0 %v1066
        %1124 = vmatpush1.bf16.msra.mxu0 %v1065
        %1125 = vmatprep.subr.bf16.mxu0 %v1070
        %1126 = vmatpush1.bf16.msra.mxu0 %v1069
        %1127 = vmatprep.subr.bf16.mxu0 %v1074
        %1128 = vmatpush1.bf16.msra.mxu0 %v1073
        %1129 = vmatprep.subr.bf16.mxu0 %v1078
        %1130 = vmatpush1.bf16.msra.mxu0 %v1077
        %1131 = vmatprep.subr.bf16.mxu0 %v1082
        %1132 = vmatpush1.bf16.msra.mxu0 %v1081
        %1133 = vmatprep.subr.bf16.mxu0 0
        %1134 = vmatpush1.bf16.msra.mxu0 0
        %1135 = vmatprep.subr.bf16.mxu0 0
        %1136 = vmatpush1.bf16.msra.mxu0 0
        %1137 = vmatprep.subr.bf16.mxu0 0
        %1138 = vmatpush1.bf16.msra.mxu0 0
        %1139 = vmatprep.subr.bf16.mxu0 0
        %1140 = vmatpush1.bf16.msra.mxu0 0
        %1141 = vmatprep.subr.bf16.mxu0 0
        %1142 = vmatpush1.bf16.msra.mxu0 0
        %1143 = vmatprep.subr.bf16.mxu0 0
        %1144 = vmatpush1.bf16.msra.mxu0 0
        %1145 = vmatprep.subr.bf16.mxu0 0
        %1146 = vmatpush1.bf16.msra.mxu0 0
        %1147 = vmatprep.subr.bf16.mxu0 0
        %1148 = vmatpush1.bf16.msra.mxu0 0
        %1149 = vmatprep.mubr.bf16.mxu0 0
        %1150 = vmatmul.mubr.bf16.gmra.mrb[0].mxu0 %v713
        %v1151 = vpop.f32.mrb[0].mxu0
        %v1152 = vadd.f32 %v910, %v1151
        %v1153 = vpop.f32.mrb[0].mxu0
        %v1154 = vadd.f32 %v912, %v1153
        %v1155 = vpop.f32.mrb[0].mxu0
        %v1156 = vpop.f32.mrb[0].mxu0
        %1157 = vdwg.mxu0
        %1158 = vmatprep.subr.bf16.mxu0 %v1056
        %1159 = vmatpush1.bf16.msra.mxu0 %v1055
        %1160 = vmatprep.subr.bf16.mxu0 %v1060
        %1161 = vmatpush1.bf16.msra.mxu0 %v1059
        %1162 = vmatprep.subr.bf16.mxu0 %v1064
        %1163 = vmatpush1.bf16.msra.mxu0 %v1063
        %1164 = vmatprep.subr.bf16.mxu0 %v1068
        %1165 = vmatpush1.bf16.msra.mxu0 %v1067
        %1166 = vmatprep.subr.bf16.mxu0 %v1072
        %1167 = vmatpush1.bf16.msra.mxu0 %v1071
        %1168 = vmatprep.subr.bf16.mxu0 %v1076
        %1169 = vmatpush1.bf16.msra.mxu0 %v1075
        %1170 = vmatprep.subr.bf16.mxu0 %v1080
        %1171 = vmatpush1.bf16.msra.mxu0 %v1079
        %1172 = vmatprep.subr.bf16.mxu0 %v1084
        %1173 = vmatpush1.bf16.msra.mxu0 %v1083
        %1174 = vmatprep.subr.bf16.mxu0 0
        %1175 = vmatpush1.bf16.msra.mxu0 0
        %1176 = vmatprep.subr.bf16.mxu0 0
        %1177 = vmatpush1.bf16.msra.mxu0 0
        %1178 = vmatprep.subr.bf16.mxu0 0
        %1179 = vmatpush1.bf16.msra.mxu0 0
        %1180 = vmatprep.subr.bf16.mxu0 0
        %1181 = vmatpush1.bf16.msra.mxu0 0
        %1182 = vmatprep.subr.bf16.mxu0 0
        %1183 = vmatpush1.bf16.msra.mxu0 0
        %1184 = vmatprep.subr.bf16.mxu0 0
        %1185 = vmatpush1.bf16.msra.mxu0 0
        %1186 = vmatprep.subr.bf16.mxu0 0
        %1187 = vmatpush1.bf16.msra.mxu0 0
        %1188 = vmatprep.subr.bf16.mxu0 0
        %1189 = vmatpush1.bf16.msra.mxu0 0
        %1190 = vmatprep.mubr.bf16.mxu0 0
        %1191 = vmatmul.mubr.bf16.gmra.mrb[0].mxu0 %v713
        %v1192 = vpop.f32.mrb[0].mxu0
        %v1193 = vadd.f32 %v951, %v1192
        %v1194 = vpop.f32.mrb[0].mxu0
        %v1195 = vadd.f32 %v953, %v1194
        %v1196 = vpop.f32.mrb[0].mxu0
        %v1197 = vpop.f32.mrb[0].mxu0
        %1198 = vdwg.mxu0
        %v1200 = vlaneseq
        %v1201 = vshrl.u32 %v1200, 7
        %v1202 = vsub.s32 0, %v1201
        %v1203 = vrot.slane %v431, %v1202
        %v1204 = vlaneseq
        %v1205 = vshrl.u32 %v1204, 7
        %v1206 = vsub.s32 1, %v1205
        %v1207 = vrot.slane %v431, %v1206
        %v1208 = vlaneseq
        %v1209 = vshrl.u32 %v1208, 7
        %v1210 = vsub.s32 2, %v1209
        %v1211 = vrot.slane %v431, %v1210
        %v1212 = vlaneseq
        %v1213 = vshrl.u32 %v1212, 7
        %v1214 = vsub.s32 3, %v1213
        %v1215 = vrot.slane %v431, %v1214
        %v1220 = vadd.f32 %v1152, %v1203
        %v1221 = vadd.f32 %v1154, %v1207
        %v1222 = vadd.f32 %v1193, %v1211
        %v1223 = vadd.f32 %v1195, %v1215
        %v1224 = vxor.u32 %v1220, 2147483648
        %v1225 = vmul.f32 %v1224, 1.442695
        %v1226 = vpow.pop %v1225
        %v1227 = vadd.f32 %v1226, 1.0
        %v1228 = vrcp.pop %v1227
        %v1229 = vmul.f32 1.0, %v1228
        %v1230 = vxor.u32 %v1221, 2147483648
        %v1231 = vmul.f32 %v1230, 1.442695
        %v1232 = vpow.pop %v1231
        %v1233 = vadd.f32 %v1232, 1.0
        %v1234 = vrcp.pop %v1233
        %v1235 = vmul.f32 1.0, %v1234
        %v1236 = vtanh.pop %v1222
        %v1237 = vxor.u32 %v1223, 2147483648
        %v1238 = vmul.f32 %v1237, 1.442695
        %v1239 = vpow.pop %v1238
        %v1240 = vadd.f32 %v1239, 1.0
        %v1241 = vrcp.pop %v1240
        %v1242 = vmul.f32 1.0, %v1241
        %v1243 = vmul.f32 %v1235, %v437
        %v1244 = vmul.f32 %v1229, %v1236
        %v1245 = vadd.f32 %v1243, %v1244
        %v1246 = vtanh.pop %v1245
        %v1247 = vmul.f32 %v1242, %v1246
        %v1248 = vpack.c.bf16 %v1247, %v1247
        %1249 = vst [vmem:[%s324] sm:$0xf] %v1248
        %s1250 = scalar_lea.vmem %s315, 32
        %v1251 = vld [vmem:[%s1250] sm:$0xff]
        %v1252 = vld [vmem:[%s1250 + $0x8] sm:$0xff]
        %v1253 = vld [vmem:[%s1250 + $0x10] sm:$0xff]
        %v1254 = vld [vmem:[%s1250 + $0x18] sm:$0xff]
        %1255 = vmatprep.subr.bf16.mxu0 %v540
        %1256 = vmatpush1.bf16.msra.mxu0 %v539
        %1257 = vmatprep.subr.bf16.mxu0 %v544
        %1258 = vmatpush1.bf16.msra.mxu0 %v543
        %1259 = vmatprep.subr.bf16.mxu0 %v548
        %1260 = vmatpush1.bf16.msra.mxu0 %v547
        %1261 = vmatprep.subr.bf16.mxu0 %v552
        %1262 = vmatpush1.bf16.msra.mxu0 %v551
        %1263 = vmatprep.subr.bf16.mxu0 %v556
        %1264 = vmatpush1.bf16.msra.mxu0 %v555
        %1265 = vmatprep.subr.bf16.mxu0 %v560
        %1266 = vmatpush1.bf16.msra.mxu0 %v559
        %1267 = vmatprep.subr.bf16.mxu0 %v564
        %1268 = vmatpush1.bf16.msra.mxu0 %v563
        %1269 = vmatprep.subr.bf16.mxu0 %v568
        %1270 = vmatpush1.bf16.msra.mxu0 %v567
        %1271 = vmatprep.subr.bf16.mxu0 0
        %1272 = vmatpush1.bf16.msra.mxu0 0
        %1273 = vmatprep.subr.bf16.mxu0 0
        %1274 = vmatpush1.bf16.msra.mxu0 0
        %1275 = vmatprep.subr.bf16.mxu0 0
        %1276 = vmatpush1.bf16.msra.mxu0 0
        %1277 = vmatprep.subr.bf16.mxu0 0
        %1278 = vmatpush1.bf16.msra.mxu0 0
        %1279 = vmatprep.subr.bf16.mxu0 0
        %1280 = vmatpush1.bf16.msra.mxu0 0
        %1281 = vmatprep.subr.bf16.mxu0 0
        %1282 = vmatpush1.bf16.msra.mxu0 0
        %1283 = vmatprep.subr.bf16.mxu0 0
        %1284 = vmatpush1.bf16.msra.mxu0 0
        %1285 = vmatprep.subr.bf16.mxu0 0
        %1286 = vmatpush1.bf16.msra.mxu0 0
        %1287 = vmatprep.mubr.bf16.mxu0 0
        %1288 = vmatmul.mubr.bf16.gmra.mrb[0].mxu0 %v713
        %v1289 = vpop.f32.mrb[0].mxu0
        %v1290 = vadd.f32 0.0, %v1289
        %v1291 = vpop.f32.mrb[0].mxu0
        %v1292 = vadd.f32 0.0, %v1291
        %v1293 = vpop.f32.mrb[0].mxu0
        %v1294 = vpop.f32.mrb[0].mxu0
        %1295 = vdwg.mxu0
        %1296 = vmatprep.subr.bf16.mxu0 %v542
        %1297 = vmatpush1.bf16.msra.mxu0 %v541
        %1298 = vmatprep.subr.bf16.mxu0 %v546
        %1299 = vmatpush1.bf16.msra.mxu0 %v545
        %1300 = vmatprep.subr.bf16.mxu0 %v550
        %1301 = vmatpush1.bf16.msra.mxu0 %v549
        %1302 = vmatprep.subr.bf16.mxu0 %v554
        %1303 = vmatpush1.bf16.msra.mxu0 %v553
        %1304 = vmatprep.subr.bf16.mxu0 %v558
        %1305 = vmatpush1.bf16.msra.mxu0 %v557
        %1306 = vmatprep.subr.bf16.mxu0 %v562
        %1307 = vmatpush1.bf16.msra.mxu0 %v561
        %1308 = vmatprep.subr.bf16.mxu0 %v566
        %1309 = vmatpush1.bf16.msra.mxu0 %v565
        %1310 = vmatprep.subr.bf16.mxu0 %v570
        %1311 = vmatpush1.bf16.msra.mxu0 %v569
        %1312 = vmatprep.subr.bf16.mxu0 0
        %1313 = vmatpush1.bf16.msra.mxu0 0
        %1314 = vmatprep.subr.bf16.mxu0 0
        %1315 = vmatpush1.bf16.msra.mxu0 0
        %1316 = vmatprep.subr.bf16.mxu0 0
        %1317 = vmatpush1.bf16.msra.mxu0 0
        %1318 = vmatprep.subr.bf16.mxu0 0
        %1319 = vmatpush1.bf16.msra.mxu0 0
        %1320 = vmatprep.subr.bf16.mxu0 0
        %1321 = vmatpush1.bf16.msra.mxu0 0
        %1322 = vmatprep.subr.bf16.mxu0 0
        %1323 = vmatpush1.bf16.msra.mxu0 0
        %1324 = vmatprep.subr.bf16.mxu0 0
        %1325 = vmatpush1.bf16.msra.mxu0 0
        %1326 = vmatprep.subr.bf16.mxu0 0
        %1327 = vmatpush1.bf16.msra.mxu0 0
        %1328 = vmatprep.mubr.bf16.mxu0 0
        %1329 = vmatmul.mubr.bf16.gmra.mrb[0].mxu0 %v713
        %v1330 = vpop.f32.mrb[0].mxu0
        %v1331 = vadd.f32 0.0, %v1330
        %v1332 = vpop.f32.mrb[0].mxu0
        %v1333 = vadd.f32 0.0, %v1332
        %v1334 = vpop.f32.mrb[0].mxu0
        %v1335 = vpop.f32.mrb[0].mxu0
        %1336 = vdwg.mxu0
        %v1337 = vadd.f32 %v1251, %v1290
        %v1338 = vadd.f32 %v1252, %v1292
        %v1339 = vadd.f32 %v1253, %v1331
        %v1340 = vadd.f32 %v1254, %v1333
        %v1341 = vxor.u32 %v1337, 2147483648
        %v1342 = vmul.f32 %v1341, 1.442695
        %v1343 = vpow.pop %v1342
        %v1344 = vadd.f32 %v1343, 1.0
        %v1345 = vrcp.pop %v1344
        %v1346 = vmul.f32 1.0, %v1345
        %v1347 = vxor.u32 %v1338, 2147483648
        %v1348 = vmul.f32 %v1347, 1.442695
        %v1349 = vpow.pop %v1348
        %v1350 = vadd.f32 %v1349, 1.0
        %v1351 = vrcp.pop %v1350
        %v1352 = vmul.f32 1.0, %v1351
        %v1353 = vtanh.pop %v1339
        %v1354 = vxor.u32 %v1340, 2147483648
        %v1355 = vmul.f32 %v1354, 1.442695
        %v1356 = vpow.pop %v1355
        %v1357 = vadd.f32 %v1356, 1.0
        %v1358 = vrcp.pop %v1357
        %v1359 = vmul.f32 1.0, %v1358
        %v1360 = vmul.f32 %v1352, %v710
        %v1361 = vmul.f32 %v1346, %v1353
        %v1362 = vadd.f32 %v1360, %v1361
        %v1363 = vtanh.pop %v1362
        %v1364 = vmul.f32 %v1359, %v1363
        %v1365 = vpack.c.bf16 %v1364, %v1364
        %1366 = vmatprep.subr.bf16.mxu0 %v812
        %1367 = vmatpush1.bf16.msra.mxu0 %v811
        %1368 = vmatprep.subr.bf16.mxu0 %v816
        %1369 = vmatpush1.bf16.msra.mxu0 %v815
        %1370 = vmatprep.subr.bf16.mxu0 %v820
        %1371 = vmatpush1.bf16.msra.mxu0 %v819
        %1372 = vmatprep.subr.bf16.mxu0 %v824
        %1373 = vmatpush1.bf16.msra.mxu0 %v823
        %1374 = vmatprep.subr.bf16.mxu0 %v828
        %1375 = vmatpush1.bf16.msra.mxu0 %v827
        %1376 = vmatprep.subr.bf16.mxu0 %v832
        %1377 = vmatpush1.bf16.msra.mxu0 %v831
        %1378 = vmatprep.subr.bf16.mxu0 %v836
        %1379 = vmatpush1.bf16.msra.mxu0 %v835
        %1380 = vmatprep.subr.bf16.mxu0 %v840
        %1381 = vmatpush1.bf16.msra.mxu0 %v839
        %1382 = vmatprep.subr.bf16.mxu0 0
        %1383 = vmatpush1.bf16.msra.mxu0 0
        %1384 = vmatprep.subr.bf16.mxu0 0
        %1385 = vmatpush1.bf16.msra.mxu0 0
        %1386 = vmatprep.subr.bf16.mxu0 0
        %1387 = vmatpush1.bf16.msra.mxu0 0
        %1388 = vmatprep.subr.bf16.mxu0 0
        %1389 = vmatpush1.bf16.msra.mxu0 0
        %1390 = vmatprep.subr.bf16.mxu0 0
        %1391 = vmatpush1.bf16.msra.mxu0 0
        %1392 = vmatprep.subr.bf16.mxu0 0
        %1393 = vmatpush1.bf16.msra.mxu0 0
        %1394 = vmatprep.subr.bf16.mxu0 0
        %1395 = vmatpush1.bf16.msra.mxu0 0
        %1396 = vmatprep.subr.bf16.mxu0 0
        %1397 = vmatpush1.bf16.msra.mxu0 0
        %1398 = vmatprep.mubr.bf16.mxu0 0
        %1399 = vmatmul.mubr.bf16.gmra.mrb[0].mxu0 %v1248
        %v1400 = vpop.f32.mrb[0].mxu0
        %v1401 = vadd.f32 0.0, %v1400
        %v1402 = vpop.f32.mrb[0].mxu0
        %v1403 = vadd.f32 0.0, %v1402
        %v1404 = vpop.f32.mrb[0].mxu0
        %v1405 = vpop.f32.mrb[0].mxu0
        %1406 = vdwg.mxu0
        %1407 = vmatprep.subr.bf16.mxu0 %v814
        %1408 = vmatpush1.bf16.msra.mxu0 %v813
        %1409 = vmatprep.subr.bf16.mxu0 %v818
        %1410 = vmatpush1.bf16.msra.mxu0 %v817
        %1411 = vmatprep.subr.bf16.mxu0 %v822
        %1412 = vmatpush1.bf16.msra.mxu0 %v821
        %1413 = vmatprep.subr.bf16.mxu0 %v826
        %1414 = vmatpush1.bf16.msra.mxu0 %v825
        %1415 = vmatprep.subr.bf16.mxu0 %v830
        %1416 = vmatpush1.bf16.msra.mxu0 %v829
        %1417 = vmatprep.subr.bf16.mxu0 %v834
        %1418 = vmatpush1.bf16.msra.mxu0 %v833
        %1419 = vmatprep.subr.bf16.mxu0 %v838
        %1420 = vmatpush1.bf16.msra.mxu0 %v837
        %1421 = vmatprep.subr.bf16.mxu0 %v842
        %1422 = vmatpush1.bf16.msra.mxu0 %v841
        %1423 = vmatprep.subr.bf16.mxu0 0
        %1424 = vmatpush1.bf16.msra.mxu0 0
        %1425 = vmatprep.subr.bf16.mxu0 0
        %1426 = vmatpush1.bf16.msra.mxu0 0
        %1427 = vmatprep.subr.bf16.mxu0 0
        %1428 = vmatpush1.bf16.msra.mxu0 0
        %1429 = vmatprep.subr.bf16.mxu0 0
        %1430 = vmatpush1.bf16.msra.mxu0 0
        %1431 = vmatprep.subr.bf16.mxu0 0
        %1432 = vmatpush1.bf16.msra.mxu0 0
        %1433 = vmatprep.subr.bf16.mxu0 0
        %1434 = vmatpush1.bf16.msra.mxu0 0
        %1435 = vmatprep.subr.bf16.mxu0 0
        %1436 = vmatpush1.bf16.msra.mxu0 0
        %1437 = vmatprep.subr.bf16.mxu0 0
        %1438 = vmatpush1.bf16.msra.mxu0 0
        %1439 = vmatprep.mubr.bf16.mxu0 0
        %1440 = vmatmul.mubr.bf16.gmra.mrb[0].mxu0 %v1248
        %v1441 = vpop.f32.mrb[0].mxu0
        %v1442 = vadd.f32 0.0, %v1441
        %v1443 = vpop.f32.mrb[0].mxu0
        %v1444 = vadd.f32 0.0, %v1443
        %v1445 = vpop.f32.mrb[0].mxu0
        %v1446 = vpop.f32.mrb[0].mxu0
        %1447 = vdwg.mxu0
        %1448 = vmatprep.subr.bf16.mxu0 %v1054
        %1449 = vmatpush1.bf16.msra.mxu0 %v1053
        %1450 = vmatprep.subr.bf16.mxu0 %v1058
        %1451 = vmatpush1.bf16.msra.mxu0 %v1057
        %1452 = vmatprep.subr.bf16.mxu0 %v1062
        %1453 = vmatpush1.bf16.msra.mxu0 %v1061
        %1454 = vmatprep.subr.bf16.mxu0 %v1066
        %1455 = vmatpush1.bf16.msra.mxu0 %v1065
        %1456 = vmatprep.subr.bf16.mxu0 %v1070
        %1457 = vmatpush1.bf16.msra.mxu0 %v1069
        %1458 = vmatprep.subr.bf16.mxu0 %v1074
        %1459 = vmatpush1.bf16.msra.mxu0 %v1073
        %1460 = vmatprep.subr.bf16.mxu0 %v1078
        %1461 = vmatpush1.bf16.msra.mxu0 %v1077
        %1462 = vmatprep.subr.bf16.mxu0 %v1082
        %1463 = vmatpush1.bf16.msra.mxu0 %v1081
        %1464 = vmatprep.subr.bf16.mxu0 0
        %1465 = vmatpush1.bf16.msra.mxu0 0
        %1466 = vmatprep.subr.bf16.mxu0 0
        %1467 = vmatpush1.bf16.msra.mxu0 0
        %1468 = vmatprep.subr.bf16.mxu0 0
        %1469 = vmatpush1.bf16.msra.mxu0 0
        %1470 = vmatprep.subr.bf16.mxu0 0
        %1471 = vmatpush1.bf16.msra.mxu0 0
        %1472 = vmatprep.subr.bf16.mxu0 0
        %1473 = vmatpush1.bf16.msra.mxu0 0
        %1474 = vmatprep.subr.bf16.mxu0 0
        %1475 = vmatpush1.bf16.msra.mxu0 0
        %1476 = vmatprep.subr.bf16.mxu0 0
        %1477 = vmatpush1.bf16.msra.mxu0 0
        %1478 = vmatprep.subr.bf16.mxu0 0
        %1479 = vmatpush1.bf16.msra.mxu0 0
        %1480 = vmatprep.mubr.bf16.mxu0 0
        %1481 = vmatmul.mubr.bf16.gmra.mrb[0].mxu0 %v1365
        %v1482 = vpop.f32.mrb[0].mxu0
        %v1483 = vadd.f32 %v1401, %v1482
        %v1484 = vpop.f32.mrb[0].mxu0
        %v1485 = vadd.f32 %v1403, %v1484
        %v1486 = vpop.f32.mrb[0].mxu0
        %v1487 = vpop.f32.mrb[0].mxu0
        %1488 = vdwg.mxu0
        %1489 = vmatprep.subr.bf16.mxu0 %v1056
        %1490 = vmatpush1.bf16.msra.mxu0 %v1055
        %1491 = vmatprep.subr.bf16.mxu0 %v1060
        %1492 = vmatpush1.bf16.msra.mxu0 %v1059
        %1493 = vmatprep.subr.bf16.mxu0 %v1064
        %1494 = vmatpush1.bf16.msra.mxu0 %v1063
        %1495 = vmatprep.subr.bf16.mxu0 %v1068
        %1496 = vmatpush1.bf16.msra.mxu0 %v1067
        %1497 = vmatprep.subr.bf16.mxu0 %v1072
        %1498 = vmatpush1.bf16.msra.mxu0 %v1071
        %1499 = vmatprep.subr.bf16.mxu0 %v1076
        %1500 = vmatpush1.bf16.msra.mxu0 %v1075
        %1501 = vmatprep.subr.bf16.mxu0 %v1080
        %1502 = vmatpush1.bf16.msra.mxu0 %v1079
        %1503 = vmatprep.subr.bf16.mxu0 %v1084
        %1504 = vmatpush1.bf16.msra.mxu0 %v1083
        %1505 = vmatprep.subr.bf16.mxu0 0
        %1506 = vmatpush1.bf16.msra.mxu0 0
        %1507 = vmatprep.subr.bf16.mxu0 0
        %1508 = vmatpush1.bf16.msra.mxu0 0
        %1509 = vmatprep.subr.bf16.mxu0 0
        %1510 = vmatpush1.bf16.msra.mxu0 0
        %1511 = vmatprep.subr.bf16.mxu0 0
        %1512 = vmatpush1.bf16.msra.mxu0 0
        %1513 = vmatprep.subr.bf16.mxu0 0
        %1514 = vmatpush1.bf16.msra.mxu0 0
        %1515 = vmatprep.subr.bf16.mxu0 0
        %1516 = vmatpush1.bf16.msra.mxu0 0
        %1517 = vmatprep.subr.bf16.mxu0 0
        %1518 = vmatpush1.bf16.msra.mxu0 0
        %1519 = vmatprep.subr.bf16.mxu0 0
        %1520 = vmatpush1.bf16.msra.mxu0 0
        %1521 = vmatprep.mubr.bf16.mxu0 0
        %1522 = vmatmul.mubr.bf16.gmra.mrb[0].mxu0 %v1365
        %v1523 = vpop.f32.mrb[0].mxu0
        %v1524 = vadd.f32 %v1442, %v1523
        %v1525 = vpop.f32.mrb[0].mxu0
        %v1526 = vadd.f32 %v1444, %v1525
        %v1527 = vpop.f32.mrb[0].mxu0
        %v1528 = vpop.f32.mrb[0].mxu0
        %1529 = vdwg.mxu0
        %v1530 = vadd.f32 %v1483, %v1203
        %v1531 = vadd.f32 %v1485, %v1207
        %v1532 = vadd.f32 %v1524, %v1211
        %v1533 = vadd.f32 %v1526, %v1215
        %v1534 = vxor.u32 %v1530, 2147483648
        %v1535 = vmul.f32 %v1534, 1.442695
        %v1536 = vpow.pop %v1535
        %v1537 = vadd.f32 %v1536, 1.0
        %v1538 = vrcp.pop %v1537
        %v1539 = vmul.f32 1.0, %v1538
        %v1540 = vxor.u32 %v1531, 2147483648
        %v1541 = vmul.f32 %v1540, 1.442695
        %v1542 = vpow.pop %v1541
        %v1543 = vadd.f32 %v1542, 1.0
        %v1544 = vrcp.pop %v1543
        %v1545 = vmul.f32 1.0, %v1544
        %v1546 = vtanh.pop %v1532
        %v1547 = vxor.u32 %v1533, 2147483648
        %v1548 = vmul.f32 %v1547, 1.442695
        %v1549 = vpow.pop %v1548
        %v1550 = vadd.f32 %v1549, 1.0
        %v1551 = vrcp.pop %v1550
        %v1552 = vmul.f32 1.0, %v1551
        %v1553 = vmul.f32 %v1545, %v1245
        %v1554 = vmul.f32 %v1539, %v1546
        %v1555 = vadd.f32 %v1553, %v1554
        %v1556 = vtanh.pop %v1555
        %v1557 = vmul.f32 %v1552, %v1556
        %v1558 = vpack.c.bf16 %v1557, %v1557
        %s1559 = scalar_lea.vmem %s324, 4
        %1560 = vst [vmem:[%s1559] sm:$0xf] %v1558
        %s1561 = scalar_lea.vmem %s315, 64
        %v1562 = vld [vmem:[%s1561] sm:$0xff]
        %v1563 = vld [vmem:[%s1561 + $0x8] sm:$0xff]
        %v1564 = vld [vmem:[%s1561 + $0x10] sm:$0xff]
        %v1565 = vld [vmem:[%s1561 + $0x18] sm:$0xff]
        %1566 = vmatprep.subr.bf16.mxu0 %v540
        %1567 = vmatpush1.bf16.msra.mxu0 %v539
        %1568 = vmatprep.subr.bf16.mxu0 %v544
        %1569 = vmatpush1.bf16.msra.mxu0 %v543
        %1570 = vmatprep.subr.bf16.mxu0 %v548
        %1571 = vmatpush1.bf16.msra.mxu0 %v547
        %1572 = vmatprep.subr.bf16.mxu0 %v552
        %1573 = vmatpush1.bf16.msra.mxu0 %v551
        %1574 = vmatprep.subr.bf16.mxu0 %v556
        %1575 = vmatpush1.bf16.msra.mxu0 %v555
        %1576 = vmatprep.subr.bf16.mxu0 %v560
        %1577 = vmatpush1.bf16.msra.mxu0 %v559
        %1578 = vmatprep.subr.bf16.mxu0 %v564
        %1579 = vmatpush1.bf16.msra.mxu0 %v563
        %1580 = vmatprep.subr.bf16.mxu0 %v568
        %1581 = vmatpush1.bf16.msra.mxu0 %v567
        %1582 = vmatprep.subr.bf16.mxu0 0
        %1583 = vmatpush1.bf16.msra.mxu0 0
        %1584 = vmatprep.subr.bf16.mxu0 0
        %1585 = vmatpush1.bf16.msra.mxu0 0
        %1586 = vmatprep.subr.bf16.mxu0 0
        %1587 = vmatpush1.bf16.msra.mxu0 0
        %1588 = vmatprep.subr.bf16.mxu0 0
        %1589 = vmatpush1.bf16.msra.mxu0 0
        %1590 = vmatprep.subr.bf16.mxu0 0
        %1591 = vmatpush1.bf16.msra.mxu0 0
        %1592 = vmatprep.subr.bf16.mxu0 0
        %1593 = vmatpush1.bf16.msra.mxu0 0
        %1594 = vmatprep.subr.bf16.mxu0 0
        %1595 = vmatpush1.bf16.msra.mxu0 0
        %1596 = vmatprep.subr.bf16.mxu0 0
        %1597 = vmatpush1.bf16.msra.mxu0 0
        %1598 = vmatprep.mubr.bf16.mxu0 0
        %1599 = vmatmul.mubr.bf16.gmra.mrb[0].mxu0 %v1365
        %v1600 = vpop.f32.mrb[0].mxu0
        %v1601 = vadd.f32 0.0, %v1600
        %v1602 = vpop.f32.mrb[0].mxu0
        %v1603 = vadd.f32 0.0, %v1602
        %v1604 = vpop.f32.mrb[0].mxu0
        %v1605 = vpop.f32.mrb[0].mxu0
        %1606 = vdwg.mxu0
        %1607 = vmatprep.subr.bf16.mxu0 %v542
        %1608 = vmatpush1.bf16.msra.mxu0 %v541
        %1609 = vmatprep.subr.bf16.mxu0 %v546
        %1610 = vmatpush1.bf16.msra.mxu0 %v545
        %1611 = vmatprep.subr.bf16.mxu0 %v550
        %1612 = vmatpush1.bf16.msra.mxu0 %v549
        %1613 = vmatprep.subr.bf16.mxu0 %v554
        %1614 = vmatpush1.bf16.msra.mxu0 %v553
        %1615 = vmatprep.subr.bf16.mxu0 %v558
        %1616 = vmatpush1.bf16.msra.mxu0 %v557
        %1617 = vmatprep.subr.bf16.mxu0 %v562
        %1618 = vmatpush1.bf16.msra.mxu0 %v561
        %1619 = vmatprep.subr.bf16.mxu0 %v566
        %1620 = vmatpush1.bf16.msra.mxu0 %v565
        %1621 = vmatprep.subr.bf16.mxu0 %v570
        %1622 = vmatpush1.bf16.msra.mxu0 %v569
        %1623 = vmatprep.subr.bf16.mxu0 0
        %1624 = vmatpush1.bf16.msra.mxu0 0
        %1625 = vmatprep.subr.bf16.mxu0 0
        %1626 = vmatpush1.bf16.msra.mxu0 0
        %1627 = vmatprep.subr.bf16.mxu0 0
        %1628 = vmatpush1.bf16.msra.mxu0 0
        %1629 = vmatprep.subr.bf16.mxu0 0
        %1630 = vmatpush1.bf16.msra.mxu0 0
        %1631 = vmatprep.subr.bf16.mxu0 0
        %1632 = vmatpush1.bf16.msra.mxu0 0
        %1633 = vmatprep.subr.bf16.mxu0 0
        %1634 = vmatpush1.bf16.msra.mxu0 0
        %1635 = vmatprep.subr.bf16.mxu0 0
        %1636 = vmatpush1.bf16.msra.mxu0 0
        %1637 = vmatprep.subr.bf16.mxu0 0
        %1638 = vmatpush1.bf16.msra.mxu0 0
        %1639 = vmatprep.mubr.bf16.mxu0 0
        %1640 = vmatmul.mubr.bf16.gmra.mrb[0].mxu0 %v1365
        %v1641 = vpop.f32.mrb[0].mxu0
        %v1642 = vadd.f32 0.0, %v1641
        %v1643 = vpop.f32.mrb[0].mxu0
        %v1644 = vadd.f32 0.0, %v1643
        %v1645 = vpop.f32.mrb[0].mxu0
        %v1646 = vpop.f32.mrb[0].mxu0
        %1647 = vdwg.mxu0
        %v1648 = vadd.f32 %v1562, %v1601
        %v1649 = vadd.f32 %v1563, %v1603
        %v1650 = vadd.f32 %v1564, %v1642
        %v1651 = vadd.f32 %v1565, %v1644
        %v1652 = vxor.u32 %v1648, 2147483648
        %v1653 = vmul.f32 %v1652, 1.442695
        %v1654 = vpow.pop %v1653
        %v1655 = vadd.f32 %v1654, 1.0
        %v1656 = vrcp.pop %v1655
        %v1657 = vmul.f32 1.0, %v1656
        %v1658 = vxor.u32 %v1649, 2147483648
        %v1659 = vmul.f32 %v1658, 1.442695
        %v1660 = vpow.pop %v1659
        %v1661 = vadd.f32 %v1660, 1.0
        %v1662 = vrcp.pop %v1661
        %v1663 = vmul.f32 1.0, %v1662
        %v1664 = vtanh.pop %v1650
        %v1665 = vxor.u32 %v1651, 2147483648
        %v1666 = vmul.f32 %v1665, 1.442695
        %v1667 = vpow.pop %v1666
        %v1668 = vadd.f32 %v1667, 1.0
        %v1669 = vrcp.pop %v1668
        %v1670 = vmul.f32 1.0, %v1669
        %v1671 = vmul.f32 %v1663, %v1362
        %v1672 = vmul.f32 %v1657, %v1664
        %v1673 = vadd.f32 %v1671, %v1672
        %v1674 = vtanh.pop %v1673
        %v1675 = vmul.f32 %v1670, %v1674
        %v1676 = vpack.c.bf16 %v1675, %v1675
        %1677 = vmatprep.subr.bf16.mxu0 %v812
        %1678 = vmatpush1.bf16.msra.mxu0 %v811
        %1679 = vmatprep.subr.bf16.mxu0 %v816
        %1680 = vmatpush1.bf16.msra.mxu0 %v815
        %1681 = vmatprep.subr.bf16.mxu0 %v820
        %1682 = vmatpush1.bf16.msra.mxu0 %v819
        %1683 = vmatprep.subr.bf16.mxu0 %v824
        %1684 = vmatpush1.bf16.msra.mxu0 %v823
        %1685 = vmatprep.subr.bf16.mxu0 %v828
        %1686 = vmatpush1.bf16.msra.mxu0 %v827
        %1687 = vmatprep.subr.bf16.mxu0 %v832
        %1688 = vmatpush1.bf16.msra.mxu0 %v831
        %1689 = vmatprep.subr.bf16.mxu0 %v836
        %1690 = vmatpush1.bf16.msra.mxu0 %v835
        %1691 = vmatprep.subr.bf16.mxu0 %v840
        %1692 = vmatpush1.bf16.msra.mxu0 %v839
        %1693 = vmatprep.subr.bf16.mxu0 0
        %1694 = vmatpush1.bf16.msra.mxu0 0
        %1695 = vmatprep.subr.bf16.mxu0 0
        %1696 = vmatpush1.bf16.msra.mxu0 0
        %1697 = vmatprep.subr.bf16.mxu0 0
        %1698 = vmatpush1.bf16.msra.mxu0 0
        %1699 = vmatprep.subr.bf16.mxu0 0
        %1700 = vmatpush1.bf16.msra.mxu0 0
        %1701 = vmatprep.subr.bf16.mxu0 0
        %1702 = vmatpush1.bf16.msra.mxu0 0
        %1703 = vmatprep.subr.bf16.mxu0 0
        %1704 = vmatpush1.bf16.msra.mxu0 0
        %1705 = vmatprep.subr.bf16.mxu0 0
        %1706 = vmatpush1.bf16.msra.mxu0 0
        %1707 = vmatprep.subr.bf16.mxu0 0
        %1708 = vmatpush1.bf16.msra.mxu0 0
        %1709 = vmatprep.mubr.bf16.mxu0 0
        %1710 = vmatmul.mubr.bf16.gmra.mrb[0].mxu0 %v1558
        %v1711 = vpop.f32.mrb[0].mxu0
        %v1712 = vadd.f32 0.0, %v1711
        %v1713 = vpop.f32.mrb[0].mxu0
        %v1714 = vadd.f32 0.0, %v1713
        %v1715 = vpop.f32.mrb[0].mxu0
        %v1716 = vpop.f32.mrb[0].mxu0
        %1717 = vdwg.mxu0
        %1718 = vmatprep.subr.bf16.mxu0 %v814
        %1719 = vmatpush1.bf16.msra.mxu0 %v813
        %1720 = vmatprep.subr.bf16.mxu0 %v818
        %1721 = vmatpush1.bf16.msra.mxu0 %v817
        %1722 = vmatprep.subr.bf16.mxu0 %v822
        %1723 = vmatpush1.bf16.msra.mxu0 %v821
        %1724 = vmatprep.subr.bf16.mxu0 %v826
        %1725 = vmatpush1.bf16.msra.mxu0 %v825
        %1726 = vmatprep.subr.bf16.mxu0 %v830
        %1727 = vmatpush1.bf16.msra.mxu0 %v829
        %1728 = vmatprep.subr.bf16.mxu0 %v834
        %1729 = vmatpush1.bf16.msra.mxu0 %v833
        %1730 = vmatprep.subr.bf16.mxu0 %v838
        %1731 = vmatpush1.bf16.msra.mxu0 %v837
        %1732 = vmatprep.subr.bf16.mxu0 %v842
        %1733 = vmatpush1.bf16.msra.mxu0 %v841
        %1734 = vmatprep.subr.bf16.mxu0 0
        %1735 = vmatpush1.bf16.msra.mxu0 0
        %1736 = vmatprep.subr.bf16.mxu0 0
        %1737 = vmatpush1.bf16.msra.mxu0 0
        %1738 = vmatprep.subr.bf16.mxu0 0
        %1739 = vmatpush1.bf16.msra.mxu0 0
        %1740 = vmatprep.subr.bf16.mxu0 0
        %1741 = vmatpush1.bf16.msra.mxu0 0
        %1742 = vmatprep.subr.bf16.mxu0 0
        %1743 = vmatpush1.bf16.msra.mxu0 0
        %1744 = vmatprep.subr.bf16.mxu0 0
        %1745 = vmatpush1.bf16.msra.mxu0 0
        %1746 = vmatprep.subr.bf16.mxu0 0
        %1747 = vmatpush1.bf16.msra.mxu0 0
        %1748 = vmatprep.subr.bf16.mxu0 0
        %1749 = vmatpush1.bf16.msra.mxu0 0
        %1750 = vmatprep.mubr.bf16.mxu0 0
        %1751 = vmatmul.mubr.bf16.gmra.mrb[0].mxu0 %v1558
        %v1752 = vpop.f32.mrb[0].mxu0
        %v1753 = vadd.f32 0.0, %v1752
        %v1754 = vpop.f32.mrb[0].mxu0
        %v1755 = vadd.f32 0.0, %v1754
        %v1756 = vpop.f32.mrb[0].mxu0
        %v1757 = vpop.f32.mrb[0].mxu0
        %1758 = vdwg.mxu0
        %1759 = vmatprep.subr.bf16.mxu0 %v1054
        %1760 = vmatpush1.bf16.msra.mxu0 %v1053
        %1761 = vmatprep.subr.bf16.mxu0 %v1058
        %1762 = vmatpush1.bf16.msra.mxu0 %v1057
        %1763 = vmatprep.subr.bf16.mxu0 %v1062
        %1764 = vmatpush1.bf16.msra.mxu0 %v1061
        %1765 = vmatprep.subr.bf16.mxu0 %v1066
        %1766 = vmatpush1.bf16.msra.mxu0 %v1065
        %1767 = vmatprep.subr.bf16.mxu0 %v1070
        %1768 = vmatpush1.bf16.msra.mxu0 %v1069
        %1769 = vmatprep.subr.bf16.mxu0 %v1074
        %1770 = vmatpush1.bf16.msra.mxu0 %v1073
        %1771 = vmatprep.subr.bf16.mxu0 %v1078
        %1772 = vmatpush1.bf16.msra.mxu0 %v1077
        %1773 = vmatprep.subr.bf16.mxu0 %v1082
        %1774 = vmatpush1.bf16.msra.mxu0 %v1081
        %1775 = vmatprep.subr.bf16.mxu0 0
        %1776 = vmatpush1.bf16.msra.mxu0 0
        %1777 = vmatprep.subr.bf16.mxu0 0
        %1778 = vmatpush1.bf16.msra.mxu0 0
        %1779 = vmatprep.subr.bf16.mxu0 0
        %1780 = vmatpush1.bf16.msra.mxu0 0
        %1781 = vmatprep.subr.bf16.mxu0 0
        %1782 = vmatpush1.bf16.msra.mxu0 0
        %1783 = vmatprep.subr.bf16.mxu0 0
        %1784 = vmatpush1.bf16.msra.mxu0 0
        %1785 = vmatprep.subr.bf16.mxu0 0
        %1786 = vmatpush1.bf16.msra.mxu0 0
        %1787 = vmatprep.subr.bf16.mxu0 0
        %1788 = vmatpush1.bf16.msra.mxu0 0
        %1789 = vmatprep.subr.bf16.mxu0 0
        %1790 = vmatpush1.bf16.msra.mxu0 0
        %1791 = vmatprep.mubr.bf16.mxu0 0
        %1792 = vmatmul.mubr.bf16.gmra.mrb[0].mxu0 %v1676
        %v1793 = vpop.f32.mrb[0].mxu0
        %v1794 = vadd.f32 %v1712, %v1793
        %v1795 = vpop.f32.mrb[0].mxu0
        %v1796 = vadd.f32 %v1714, %v1795
        %v1797 = vpop.f32.mrb[0].mxu0
        %v1798 = vpop.f32.mrb[0].mxu0
        %1799 = vdwg.mxu0
        %1800 = vmatprep.subr.bf16.mxu0 %v1056
        %1801 = vmatpush1.bf16.msra.mxu0 %v1055
        %1802 = vmatprep.subr.bf16.mxu0 %v1060
        %1803 = vmatpush1.bf16.msra.mxu0 %v1059
        %1804 = vmatprep.subr.bf16.mxu0 %v1064
        %1805 = vmatpush1.bf16.msra.mxu0 %v1063
        %1806 = vmatprep.subr.bf16.mxu0 %v1068
        %1807 = vmatpush1.bf16.msra.mxu0 %v1067
        %1808 = vmatprep.subr.bf16.mxu0 %v1072
        %1809 = vmatpush1.bf16.msra.mxu0 %v1071
        %1810 = vmatprep.subr.bf16.mxu0 %v1076
        %1811 = vmatpush1.bf16.msra.mxu0 %v1075
        %1812 = vmatprep.subr.bf16.mxu0 %v1080
        %1813 = vmatpush1.bf16.msra.mxu0 %v1079
        %1814 = vmatprep.subr.bf16.mxu0 %v1084
        %1815 = vmatpush1.bf16.msra.mxu0 %v1083
        %1816 = vmatprep.subr.bf16.mxu0 0
        %1817 = vmatpush1.bf16.msra.mxu0 0
        %1818 = vmatprep.subr.bf16.mxu0 0
        %1819 = vmatpush1.bf16.msra.mxu0 0
        %1820 = vmatprep.subr.bf16.mxu0 0
        %1821 = vmatpush1.bf16.msra.mxu0 0
        %1822 = vmatprep.subr.bf16.mxu0 0
        %1823 = vmatpush1.bf16.msra.mxu0 0
        %1824 = vmatprep.subr.bf16.mxu0 0
        %1825 = vmatpush1.bf16.msra.mxu0 0
        %1826 = vmatprep.subr.bf16.mxu0 0
        %1827 = vmatpush1.bf16.msra.mxu0 0
        %1828 = vmatprep.subr.bf16.mxu0 0
        %1829 = vmatpush1.bf16.msra.mxu0 0
        %1830 = vmatprep.subr.bf16.mxu0 0
        %1831 = vmatpush1.bf16.msra.mxu0 0
        %1832 = vmatprep.mubr.bf16.mxu0 0
        %1833 = vmatmul.mubr.bf16.gmra.mrb[0].mxu0 %v1676
        %v1834 = vpop.f32.mrb[0].mxu0
        %v1835 = vadd.f32 %v1753, %v1834
        %v1836 = vpop.f32.mrb[0].mxu0
        %v1837 = vadd.f32 %v1755, %v1836
        %v1838 = vpop.f32.mrb[0].mxu0
        %v1839 = vpop.f32.mrb[0].mxu0
        %1840 = vdwg.mxu0
        %v1841 = vadd.f32 %v1794, %v1203
        %v1842 = vadd.f32 %v1796, %v1207
        %v1843 = vadd.f32 %v1835, %v1211
        %v1844 = vadd.f32 %v1837, %v1215
        %v1845 = vxor.u32 %v1841, 2147483648
        %v1846 = vmul.f32 %v1845, 1.442695
        %v1847 = vpow.pop %v1846
        %v1848 = vadd.f32 %v1847, 1.0
        %v1849 = vrcp.pop %v1848
        %v1850 = vmul.f32 1.0, %v1849
        %v1851 = vxor.u32 %v1842, 2147483648
        %v1852 = vmul.f32 %v1851, 1.442695
        %v1853 = vpow.pop %v1852
        %v1854 = vadd.f32 %v1853, 1.0
        %v1855 = vrcp.pop %v1854
        %v1856 = vmul.f32 1.0, %v1855
        %v1857 = vtanh.pop %v1843
        %v1858 = vxor.u32 %v1844, 2147483648
        %v1859 = vmul.f32 %v1858, 1.442695
        %v1860 = vpow.pop %v1859
        %v1861 = vadd.f32 %v1860, 1.0
        %v1862 = vrcp.pop %v1861
        %v1863 = vmul.f32 1.0, %v1862
        %v1864 = vmul.f32 %v1856, %v1555
        %v1865 = vmul.f32 %v1850, %v1857
        %v1866 = vadd.f32 %v1864, %v1865
        %v1867 = vtanh.pop %v1866
        %v1868 = vmul.f32 %v1863, %v1867
        %v1869 = vpack.c.bf16 %v1868, %v1868
        %s1870 = scalar_lea.vmem %s324, 8
        %1871 = vst [vmem:[%s1870] sm:$0xf] %v1869
        %s1872 = scalar_lea.vmem %s315, 96
        %v1873 = vld [vmem:[%s1872] sm:$0xff]
        %v1874 = vld [vmem:[%s1872 + $0x8] sm:$0xff]
        %v1875 = vld [vmem:[%s1872 + $0x10] sm:$0xff]
        %v1876 = vld [vmem:[%s1872 + $0x18] sm:$0xff]
        %1877 = vmatprep.subr.bf16.mxu0 %v540
        %1878 = vmatpush1.bf16.msra.mxu0 %v539
        %1879 = vmatprep.subr.bf16.mxu0 %v544
        %1880 = vmatpush1.bf16.msra.mxu0 %v543
        %1881 = vmatprep.subr.bf16.mxu0 %v548
        %1882 = vmatpush1.bf16.msra.mxu0 %v547
        %1883 = vmatprep.subr.bf16.mxu0 %v552
        %1884 = vmatpush1.bf16.msra.mxu0 %v551
        %1885 = vmatprep.subr.bf16.mxu0 %v556
        %1886 = vmatpush1.bf16.msra.mxu0 %v555
        %1887 = vmatprep.subr.bf16.mxu0 %v560
        %1888 = vmatpush1.bf16.msra.mxu0 %v559
        %1889 = vmatprep.subr.bf16.mxu0 %v564
        %1890 = vmatpush1.bf16.msra.mxu0 %v563
        %1891 = vmatprep.subr.bf16.mxu0 %v568
        %1892 = vmatpush1.bf16.msra.mxu0 %v567
        %1893 = vmatprep.subr.bf16.mxu0 0
        %1894 = vmatpush1.bf16.msra.mxu0 0
        %1895 = vmatprep.subr.bf16.mxu0 0
        %1896 = vmatpush1.bf16.msra.mxu0 0
        %1897 = vmatprep.subr.bf16.mxu0 0
        %1898 = vmatpush1.bf16.msra.mxu0 0
        %1899 = vmatprep.subr.bf16.mxu0 0
        %1900 = vmatpush1.bf16.msra.mxu0 0
        %1901 = vmatprep.subr.bf16.mxu0 0
        %1902 = vmatpush1.bf16.msra.mxu0 0
        %1903 = vmatprep.subr.bf16.mxu0 0
        %1904 = vmatpush1.bf16.msra.mxu0 0
        %1905 = vmatprep.subr.bf16.mxu0 0
        %1906 = vmatpush1.bf16.msra.mxu0 0
        %1907 = vmatprep.subr.bf16.mxu0 0
        %1908 = vmatpush1.bf16.msra.mxu0 0
        %1909 = vmatprep.mubr.bf16.mxu0 0
        %1910 = vmatmul.mubr.bf16.gmra.mrb[0].mxu0 %v1676
        %v1911 = vpop.f32.mrb[0].mxu0
        %v1912 = vadd.f32 0.0, %v1911
        %v1913 = vpop.f32.mrb[0].mxu0
        %v1914 = vadd.f32 0.0, %v1913
        %v1915 = vpop.f32.mrb[0].mxu0
        %v1916 = vpop.f32.mrb[0].mxu0
        %1917 = vdwg.mxu0
        %1918 = vmatprep.subr.bf16.mxu0 %v542
        %1919 = vmatpush1.bf16.msra.mxu0 %v541
        %1920 = vmatprep.subr.bf16.mxu0 %v546
        %1921 = vmatpush1.bf16.msra.mxu0 %v545
        %1922 = vmatprep.subr.bf16.mxu0 %v550
        %1923 = vmatpush1.bf16.msra.mxu0 %v549
        %1924 = vmatprep.subr.bf16.mxu0 %v554
        %1925 = vmatpush1.bf16.msra.mxu0 %v553
        %1926 = vmatprep.subr.bf16.mxu0 %v558
        %1927 = vmatpush1.bf16.msra.mxu0 %v557
        %1928 = vmatprep.subr.bf16.mxu0 %v562
        %1929 = vmatpush1.bf16.msra.mxu0 %v561
        %1930 = vmatprep.subr.bf16.mxu0 %v566
        %1931 = vmatpush1.bf16.msra.mxu0 %v565
        %1932 = vmatprep.subr.bf16.mxu0 %v570
        %1933 = vmatpush1.bf16.msra.mxu0 %v569
        %1934 = vmatprep.subr.bf16.mxu0 0
        %1935 = vmatpush1.bf16.msra.mxu0 0
        %1936 = vmatprep.subr.bf16.mxu0 0
        %1937 = vmatpush1.bf16.msra.mxu0 0
        %1938 = vmatprep.subr.bf16.mxu0 0
        %1939 = vmatpush1.bf16.msra.mxu0 0
        %1940 = vmatprep.subr.bf16.mxu0 0
        %1941 = vmatpush1.bf16.msra.mxu0 0
        %1942 = vmatprep.subr.bf16.mxu0 0
        %1943 = vmatpush1.bf16.msra.mxu0 0
        %1944 = vmatprep.subr.bf16.mxu0 0
        %1945 = vmatpush1.bf16.msra.mxu0 0
        %1946 = vmatprep.subr.bf16.mxu0 0
        %1947 = vmatpush1.bf16.msra.mxu0 0
        %1948 = vmatprep.subr.bf16.mxu0 0
        %1949 = vmatpush1.bf16.msra.mxu0 0
        %1950 = vmatprep.mubr.bf16.mxu0 0
        %1951 = vmatmul.mubr.bf16.gmra.mrb[0].mxu0 %v1676
        %v1952 = vpop.f32.mrb[0].mxu0
        %v1953 = vadd.f32 0.0, %v1952
        %v1954 = vpop.f32.mrb[0].mxu0
        %v1955 = vadd.f32 0.0, %v1954
        %v1956 = vpop.f32.mrb[0].mxu0
        %v1957 = vpop.f32.mrb[0].mxu0
        %1958 = vdwg.mxu0
        %v1959 = vadd.f32 %v1873, %v1912
        %v1960 = vadd.f32 %v1874, %v1914
        %v1961 = vadd.f32 %v1875, %v1953
        %v1962 = vadd.f32 %v1876, %v1955
        %v1963 = vxor.u32 %v1959, 2147483648
        %v1964 = vmul.f32 %v1963, 1.442695
        %v1965 = vpow.pop %v1964
        %v1966 = vadd.f32 %v1965, 1.0
        %v1967 = vrcp.pop %v1966
        %v1968 = vmul.f32 1.0, %v1967
        %v1969 = vxor.u32 %v1960, 2147483648
        %v1970 = vmul.f32 %v1969, 1.442695
        %v1971 = vpow.pop %v1970
        %v1972 = vadd.f32 %v1971, 1.0
        %v1973 = vrcp.pop %v1972
        %v1974 = vmul.f32 1.0, %v1973
        %v1975 = vtanh.pop %v1961
        %v1976 = vxor.u32 %v1962, 2147483648
        %v1977 = vmul.f32 %v1976, 1.442695
        %v1978 = vpow.pop %v1977
        %v1979 = vadd.f32 %v1978, 1.0
        %v1980 = vrcp.pop %v1979
        %v1981 = vmul.f32 1.0, %v1980
        %v1982 = vmul.f32 %v1974, %v1673
        %v1983 = vmul.f32 %v1968, %v1975
        %v1984 = vadd.f32 %v1982, %v1983
        %v1985 = vtanh.pop %v1984
        %v1986 = vmul.f32 %v1981, %v1985
        %v1987 = vpack.c.bf16 %v1986, %v1986
        %1988 = vmatprep.subr.bf16.mxu0 %v812
        %1989 = vmatpush1.bf16.msra.mxu0 %v811
        %1990 = vmatprep.subr.bf16.mxu0 %v816
        %1991 = vmatpush1.bf16.msra.mxu0 %v815
        %1992 = vmatprep.subr.bf16.mxu0 %v820
        %1993 = vmatpush1.bf16.msra.mxu0 %v819
        %1994 = vmatprep.subr.bf16.mxu0 %v824
        %1995 = vmatpush1.bf16.msra.mxu0 %v823
        %1996 = vmatprep.subr.bf16.mxu0 %v828
        %1997 = vmatpush1.bf16.msra.mxu0 %v827
        %1998 = vmatprep.subr.bf16.mxu0 %v832
        %1999 = vmatpush1.bf16.msra.mxu0 %v831
        %2000 = vmatprep.subr.bf16.mxu0 %v836
        %2001 = vmatpush1.bf16.msra.mxu0 %v835
        %2002 = vmatprep.subr.bf16.mxu0 %v840
        %2003 = vmatpush1.bf16.msra.mxu0 %v839
        %2004 = vmatprep.subr.bf16.mxu0 0
        %2005 = vmatpush1.bf16.msra.mxu0 0
        %2006 = vmatprep.subr.bf16.mxu0 0
        %2007 = vmatpush1.bf16.msra.mxu0 0
        %2008 = vmatprep.subr.bf16.mxu0 0
        %2009 = vmatpush1.bf16.msra.mxu0 0
        %2010 = vmatprep.subr.bf16.mxu0 0
        %2011 = vmatpush1.bf16.msra.mxu0 0
        %2012 = vmatprep.subr.bf16.mxu0 0
        %2013 = vmatpush1.bf16.msra.mxu0 0
        %2014 = vmatprep.subr.bf16.mxu0 0
        %2015 = vmatpush1.bf16.msra.mxu0 0
        %2016 = vmatprep.subr.bf16.mxu0 0
        %2017 = vmatpush1.bf16.msra.mxu0 0
        %2018 = vmatprep.subr.bf16.mxu0 0
        %2019 = vmatpush1.bf16.msra.mxu0 0
        %2020 = vmatprep.mubr.bf16.mxu0 0
        %2021 = vmatmul.mubr.bf16.gmra.mrb[0].mxu0 %v1869
        %v2022 = vpop.f32.mrb[0].mxu0
        %v2023 = vadd.f32 0.0, %v2022
        %v2024 = vpop.f32.mrb[0].mxu0
        %v2025 = vadd.f32 0.0, %v2024
        %v2026 = vpop.f32.mrb[0].mxu0
        %v2027 = vpop.f32.mrb[0].mxu0
        %2028 = vdwg.mxu0
        %2029 = vmatprep.subr.bf16.mxu0 %v814
        %2030 = vmatpush1.bf16.msra.mxu0 %v813
        %2031 = vmatprep.subr.bf16.mxu0 %v818
        %2032 = vmatpush1.bf16.msra.mxu0 %v817
        %2033 = vmatprep.subr.bf16.mxu0 %v822
        %2034 = vmatpush1.bf16.msra.mxu0 %v821
        %2035 = vmatprep.subr.bf16.mxu0 %v826
        %2036 = vmatpush1.bf16.msra.mxu0 %v825
        %2037 = vmatprep.subr.bf16.mxu0 %v830
        %2038 = vmatpush1.bf16.msra.mxu0 %v829
        %2039 = vmatprep.subr.bf16.mxu0 %v834
        %2040 = vmatpush1.bf16.msra.mxu0 %v833
        %2041 = vmatprep.subr.bf16.mxu0 %v838
        %2042 = vmatpush1.bf16.msra.mxu0 %v837
        %2043 = vmatprep.subr.bf16.mxu0 %v842
        %2044 = vmatpush1.bf16.msra.mxu0 %v841
        %2045 = vmatprep.subr.bf16.mxu0 0
        %2046 = vmatpush1.bf16.msra.mxu0 0
        %2047 = vmatprep.subr.bf16.mxu0 0
        %2048 = vmatpush1.bf16.msra.mxu0 0
        %2049 = vmatprep.subr.bf16.mxu0 0
        %2050 = vmatpush1.bf16.msra.mxu0 0
        %2051 = vmatprep.subr.bf16.mxu0 0
        %2052 = vmatpush1.bf16.msra.mxu0 0
        %2053 = vmatprep.subr.bf16.mxu0 0
        %2054 = vmatpush1.bf16.msra.mxu0 0
        %2055 = vmatprep.subr.bf16.mxu0 0
        %2056 = vmatpush1.bf16.msra.mxu0 0
        %2057 = vmatprep.subr.bf16.mxu0 0
        %2058 = vmatpush1.bf16.msra.mxu0 0
        %2059 = vmatprep.subr.bf16.mxu0 0
        %2060 = vmatpush1.bf16.msra.mxu0 0
        %2061 = vmatprep.mubr.bf16.mxu0 0
        %2062 = vmatmul.mubr.bf16.gmra.mrb[0].mxu0 %v1869
        %v2063 = vpop.f32.mrb[0].mxu0
        %v2064 = vadd.f32 0.0, %v2063
        %v2065 = vpop.f32.mrb[0].mxu0
        %v2066 = vadd.f32 0.0, %v2065
        %v2067 = vpop.f32.mrb[0].mxu0
        %v2068 = vpop.f32.mrb[0].mxu0
        %2069 = vdwg.mxu0
        %2070 = vmatprep.subr.bf16.mxu0 %v1054
        %2071 = vmatpush1.bf16.msra.mxu0 %v1053
        %2072 = vmatprep.subr.bf16.mxu0 %v1058
        %2073 = vmatpush1.bf16.msra.mxu0 %v1057
        %2074 = vmatprep.subr.bf16.mxu0 %v1062
        %2075 = vmatpush1.bf16.msra.mxu0 %v1061
        %2076 = vmatprep.subr.bf16.mxu0 %v1066
        %2077 = vmatpush1.bf16.msra.mxu0 %v1065
        %2078 = vmatprep.subr.bf16.mxu0 %v1070
        %2079 = vmatpush1.bf16.msra.mxu0 %v1069
        %2080 = vmatprep.subr.bf16.mxu0 %v1074
        %2081 = vmatpush1.bf16.msra.mxu0 %v1073
        %2082 = vmatprep.subr.bf16.mxu0 %v1078
        %2083 = vmatpush1.bf16.msra.mxu0 %v1077
        %2084 = vmatprep.subr.bf16.mxu0 %v1082
        %2085 = vmatpush1.bf16.msra.mxu0 %v1081
        %2086 = vmatprep.subr.bf16.mxu0 0
        %2087 = vmatpush1.bf16.msra.mxu0 0
        %2088 = vmatprep.subr.bf16.mxu0 0
        %2089 = vmatpush1.bf16.msra.mxu0 0
        %2090 = vmatprep.subr.bf16.mxu0 0
        %2091 = vmatpush1.bf16.msra.mxu0 0
        %2092 = vmatprep.subr.bf16.mxu0 0
        %2093 = vmatpush1.bf16.msra.mxu0 0
        %2094 = vmatprep.subr.bf16.mxu0 0
        %2095 = vmatpush1.bf16.msra.mxu0 0
        %2096 = vmatprep.subr.bf16.mxu0 0
        %2097 = vmatpush1.bf16.msra.mxu0 0
        %2098 = vmatprep.subr.bf16.mxu0 0
        %2099 = vmatpush1.bf16.msra.mxu0 0
        %2100 = vmatprep.subr.bf16.mxu0 0
        %2101 = vmatpush1.bf16.msra.mxu0 0
        %2102 = vmatprep.mubr.bf16.mxu0 0
        %2103 = vmatmul.mubr.bf16.gmra.mrb[0].mxu0 %v1987
        %v2104 = vpop.f32.mrb[0].mxu0
        %v2105 = vadd.f32 %v2023, %v2104
        %v2106 = vpop.f32.mrb[0].mxu0
        %v2107 = vadd.f32 %v2025, %v2106
        %v2108 = vpop.f32.mrb[0].mxu0
        %v2109 = vpop.f32.mrb[0].mxu0
        %2110 = vdwg.mxu0
        %2111 = vmatprep.subr.bf16.mxu0 %v1056
        %2112 = vmatpush1.bf16.msra.mxu0 %v1055
        %2113 = vmatprep.subr.bf16.mxu0 %v1060
        %2114 = vmatpush1.bf16.msra.mxu0 %v1059
        %2115 = vmatprep.subr.bf16.mxu0 %v1064
        %2116 = vmatpush1.bf16.msra.mxu0 %v1063
        %2117 = vmatprep.subr.bf16.mxu0 %v1068
        %2118 = vmatpush1.bf16.msra.mxu0 %v1067
        %2119 = vmatprep.subr.bf16.mxu0 %v1072
        %2120 = vmatpush1.bf16.msra.mxu0 %v1071
        %2121 = vmatprep.subr.bf16.mxu0 %v1076
        %2122 = vmatpush1.bf16.msra.mxu0 %v1075
        %2123 = vmatprep.subr.bf16.mxu0 %v1080
        %2124 = vmatpush1.bf16.msra.mxu0 %v1079
        %2125 = vmatprep.subr.bf16.mxu0 %v1084
        %2126 = vmatpush1.bf16.msra.mxu0 %v1083
        %2127 = vmatprep.subr.bf16.mxu0 0
        %2128 = vmatpush1.bf16.msra.mxu0 0
        %2129 = vmatprep.subr.bf16.mxu0 0
        %2130 = vmatpush1.bf16.msra.mxu0 0
        %2131 = vmatprep.subr.bf16.mxu0 0
        %2132 = vmatpush1.bf16.msra.mxu0 0
        %2133 = vmatprep.subr.bf16.mxu0 0
        %2134 = vmatpush1.bf16.msra.mxu0 0
        %2135 = vmatprep.subr.bf16.mxu0 0
        %2136 = vmatpush1.bf16.msra.mxu0 0
        %2137 = vmatprep.subr.bf16.mxu0 0
        %2138 = vmatpush1.bf16.msra.mxu0 0
        %2139 = vmatprep.subr.bf16.mxu0 0
        %2140 = vmatpush1.bf16.msra.mxu0 0
        %2141 = vmatprep.subr.bf16.mxu0 0
        %2142 = vmatpush1.bf16.msra.mxu0 0
        %2143 = vmatprep.mubr.bf16.mxu0 0
        %2144 = vmatmul.mubr.bf16.gmra.mrb[0].mxu0 %v1987
        %v2145 = vpop.f32.mrb[0].mxu0
        %v2146 = vadd.f32 %v2064, %v2145
        %v2147 = vpop.f32.mrb[0].mxu0
        %v2148 = vadd.f32 %v2066, %v2147
        %v2149 = vpop.f32.mrb[0].mxu0
        %v2150 = vpop.f32.mrb[0].mxu0
        %2151 = vdwg.mxu0
        %v2152 = vadd.f32 %v2105, %v1203
        %v2153 = vadd.f32 %v2107, %v1207
        %v2154 = vadd.f32 %v2146, %v1211
        %v2155 = vadd.f32 %v2148, %v1215
        %v2156 = vxor.u32 %v2152, 2147483648
        %v2157 = vmul.f32 %v2156, 1.442695
        %v2158 = vpow.pop %v2157
        %v2159 = vadd.f32 %v2158, 1.0
        %v2160 = vrcp.pop %v2159
        %v2161 = vmul.f32 1.0, %v2160
        %v2162 = vxor.u32 %v2153, 2147483648
        %v2163 = vmul.f32 %v2162, 1.442695
        %v2164 = vpow.pop %v2163
        %v2165 = vadd.f32 %v2164, 1.0
        %v2166 = vrcp.pop %v2165
        %v2167 = vmul.f32 1.0, %v2166
        %v2168 = vtanh.pop %v2154
        %v2169 = vxor.u32 %v2155, 2147483648
        %v2170 = vmul.f32 %v2169, 1.442695
        %v2171 = vpow.pop %v2170
        %v2172 = vadd.f32 %v2171, 1.0
        %v2173 = vrcp.pop %v2172
        %v2174 = vmul.f32 1.0, %v2173
        %v2175 = vmul.f32 %v2167, %v1866
        %v2176 = vmul.f32 %v2161, %v2168
        %v2177 = vadd.f32 %v2175, %v2176
        %v2178 = vtanh.pop %v2177
        %v2179 = vmul.f32 %v2174, %v2178
        %v2180 = vpack.c.bf16 %v2179, %v2179
        %s2181 = scalar_lea.vmem %s324, 12
        %2182 = vst [vmem:[%s2181] sm:$0xf] %v2180
        %s2183 = scalar_lea.vmem %s315, 128
        %v2184 = vld [vmem:[%s2183] sm:$0xff]
        %v2185 = vld [vmem:[%s2183 + $0x8] sm:$0xff]
        %v2186 = vld [vmem:[%s2183 + $0x10] sm:$0xff]
        %v2187 = vld [vmem:[%s2183 + $0x18] sm:$0xff]
        %2188 = vmatprep.subr.bf16.mxu0 %v540
        %2189 = vmatpush1.bf16.msra.mxu0 %v539
        %2190 = vmatprep.subr.bf16.mxu0 %v544
        %2191 = vmatpush1.bf16.msra.mxu0 %v543
        %2192 = vmatprep.subr.bf16.mxu0 %v548
        %2193 = vmatpush1.bf16.msra.mxu0 %v547
        %2194 = vmatprep.subr.bf16.mxu0 %v552
        %2195 = vmatpush1.bf16.msra.mxu0 %v551
        %2196 = vmatprep.subr.bf16.mxu0 %v556
        %2197 = vmatpush1.bf16.msra.mxu0 %v555
        %2198 = vmatprep.subr.bf16.mxu0 %v560
        %2199 = vmatpush1.bf16.msra.mxu0 %v559
        %2200 = vmatprep.subr.bf16.mxu0 %v564
        %2201 = vmatpush1.bf16.msra.mxu0 %v563
        %2202 = vmatprep.subr.bf16.mxu0 %v568
        %2203 = vmatpush1.bf16.msra.mxu0 %v567
        %2204 = vmatprep.subr.bf16.mxu0 0
        %2205 = vmatpush1.bf16.msra.mxu0 0
        %2206 = vmatprep.subr.bf16.mxu0 0
        %2207 = vmatpush1.bf16.msra.mxu0 0
        %2208 = vmatprep.subr.bf16.mxu0 0
        %2209 = vmatpush1.bf16.msra.mxu0 0
        %2210 = vmatprep.subr.bf16.mxu0 0
        %2211 = vmatpush1.bf16.msra.mxu0 0
        %2212 = vmatprep.subr.bf16.mxu0 0
        %2213 = vmatpush1.bf16.msra.mxu0 0
        %2214 = vmatprep.subr.bf16.mxu0 0
        %2215 = vmatpush1.bf16.msra.mxu0 0
        %2216 = vmatprep.subr.bf16.mxu0 0
        %2217 = vmatpush1.bf16.msra.mxu0 0
        %2218 = vmatprep.subr.bf16.mxu0 0
        %2219 = vmatpush1.bf16.msra.mxu0 0
        %2220 = vmatprep.mubr.bf16.mxu0 0
        %2221 = vmatmul.mubr.bf16.gmra.mrb[0].mxu0 %v1987
        %v2222 = vpop.f32.mrb[0].mxu0
        %v2223 = vadd.f32 0.0, %v2222
        %v2224 = vpop.f32.mrb[0].mxu0
        %v2225 = vadd.f32 0.0, %v2224
        %v2226 = vpop.f32.mrb[0].mxu0
        %v2227 = vpop.f32.mrb[0].mxu0
        %2228 = vdwg.mxu0
        %2229 = vmatprep.subr.bf16.mxu0 %v542
        %2230 = vmatpush1.bf16.msra.mxu0 %v541
        %2231 = vmatprep.subr.bf16.mxu0 %v546
        %2232 = vmatpush1.bf16.msra.mxu0 %v545
        %2233 = vmatprep.subr.bf16.mxu0 %v550
        %2234 = vmatpush1.bf16.msra.mxu0 %v549
        %2235 = vmatprep.subr.bf16.mxu0 %v554
        %2236 = vmatpush1.bf16.msra.mxu0 %v553
        %2237 = vmatprep.subr.bf16.mxu0 %v558
        %2238 = vmatpush1.bf16.msra.mxu0 %v557
        %2239 = vmatprep.subr.bf16.mxu0 %v562
        %2240 = vmatpush1.bf16.msra.mxu0 %v561
        %2241 = vmatprep.subr.bf16.mxu0 %v566
        %2242 = vmatpush1.bf16.msra.mxu0 %v565
        %2243 = vmatprep.subr.bf16.mxu0 %v570
        %2244 = vmatpush1.bf16.msra.mxu0 %v569
        %2245 = vmatprep.subr.bf16.mxu0 0
        %2246 = vmatpush1.bf16.msra.mxu0 0
        %2247 = vmatprep.subr.bf16.mxu0 0
        %2248 = vmatpush1.bf16.msra.mxu0 0
        %2249 = vmatprep.subr.bf16.mxu0 0
        %2250 = vmatpush1.bf16.msra.mxu0 0
        %2251 = vmatprep.subr.bf16.mxu0 0
        %2252 = vmatpush1.bf16.msra.mxu0 0
        %2253 = vmatprep.subr.bf16.mxu0 0
        %2254 = vmatpush1.bf16.msra.mxu0 0
        %2255 = vmatprep.subr.bf16.mxu0 0
        %2256 = vmatpush1.bf16.msra.mxu0 0
        %2257 = vmatprep.subr.bf16.mxu0 0
        %2258 = vmatpush1.bf16.msra.mxu0 0
        %2259 = vmatprep.subr.bf16.mxu0 0
        %2260 = vmatpush1.bf16.msra.mxu0 0
        %2261 = vmatprep.mubr.bf16.mxu0 0
        %2262 = vmatmul.mubr.bf16.gmra.mrb[0].mxu0 %v1987
        %v2263 = vpop.f32.mrb[0].mxu0
        %v2264 = vadd.f32 0.0, %v2263
        %v2265 = vpop.f32.mrb[0].mxu0
        %v2266 = vadd.f32 0.0, %v2265
        %v2267 = vpop.f32.mrb[0].mxu0
        %v2268 = vpop.f32.mrb[0].mxu0
        %2269 = vdwg.mxu0
        %v2270 = vadd.f32 %v2184, %v2223
        %v2271 = vadd.f32 %v2185, %v2225
        %v2272 = vadd.f32 %v2186, %v2264
        %v2273 = vadd.f32 %v2187, %v2266
        %v2274 = vxor.u32 %v2270, 2147483648
        %v2275 = vmul.f32 %v2274, 1.442695
        %v2276 = vpow.pop %v2275
        %v2277 = vadd.f32 %v2276, 1.0
        %v2278 = vrcp.pop %v2277
        %v2279 = vmul.f32 1.0, %v2278
        %v2280 = vxor.u32 %v2271, 2147483648
        %v2281 = vmul.f32 %v2280, 1.442695
        %v2282 = vpow.pop %v2281
        %v2283 = vadd.f32 %v2282, 1.0
        %v2284 = vrcp.pop %v2283
        %v2285 = vmul.f32 1.0, %v2284
        %v2286 = vtanh.pop %v2272
        %v2287 = vxor.u32 %v2273, 2147483648
        %v2288 = vmul.f32 %v2287, 1.442695
        %v2289 = vpow.pop %v2288
        %v2290 = vadd.f32 %v2289, 1.0
        %v2291 = vrcp.pop %v2290
        %v2292 = vmul.f32 1.0, %v2291
        %v2293 = vmul.f32 %v2285, %v1984
        %v2294 = vmul.f32 %v2279, %v2286
        %v2295 = vadd.f32 %v2293, %v2294
        %v2296 = vtanh.pop %v2295
        %v2297 = vmul.f32 %v2292, %v2296
        %v2298 = vpack.c.bf16 %v2297, %v2297
        %2299 = vmatprep.subr.bf16.mxu0 %v812
        %2300 = vmatpush1.bf16.msra.mxu0 %v811
        %2301 = vmatprep.subr.bf16.mxu0 %v816
        %2302 = vmatpush1.bf16.msra.mxu0 %v815
        %2303 = vmatprep.subr.bf16.mxu0 %v820
        %2304 = vmatpush1.bf16.msra.mxu0 %v819
        %2305 = vmatprep.subr.bf16.mxu0 %v824
        %2306 = vmatpush1.bf16.msra.mxu0 %v823
        %2307 = vmatprep.subr.bf16.mxu0 %v828
        %2308 = vmatpush1.bf16.msra.mxu0 %v827
        %2309 = vmatprep.subr.bf16.mxu0 %v832
        %2310 = vmatpush1.bf16.msra.mxu0 %v831
        %2311 = vmatprep.subr.bf16.mxu0 %v836
        %2312 = vmatpush1.bf16.msra.mxu0 %v835
        %2313 = vmatprep.subr.bf16.mxu0 %v840
        %2314 = vmatpush1.bf16.msra.mxu0 %v839
        %2315 = vmatprep.subr.bf16.mxu0 0
        %2316 = vmatpush1.bf16.msra.mxu0 0
        %2317 = vmatprep.subr.bf16.mxu0 0
        %2318 = vmatpush1.bf16.msra.mxu0 0
        %2319 = vmatprep.subr.bf16.mxu0 0
        %2320 = vmatpush1.bf16.msra.mxu0 0
        %2321 = vmatprep.subr.bf16.mxu0 0
        %2322 = vmatpush1.bf16.msra.mxu0 0
        %2323 = vmatprep.subr.bf16.mxu0 0
        %2324 = vmatpush1.bf16.msra.mxu0 0
        %2325 = vmatprep.subr.bf16.mxu0 0
        %2326 = vmatpush1.bf16.msra.mxu0 0
        %2327 = vmatprep.subr.bf16.mxu0 0
        %2328 = vmatpush1.bf16.msra.mxu0 0
        %2329 = vmatprep.subr.bf16.mxu0 0
        %2330 = vmatpush1.bf16.msra.mxu0 0
        %2331 = vmatprep.mubr.bf16.mxu0 0
        %2332 = vmatmul.mubr.bf16.gmra.mrb[0].mxu0 %v2180
        %v2333 = vpop.f32.mrb[0].mxu0
        %v2334 = vadd.f32 0.0, %v2333
        %v2335 = vpop.f32.mrb[0].mxu0
        %v2336 = vadd.f32 0.0, %v2335
        %v2337 = vpop.f32.mrb[0].mxu0
        %v2338 = vpop.f32.mrb[0].mxu0
        %2339 = vdwg.mxu0
        %2340 = vmatprep.subr.bf16.mxu0 %v814
        %2341 = vmatpush1.bf16.msra.mxu0 %v813
        %2342 = vmatprep.subr.bf16.mxu0 %v818
        %2343 = vmatpush1.bf16.msra.mxu0 %v817
        %2344 = vmatprep.subr.bf16.mxu0 %v822
        %2345 = vmatpush1.bf16.msra.mxu0 %v821
        %2346 = vmatprep.subr.bf16.mxu0 %v826
        %2347 = vmatpush1.bf16.msra.mxu0 %v825
        %2348 = vmatprep.subr.bf16.mxu0 %v830
        %2349 = vmatpush1.bf16.msra.mxu0 %v829
        %2350 = vmatprep.subr.bf16.mxu0 %v834
        %2351 = vmatpush1.bf16.msra.mxu0 %v833
        %2352 = vmatprep.subr.bf16.mxu0 %v838
        %2353 = vmatpush1.bf16.msra.mxu0 %v837
        %2354 = vmatprep.subr.bf16.mxu0 %v842
        %2355 = vmatpush1.bf16.msra.mxu0 %v841
        %2356 = vmatprep.subr.bf16.mxu0 0
        %2357 = vmatpush1.bf16.msra.mxu0 0
        %2358 = vmatprep.subr.bf16.mxu0 0
        %2359 = vmatpush1.bf16.msra.mxu0 0
        %2360 = vmatprep.subr.bf16.mxu0 0
        %2361 = vmatpush1.bf16.msra.mxu0 0
        %2362 = vmatprep.subr.bf16.mxu0 0
        %2363 = vmatpush1.bf16.msra.mxu0 0
        %2364 = vmatprep.subr.bf16.mxu0 0
        %2365 = vmatpush1.bf16.msra.mxu0 0
        %2366 = vmatprep.subr.bf16.mxu0 0
        %2367 = vmatpush1.bf16.msra.mxu0 0
        %2368 = vmatprep.subr.bf16.mxu0 0
        %2369 = vmatpush1.bf16.msra.mxu0 0
        %2370 = vmatprep.subr.bf16.mxu0 0
        %2371 = vmatpush1.bf16.msra.mxu0 0
        %2372 = vmatprep.mubr.bf16.mxu0 0
        %2373 = vmatmul.mubr.bf16.gmra.mrb[0].mxu0 %v2180
        %v2374 = vpop.f32.mrb[0].mxu0
        %v2375 = vadd.f32 0.0, %v2374
        %v2376 = vpop.f32.mrb[0].mxu0
        %v2377 = vadd.f32 0.0, %v2376
        %v2378 = vpop.f32.mrb[0].mxu0
        %v2379 = vpop.f32.mrb[0].mxu0
        %2380 = vdwg.mxu0
        %2381 = vmatprep.subr.bf16.mxu0 %v1054
        %2382 = vmatpush1.bf16.msra.mxu0 %v1053
        %2383 = vmatprep.subr.bf16.mxu0 %v1058
        %2384 = vmatpush1.bf16.msra.mxu0 %v1057
        %2385 = vmatprep.subr.bf16.mxu0 %v1062
        %2386 = vmatpush1.bf16.msra.mxu0 %v1061
        %2387 = vmatprep.subr.bf16.mxu0 %v1066
        %2388 = vmatpush1.bf16.msra.mxu0 %v1065
        %2389 = vmatprep.subr.bf16.mxu0 %v1070
        %2390 = vmatpush1.bf16.msra.mxu0 %v1069
        %2391 = vmatprep.subr.bf16.mxu0 %v1074
        %2392 = vmatpush1.bf16.msra.mxu0 %v1073
        %2393 = vmatprep.subr.bf16.mxu0 %v1078
        %2394 = vmatpush1.bf16.msra.mxu0 %v1077
        %2395 = vmatprep.subr.bf16.mxu0 %v1082
        %2396 = vmatpush1.bf16.msra.mxu0 %v1081
        %2397 = vmatprep.subr.bf16.mxu0 0
        %2398 = vmatpush1.bf16.msra.mxu0 0
        %2399 = vmatprep.subr.bf16.mxu0 0
        %2400 = vmatpush1.bf16.msra.mxu0 0
        %2401 = vmatprep.subr.bf16.mxu0 0
        %2402 = vmatpush1.bf16.msra.mxu0 0
        %2403 = vmatprep.subr.bf16.mxu0 0
        %2404 = vmatpush1.bf16.msra.mxu0 0
        %2405 = vmatprep.subr.bf16.mxu0 0
        %2406 = vmatpush1.bf16.msra.mxu0 0
        %2407 = vmatprep.subr.bf16.mxu0 0
        %2408 = vmatpush1.bf16.msra.mxu0 0
        %2409 = vmatprep.subr.bf16.mxu0 0
        %2410 = vmatpush1.bf16.msra.mxu0 0
        %2411 = vmatprep.subr.bf16.mxu0 0
        %2412 = vmatpush1.bf16.msra.mxu0 0
        %2413 = vmatprep.mubr.bf16.mxu0 0
        %2414 = vmatmul.mubr.bf16.gmra.mrb[0].mxu0 %v2298
        %v2415 = vpop.f32.mrb[0].mxu0
        %v2416 = vadd.f32 %v2334, %v2415
        %v2417 = vpop.f32.mrb[0].mxu0
        %v2418 = vadd.f32 %v2336, %v2417
        %v2419 = vpop.f32.mrb[0].mxu0
        %v2420 = vpop.f32.mrb[0].mxu0
        %2421 = vdwg.mxu0
        %2422 = vmatprep.subr.bf16.mxu0 %v1056
        %2423 = vmatpush1.bf16.msra.mxu0 %v1055
        %2424 = vmatprep.subr.bf16.mxu0 %v1060
        %2425 = vmatpush1.bf16.msra.mxu0 %v1059
        %2426 = vmatprep.subr.bf16.mxu0 %v1064
        %2427 = vmatpush1.bf16.msra.mxu0 %v1063
        %2428 = vmatprep.subr.bf16.mxu0 %v1068
        %2429 = vmatpush1.bf16.msra.mxu0 %v1067
        %2430 = vmatprep.subr.bf16.mxu0 %v1072
        %2431 = vmatpush1.bf16.msra.mxu0 %v1071
        %2432 = vmatprep.subr.bf16.mxu0 %v1076
        %2433 = vmatpush1.bf16.msra.mxu0 %v1075
        %2434 = vmatprep.subr.bf16.mxu0 %v1080
        %2435 = vmatpush1.bf16.msra.mxu0 %v1079
        %2436 = vmatprep.subr.bf16.mxu0 %v1084
        %2437 = vmatpush1.bf16.msra.mxu0 %v1083
        %2438 = vmatprep.subr.bf16.mxu0 0
        %2439 = vmatpush1.bf16.msra.mxu0 0
        %2440 = vmatprep.subr.bf16.mxu0 0
        %2441 = vmatpush1.bf16.msra.mxu0 0
        %2442 = vmatprep.subr.bf16.mxu0 0
        %2443 = vmatpush1.bf16.msra.mxu0 0
        %2444 = vmatprep.subr.bf16.mxu0 0
        %2445 = vmatpush1.bf16.msra.mxu0 0
        %2446 = vmatprep.subr.bf16.mxu0 0
        %2447 = vmatpush1.bf16.msra.mxu0 0
        %2448 = vmatprep.subr.bf16.mxu0 0
        %2449 = vmatpush1.bf16.msra.mxu0 0
        %2450 = vmatprep.subr.bf16.mxu0 0
        %2451 = vmatpush1.bf16.msra.mxu0 0
        %2452 = vmatprep.subr.bf16.mxu0 0
        %2453 = vmatpush1.bf16.msra.mxu0 0
        %2454 = vmatprep.mubr.bf16.mxu0 0
        %2455 = vmatmul.mubr.bf16.gmra.mrb[0].mxu0 %v2298
        %v2456 = vpop.f32.mrb[0].mxu0
        %v2457 = vadd.f32 %v2375, %v2456
        %v2458 = vpop.f32.mrb[0].mxu0
        %v2459 = vadd.f32 %v2377, %v2458
        %v2460 = vpop.f32.mrb[0].mxu0
        %v2461 = vpop.f32.mrb[0].mxu0
        %2462 = vdwg.mxu0
        %v2463 = vadd.f32 %v2416, %v1203
        %v2464 = vadd.f32 %v2418, %v1207
        %v2465 = vadd.f32 %v2457, %v1211
        %v2466 = vadd.f32 %v2459, %v1215
        %v2467 = vxor.u32 %v2463, 2147483648
        %v2468 = vmul.f32 %v2467, 1.442695
        %v2469 = vpow.pop %v2468
        %v2470 = vadd.f32 %v2469, 1.0
        %v2471 = vrcp.pop %v2470
        %v2472 = vmul.f32 1.0, %v2471
        %v2473 = vxor.u32 %v2464, 2147483648
        %v2474 = vmul.f32 %v2473, 1.442695
        %v2475 = vpow.pop %v2474
        %v2476 = vadd.f32 %v2475, 1.0
        %v2477 = vrcp.pop %v2476
        %v2478 = vmul.f32 1.0, %v2477
        %v2479 = vtanh.pop %v2465
        %v2480 = vxor.u32 %v2466, 2147483648
        %v2481 = vmul.f32 %v2480, 1.442695
        %v2482 = vpow.pop %v2481
        %v2483 = vadd.f32 %v2482, 1.0
        %v2484 = vrcp.pop %v2483
        %v2485 = vmul.f32 1.0, %v2484
        %v2486 = vmul.f32 %v2478, %v2177
        %v2487 = vmul.f32 %v2472, %v2479
        %v2488 = vadd.f32 %v2486, %v2487
        %v2489 = vtanh.pop %v2488
        %v2490 = vmul.f32 %v2485, %v2489
        %v2491 = vpack.c.bf16 %v2490, %v2490
        %s2492 = scalar_lea.vmem %s324, 16
        %2493 = vst [vmem:[%s2492] sm:$0xf] %v2491
        %s2494 = scalar_lea.vmem %s315, 160
        %v2495 = vld [vmem:[%s2494] sm:$0xff]
        %v2496 = vld [vmem:[%s2494 + $0x8] sm:$0xff]
        %v2497 = vld [vmem:[%s2494 + $0x10] sm:$0xff]
        %v2498 = vld [vmem:[%s2494 + $0x18] sm:$0xff]
        %2499 = vmatprep.subr.bf16.mxu0 %v540
        %2500 = vmatpush1.bf16.msra.mxu0 %v539
        %2501 = vmatprep.subr.bf16.mxu0 %v544
        %2502 = vmatpush1.bf16.msra.mxu0 %v543
        %2503 = vmatprep.subr.bf16.mxu0 %v548
        %2504 = vmatpush1.bf16.msra.mxu0 %v547
        %2505 = vmatprep.subr.bf16.mxu0 %v552
        %2506 = vmatpush1.bf16.msra.mxu0 %v551
        %2507 = vmatprep.subr.bf16.mxu0 %v556
        %2508 = vmatpush1.bf16.msra.mxu0 %v555
        %2509 = vmatprep.subr.bf16.mxu0 %v560
        %2510 = vmatpush1.bf16.msra.mxu0 %v559
        %2511 = vmatprep.subr.bf16.mxu0 %v564
        %2512 = vmatpush1.bf16.msra.mxu0 %v563
        %2513 = vmatprep.subr.bf16.mxu0 %v568
        %2514 = vmatpush1.bf16.msra.mxu0 %v567
        %2515 = vmatprep.subr.bf16.mxu0 0
        %2516 = vmatpush1.bf16.msra.mxu0 0
        %2517 = vmatprep.subr.bf16.mxu0 0
        %2518 = vmatpush1.bf16.msra.mxu0 0
        %2519 = vmatprep.subr.bf16.mxu0 0
        %2520 = vmatpush1.bf16.msra.mxu0 0
        %2521 = vmatprep.subr.bf16.mxu0 0
        %2522 = vmatpush1.bf16.msra.mxu0 0
        %2523 = vmatprep.subr.bf16.mxu0 0
        %2524 = vmatpush1.bf16.msra.mxu0 0
        %2525 = vmatprep.subr.bf16.mxu0 0
        %2526 = vmatpush1.bf16.msra.mxu0 0
        %2527 = vmatprep.subr.bf16.mxu0 0
        %2528 = vmatpush1.bf16.msra.mxu0 0
        %2529 = vmatprep.subr.bf16.mxu0 0
        %2530 = vmatpush1.bf16.msra.mxu0 0
        %2531 = vmatprep.mubr.bf16.mxu0 0
        %2532 = vmatmul.mubr.bf16.gmra.mrb[0].mxu0 %v2298
        %v2533 = vpop.f32.mrb[0].mxu0
        %v2534 = vadd.f32 0.0, %v2533
        %v2535 = vpop.f32.mrb[0].mxu0
        %v2536 = vadd.f32 0.0, %v2535
        %v2537 = vpop.f32.mrb[0].mxu0
        %v2538 = vpop.f32.mrb[0].mxu0
        %2539 = vdwg.mxu0
        %2540 = vmatprep.subr.bf16.mxu0 %v542
        %2541 = vmatpush1.bf16.msra.mxu0 %v541
        %2542 = vmatprep.subr.bf16.mxu0 %v546
        %2543 = vmatpush1.bf16.msra.mxu0 %v545
        %2544 = vmatprep.subr.bf16.mxu0 %v550
        %2545 = vmatpush1.bf16.msra.mxu0 %v549
        %2546 = vmatprep.subr.bf16.mxu0 %v554
        %2547 = vmatpush1.bf16.msra.mxu0 %v553
        %2548 = vmatprep.subr.bf16.mxu0 %v558
        %2549 = vmatpush1.bf16.msra.mxu0 %v557
        %2550 = vmatprep.subr.bf16.mxu0 %v562
        %2551 = vmatpush1.bf16.msra.mxu0 %v561
        %2552 = vmatprep.subr.bf16.mxu0 %v566
        %2553 = vmatpush1.bf16.msra.mxu0 %v565
        %2554 = vmatprep.subr.bf16.mxu0 %v570
        %2555 = vmatpush1.bf16.msra.mxu0 %v569
        %2556 = vmatprep.subr.bf16.mxu0 0
        %2557 = vmatpush1.bf16.msra.mxu0 0
        %2558 = vmatprep.subr.bf16.mxu0 0
        %2559 = vmatpush1.bf16.msra.mxu0 0
        %2560 = vmatprep.subr.bf16.mxu0 0
        %2561 = vmatpush1.bf16.msra.mxu0 0
        %2562 = vmatprep.subr.bf16.mxu0 0
        %2563 = vmatpush1.bf16.msra.mxu0 0
        %2564 = vmatprep.subr.bf16.mxu0 0
        %2565 = vmatpush1.bf16.msra.mxu0 0
        %2566 = vmatprep.subr.bf16.mxu0 0
        %2567 = vmatpush1.bf16.msra.mxu0 0
        %2568 = vmatprep.subr.bf16.mxu0 0
        %2569 = vmatpush1.bf16.msra.mxu0 0
        %2570 = vmatprep.subr.bf16.mxu0 0
        %2571 = vmatpush1.bf16.msra.mxu0 0
        %2572 = vmatprep.mubr.bf16.mxu0 0
        %2573 = vmatmul.mubr.bf16.gmra.mrb[0].mxu0 %v2298
        %v2574 = vpop.f32.mrb[0].mxu0
        %v2575 = vadd.f32 0.0, %v2574
        %v2576 = vpop.f32.mrb[0].mxu0
        %v2577 = vadd.f32 0.0, %v2576
        %v2578 = vpop.f32.mrb[0].mxu0
        %v2579 = vpop.f32.mrb[0].mxu0
        %2580 = vdwg.mxu0
        %v2581 = vadd.f32 %v2495, %v2534
        %v2582 = vadd.f32 %v2496, %v2536
        %v2583 = vadd.f32 %v2497, %v2575
        %v2584 = vadd.f32 %v2498, %v2577
        %v2585 = vxor.u32 %v2581, 2147483648
        %v2586 = vmul.f32 %v2585, 1.442695
        %v2587 = vpow.pop %v2586
        %v2588 = vadd.f32 %v2587, 1.0
        %v2589 = vrcp.pop %v2588
        %v2590 = vmul.f32 1.0, %v2589
        %v2591 = vxor.u32 %v2582, 2147483648
        %v2592 = vmul.f32 %v2591, 1.442695
        %v2593 = vpow.pop %v2592
        %v2594 = vadd.f32 %v2593, 1.0
        %v2595 = vrcp.pop %v2594
        %v2596 = vmul.f32 1.0, %v2595
        %v2597 = vtanh.pop %v2583
        %v2598 = vxor.u32 %v2584, 2147483648
        %v2599 = vmul.f32 %v2598, 1.442695
        %v2600 = vpow.pop %v2599
        %v2601 = vadd.f32 %v2600, 1.0
        %v2602 = vrcp.pop %v2601
        %v2603 = vmul.f32 1.0, %v2602
        %v2604 = vmul.f32 %v2596, %v2295
        %v2605 = vmul.f32 %v2590, %v2597
        %v2606 = vadd.f32 %v2604, %v2605
        %v2607 = vtanh.pop %v2606
        %v2608 = vmul.f32 %v2603, %v2607
        %v2609 = vpack.c.bf16 %v2608, %v2608
        %2610 = vmatprep.subr.bf16.mxu0 %v812
        %2611 = vmatpush1.bf16.msra.mxu0 %v811
        %2612 = vmatprep.subr.bf16.mxu0 %v816
        %2613 = vmatpush1.bf16.msra.mxu0 %v815
        %2614 = vmatprep.subr.bf16.mxu0 %v820
        %2615 = vmatpush1.bf16.msra.mxu0 %v819
        %2616 = vmatprep.subr.bf16.mxu0 %v824
        %2617 = vmatpush1.bf16.msra.mxu0 %v823
        %2618 = vmatprep.subr.bf16.mxu0 %v828
        %2619 = vmatpush1.bf16.msra.mxu0 %v827
        %2620 = vmatprep.subr.bf16.mxu0 %v832
        %2621 = vmatpush1.bf16.msra.mxu0 %v831
        %2622 = vmatprep.subr.bf16.mxu0 %v836
        %2623 = vmatpush1.bf16.msra.mxu0 %v835
        %2624 = vmatprep.subr.bf16.mxu0 %v840
        %2625 = vmatpush1.bf16.msra.mxu0 %v839
        %2626 = vmatprep.subr.bf16.mxu0 0
        %2627 = vmatpush1.bf16.msra.mxu0 0
        %2628 = vmatprep.subr.bf16.mxu0 0
        %2629 = vmatpush1.bf16.msra.mxu0 0
        %2630 = vmatprep.subr.bf16.mxu0 0
        %2631 = vmatpush1.bf16.msra.mxu0 0
        %2632 = vmatprep.subr.bf16.mxu0 0
        %2633 = vmatpush1.bf16.msra.mxu0 0
        %2634 = vmatprep.subr.bf16.mxu0 0
        %2635 = vmatpush1.bf16.msra.mxu0 0
        %2636 = vmatprep.subr.bf16.mxu0 0
        %2637 = vmatpush1.bf16.msra.mxu0 0
        %2638 = vmatprep.subr.bf16.mxu0 0
        %2639 = vmatpush1.bf16.msra.mxu0 0
        %2640 = vmatprep.subr.bf16.mxu0 0
        %2641 = vmatpush1.bf16.msra.mxu0 0
        %2642 = vmatprep.mubr.bf16.mxu0 0
        %2643 = vmatmul.mubr.bf16.gmra.mrb[0].mxu0 %v2491
        %v2644 = vpop.f32.mrb[0].mxu0
        %v2645 = vadd.f32 0.0, %v2644
        %v2646 = vpop.f32.mrb[0].mxu0
        %v2647 = vadd.f32 0.0, %v2646
        %v2648 = vpop.f32.mrb[0].mxu0
        %v2649 = vpop.f32.mrb[0].mxu0
        %2650 = vdwg.mxu0
        %2651 = vmatprep.subr.bf16.mxu0 %v814
        %2652 = vmatpush1.bf16.msra.mxu0 %v813
        %2653 = vmatprep.subr.bf16.mxu0 %v818
        %2654 = vmatpush1.bf16.msra.mxu0 %v817
        %2655 = vmatprep.subr.bf16.mxu0 %v822
        %2656 = vmatpush1.bf16.msra.mxu0 %v821
        %2657 = vmatprep.subr.bf16.mxu0 %v826
        %2658 = vmatpush1.bf16.msra.mxu0 %v825
        %2659 = vmatprep.subr.bf16.mxu0 %v830
        %2660 = vmatpush1.bf16.msra.mxu0 %v829
        %2661 = vmatprep.subr.bf16.mxu0 %v834
        %2662 = vmatpush1.bf16.msra.mxu0 %v833
        %2663 = vmatprep.subr.bf16.mxu0 %v838
        %2664 = vmatpush1.bf16.msra.mxu0 %v837
        %2665 = vmatprep.subr.bf16.mxu0 %v842
        %2666 = vmatpush1.bf16.msra.mxu0 %v841
        %2667 = vmatprep.subr.bf16.mxu0 0
        %2668 = vmatpush1.bf16.msra.mxu0 0
        %2669 = vmatprep.subr.bf16.mxu0 0
        %2670 = vmatpush1.bf16.msra.mxu0 0
        %2671 = vmatprep.subr.bf16.mxu0 0
        %2672 = vmatpush1.bf16.msra.mxu0 0
        %2673 = vmatprep.subr.bf16.mxu0 0
        %2674 = vmatpush1.bf16.msra.mxu0 0
        %2675 = vmatprep.subr.bf16.mxu0 0
        %2676 = vmatpush1.bf16.msra.mxu0 0
        %2677 = vmatprep.subr.bf16.mxu0 0
        %2678 = vmatpush1.bf16.msra.mxu0 0
        %2679 = vmatprep.subr.bf16.mxu0 0
        %2680 = vmatpush1.bf16.msra.mxu0 0
        %2681 = vmatprep.subr.bf16.mxu0 0
        %2682 = vmatpush1.bf16.msra.mxu0 0
        %2683 = vmatprep.mubr.bf16.mxu0 0
        %2684 = vmatmul.mubr.bf16.gmra.mrb[0].mxu0 %v2491
        %v2685 = vpop.f32.mrb[0].mxu0
        %v2686 = vadd.f32 0.0, %v2685
        %v2687 = vpop.f32.mrb[0].mxu0
        %v2688 = vadd.f32 0.0, %v2687
        %v2689 = vpop.f32.mrb[0].mxu0
        %v2690 = vpop.f32.mrb[0].mxu0
        %2691 = vdwg.mxu0
        %2692 = vmatprep.subr.bf16.mxu0 %v1054
        %2693 = vmatpush1.bf16.msra.mxu0 %v1053
        %2694 = vmatprep.subr.bf16.mxu0 %v1058
        %2695 = vmatpush1.bf16.msra.mxu0 %v1057
        %2696 = vmatprep.subr.bf16.mxu0 %v1062
        %2697 = vmatpush1.bf16.msra.mxu0 %v1061
        %2698 = vmatprep.subr.bf16.mxu0 %v1066
        %2699 = vmatpush1.bf16.msra.mxu0 %v1065
        %2700 = vmatprep.subr.bf16.mxu0 %v1070
        %2701 = vmatpush1.bf16.msra.mxu0 %v1069
        %2702 = vmatprep.subr.bf16.mxu0 %v1074
        %2703 = vmatpush1.bf16.msra.mxu0 %v1073
        %2704 = vmatprep.subr.bf16.mxu0 %v1078
        %2705 = vmatpush1.bf16.msra.mxu0 %v1077
        %2706 = vmatprep.subr.bf16.mxu0 %v1082
        %2707 = vmatpush1.bf16.msra.mxu0 %v1081
        %2708 = vmatprep.subr.bf16.mxu0 0
        %2709 = vmatpush1.bf16.msra.mxu0 0
        %2710 = vmatprep.subr.bf16.mxu0 0
        %2711 = vmatpush1.bf16.msra.mxu0 0
        %2712 = vmatprep.subr.bf16.mxu0 0
        %2713 = vmatpush1.bf16.msra.mxu0 0
        %2714 = vmatprep.subr.bf16.mxu0 0
        %2715 = vmatpush1.bf16.msra.mxu0 0
        %2716 = vmatprep.subr.bf16.mxu0 0
        %2717 = vmatpush1.bf16.msra.mxu0 0
        %2718 = vmatprep.subr.bf16.mxu0 0
        %2719 = vmatpush1.bf16.msra.mxu0 0
        %2720 = vmatprep.subr.bf16.mxu0 0
        %2721 = vmatpush1.bf16.msra.mxu0 0
        %2722 = vmatprep.subr.bf16.mxu0 0
        %2723 = vmatpush1.bf16.msra.mxu0 0
        %2724 = vmatprep.mubr.bf16.mxu0 0
        %2725 = vmatmul.mubr.bf16.gmra.mrb[0].mxu0 %v2609
        %v2726 = vpop.f32.mrb[0].mxu0
        %v2727 = vadd.f32 %v2645, %v2726
        %v2728 = vpop.f32.mrb[0].mxu0
        %v2729 = vadd.f32 %v2647, %v2728
        %v2730 = vpop.f32.mrb[0].mxu0
        %v2731 = vpop.f32.mrb[0].mxu0
        %2732 = vdwg.mxu0
        %2733 = vmatprep.subr.bf16.mxu0 %v1056
        %2734 = vmatpush1.bf16.msra.mxu0 %v1055
        %2735 = vmatprep.subr.bf16.mxu0 %v1060
        %2736 = vmatpush1.bf16.msra.mxu0 %v1059
        %2737 = vmatprep.subr.bf16.mxu0 %v1064
        %2738 = vmatpush1.bf16.msra.mxu0 %v1063
        %2739 = vmatprep.subr.bf16.mxu0 %v1068
        %2740 = vmatpush1.bf16.msra.mxu0 %v1067
        %2741 = vmatprep.subr.bf16.mxu0 %v1072
        %2742 = vmatpush1.bf16.msra.mxu0 %v1071
        %2743 = vmatprep.subr.bf16.mxu0 %v1076
        %2744 = vmatpush1.bf16.msra.mxu0 %v1075
        %2745 = vmatprep.subr.bf16.mxu0 %v1080
        %2746 = vmatpush1.bf16.msra.mxu0 %v1079
        %2747 = vmatprep.subr.bf16.mxu0 %v1084
        %2748 = vmatpush1.bf16.msra.mxu0 %v1083
        %2749 = vmatprep.subr.bf16.mxu0 0
        %2750 = vmatpush1.bf16.msra.mxu0 0
        %2751 = vmatprep.subr.bf16.mxu0 0
        %2752 = vmatpush1.bf16.msra.mxu0 0
        %2753 = vmatprep.subr.bf16.mxu0 0
        %2754 = vmatpush1.bf16.msra.mxu0 0
        %2755 = vmatprep.subr.bf16.mxu0 0
        %2756 = vmatpush1.bf16.msra.mxu0 0
        %2757 = vmatprep.subr.bf16.mxu0 0
        %2758 = vmatpush1.bf16.msra.mxu0 0
        %2759 = vmatprep.subr.bf16.mxu0 0
        %2760 = vmatpush1.bf16.msra.mxu0 0
        %2761 = vmatprep.subr.bf16.mxu0 0
        %2762 = vmatpush1.bf16.msra.mxu0 0
        %2763 = vmatprep.subr.bf16.mxu0 0
        %2764 = vmatpush1.bf16.msra.mxu0 0
        %2765 = vmatprep.mubr.bf16.mxu0 0
        %2766 = vmatmul.mubr.bf16.gmra.mrb[0].mxu0 %v2609
        %v2767 = vpop.f32.mrb[0].mxu0
        %v2768 = vadd.f32 %v2686, %v2767
        %v2769 = vpop.f32.mrb[0].mxu0
        %v2770 = vadd.f32 %v2688, %v2769
        %v2771 = vpop.f32.mrb[0].mxu0
        %v2772 = vpop.f32.mrb[0].mxu0
        %2773 = vdwg.mxu0
        %v2774 = vadd.f32 %v2727, %v1203
        %v2775 = vadd.f32 %v2729, %v1207
        %v2776 = vadd.f32 %v2768, %v1211
        %v2777 = vadd.f32 %v2770, %v1215
        %v2778 = vxor.u32 %v2774, 2147483648
        %v2779 = vmul.f32 %v2778, 1.442695
        %v2780 = vpow.pop %v2779
        %v2781 = vadd.f32 %v2780, 1.0
        %v2782 = vrcp.pop %v2781
        %v2783 = vmul.f32 1.0, %v2782
        %v2784 = vxor.u32 %v2775, 2147483648
        %v2785 = vmul.f32 %v2784, 1.442695
        %v2786 = vpow.pop %v2785
        %v2787 = vadd.f32 %v2786, 1.0
        %v2788 = vrcp.pop %v2787
        %v2789 = vmul.f32 1.0, %v2788
        %v2790 = vtanh.pop %v2776
        %v2791 = vxor.u32 %v2777, 2147483648
        %v2792 = vmul.f32 %v2791, 1.442695
        %v2793 = vpow.pop %v2792
        %v2794 = vadd.f32 %v2793, 1.0
        %v2795 = vrcp.pop %v2794
        %v2796 = vmul.f32 1.0, %v2795
        %v2797 = vmul.f32 %v2789, %v2488
        %v2798 = vmul.f32 %v2783, %v2790
        %v2799 = vadd.f32 %v2797, %v2798
        %v2800 = vtanh.pop %v2799
        %v2801 = vmul.f32 %v2796, %v2800
        %v2802 = vpack.c.bf16 %v2801, %v2801
        %s2803 = scalar_lea.vmem %s324, 20
        %2804 = vst [vmem:[%s2803] sm:$0xf] %v2802
        %s2805 = scalar_lea.vmem %s315, 192
        %v2806 = vld [vmem:[%s2805] sm:$0xff]
        %v2807 = vld [vmem:[%s2805 + $0x8] sm:$0xff]
        %v2808 = vld [vmem:[%s2805 + $0x10] sm:$0xff]
        %v2809 = vld [vmem:[%s2805 + $0x18] sm:$0xff]
        %2810 = vmatprep.subr.bf16.mxu0 %v540
        %2811 = vmatpush1.bf16.msra.mxu0 %v539
        %2812 = vmatprep.subr.bf16.mxu0 %v544
        %2813 = vmatpush1.bf16.msra.mxu0 %v543
        %2814 = vmatprep.subr.bf16.mxu0 %v548
        %2815 = vmatpush1.bf16.msra.mxu0 %v547
        %2816 = vmatprep.subr.bf16.mxu0 %v552
        %2817 = vmatpush1.bf16.msra.mxu0 %v551
        %2818 = vmatprep.subr.bf16.mxu0 %v556
        %2819 = vmatpush1.bf16.msra.mxu0 %v555
        %2820 = vmatprep.subr.bf16.mxu0 %v560
        %2821 = vmatpush1.bf16.msra.mxu0 %v559
        %2822 = vmatprep.subr.bf16.mxu0 %v564
        %2823 = vmatpush1.bf16.msra.mxu0 %v563
        %2824 = vmatprep.subr.bf16.mxu0 %v568
        %2825 = vmatpush1.bf16.msra.mxu0 %v567
        %2826 = vmatprep.subr.bf16.mxu0 0
        %2827 = vmatpush1.bf16.msra.mxu0 0
        %2828 = vmatprep.subr.bf16.mxu0 0
        %2829 = vmatpush1.bf16.msra.mxu0 0
        %2830 = vmatprep.subr.bf16.mxu0 0
        %2831 = vmatpush1.bf16.msra.mxu0 0
        %2832 = vmatprep.subr.bf16.mxu0 0
        %2833 = vmatpush1.bf16.msra.mxu0 0
        %2834 = vmatprep.subr.bf16.mxu0 0
        %2835 = vmatpush1.bf16.msra.mxu0 0
        %2836 = vmatprep.subr.bf16.mxu0 0
        %2837 = vmatpush1.bf16.msra.mxu0 0
        %2838 = vmatprep.subr.bf16.mxu0 0
        %2839 = vmatpush1.bf16.msra.mxu0 0
        %2840 = vmatprep.subr.bf16.mxu0 0
        %2841 = vmatpush1.bf16.msra.mxu0 0
        %2842 = vmatprep.mubr.bf16.mxu0 0
        %2843 = vmatmul.mubr.bf16.gmra.mrb[0].mxu0 %v2609
        %v2844 = vpop.f32.mrb[0].mxu0
        %v2845 = vadd.f32 0.0, %v2844
        %v2846 = vpop.f32.mrb[0].mxu0
        %v2847 = vadd.f32 0.0, %v2846
        %v2848 = vpop.f32.mrb[0].mxu0
        %v2849 = vpop.f32.mrb[0].mxu0
        %2850 = vdwg.mxu0
        %2851 = vmatprep.subr.bf16.mxu0 %v542
        %2852 = vmatpush1.bf16.msra.mxu0 %v541
        %2853 = vmatprep.subr.bf16.mxu0 %v546
        %2854 = vmatpush1.bf16.msra.mxu0 %v545
        %2855 = vmatprep.subr.bf16.mxu0 %v550
        %2856 = vmatpush1.bf16.msra.mxu0 %v549
        %2857 = vmatprep.subr.bf16.mxu0 %v554
        %2858 = vmatpush1.bf16.msra.mxu0 %v553
        %2859 = vmatprep.subr.bf16.mxu0 %v558
        %2860 = vmatpush1.bf16.msra.mxu0 %v557
        %2861 = vmatprep.subr.bf16.mxu0 %v562
        %2862 = vmatpush1.bf16.msra.mxu0 %v561
        %2863 = vmatprep.subr.bf16.mxu0 %v566
        %2864 = vmatpush1.bf16.msra.mxu0 %v565
        %2865 = vmatprep.subr.bf16.mxu0 %v570
        %2866 = vmatpush1.bf16.msra.mxu0 %v569
        %2867 = vmatprep.subr.bf16.mxu0 0
        %2868 = vmatpush1.bf16.msra.mxu0 0
        %2869 = vmatprep.subr.bf16.mxu0 0
        %2870 = vmatpush1.bf16.msra.mxu0 0
        %2871 = vmatprep.subr.bf16.mxu0 0
        %2872 = vmatpush1.bf16.msra.mxu0 0
        %2873 = vmatprep.subr.bf16.mxu0 0
        %2874 = vmatpush1.bf16.msra.mxu0 0
        %2875 = vmatprep.subr.bf16.mxu0 0
        %2876 = vmatpush1.bf16.msra.mxu0 0
        %2877 = vmatprep.subr.bf16.mxu0 0
        %2878 = vmatpush1.bf16.msra.mxu0 0
        %2879 = vmatprep.subr.bf16.mxu0 0
        %2880 = vmatpush1.bf16.msra.mxu0 0
        %2881 = vmatprep.subr.bf16.mxu0 0
        %2882 = vmatpush1.bf16.msra.mxu0 0
        %2883 = vmatprep.mubr.bf16.mxu0 0
        %2884 = vmatmul.mubr.bf16.gmra.mrb[0].mxu0 %v2609
        %v2885 = vpop.f32.mrb[0].mxu0
        %v2886 = vadd.f32 0.0, %v2885
        %v2887 = vpop.f32.mrb[0].mxu0
        %v2888 = vadd.f32 0.0, %v2887
        %v2889 = vpop.f32.mrb[0].mxu0
        %v2890 = vpop.f32.mrb[0].mxu0
        %2891 = vdwg.mxu0
        %v2892 = vadd.f32 %v2806, %v2845
        %v2893 = vadd.f32 %v2807, %v2847
        %v2894 = vadd.f32 %v2808, %v2886
        %v2895 = vadd.f32 %v2809, %v2888
        %v2896 = vxor.u32 %v2892, 2147483648
        %v2897 = vmul.f32 %v2896, 1.442695
        %v2898 = vpow.pop %v2897
        %v2899 = vadd.f32 %v2898, 1.0
        %v2900 = vrcp.pop %v2899
        %v2901 = vmul.f32 1.0, %v2900
        %v2902 = vxor.u32 %v2893, 2147483648
        %v2903 = vmul.f32 %v2902, 1.442695
        %v2904 = vpow.pop %v2903
        %v2905 = vadd.f32 %v2904, 1.0
        %v2906 = vrcp.pop %v2905
        %v2907 = vmul.f32 1.0, %v2906
        %v2908 = vtanh.pop %v2894
        %v2909 = vxor.u32 %v2895, 2147483648
        %v2910 = vmul.f32 %v2909, 1.442695
        %v2911 = vpow.pop %v2910
        %v2912 = vadd.f32 %v2911, 1.0
        %v2913 = vrcp.pop %v2912
        %v2914 = vmul.f32 1.0, %v2913
        %v2915 = vmul.f32 %v2907, %v2606
        %v2916 = vmul.f32 %v2901, %v2908
        %v2917 = vadd.f32 %v2915, %v2916
        %v2918 = vtanh.pop %v2917
        %v2919 = vmul.f32 %v2914, %v2918
        %v2920 = vpack.c.bf16 %v2919, %v2919
        %2921 = vmatprep.subr.bf16.mxu0 %v812
        %2922 = vmatpush1.bf16.msra.mxu0 %v811
        %2923 = vmatprep.subr.bf16.mxu0 %v816
        %2924 = vmatpush1.bf16.msra.mxu0 %v815
        %2925 = vmatprep.subr.bf16.mxu0 %v820
        %2926 = vmatpush1.bf16.msra.mxu0 %v819
        %2927 = vmatprep.subr.bf16.mxu0 %v824
        %2928 = vmatpush1.bf16.msra.mxu0 %v823
        %2929 = vmatprep.subr.bf16.mxu0 %v828
        %2930 = vmatpush1.bf16.msra.mxu0 %v827
        %2931 = vmatprep.subr.bf16.mxu0 %v832
        %2932 = vmatpush1.bf16.msra.mxu0 %v831
        %2933 = vmatprep.subr.bf16.mxu0 %v836
        %2934 = vmatpush1.bf16.msra.mxu0 %v835
        %2935 = vmatprep.subr.bf16.mxu0 %v840
        %2936 = vmatpush1.bf16.msra.mxu0 %v839
        %2937 = vmatprep.subr.bf16.mxu0 0
        %2938 = vmatpush1.bf16.msra.mxu0 0
        %2939 = vmatprep.subr.bf16.mxu0 0
        %2940 = vmatpush1.bf16.msra.mxu0 0
        %2941 = vmatprep.subr.bf16.mxu0 0
        %2942 = vmatpush1.bf16.msra.mxu0 0
        %2943 = vmatprep.subr.bf16.mxu0 0
        %2944 = vmatpush1.bf16.msra.mxu0 0
        %2945 = vmatprep.subr.bf16.mxu0 0
        %2946 = vmatpush1.bf16.msra.mxu0 0
        %2947 = vmatprep.subr.bf16.mxu0 0
        %2948 = vmatpush1.bf16.msra.mxu0 0
        %2949 = vmatprep.subr.bf16.mxu0 0
        %2950 = vmatpush1.bf16.msra.mxu0 0
        %2951 = vmatprep.subr.bf16.mxu0 0
        %2952 = vmatpush1.bf16.msra.mxu0 0
        %2953 = vmatprep.mubr.bf16.mxu0 0
        %2954 = vmatmul.mubr.bf16.gmra.mrb[0].mxu0 %v2802
        %v2955 = vpop.f32.mrb[0].mxu0
        %v2956 = vadd.f32 0.0, %v2955
        %v2957 = vpop.f32.mrb[0].mxu0
        %v2958 = vadd.f32 0.0, %v2957
        %v2959 = vpop.f32.mrb[0].mxu0
        %v2960 = vpop.f32.mrb[0].mxu0
        %2961 = vdwg.mxu0
        %2962 = vmatprep.subr.bf16.mxu0 %v814
        %2963 = vmatpush1.bf16.msra.mxu0 %v813
        %2964 = vmatprep.subr.bf16.mxu0 %v818
        %2965 = vmatpush1.bf16.msra.mxu0 %v817
        %2966 = vmatprep.subr.bf16.mxu0 %v822
        %2967 = vmatpush1.bf16.msra.mxu0 %v821
        %2968 = vmatprep.subr.bf16.mxu0 %v826
        %2969 = vmatpush1.bf16.msra.mxu0 %v825
        %2970 = vmatprep.subr.bf16.mxu0 %v830
        %2971 = vmatpush1.bf16.msra.mxu0 %v829
        %2972 = vmatprep.subr.bf16.mxu0 %v834
        %2973 = vmatpush1.bf16.msra.mxu0 %v833
        %2974 = vmatprep.subr.bf16.mxu0 %v838
        %2975 = vmatpush1.bf16.msra.mxu0 %v837
        %2976 = vmatprep.subr.bf16.mxu0 %v842
        %2977 = vmatpush1.bf16.msra.mxu0 %v841
        %2978 = vmatprep.subr.bf16.mxu0 0
        %2979 = vmatpush1.bf16.msra.mxu0 0
        %2980 = vmatprep.subr.bf16.mxu0 0
        %2981 = vmatpush1.bf16.msra.mxu0 0
        %2982 = vmatprep.subr.bf16.mxu0 0
        %2983 = vmatpush1.bf16.msra.mxu0 0
        %2984 = vmatprep.subr.bf16.mxu0 0
        %2985 = vmatpush1.bf16.msra.mxu0 0
        %2986 = vmatprep.subr.bf16.mxu0 0
        %2987 = vmatpush1.bf16.msra.mxu0 0
        %2988 = vmatprep.subr.bf16.mxu0 0
        %2989 = vmatpush1.bf16.msra.mxu0 0
        %2990 = vmatprep.subr.bf16.mxu0 0
        %2991 = vmatpush1.bf16.msra.mxu0 0
        %2992 = vmatprep.subr.bf16.mxu0 0
        %2993 = vmatpush1.bf16.msra.mxu0 0
        %2994 = vmatprep.mubr.bf16.mxu0 0
        %2995 = vmatmul.mubr.bf16.gmra.mrb[0].mxu0 %v2802
        %v2996 = vpop.f32.mrb[0].mxu0
        %v2997 = vadd.f32 0.0, %v2996
        %v2998 = vpop.f32.mrb[0].mxu0
        %v2999 = vadd.f32 0.0, %v2998
        %v3000 = vpop.f32.mrb[0].mxu0
        %v3001 = vpop.f32.mrb[0].mxu0
        %3002 = vdwg.mxu0
        %3003 = vmatprep.subr.bf16.mxu0 %v1054
        %3004 = vmatpush1.bf16.msra.mxu0 %v1053
        %3005 = vmatprep.subr.bf16.mxu0 %v1058
        %3006 = vmatpush1.bf16.msra.mxu0 %v1057
        %3007 = vmatprep.subr.bf16.mxu0 %v1062
        %3008 = vmatpush1.bf16.msra.mxu0 %v1061
        %3009 = vmatprep.subr.bf16.mxu0 %v1066
        %3010 = vmatpush1.bf16.msra.mxu0 %v1065
        %3011 = vmatprep.subr.bf16.mxu0 %v1070
        %3012 = vmatpush1.bf16.msra.mxu0 %v1069
        %3013 = vmatprep.subr.bf16.mxu0 %v1074
        %3014 = vmatpush1.bf16.msra.mxu0 %v1073
        %3015 = vmatprep.subr.bf16.mxu0 %v1078
        %3016 = vmatpush1.bf16.msra.mxu0 %v1077
        %3017 = vmatprep.subr.bf16.mxu0 %v1082
        %3018 = vmatpush1.bf16.msra.mxu0 %v1081
        %3019 = vmatprep.subr.bf16.mxu0 0
        %3020 = vmatpush1.bf16.msra.mxu0 0
        %3021 = vmatprep.subr.bf16.mxu0 0
        %3022 = vmatpush1.bf16.msra.mxu0 0
        %3023 = vmatprep.subr.bf16.mxu0 0
        %3024 = vmatpush1.bf16.msra.mxu0 0
        %3025 = vmatprep.subr.bf16.mxu0 0
        %3026 = vmatpush1.bf16.msra.mxu0 0
        %3027 = vmatprep.subr.bf16.mxu0 0
        %3028 = vmatpush1.bf16.msra.mxu0 0
        %3029 = vmatprep.subr.bf16.mxu0 0
        %3030 = vmatpush1.bf16.msra.mxu0 0
        %3031 = vmatprep.subr.bf16.mxu0 0
        %3032 = vmatpush1.bf16.msra.mxu0 0
        %3033 = vmatprep.subr.bf16.mxu0 0
        %3034 = vmatpush1.bf16.msra.mxu0 0
        %3035 = vmatprep.mubr.bf16.mxu0 0
        %3036 = vmatmul.mubr.bf16.gmra.mrb[0].mxu0 %v2920
        %v3037 = vpop.f32.mrb[0].mxu0
        %v3038 = vadd.f32 %v2956, %v3037
        %v3039 = vpop.f32.mrb[0].mxu0
        %v3040 = vadd.f32 %v2958, %v3039
        %v3041 = vpop.f32.mrb[0].mxu0
        %v3042 = vpop.f32.mrb[0].mxu0
        %3043 = vdwg.mxu0
        %3044 = vmatprep.subr.bf16.mxu0 %v1056
        %3045 = vmatpush1.bf16.msra.mxu0 %v1055
        %3046 = vmatprep.subr.bf16.mxu0 %v1060
        %3047 = vmatpush1.bf16.msra.mxu0 %v1059
        %3048 = vmatprep.subr.bf16.mxu0 %v1064
        %3049 = vmatpush1.bf16.msra.mxu0 %v1063
        %3050 = vmatprep.subr.bf16.mxu0 %v1068
        %3051 = vmatpush1.bf16.msra.mxu0 %v1067
        %3052 = vmatprep.subr.bf16.mxu0 %v1072
        %3053 = vmatpush1.bf16.msra.mxu0 %v1071
        %3054 = vmatprep.subr.bf16.mxu0 %v1076
        %3055 = vmatpush1.bf16.msra.mxu0 %v1075
        %3056 = vmatprep.subr.bf16.mxu0 %v1080
        %3057 = vmatpush1.bf16.msra.mxu0 %v1079
        %3058 = vmatprep.subr.bf16.mxu0 %v1084
        %3059 = vmatpush1.bf16.msra.mxu0 %v1083
        %3060 = vmatprep.subr.bf16.mxu0 0
        %3061 = vmatpush1.bf16.msra.mxu0 0
        %3062 = vmatprep.subr.bf16.mxu0 0
        %3063 = vmatpush1.bf16.msra.mxu0 0
        %3064 = vmatprep.subr.bf16.mxu0 0
        %3065 = vmatpush1.bf16.msra.mxu0 0
        %3066 = vmatprep.subr.bf16.mxu0 0
        %3067 = vmatpush1.bf16.msra.mxu0 0
        %3068 = vmatprep.subr.bf16.mxu0 0
        %3069 = vmatpush1.bf16.msra.mxu0 0
        %3070 = vmatprep.subr.bf16.mxu0 0
        %3071 = vmatpush1.bf16.msra.mxu0 0
        %3072 = vmatprep.subr.bf16.mxu0 0
        %3073 = vmatpush1.bf16.msra.mxu0 0
        %3074 = vmatprep.subr.bf16.mxu0 0
        %3075 = vmatpush1.bf16.msra.mxu0 0
        %3076 = vmatprep.mubr.bf16.mxu0 0
        %3077 = vmatmul.mubr.bf16.gmra.mrb[0].mxu0 %v2920
        %v3078 = vpop.f32.mrb[0].mxu0
        %v3079 = vadd.f32 %v2997, %v3078
        %v3080 = vpop.f32.mrb[0].mxu0
        %v3081 = vadd.f32 %v2999, %v3080
        %v3082 = vpop.f32.mrb[0].mxu0
        %v3083 = vpop.f32.mrb[0].mxu0
        %3084 = vdwg.mxu0
        %v3085 = vadd.f32 %v3038, %v1203
        %v3086 = vadd.f32 %v3040, %v1207
        %v3087 = vadd.f32 %v3079, %v1211
        %v3088 = vadd.f32 %v3081, %v1215
        %v3089 = vxor.u32 %v3085, 2147483648
        %v3090 = vmul.f32 %v3089, 1.442695
        %v3091 = vpow.pop %v3090
        %v3092 = vadd.f32 %v3091, 1.0
        %v3093 = vrcp.pop %v3092
        %v3094 = vmul.f32 1.0, %v3093
        %v3095 = vxor.u32 %v3086, 2147483648
        %v3096 = vmul.f32 %v3095, 1.442695
        %v3097 = vpow.pop %v3096
        %v3098 = vadd.f32 %v3097, 1.0
        %v3099 = vrcp.pop %v3098
        %v3100 = vmul.f32 1.0, %v3099
        %v3101 = vtanh.pop %v3087
        %v3102 = vxor.u32 %v3088, 2147483648
        %v3103 = vmul.f32 %v3102, 1.442695
        %v3104 = vpow.pop %v3103
        %v3105 = vadd.f32 %v3104, 1.0
        %v3106 = vrcp.pop %v3105
        %v3107 = vmul.f32 1.0, %v3106
        %v3108 = vmul.f32 %v3100, %v2799
        %v3109 = vmul.f32 %v3094, %v3101
        %v3110 = vadd.f32 %v3108, %v3109
        %v3111 = vtanh.pop %v3110
        %v3112 = vmul.f32 %v3107, %v3111
        %v3113 = vpack.c.bf16 %v3112, %v3112
        %s3114 = scalar_lea.vmem %s324, 24
        %3115 = vst [vmem:[%s3114] sm:$0xf] %v3113
        %s3116 = scalar_lea.vmem %s315, 224
        %v3117 = vld [vmem:[%s3116] sm:$0xff]
        %v3118 = vld [vmem:[%s3116 + $0x8] sm:$0xff]
        %v3119 = vld [vmem:[%s3116 + $0x10] sm:$0xff]
        %v3120 = vld [vmem:[%s3116 + $0x18] sm:$0xff]
        %3121 = vmatprep.subr.bf16.mxu0 %v540
        %3122 = vmatpush1.bf16.msra.mxu0 %v539
        %3123 = vmatprep.subr.bf16.mxu0 %v544
        %3124 = vmatpush1.bf16.msra.mxu0 %v543
        %3125 = vmatprep.subr.bf16.mxu0 %v548
        %3126 = vmatpush1.bf16.msra.mxu0 %v547
        %3127 = vmatprep.subr.bf16.mxu0 %v552
        %3128 = vmatpush1.bf16.msra.mxu0 %v551
        %3129 = vmatprep.subr.bf16.mxu0 %v556
        %3130 = vmatpush1.bf16.msra.mxu0 %v555
        %3131 = vmatprep.subr.bf16.mxu0 %v560
        %3132 = vmatpush1.bf16.msra.mxu0 %v559
        %3133 = vmatprep.subr.bf16.mxu0 %v564
        %3134 = vmatpush1.bf16.msra.mxu0 %v563
        %3135 = vmatprep.subr.bf16.mxu0 %v568
        %3136 = vmatpush1.bf16.msra.mxu0 %v567
        %3137 = vmatprep.subr.bf16.mxu0 0
        %3138 = vmatpush1.bf16.msra.mxu0 0
        %3139 = vmatprep.subr.bf16.mxu0 0
        %3140 = vmatpush1.bf16.msra.mxu0 0
        %3141 = vmatprep.subr.bf16.mxu0 0
        %3142 = vmatpush1.bf16.msra.mxu0 0
        %3143 = vmatprep.subr.bf16.mxu0 0
        %3144 = vmatpush1.bf16.msra.mxu0 0
        %3145 = vmatprep.subr.bf16.mxu0 0
        %3146 = vmatpush1.bf16.msra.mxu0 0
        %3147 = vmatprep.subr.bf16.mxu0 0
        %3148 = vmatpush1.bf16.msra.mxu0 0
        %3149 = vmatprep.subr.bf16.mxu0 0
        %3150 = vmatpush1.bf16.msra.mxu0 0
        %3151 = vmatprep.subr.bf16.mxu0 0
        %3152 = vmatpush1.bf16.msra.mxu0 0
        %3153 = vmatprep.mubr.bf16.mxu0 0
        %3154 = vmatmul.mubr.bf16.gmra.mrb[0].mxu0 %v2920
        %v3155 = vpop.f32.mrb[0].mxu0
        %v3156 = vadd.f32 0.0, %v3155
        %v3157 = vpop.f32.mrb[0].mxu0
        %v3158 = vadd.f32 0.0, %v3157
        %v3159 = vpop.f32.mrb[0].mxu0
        %v3160 = vpop.f32.mrb[0].mxu0
        %3161 = vdwg.mxu0
        %3162 = vmatprep.subr.bf16.mxu0 %v542
        %3163 = vmatpush1.bf16.msra.mxu0 %v541
        %3164 = vmatprep.subr.bf16.mxu0 %v546
        %3165 = vmatpush1.bf16.msra.mxu0 %v545
        %3166 = vmatprep.subr.bf16.mxu0 %v550
        %3167 = vmatpush1.bf16.msra.mxu0 %v549
        %3168 = vmatprep.subr.bf16.mxu0 %v554
        %3169 = vmatpush1.bf16.msra.mxu0 %v553
        %3170 = vmatprep.subr.bf16.mxu0 %v558
        %3171 = vmatpush1.bf16.msra.mxu0 %v557
        %3172 = vmatprep.subr.bf16.mxu0 %v562
        %3173 = vmatpush1.bf16.msra.mxu0 %v561
        %3174 = vmatprep.subr.bf16.mxu0 %v566
        %3175 = vmatpush1.bf16.msra.mxu0 %v565
        %3176 = vmatprep.subr.bf16.mxu0 %v570
        %3177 = vmatpush1.bf16.msra.mxu0 %v569
        %3178 = vmatprep.subr.bf16.mxu0 0
        %3179 = vmatpush1.bf16.msra.mxu0 0
        %3180 = vmatprep.subr.bf16.mxu0 0
        %3181 = vmatpush1.bf16.msra.mxu0 0
        %3182 = vmatprep.subr.bf16.mxu0 0
        %3183 = vmatpush1.bf16.msra.mxu0 0
        %3184 = vmatprep.subr.bf16.mxu0 0
        %3185 = vmatpush1.bf16.msra.mxu0 0
        %3186 = vmatprep.subr.bf16.mxu0 0
        %3187 = vmatpush1.bf16.msra.mxu0 0
        %3188 = vmatprep.subr.bf16.mxu0 0
        %3189 = vmatpush1.bf16.msra.mxu0 0
        %3190 = vmatprep.subr.bf16.mxu0 0
        %3191 = vmatpush1.bf16.msra.mxu0 0
        %3192 = vmatprep.subr.bf16.mxu0 0
        %3193 = vmatpush1.bf16.msra.mxu0 0
        %3194 = vmatprep.mubr.bf16.mxu0 0
        %3195 = vmatmul.mubr.bf16.gmra.mrb[0].mxu0 %v2920
        %v3196 = vpop.f32.mrb[0].mxu0
        %v3197 = vadd.f32 0.0, %v3196
        %v3198 = vpop.f32.mrb[0].mxu0
        %v3199 = vadd.f32 0.0, %v3198
        %v3200 = vpop.f32.mrb[0].mxu0
        %v3201 = vpop.f32.mrb[0].mxu0
        %3202 = vdwg.mxu0
        %v3203 = vadd.f32 %v3117, %v3156
        %v3204 = vadd.f32 %v3118, %v3158
        %v3205 = vadd.f32 %v3119, %v3197
        %v3206 = vadd.f32 %v3120, %v3199
        %v3207 = vxor.u32 %v3203, 2147483648
        %v3208 = vmul.f32 %v3207, 1.442695
        %v3209 = vpow.pop %v3208
        %v3210 = vadd.f32 %v3209, 1.0
        %v3211 = vrcp.pop %v3210
        %v3212 = vmul.f32 1.0, %v3211
        %v3213 = vxor.u32 %v3204, 2147483648
        %v3214 = vmul.f32 %v3213, 1.442695
        %v3215 = vpow.pop %v3214
        %v3216 = vadd.f32 %v3215, 1.0
        %v3217 = vrcp.pop %v3216
        %v3218 = vmul.f32 1.0, %v3217
        %v3219 = vtanh.pop %v3205
        %v3220 = vxor.u32 %v3206, 2147483648
        %v3221 = vmul.f32 %v3220, 1.442695
        %v3222 = vpow.pop %v3221
        %v3223 = vadd.f32 %v3222, 1.0
        %v3224 = vrcp.pop %v3223
        %v3225 = vmul.f32 1.0, %v3224
        %v3226 = vmul.f32 %v3218, %v2917
        %v3227 = vmul.f32 %v3212, %v3219
        %v3228 = vadd.f32 %v3226, %v3227
        %v3229 = vtanh.pop %v3228
        %v3230 = vmul.f32 %v3225, %v3229
        %v3231 = vpack.c.bf16 %v3230, %v3230
        %3232 = vmatprep.subr.bf16.mxu0 %v812
        %3233 = vmatpush1.bf16.msra.mxu0 %v811
        %3234 = vmatprep.subr.bf16.mxu0 %v816
        %3235 = vmatpush1.bf16.msra.mxu0 %v815
        %3236 = vmatprep.subr.bf16.mxu0 %v820
        %3237 = vmatpush1.bf16.msra.mxu0 %v819
        %3238 = vmatprep.subr.bf16.mxu0 %v824
        %3239 = vmatpush1.bf16.msra.mxu0 %v823
        %3240 = vmatprep.subr.bf16.mxu0 %v828
        %3241 = vmatpush1.bf16.msra.mxu0 %v827
        %3242 = vmatprep.subr.bf16.mxu0 %v832
        %3243 = vmatpush1.bf16.msra.mxu0 %v831
        %3244 = vmatprep.subr.bf16.mxu0 %v836
        %3245 = vmatpush1.bf16.msra.mxu0 %v835
        %3246 = vmatprep.subr.bf16.mxu0 %v840
        %3247 = vmatpush1.bf16.msra.mxu0 %v839
        %3248 = vmatprep.subr.bf16.mxu0 0
        %3249 = vmatpush1.bf16.msra.mxu0 0
        %3250 = vmatprep.subr.bf16.mxu0 0
        %3251 = vmatpush1.bf16.msra.mxu0 0
        %3252 = vmatprep.subr.bf16.mxu0 0
        %3253 = vmatpush1.bf16.msra.mxu0 0
        %3254 = vmatprep.subr.bf16.mxu0 0
        %3255 = vmatpush1.bf16.msra.mxu0 0
        %3256 = vmatprep.subr.bf16.mxu0 0
        %3257 = vmatpush1.bf16.msra.mxu0 0
        %3258 = vmatprep.subr.bf16.mxu0 0
        %3259 = vmatpush1.bf16.msra.mxu0 0
        %3260 = vmatprep.subr.bf16.mxu0 0
        %3261 = vmatpush1.bf16.msra.mxu0 0
        %3262 = vmatprep.subr.bf16.mxu0 0
        %3263 = vmatpush1.bf16.msra.mxu0 0
        %3264 = vmatprep.mubr.bf16.mxu0 0
        %3265 = vmatmul.mubr.bf16.gmra.mrb[0].mxu0 %v3113
        %v3266 = vpop.f32.mrb[0].mxu0
        %v3267 = vadd.f32 0.0, %v3266
        %v3268 = vpop.f32.mrb[0].mxu0
        %v3269 = vadd.f32 0.0, %v3268
        %v3270 = vpop.f32.mrb[0].mxu0
        %v3271 = vpop.f32.mrb[0].mxu0
        %3272 = vdwg.mxu0
        %3273 = vmatprep.subr.bf16.mxu0 %v814
        %3274 = vmatpush1.bf16.msra.mxu0 %v813
        %3275 = vmatprep.subr.bf16.mxu0 %v818
        %3276 = vmatpush1.bf16.msra.mxu0 %v817
        %3277 = vmatprep.subr.bf16.mxu0 %v822
        %3278 = vmatpush1.bf16.msra.mxu0 %v821
        %3279 = vmatprep.subr.bf16.mxu0 %v826
        %3280 = vmatpush1.bf16.msra.mxu0 %v825
        %3281 = vmatprep.subr.bf16.mxu0 %v830
        %3282 = vmatpush1.bf16.msra.mxu0 %v829
        %3283 = vmatprep.subr.bf16.mxu0 %v834
        %3284 = vmatpush1.bf16.msra.mxu0 %v833
        %3285 = vmatprep.subr.bf16.mxu0 %v838
        %3286 = vmatpush1.bf16.msra.mxu0 %v837
        %3287 = vmatprep.subr.bf16.mxu0 %v842
        %3288 = vmatpush1.bf16.msra.mxu0 %v841
        %3289 = vmatprep.subr.bf16.mxu0 0
        %3290 = vmatpush1.bf16.msra.mxu0 0
        %3291 = vmatprep.subr.bf16.mxu0 0
        %3292 = vmatpush1.bf16.msra.mxu0 0
        %3293 = vmatprep.subr.bf16.mxu0 0
        %3294 = vmatpush1.bf16.msra.mxu0 0
        %3295 = vmatprep.subr.bf16.mxu0 0
        %3296 = vmatpush1.bf16.msra.mxu0 0
        %3297 = vmatprep.subr.bf16.mxu0 0
        %3298 = vmatpush1.bf16.msra.mxu0 0
        %3299 = vmatprep.subr.bf16.mxu0 0
        %3300 = vmatpush1.bf16.msra.mxu0 0
        %3301 = vmatprep.subr.bf16.mxu0 0
        %3302 = vmatpush1.bf16.msra.mxu0 0
        %3303 = vmatprep.subr.bf16.mxu0 0
        %3304 = vmatpush1.bf16.msra.mxu0 0
        %3305 = vmatprep.mubr.bf16.mxu0 0
        %3306 = vmatmul.mubr.bf16.gmra.mrb[0].mxu0 %v3113
        %v3307 = vpop.f32.mrb[0].mxu0
        %v3308 = vadd.f32 0.0, %v3307
        %v3309 = vpop.f32.mrb[0].mxu0
        %v3310 = vadd.f32 0.0, %v3309
        %v3311 = vpop.f32.mrb[0].mxu0
        %v3312 = vpop.f32.mrb[0].mxu0
        %3313 = vdwg.mxu0
        %3314 = vmatprep.subr.bf16.mxu0 %v1054
        %3315 = vmatpush1.bf16.msra.mxu0 %v1053
        %3316 = vmatprep.subr.bf16.mxu0 %v1058
        %3317 = vmatpush1.bf16.msra.mxu0 %v1057
        %3318 = vmatprep.subr.bf16.mxu0 %v1062
        %3319 = vmatpush1.bf16.msra.mxu0 %v1061
        %3320 = vmatprep.subr.bf16.mxu0 %v1066
        %3321 = vmatpush1.bf16.msra.mxu0 %v1065
        %3322 = vmatprep.subr.bf16.mxu0 %v1070
        %3323 = vmatpush1.bf16.msra.mxu0 %v1069
        %3324 = vmatprep.subr.bf16.mxu0 %v1074
        %3325 = vmatpush1.bf16.msra.mxu0 %v1073
        %3326 = vmatprep.subr.bf16.mxu0 %v1078
        %3327 = vmatpush1.bf16.msra.mxu0 %v1077
        %3328 = vmatprep.subr.bf16.mxu0 %v1082
        %3329 = vmatpush1.bf16.msra.mxu0 %v1081
        %3330 = vmatprep.subr.bf16.mxu0 0
        %3331 = vmatpush1.bf16.msra.mxu0 0
        %3332 = vmatprep.subr.bf16.mxu0 0
        %3333 = vmatpush1.bf16.msra.mxu0 0
        %3334 = vmatprep.subr.bf16.mxu0 0
        %3335 = vmatpush1.bf16.msra.mxu0 0
        %3336 = vmatprep.subr.bf16.mxu0 0
        %3337 = vmatpush1.bf16.msra.mxu0 0
        %3338 = vmatprep.subr.bf16.mxu0 0
        %3339 = vmatpush1.bf16.msra.mxu0 0
        %3340 = vmatprep.subr.bf16.mxu0 0
        %3341 = vmatpush1.bf16.msra.mxu0 0
        %3342 = vmatprep.subr.bf16.mxu0 0
        %3343 = vmatpush1.bf16.msra.mxu0 0
        %3344 = vmatprep.subr.bf16.mxu0 0
        %3345 = vmatpush1.bf16.msra.mxu0 0
        %3346 = vmatprep.mubr.bf16.mxu0 0
        %3347 = vmatmul.mubr.bf16.gmra.mrb[0].mxu0 %v3231
        %v3348 = vpop.f32.mrb[0].mxu0
        %v3349 = vadd.f32 %v3267, %v3348
        %v3350 = vpop.f32.mrb[0].mxu0
        %v3351 = vadd.f32 %v3269, %v3350
        %v3352 = vpop.f32.mrb[0].mxu0
        %v3353 = vpop.f32.mrb[0].mxu0
        %3354 = vdwg.mxu0
        %3355 = vmatprep.subr.bf16.mxu0 %v1056
        %3356 = vmatpush1.bf16.msra.mxu0 %v1055
        %3357 = vmatprep.subr.bf16.mxu0 %v1060
        %3358 = vmatpush1.bf16.msra.mxu0 %v1059
        %3359 = vmatprep.subr.bf16.mxu0 %v1064
        %3360 = vmatpush1.bf16.msra.mxu0 %v1063
        %3361 = vmatprep.subr.bf16.mxu0 %v1068
        %3362 = vmatpush1.bf16.msra.mxu0 %v1067
        %3363 = vmatprep.subr.bf16.mxu0 %v1072
        %3364 = vmatpush1.bf16.msra.mxu0 %v1071
        %3365 = vmatprep.subr.bf16.mxu0 %v1076
        %3366 = vmatpush1.bf16.msra.mxu0 %v1075
        %3367 = vmatprep.subr.bf16.mxu0 %v1080
        %3368 = vmatpush1.bf16.msra.mxu0 %v1079
        %3369 = vmatprep.subr.bf16.mxu0 %v1084
        %3370 = vmatpush1.bf16.msra.mxu0 %v1083
        %3371 = vmatprep.subr.bf16.mxu0 0
        %3372 = vmatpush1.bf16.msra.mxu0 0
        %3373 = vmatprep.subr.bf16.mxu0 0
        %3374 = vmatpush1.bf16.msra.mxu0 0
        %3375 = vmatprep.subr.bf16.mxu0 0
        %3376 = vmatpush1.bf16.msra.mxu0 0
        %3377 = vmatprep.subr.bf16.mxu0 0
        %3378 = vmatpush1.bf16.msra.mxu0 0
        %3379 = vmatprep.subr.bf16.mxu0 0
        %3380 = vmatpush1.bf16.msra.mxu0 0
        %3381 = vmatprep.subr.bf16.mxu0 0
        %3382 = vmatpush1.bf16.msra.mxu0 0
        %3383 = vmatprep.subr.bf16.mxu0 0
        %3384 = vmatpush1.bf16.msra.mxu0 0
        %3385 = vmatprep.subr.bf16.mxu0 0
        %3386 = vmatpush1.bf16.msra.mxu0 0
        %3387 = vmatprep.mubr.bf16.mxu0 0
        %3388 = vmatmul.mubr.bf16.gmra.mrb[0].mxu0 %v3231
        %v3389 = vpop.f32.mrb[0].mxu0
        %v3390 = vadd.f32 %v3308, %v3389
        %v3391 = vpop.f32.mrb[0].mxu0
        %v3392 = vadd.f32 %v3310, %v3391
        %v3393 = vpop.f32.mrb[0].mxu0
        %v3394 = vpop.f32.mrb[0].mxu0
        %3395 = vdwg.mxu0
        %v3396 = vadd.f32 %v3349, %v1203
        %v3397 = vadd.f32 %v3351, %v1207
        %v3398 = vadd.f32 %v3390, %v1211
        %v3399 = vadd.f32 %v3392, %v1215
        %v3400 = vxor.u32 %v3396, 2147483648
        %v3401 = vmul.f32 %v3400, 1.442695
        %v3402 = vpow.pop %v3401
        %v3403 = vadd.f32 %v3402, 1.0
        %v3404 = vrcp.pop %v3403
        %v3405 = vmul.f32 1.0, %v3404
        %v3406 = vxor.u32 %v3397, 2147483648
        %v3407 = vmul.f32 %v3406, 1.442695
        %v3408 = vpow.pop %v3407
        %v3409 = vadd.f32 %v3408, 1.0
        %v3410 = vrcp.pop %v3409
        %v3411 = vmul.f32 1.0, %v3410
        %v3412 = vtanh.pop %v3398
        %v3413 = vxor.u32 %v3399, 2147483648
        %v3414 = vmul.f32 %v3413, 1.442695
        %v3415 = vpow.pop %v3414
        %v3416 = vadd.f32 %v3415, 1.0
        %v3417 = vrcp.pop %v3416
        %v3418 = vmul.f32 1.0, %v3417
        %v3419 = vmul.f32 %v3411, %v3110
        %v3420 = vmul.f32 %v3405, %v3412
        %v3421 = vadd.f32 %v3419, %v3420
        %v3422 = vtanh.pop %v3421
        %v3423 = vmul.f32 %v3418, %v3422
        %v3424 = vpack.c.bf16 %v3423, %v3423
        %s3425 = scalar_lea.vmem %s324, 28
        %3426 = vst [vmem:[%s3425] sm:$0xf] %v3424
        %3427 = vst [vmem:[#allocation2] sm:$0xff] %v3230
        %3428 = vst [vmem:[#allocation4] sm:$0xff] %v3228
        %3429 = vst [vmem:[%s434] sm:$0xff] %v3423
        %3430 = vst [vmem:[%s436] sm:$0xff] %v3421
        %s3431 = smul.u32 8, %s26
        %p3432 = scmp.lt.s32.totalorder %s3431, 31
        %s3433 = scalar_select %p3432, %s3431, 31
        %p3434 = scmp.lt.s32.totalorder %s25, 0
        %s3435 = scalar_select %p3434, %s25, 0
        %s3436 = sadd.s32 %s3435, %s3433
        %s3437 = smul.addr %s3436, 4
        %s3438 = scalar_lea.vmem %s5, %s3437
        // Predicated region
        $region45: #{_lambda_.4} parent=39 // pred_check
          %p3439 = pneg %p165
        $region46: #{_lambda_.4} parent=39 // pred_check_branch
          %3441 = sbr.rel (%p3439) target = $region48
        $region47: #{_lambda_.4} parent=39 // pred_region
          %s3442 = smul.u32 8, %s26
        $region48: #{_lambda_.4} parent=39 // pred_fallthru
          _
        // Predicated region
        $region49: #{_lambda_.4} parent=39 // pred_check
          %p3443 = pneg %p191
        $region50: #{_lambda_.4} parent=39 // pred_check_branch
          %3445 = sbr.rel (%p3443) target = $region52
        $region51: #{_lambda_.4} parent=39 // pred_region
          %s3447 = ssub.s32 256, 256
          %3448 = vsyncadd [#allocation3], %s3447
          %s3449 = smul.addr %s25, 128
          %s3450 = scalar_lea.hbm %s6, %s3449
          %s3451 = sshll.u32 [#allocation2], 4
          %s3452 = int_to_ptr.vmem [resolvable:$true] %s3451
          %3457 = dma.vmem_to_hbm [thread:$0]  %s3452, 256, %s3450, [#allocation3], 128, 128, 8
        $region52: #{_lambda_.4} parent=39 // pred_fallthru
          _
        // Predicated region
        $region53: #{_lambda_.4} parent=39 // pred_check
          %p3458 = pneg %p217
        $region54: #{_lambda_.4} parent=39 // pred_check_branch
          %3460 = sbr.rel (%p3458) target = $region56
        $region55: #{_lambda_.4} parent=39 // pred_region
          %s3462 = ssub.s32 256, 256
          %3463 = vsyncadd [#allocation5], %s3462
          %s3464 = smul.addr %s25, 128
          %s3465 = scalar_lea.hbm %s7, %s3464
          %s3466 = sshll.u32 [#allocation4], 4
          %s3467 = int_to_ptr.vmem [resolvable:$true] %s3466
          %3472 = dma.vmem_to_hbm [thread:$0]  %s3467, 256, %s3465, [#allocation5], 128, 128, 8
        $region56: #{_lambda_.4} parent=39 // pred_fallthru
          _
        // Predicated region
        $region57: #{_lambda_.4} parent=39 // pred_check
          %p3473 = pneg %p191
        $region58: #{_lambda_.4} parent=39 // pred_check_branch
          %3475 = sbr.rel (%p3473) target = $region60
        $region59: #{_lambda_.4} parent=39 // pred_region
          %3476 = dma.done [#allocation3], 256
        $region60: #{_lambda_.4} parent=39 // pred_fallthru
          _
        // Predicated region
        $region61: #{_lambda_.4} parent=39 // pred_check
          %p3477 = pneg %p217
        $region62: #{_lambda_.4} parent=39 // pred_check_branch
          %3479 = sbr.rel (%p3477) target = $region64
        $region63: #{_lambda_.4} parent=39 // pred_region
          %3480 = dma.done [#allocation5], 256
        $region64: #{_lambda_.4} parent=39 // pred_fallthru
          _
      $region40: #{_lambda_.4} parent=5 // pred_fallthru
        _
      %p3481 = scmp.le.s32.totalorder 2, %s16
      // Predicated region
      $region65: #{_lambda_.4} parent=5 // pred_check
        %p3482 = pneg %p3481
      $region66: #{_lambda_.4} parent=5 // pred_check_branch
        %3484 = sbr.rel (%p3482) target = $region68
      $region67: #{_lambda_.4} parent=5 // pred_region
        %s3485 = ssub.s32 %s16, 2
        // Predicated region
        $region69: #{_lambda_.4} parent=67 // pred_check
          %p3486 = pneg %p171
        $region70: #{_lambda_.4} parent=67 // pred_check_branch
          %3488 = sbr.rel (%p3486) target = $region72
        $region71: #{_lambda_.4} parent=67 // pred_region
          %s3489 = smul.u32 8, %s28
          %p3490 = scmp.lt.s32.totalorder %s3489, 31
          %s3491 = scalar_select %p3490, %s3489, 31
          %p3492 = scmp.lt.s32.totalorder %s27, 0
          %s3493 = scalar_select %p3492, %s27, 0
          %s3494 = sadd.s32 %s3493, %s3491
          %s3495 = smul.addr %s3494, 4
          %s3496 = scalar_lea.vmem %s5, %s3495
        $region72: #{_lambda_.4} parent=67 // pred_fallthru
          _
      $region68: #{_lambda_.4} parent=5 // pred_fallthru
        _
    $region6: #{_lambda_.4} parent=1 // loop_footer
      %s20 = sadd.s32 1, %s16
    $region7: #{_lambda_.4} parent=1 // loop_footer_branch
      %15 = sbr.rel target = $region3
    $region8: #{_lambda_.4} parent=1 // loop_exit
      _
    %3497 = vsyncpa [#allocation3], 1
    %s3498 = scalar_lea.sflag [#allocation3], 1
    %3499 = vsyncpa %s3498, 1
    %3500 = vsyncpa [#allocation5], 1

</llo_original>
